<compile_context>
chip_gen: v7x
topology: tpu7x:2x2x1
jax: 0.10.0
libtpu: 0.0.40
codegen_flags: <defaults>
</compile_context>

<pallas_src>
import functools

import jax
import jax.numpy as jnp
from jax import lax
from jax.experimental import pallas as pl
from jax.experimental.pallas import tpu as pltpu

_LANE = 128
_LPAD = 16            # interior column offset in pool pad scratch (bf16 sublane tile)
_NEG = -jnp.inf       # pool border sentinel; pooled tensor is post-SiLU => finite, so -inf never wins


def _round_up(v, m):
    return (v + m - 1) // m * m


# --------------------------------------------------------------------------
# Pallas kernel
# --------------------------------------------------------------------------
def _sppf_kernel(x_ref, w1_ref, s1_ref, b1_ref, w2_ref, s2_ref, b2_ref,
                 o_ref, pad_ref, acc_ref, *, H, W):
    # x_ref  : (1, H*W, C1)      bf16, one batch element (flattened spatial)
    # w1_ref : (C1, Chp)         bf16 folded cv1 weight
    # s1/b1  : (1, Chp)          f32 folded BN scale / bias for cv1
    # w2_ref : (4, Chp, C2p)     bf16 folded cv2 weight, split per concat branch
    # s2/b2  : (1, C2p)          f32
    # o_ref  : (1, H*W, C2p)     bf16
    # pad_ref: (H+4, _LPAD+W+2, Chp) bf16 VMEM scratch, reused padded pool buffer
    # acc_ref: (H*W, C2p)        f32 VMEM scratch, cv2 accumulator
    Chp = w1_ref.shape[1]
    C2p = w2_ref.shape[2]
    HW = H * W
    PH = H + 4
    c0 = _LPAD - 2                     # leftmost padded column ever read

    def silu_f32(v):
        # exp -> EUP slot; approx reciprocal -> EUP slot (divide off the VALU path)
        return v * pl.reciprocal(1.0 + jnp.exp(-v), approx=True)

    # ---- cv1: 1x1 conv as channel matmul (bf16 in, f32 acc) + BN fold + SiLU
    x = x_ref[0]                                                   # (HW, C1) bf16
    y = jnp.dot(x, w1_ref[...], preferred_element_type=jnp.float32)
    y = silu_f32(y * s1_ref[...] + b1_ref[...])
    yb = y.astype(jnp.bfloat16)                                    # pool pipeline is bf16

    # ---- cv2 accumulator in VMEM scratch; branch 0 = un-pooled tensor -------
    acc_ref[...] = jnp.dot(yb, w2_ref[0], preferred_element_type=jnp.float32)

    # ---- fill only the thin -inf border of the pool pad scratch -------------
    # Interior lives at rows [2, 2+H), cols [_LPAD, _LPAD+W). Border cells are
    # never overwritten; refilled each grid step (cheap) so correctness does not
    # rely on scratch persistence across grid partitions / cores.
    neg_col = jnp.full((PH, 2, Chp), _NEG, jnp.bfloat16)
    neg_row = jnp.full((2, W + 4, Chp), _NEG, jnp.bfloat16)
    pad_ref[:, c0:_LPAD, :] = neg_col                        # left halo cols
    pad_ref[:, _LPAD + W:_LPAD + W + 2, :] = neg_col         # right halo cols
    pad_ref[0:2, c0:_LPAD + W + 2, :] = neg_row              # top halo rows
    pad_ref[2 + H:4 + H, c0:_LPAD + W + 2, :] = neg_row      # bottom halo rows

    cur = yb.reshape(H, W, Chp)
    for i in range(1, 4):
        # interior store starts at a bf16-sublane-aligned column (_LPAD = 16)
        pad_ref[2:2 + H, _LPAD:_LPAD + W, :] = cur
        pbuf = pad_ref[:, c0:c0 + W + 4, :]                  # (PH, W+4, Chp)

        # separable 5-tap max: W (sublane) pass ...
        r = pbuf[:, 0:W, :]
        for d in range(1, 5):
            r = jnp.maximum(r, pbuf[:, d:d + W, :])          # (PH, W, Chp)
        # ... then H pass (major-axis slices: free address offsets)
        cur = r[0:H]
        for d in range(1, 5):
            cur = jnp.maximum(cur, r[d:d + H])               # (H, W, Chp)

        # accumulate this branch's partial cv2 matmul (no concat buffer)
        acc_ref[...] += jnp.dot(cur.reshape(HW, Chp), w2_ref[i],
                                preferred_element_type=jnp.float32)

    # ---- cv2 BN fold + SiLU + bf16 lane-dense store --------------------------
    z = silu_f32(acc_ref[...] * s2_ref[...] + b2_ref[...])
    o_ref[0] = z.astype(o_ref.dtype)


# --------------------------------------------------------------------------
# Parameter folding: BN fold, channel padding to lane multiples, bf16 weights
# --------------------------------------------------------------------------
def prepare_params(params, eps=1e-5):
    cv1_w = params["cv1_w"]          # (Ch, C1, 1, 1)
    cv2_w = params["cv2_w"]          # (C2, 4*Ch, 1, 1)
    Ch, C1 = cv1_w.shape[0], cv1_w.shape[1]
    C2 = cv2_w.shape[0]
    Chp = _round_up(Ch, _LANE)
    C2p = _round_up(C2, _LANE)

    s1 = params["bn1_g"] / jnp.sqrt(params["bn1_v"] + eps)
    b1 = params["bn1_b"] - params["bn1_m"] * s1
    w1 = jnp.transpose(cv1_w[:, :, 0, 0], (1, 0))            # (C1, Ch)
    w1 = jnp.pad(w1, ((0, 0), (0, Chp - Ch))).astype(jnp.bfloat16)
    s1 = jnp.pad(s1, (0, Chp - Ch))[None, :].astype(jnp.float32)
    b1 = jnp.pad(b1, (0, Chp - Ch))[None, :].astype(jnp.float32)

    s2 = params["bn2_g"] / jnp.sqrt(params["bn2_v"] + eps)
    b2 = params["bn2_b"] - params["bn2_m"] * s2
    w2 = jnp.transpose(cv2_w[:, :, 0, 0], (1, 0))            # (4*Ch, C2)
    w2 = w2.reshape(4, Ch, C2)                               # per concat branch
    w2 = jnp.pad(w2, ((0, 0), (0, Chp - Ch), (0, C2p - C2))).astype(jnp.bfloat16)
    s2 = jnp.pad(s2, (0, C2p - C2))[None, :].astype(jnp.float32)
    b2 = jnp.pad(b2, (0, C2p - C2))[None, :].astype(jnp.float32)

    return w1, s1, b1, w2, s2, b2, C2


# --------------------------------------------------------------------------
# Forward (NHWC primary, NCHW wrapper for PyTorch API parity)
# --------------------------------------------------------------------------
@jax.jit
def sppf_forward_nhwc(x_nhwc, params):
    """x_nhwc: (N, H, W, C1) -> (N, H, W, C2) in bf16."""
    w1, s1, b1, w2, s2, b2, C2 = prepare_params(params)

    N, H, W, C1 = x_nhwc.shape
    Chp = w1.shape[1]
    C2p = w2.shape[2]
    HW = H * W
    PH, PW = H + 4, _LPAD + W + 2

    # bf16 activations across HBM (half the DMA bytes vs f32)
    x = x_nhwc.astype(jnp.bfloat16).reshape(N, HW, C1)

    # VMEM estimate: double-buffered I/O blocks + scratches + live intermediates
    # + double-buffered weights + headroom.
    est = (2 * HW * C1 * 2
           + 2 * HW * C2p * 2
           + PH * PW * Chp * 2
           + HW * C2p * 4
           + 4 * HW * Chp * 4
           + 2 * (w1.size + w2.size) * 2
           + 2 * (s1.size + b1.size + s2.size + b2.size) * 4
           + 4 * 1024 * 1024)
    try:
        vmem_cap = pltpu.get_tpu_info().vmem_capacity_bytes   # generation-aware
    except Exception:
        vmem_cap = 64 * 1024 * 1024
    vmem_limit = int(min(vmem_cap - 2 * 1024 * 1024,
                         max(16 * 1024 * 1024, est)))

    kernel = functools.partial(_sppf_kernel, H=H, W=W)

    out = pl.pallas_call(
        kernel,
        out_shape=jax.ShapeDtypeStruct((N, HW, C2p), jnp.bfloat16),
        grid=(N,),
        in_specs=[
            pl.BlockSpec((1, HW, C1), lambda n: (n, 0, 0)),
            pl.BlockSpec((C1, Chp), lambda n: (0, 0)),
            pl.BlockSpec((1, Chp), lambda n: (0, 0)),
            pl.BlockSpec((1, Chp), lambda n: (0, 0)),
            pl.BlockSpec((4, Chp, C2p), lambda n: (0, 0, 0)),
            pl.BlockSpec((1, C2p), lambda n: (0, 0)),
            pl.BlockSpec((1, C2p), lambda n: (0, 0)),
        ],
        out_specs=pl.BlockSpec((1, HW, C2p), lambda n: (n, 0, 0)),
        scratch_shapes=[pltpu.VMEM((PH, PW, Chp), jnp.bfloat16),   # pool pad buffer
                        pltpu.VMEM((HW, C2p), jnp.float32)],       # cv2 accumulator
        compiler_params=pltpu.CompilerParams(
            dimension_semantics=("parallel",),
            vmem_limit_bytes=vmem_limit),
    )(x, w1, s1, b1, w2, s2, b2)

    return out.reshape(N, H, W, C2p)[..., :C2]   # drop padded output channels


@jax.jit
def sppf_forward(x_nchw, params):
    """PyTorch-layout API: (N, C1, H, W) -> (N, C2, H, W) in bf16."""
    x = jnp.transpose(x_nchw, (0, 2, 3, 1))
    y = sppf_forward_nhwc(x, params)
    return jnp.transpose(y, (0, 3, 1, 2))


# --------------------------------------------------------------------------
# Pure-JAX reference (mirrors the kernel's bf16 matmul numerics)
# --------------------------------------------------------------------------
def sppf_reference(x_nchw, params):
    w1, s1, b1, w2, s2, b2, C2 = prepare_params(params)
    x = jnp.transpose(x_nchw, (0, 2, 3, 1)).astype(jnp.float32)

    def silu(v):
        return v * (1.0 / (1.0 + jnp.exp(-v)))

    y = jnp.einsum("nhwc,cd->nhwd", x.astype(jnp.bfloat16), w1,
                   preferred_element_type=jnp.float32)
    y = silu(y * s1[0] + b1[0])

    def mp(t):
        return lax.reduce_window(
            t, -jnp.inf, lax.max,
            window_dimensions=(1, 5, 5, 1), window_strides=(1, 1, 1, 1),
            padding=[(0, 0), (2, 2), (2, 2), (0, 0)])

    ys = [y]
    for _ in range(3):
        ys.append(mp(ys[-1]))

    z = sum(jnp.einsum("nhwc,cd->nhwd", yi.astype(jnp.bfloat16), w2[i],
                       preferred_element_type=jnp.float32)
            for i, yi in enumerate(ys))
    z = silu(z * s2[0] + b2[0])
    return jnp.transpose(z[..., :C2], (0, 3, 1, 2))


# --------------------------------------------------------------------------
# Deterministic parameter init + demo
# --------------------------------------------------------------------------
def make_params(key, c1, c2):
    c_ = c1 // 2
    ks = jax.random.split(key, 10)
    return {
        "cv1_w": 0.5 * jax.random.normal(ks[0], (c_, c1, 1, 1), jnp.float32),
        "bn1_g": jax.random.uniform(ks[1], (c_,), jnp.float32, 0.5, 1.5),
        "bn1_b": 0.1 * jax.random.normal(ks[2], (c_,), jnp.float32),
        "bn1_m": 0.1 * jax.random.normal(ks[3], (c_,), jnp.float32),
        "bn1_v": jax.random.uniform(ks[4], (c_,), jnp.float32, 0.5, 1.5),
        "cv2_w": 0.5 * jax.random.normal(ks[5], (c2, 4 * c_, 1, 1), jnp.float32),
        "bn2_g": jax.random.uniform(ks[6], (c2,), jnp.float32, 0.5, 1.5),
        "bn2_b": 0.1 * jax.random.normal(ks[7], (c2,), jnp.float32),
        "bn2_m": 0.1 * jax.random.normal(ks[8], (c2,), jnp.float32),
        "bn2_v": jax.random.uniform(ks[9], (c2,), jnp.float32, 0.5, 1.5),
    }


if __name__ == "__main__":
    key = jax.random.PRNGKey(0)
    k_x, k_p = jax.random.split(key)

    N, C1, H, W = 2, 4, 16, 16
    C2 = 8

    x = jax.random.normal(k_x, (N, C1, H, W), jnp.float32)
    params = make_params(k_p, C1, C2)

    out = sppf_forward(x, params)
    out = jax.block_until_ready(out)

    ref = sppf_reference(x, params)
    assert out.shape == (N, C2, H, W), out.shape
    out_f32 = out.astype(jnp.float32)
    err = float(jnp.max(jnp.abs(out_f32 - ref)))
    # bf16 output + approx-reciprocal SiLU vs exact-sigmoid f32 reference.
    assert jnp.allclose(out_f32, ref, rtol=3e-2, atol=3e-2), err

    print("KERNEL_OK")
</pallas_src>

<mosaic_0001>
module attributes {stable_mosaic.version = 11 : i64} {
  func.func @_sppf_kernel(%arg0: i32, %arg1: memref<1x256x4xbf16, #tpu.memory_space<vmem>>, %arg2: memref<4x128xbf16, #tpu.memory_space<vmem>>, %arg3: memref<1x128xf32, #tpu.memory_space<vmem>>, %arg4: memref<1x128xf32, #tpu.memory_space<vmem>>, %arg5: memref<4x128x128xbf16, #tpu.memory_space<vmem>>, %arg6: memref<1x128xf32, #tpu.memory_space<vmem>>, %arg7: memref<1x128xf32, #tpu.memory_space<vmem>>, %arg8: memref<1x256x128xbf16, #tpu.memory_space<vmem>>, %arg9: memref<20x34x128xbf16, #tpu.memory_space<vmem>>, %arg10: memref<256x128xf32, #tpu.memory_space<vmem>>) attributes {dimension_semantics = [#tpu.dimension_semantics<parallel>], iteration_bounds = array<i64: 2>, scalar_prefetch = 0 : i64, scratch_operands = 2 : i64, tpu.core_type = #tpu.core_type<tc>, window_params = [{transform_indices = @transform_0, window_bounds = array<i64: 1, 256, 4>}, {pipeline_mode = #tpu.pipeline_mode<synchronous>, transform_indices = @transform_1, window_bounds = array<i64: 4, 128>}, {pipeline_mode = #tpu.pipeline_mode<synchronous>, transform_indices = @transform_2, window_bounds = array<i64: 1, 128>}, {pipeline_mode = #tpu.pipeline_mode<synchronous>, transform_indices = @transform_3, window_bounds = array<i64: 1, 128>}, {pipeline_mode = #tpu.pipeline_mode<synchronous>, transform_indices = @transform_4, window_bounds = array<i64: 4, 128, 128>}, {pipeline_mode = #tpu.pipeline_mode<synchronous>, transform_indices = @transform_5, window_bounds = array<i64: 1, 128>}, {pipeline_mode = #tpu.pipeline_mode<synchronous>, transform_indices = @transform_6, window_bounds = array<i64: 1, 128>}, {transform_indices = @transform_7, window_bounds = array<i64: 1, 256, 128>}]} {
    %c0 = arith.constant 0 : index
    %c0_0 = arith.constant 0 : index
    %c0_1 = arith.constant 0 : index
    %0 = vector.load %arg1[%c0, %c0_0, %c0_1] : memref<1x256x4xbf16, #tpu.memory_space<vmem>>, vector<1x256x4xbf16>
    %1 = vector.shape_cast %0 : vector<1x256x4xbf16> to vector<256x4xbf16>
    %c0_2 = arith.constant 0 : index
    %c0_3 = arith.constant 0 : index
    %2 = vector.load %arg2[%c0_2, %c0_3] : memref<4x128xbf16, #tpu.memory_space<vmem>>, vector<4x128xbf16>
    %cst = arith.constant dense<0.000000e+00> : vector<256x128xf32>
    %3 = tpu.matmul %1, %2, %cst {dimension_numbers = #tpu.dot_dimension_numbers<[1], [0], [0], [1], [0, 0, 1, 1], [], []>} : vector<256x4xbf16>, vector<4x128xbf16>, vector<256x128xf32> -> vector<256x128xf32>
    %c0_4 = arith.constant 0 : index
    %c0_5 = arith.constant 0 : index
    %4 = vector.load %arg3[%c0_4, %c0_5] : memref<1x128xf32, #tpu.memory_space<vmem>>, vector<1x128xf32>
    %5 = vector.broadcast %4 : vector<1x128xf32> to vector<256x128xf32>
    %6 = arith.mulf %3, %5 : vector<256x128xf32>
    %c0_6 = arith.constant 0 : index
    %c0_7 = arith.constant 0 : index
    %7 = vector.load %arg4[%c0_6, %c0_7] : memref<1x128xf32, #tpu.memory_space<vmem>>, vector<1x128xf32>
    %8 = vector.broadcast %7 : vector<1x128xf32> to vector<256x128xf32>
    %9 = arith.addf %6, %8 : vector<256x128xf32>
    %cst_8 = arith.constant 0.000000e+00 : f32
    %10 = vector.broadcast %cst_8 : f32 to vector<256x128xf32>
    %11 = arith.subf %10, %9 : vector<256x128xf32>
    %12 = math.exp %11 : vector<256x128xf32>
    %cst_9 = arith.constant 1.000000e+00 : f32
    %13 = vector.broadcast %cst_9 : f32 to vector<256x128xf32>
    %14 = arith.addf %13, %12 : vector<256x128xf32>
    %15 = tpu.reciprocal %14 {approx = true} : vector<256x128xf32> -> vector<256x128xf32>
    %16 = arith.mulf %9, %15 : vector<256x128xf32>
    %17 = arith.truncf %16 : vector<256x128xf32> to vector<256x128xbf16>
    %c0_10 = arith.constant 0 : index
    %c0_11 = arith.constant 0 : index
    %c0_12 = arith.constant 0 : index
    %18 = vector.load %arg5[%c0_10, %c0_11, %c0_12] : memref<4x128x128xbf16, #tpu.memory_space<vmem>>, vector<1x128x128xbf16>
    %19 = vector.shape_cast %18 : vector<1x128x128xbf16> to vector<128x128xbf16>
    %cst_13 = arith.constant dense<0.000000e+00> : vector<256x128xf32>
    %20 = tpu.matmul %17, %19, %cst_13 {dimension_numbers = #tpu.dot_dimension_numbers<[1], [0], [0], [1], [0, 0, 1, 1], [], []>} : vector<256x128xbf16>, vector<128x128xbf16>, vector<256x128xf32> -> vector<256x128xf32>
    %c0_14 = arith.constant 0 : index
    %c0_15 = arith.constant 0 : index
    %21 = vector.load %arg10[%c0_14, %c0_15] : memref<256x128xf32, #tpu.memory_space<vmem>>, vector<256x128xf32>
    tpu.vector_store %arg10[%c0_14, %c0_15], %20 {strides = array<i32>} : memref<256x128xf32, #tpu.memory_space<vmem>>, vector<256x128xf32>,
    %cst_16 = arith.constant 0xFF80 : bf16
    %22 = vector.broadcast %cst_16 : bf16 to vector<20x2x128xbf16>
    %cst_17 = arith.constant 0xFF80 : bf16
    %23 = vector.broadcast %cst_17 : bf16 to vector<2x20x128xbf16>
    %c0_18 = arith.constant 0 : index
    %c14 = arith.constant 14 : index
    %c0_19 = arith.constant 0 : index
    %24 = vector.load %arg9[%c0_18, %c14, %c0_19] : memref<20x34x128xbf16, #tpu.memory_space<vmem>>, vector<20x2x128xbf16>
    tpu.vector_store %arg9[%c0_18, %c14, %c0_19], %22 {strides = array<i32>} : memref<20x34x128xbf16, #tpu.memory_space<vmem>>, vector<20x2x128xbf16>,
    %c0_20 = arith.constant 0 : index
    %c32 = arith.constant 32 : index
    %c0_21 = arith.constant 0 : index
    %25 = vector.load %arg9[%c0_20, %c32, %c0_21] : memref<20x34x128xbf16, #tpu.memory_space<vmem>>, vector<20x2x128xbf16>
    tpu.vector_store %arg9[%c0_20, %c32, %c0_21], %22 {strides = array<i32>} : memref<20x34x128xbf16, #tpu.memory_space<vmem>>, vector<20x2x128xbf16>,
    %c0_22 = arith.constant 0 : index
    %c14_23 = arith.constant 14 : index
    %c0_24 = arith.constant 0 : index
    %26 = vector.load %arg9[%c0_22, %c14_23, %c0_24] : memref<20x34x128xbf16, #tpu.memory_space<vmem>>, vector<2x20x128xbf16>
    tpu.vector_store %arg9[%c0_22, %c14_23, %c0_24], %23 {strides = array<i32>} : memref<20x34x128xbf16, #tpu.memory_space<vmem>>, vector<2x20x128xbf16>,
    %c18 = arith.constant 18 : index
    %c14_25 = arith.constant 14 : index
    %c0_26 = arith.constant 0 : index
    %27 = vector.load %arg9[%c18, %c14_25, %c0_26] : memref<20x34x128xbf16, #tpu.memory_space<vmem>>, vector<2x20x128xbf16>
    tpu.vector_store %arg9[%c18, %c14_25, %c0_26], %23 {strides = array<i32>} : memref<20x34x128xbf16, #tpu.memory_space<vmem>>, vector<2x20x128xbf16>,
    %28 = vector.shape_cast %17 : vector<256x128xbf16> to vector<16x16x128xbf16>
    %c2 = arith.constant 2 : index
    %c16 = arith.constant 16 : index
    %c0_27 = arith.constant 0 : index
    %29 = vector.load %arg9[%c2, %c16, %c0_27] : memref<20x34x128xbf16, #tpu.memory_space<vmem>>, vector<16x16x128xbf16>
    tpu.vector_store %arg9[%c2, %c16, %c0_27], %28 {strides = array<i32>} : memref<20x34x128xbf16, #tpu.memory_space<vmem>>, vector<16x16x128xbf16>,
    %c0_28 = arith.constant 0 : index
    %c14_29 = arith.constant 14 : index
    %c0_30 = arith.constant 0 : index
    %30 = vector.load %arg9[%c0_28, %c14_29, %c0_30] : memref<20x34x128xbf16, #tpu.memory_space<vmem>>, vector<20x20x128xbf16>
    %31 = vector.extract_strided_slice %30 {offsets = [0, 0, 0], sizes = [20, 16, 128], strides = [1, 1, 1]} : vector<20x20x128xbf16> to vector<20x16x128xbf16>
    %32 = vector.extract_strided_slice %30 {offsets = [0, 1, 0], sizes = [20, 16, 128], strides = [1, 1, 1]} : vector<20x20x128xbf16> to vector<20x16x128xbf16>
    %33 = arith.maximumf %31, %32 : vector<20x16x128xbf16>
    %34 = vector.extract_strided_slice %30 {offsets = [0, 2, 0], sizes = [20, 16, 128], strides = [1, 1, 1]} : vector<20x20x128xbf16> to vector<20x16x128xbf16>
    %35 = arith.maximumf %33, %34 : vector<20x16x128xbf16>
    %36 = vector.extract_strided_slice %30 {offsets = [0, 3, 0], sizes = [20, 16, 128], strides = [1, 1, 1]} : vector<20x20x128xbf16> to vector<20x16x128xbf16>
    %37 = arith.maximumf %35, %36 : vector<20x16x128xbf16>
    %38 = vector.extract_strided_slice %30 {offsets = [0, 4, 0], sizes = [20, 16, 128], strides = [1, 1, 1]} : vector<20x20x128xbf16> to vector<20x16x128xbf16>
    %39 = arith.maximumf %37, %38 : vector<20x16x128xbf16>
    %40 = vector.extract_strided_slice %39 {offsets = [0, 0, 0], sizes = [16, 16, 128], strides = [1, 1, 1]} : vector<20x16x128xbf16> to vector<16x16x128xbf16>
    %41 = vector.extract_strided_slice %39 {offsets = [1, 0, 0], sizes = [16, 16, 128], strides = [1, 1, 1]} : vector<20x16x128xbf16> to vector<16x16x128xbf16>
    %42 = arith.maximumf %40, %41 : vector<16x16x128xbf16>
    %43 = vector.extract_strided_slice %39 {offsets = [2, 0, 0], sizes = [16, 16, 128], strides = [1, 1, 1]} : vector<20x16x128xbf16> to vector<16x16x128xbf16>
    %44 = arith.maximumf %42, %43 : vector<16x16x128xbf16>
    %45 = vector.extract_strided_slice %39 {offsets = [3, 0, 0], sizes = [16, 16, 128], strides = [1, 1, 1]} : vector<20x16x128xbf16> to vector<16x16x128xbf16>
    %46 = arith.maximumf %44, %45 : vector<16x16x128xbf16>
    %47 = vector.extract_strided_slice %39 {offsets = [4, 0, 0], sizes = [16, 16, 128], strides = [1, 1, 1]} : vector<20x16x128xbf16> to vector<16x16x128xbf16>
    %48 = arith.maximumf %46, %47 : vector<16x16x128xbf16>
    %c0_31 = arith.constant 0 : index
    %c0_32 = arith.constant 0 : index
    %49 = vector.load %arg10[%c0_31, %c0_32] : memref<256x128xf32, #tpu.memory_space<vmem>>, vector<256x128xf32>
    %50 = vector.shape_cast %48 : vector<16x16x128xbf16> to vector<256x128xbf16>
    %c1 = arith.constant 1 : index
    %c0_33 = arith.constant 0 : index
    %c0_34 = arith.constant 0 : index
    %51 = vector.load %arg5[%c1, %c0_33, %c0_34] : memref<4x128x128xbf16, #tpu.memory_space<vmem>>, vector<1x128x128xbf16>
    %52 = vector.shape_cast %51 : vector<1x128x128xbf16> to vector<128x128xbf16>
    %cst_35 = arith.constant dense<0.000000e+00> : vector<256x128xf32>
    %53 = tpu.matmul %50, %52, %cst_35 {dimension_numbers = #tpu.dot_dimension_numbers<[1], [0], [0], [1], [0, 0, 1, 1], [], []>} : vector<256x128xbf16>, vector<128x128xbf16>, vector<256x128xf32> -> vector<256x128xf32>
    %54 = arith.addf %49, %53 : vector<256x128xf32>
    %c0_36 = arith.constant 0 : index
    %c0_37 = arith.constant 0 : index
    %55 = vector.load %arg10[%c0_36, %c0_37] : memref<256x128xf32, #tpu.memory_space<vmem>>, vector<256x128xf32>
    tpu.vector_store %arg10[%c0_36, %c0_37], %54 {strides = array<i32>} : memref<256x128xf32, #tpu.memory_space<vmem>>, vector<256x128xf32>,
    %c2_38 = arith.constant 2 : index
    %c16_39 = arith.constant 16 : index
    %c0_40 = arith.constant 0 : index
    %56 = vector.load %arg9[%c2_38, %c16_39, %c0_40] : memref<20x34x128xbf16, #tpu.memory_space<vmem>>, vector<16x16x128xbf16>
    tpu.vector_store %arg9[%c2_38, %c16_39, %c0_40], %48 {strides = array<i32>} : memref<20x34x128xbf16, #tpu.memory_space<vmem>>, vector<16x16x128xbf16>,
    %c0_41 = arith.constant 0 : index
    %c14_42 = arith.constant 14 : index
    %c0_43 = arith.constant 0 : index
    %57 = vector.load %arg9[%c0_41, %c14_42, %c0_43] : memref<20x34x128xbf16, #tpu.memory_space<vmem>>, vector<20x20x128xbf16>
    %58 = vector.extract_strided_slice %57 {offsets = [0, 0, 0], sizes = [20, 16, 128], strides = [1, 1, 1]} : vector<20x20x128xbf16> to vector<20x16x128xbf16>
    %59 = vector.extract_strided_slice %57 {offsets = [0, 1, 0], sizes = [20, 16, 128], strides = [1, 1, 1]} : vector<20x20x128xbf16> to vector<20x16x128xbf16>
    %60 = arith.maximumf %58, %59 : vector<20x16x128xbf16>
    %61 = vector.extract_strided_slice %57 {offsets = [0, 2, 0], sizes = [20, 16, 128], strides = [1, 1, 1]} : vector<20x20x128xbf16> to vector<20x16x128xbf16>
    %62 = arith.maximumf %60, %61 : vector<20x16x128xbf16>
    %63 = vector.extract_strided_slice %57 {offsets = [0, 3, 0], sizes = [20, 16, 128], strides = [1, 1, 1]} : vector<20x20x128xbf16> to vector<20x16x128xbf16>
    %64 = arith.maximumf %62, %63 : vector<20x16x128xbf16>
    %65 = vector.extract_strided_slice %57 {offsets = [0, 4, 0], sizes = [20, 16, 128], strides = [1, 1, 1]} : vector<20x20x128xbf16> to vector<20x16x128xbf16>
    %66 = arith.maximumf %64, %65 : vector<20x16x128xbf16>
    %67 = vector.extract_strided_slice %66 {offsets = [0, 0, 0], sizes = [16, 16, 128], strides = [1, 1, 1]} : vector<20x16x128xbf16> to vector<16x16x128xbf16>
    %68 = vector.extract_strided_slice %66 {offsets = [1, 0, 0], sizes = [16, 16, 128], strides = [1, 1, 1]} : vector<20x16x128xbf16> to vector<16x16x128xbf16>
    %69 = arith.maximumf %67, %68 : vector<16x16x128xbf16>
    %70 = vector.extract_strided_slice %66 {offsets = [2, 0, 0], sizes = [16, 16, 128], strides = [1, 1, 1]} : vector<20x16x128xbf16> to vector<16x16x128xbf16>
    %71 = arith.maximumf %69, %70 : vector<16x16x128xbf16>
    %72 = vector.extract_strided_slice %66 {offsets = [3, 0, 0], sizes = [16, 16, 128], strides = [1, 1, 1]} : vector<20x16x128xbf16> to vector<16x16x128xbf16>
    %73 = arith.maximumf %71, %72 : vector<16x16x128xbf16>
    %74 = vector.extract_strided_slice %66 {offsets = [4, 0, 0], sizes = [16, 16, 128], strides = [1, 1, 1]} : vector<20x16x128xbf16> to vector<16x16x128xbf16>
    %75 = arith.maximumf %73, %74 : vector<16x16x128xbf16>
    %c0_44 = arith.constant 0 : index
    %c0_45 = arith.constant 0 : index
    %76 = vector.load %arg10[%c0_44, %c0_45] : memref<256x128xf32, #tpu.memory_space<vmem>>, vector<256x128xf32>
    %77 = vector.shape_cast %75 : vector<16x16x128xbf16> to vector<256x128xbf16>
    %c2_46 = arith.constant 2 : index
    %c0_47 = arith.constant 0 : index
    %c0_48 = arith.constant 0 : index
    %78 = vector.load %arg5[%c2_46, %c0_47, %c0_48] : memref<4x128x128xbf16, #tpu.memory_space<vmem>>, vector<1x128x128xbf16>
    %79 = vector.shape_cast %78 : vector<1x128x128xbf16> to vector<128x128xbf16>
    %cst_49 = arith.constant dense<0.000000e+00> : vector<256x128xf32>
    %80 = tpu.matmul %77, %79, %cst_49 {dimension_numbers = #tpu.dot_dimension_numbers<[1], [0], [0], [1], [0, 0, 1, 1], [], []>} : vector<256x128xbf16>, vector<128x128xbf16>, vector<256x128xf32> -> vector<256x128xf32>
    %81 = arith.addf %76, %80 : vector<256x128xf32>
    %c0_50 = arith.constant 0 : index
    %c0_51 = arith.constant 0 : index
    %82 = vector.load %arg10[%c0_50, %c0_51] : memref<256x128xf32, #tpu.memory_space<vmem>>, vector<256x128xf32>
    tpu.vector_store %arg10[%c0_50, %c0_51], %81 {strides = array<i32>} : memref<256x128xf32, #tpu.memory_space<vmem>>, vector<256x128xf32>,
    %c2_52 = arith.constant 2 : index
    %c16_53 = arith.constant 16 : index
    %c0_54 = arith.constant 0 : index
    %83 = vector.load %arg9[%c2_52, %c16_53, %c0_54] : memref<20x34x128xbf16, #tpu.memory_space<vmem>>, vector<16x16x128xbf16>
    tpu.vector_store %arg9[%c2_52, %c16_53, %c0_54], %75 {strides = array<i32>} : memref<20x34x128xbf16, #tpu.memory_space<vmem>>, vector<16x16x128xbf16>,
    %c0_55 = arith.constant 0 : index
    %c14_56 = arith.constant 14 : index
    %c0_57 = arith.constant 0 : index
    %84 = vector.load %arg9[%c0_55, %c14_56, %c0_57] : memref<20x34x128xbf16, #tpu.memory_space<vmem>>, vector<20x20x128xbf16>
    %85 = vector.extract_strided_slice %84 {offsets = [0, 0, 0], sizes = [20, 16, 128], strides = [1, 1, 1]} : vector<20x20x128xbf16> to vector<20x16x128xbf16>
    %86 = vector.extract_strided_slice %84 {offsets = [0, 1, 0], sizes = [20, 16, 128], strides = [1, 1, 1]} : vector<20x20x128xbf16> to vector<20x16x128xbf16>
    %87 = arith.maximumf %85, %86 : vector<20x16x128xbf16>
    %88 = vector.extract_strided_slice %84 {offsets = [0, 2, 0], sizes = [20, 16, 128], strides = [1, 1, 1]} : vector<20x20x128xbf16> to vector<20x16x128xbf16>
    %89 = arith.maximumf %87, %88 : vector<20x16x128xbf16>
    %90 = vector.extract_strided_slice %84 {offsets = [0, 3, 0], sizes = [20, 16, 128], strides = [1, 1, 1]} : vector<20x20x128xbf16> to vector<20x16x128xbf16>
    %91 = arith.maximumf %89, %90 : vector<20x16x128xbf16>
    %92 = vector.extract_strided_slice %84 {offsets = [0, 4, 0], sizes = [20, 16, 128], strides = [1, 1, 1]} : vector<20x20x128xbf16> to vector<20x16x128xbf16>
    %93 = arith.maximumf %91, %92 : vector<20x16x128xbf16>
    %94 = vector.extract_strided_slice %93 {offsets = [0, 0, 0], sizes = [16, 16, 128], strides = [1, 1, 1]} : vector<20x16x128xbf16> to vector<16x16x128xbf16>
    %95 = vector.extract_strided_slice %93 {offsets = [1, 0, 0], sizes = [16, 16, 128], strides = [1, 1, 1]} : vector<20x16x128xbf16> to vector<16x16x128xbf16>
    %96 = arith.maximumf %94, %95 : vector<16x16x128xbf16>
    %97 = vector.extract_strided_slice %93 {offsets = [2, 0, 0], sizes = [16, 16, 128], strides = [1, 1, 1]} : vector<20x16x128xbf16> to vector<16x16x128xbf16>
    %98 = arith.maximumf %96, %97 : vector<16x16x128xbf16>
    %99 = vector.extract_strided_slice %93 {offsets = [3, 0, 0], sizes = [16, 16, 128], strides = [1, 1, 1]} : vector<20x16x128xbf16> to vector<16x16x128xbf16>
    %100 = arith.maximumf %98, %99 : vector<16x16x128xbf16>
    %101 = vector.extract_strided_slice %93 {offsets = [4, 0, 0], sizes = [16, 16, 128], strides = [1, 1, 1]} : vector<20x16x128xbf16> to vector<16x16x128xbf16>
    %102 = arith.maximumf %100, %101 : vector<16x16x128xbf16>
    %c0_58 = arith.constant 0 : index
    %c0_59 = arith.constant 0 : index
    %103 = vector.load %arg10[%c0_58, %c0_59] : memref<256x128xf32, #tpu.memory_space<vmem>>, vector<256x128xf32>
    %104 = vector.shape_cast %102 : vector<16x16x128xbf16> to vector<256x128xbf16>
    %c3 = arith.constant 3 : index
    %c0_60 = arith.constant 0 : index
    %c0_61 = arith.constant 0 : index
    %105 = vector.load %arg5[%c3, %c0_60, %c0_61] : memref<4x128x128xbf16, #tpu.memory_space<vmem>>, vector<1x128x128xbf16>
    %106 = vector.shape_cast %105 : vector<1x128x128xbf16> to vector<128x128xbf16>
    %cst_62 = arith.constant dense<0.000000e+00> : vector<256x128xf32>
    %107 = tpu.matmul %104, %106, %cst_62 {dimension_numbers = #tpu.dot_dimension_numbers<[1], [0], [0], [1], [0, 0, 1, 1], [], []>} : vector<256x128xbf16>, vector<128x128xbf16>, vector<256x128xf32> -> vector<256x128xf32>
    %108 = arith.addf %103, %107 : vector<256x128xf32>
    %c0_63 = arith.constant 0 : index
    %c0_64 = arith.constant 0 : index
    %109 = vector.load %arg10[%c0_63, %c0_64] : memref<256x128xf32, #tpu.memory_space<vmem>>, vector<256x128xf32>
    tpu.vector_store %arg10[%c0_63, %c0_64], %108 {strides = array<i32>} : memref<256x128xf32, #tpu.memory_space<vmem>>, vector<256x128xf32>,
    %c0_65 = arith.constant 0 : index
    %c0_66 = arith.constant 0 : index
    %110 = vector.load %arg10[%c0_65, %c0_66] : memref<256x128xf32, #tpu.memory_space<vmem>>, vector<256x128xf32>
    %c0_67 = arith.constant 0 : index
    %c0_68 = arith.constant 0 : index
    %111 = vector.load %arg6[%c0_67, %c0_68] : memref<1x128xf32, #tpu.memory_space<vmem>>, vector<1x128xf32>
    %112 = vector.broadcast %111 : vector<1x128xf32> to vector<256x128xf32>
    %113 = arith.mulf %110, %112 : vector<256x128xf32>
    %c0_69 = arith.constant 0 : index
    %c0_70 = arith.constant 0 : index
    %114 = vector.load %arg7[%c0_69, %c0_70] : memref<1x128xf32, #tpu.memory_space<vmem>>, vector<1x128xf32>
    %115 = vector.broadcast %114 : vector<1x128xf32> to vector<256x128xf32>
    %116 = arith.addf %113, %115 : vector<256x128xf32>
    %cst_71 = arith.constant 0.000000e+00 : f32
    %117 = vector.broadcast %cst_71 : f32 to vector<256x128xf32>
    %118 = arith.subf %117, %116 : vector<256x128xf32>
    %119 = math.exp %118 : vector<256x128xf32>
    %cst_72 = arith.constant 1.000000e+00 : f32
    %120 = vector.broadcast %cst_72 : f32 to vector<256x128xf32>
    %121 = arith.addf %120, %119 : vector<256x128xf32>
    %122 = tpu.reciprocal %121 {approx = true} : vector<256x128xf32> -> vector<256x128xf32>
    %123 = arith.mulf %116, %122 : vector<256x128xf32>
    %124 = arith.truncf %123 : vector<256x128xf32> to vector<256x128xbf16>
    %c0_73 = arith.constant 0 : index
    %c0_74 = arith.constant 0 : index
    %c0_75 = arith.constant 0 : index
    %125 = vector.load %arg8[%c0_73, %c0_74, %c0_75] : memref<1x256x128xbf16, #tpu.memory_space<vmem>>, vector<1x256x128xbf16>
    %126 = vector.shape_cast %125 : vector<1x256x128xbf16> to vector<256x128xbf16>
    %127 = vector.shape_cast %124 : vector<256x128xbf16> to vector<1x256x128xbf16>
    tpu.vector_store %arg8[%c0_73, %c0_74, %c0_75], %127 {strides = array<i32>} : memref<1x256x128xbf16, #tpu.memory_space<vmem>>, vector<1x256x128xbf16>,
    return
  }
  func.func @transform_0(%arg0: i32) -> (i32, i32, i32) {
    %c0_i32 = arith.constant 0 : i32
    %c0_i32_0 = arith.constant 0 : i32
    %c0_i32_1 = arith.constant 0 : i32
    return %arg0, %c0_i32, %c0_i32_0 : i32, i32, i32
  }
  func.func @transform_1(%arg0: i32) -> (i32, i32) {
    %c0_i32 = arith.constant 0 : i32
    %c0_i32_0 = arith.constant 0 : i32
    %c0_i32_1 = arith.constant 0 : i32
    return %c0_i32, %c0_i32_0 : i32, i32
  }
  func.func @transform_2(%arg0: i32) -> (i32, i32) {
    %c0_i32 = arith.constant 0 : i32
    %c0_i32_0 = arith.constant 0 : i32
    %c0_i32_1 = arith.constant 0 : i32
    return %c0_i32, %c0_i32_0 : i32, i32
  }
  func.func @transform_3(%arg0: i32) -> (i32, i32) {
    %c0_i32 = arith.constant 0 : i32
    %c0_i32_0 = arith.constant 0 : i32
    %c0_i32_1 = arith.constant 0 : i32
    return %c0_i32, %c0_i32_0 : i32, i32
  }
  func.func @transform_4(%arg0: i32) -> (i32, i32, i32) {
    %c0_i32 = arith.constant 0 : i32
    %c0_i32_0 = arith.constant 0 : i32
    %c0_i32_1 = arith.constant 0 : i32
    %c0_i32_2 = arith.constant 0 : i32
    return %c0_i32, %c0_i32_0, %c0_i32_1 : i32, i32, i32
  }
  func.func @transform_5(%arg0: i32) -> (i32, i32) {
    %c0_i32 = arith.constant 0 : i32
    %c0_i32_0 = arith.constant 0 : i32
    %c0_i32_1 = arith.constant 0 : i32
    return %c0_i32, %c0_i32_0 : i32, i32
  }
  func.func @transform_6(%arg0: i32) -> (i32, i32) {
    %c0_i32 = arith.constant 0 : i32
    %c0_i32_0 = arith.constant 0 : i32
    %c0_i32_1 = arith.constant 0 : i32
    return %c0_i32, %c0_i32_0 : i32, i32
  }
  func.func @transform_7(%arg0: i32) -> (i32, i32, i32) {
    %c0_i32 = arith.constant 0 : i32
    %c0_i32_0 = arith.constant 0 : i32
    %c0_i32_1 = arith.constant 0 : i32
    return %arg0, %c0_i32, %c0_i32_0 : i32, i32, i32
  }
}

</mosaic_0001>

<llo_original>
// kernel: sppf_forward_nhwc.1
$region0: #{sppf_forward_nhwc.1}
  #allocation0 [shape = 'u32[]', space=smem, size = 0x4, offset = 0x4, fixed_abs, tag = 'smem constant byte address 0x4 - core index']
  #allocation1 [shape = 'u32[144,128]{1,0:T(1,128)}', space=vmem, size = 0x12000, scoped, tag = 'internal scratch']
  #allocation2 [shape = 'bf16[20,34,128]{2,1,0:T(8,128)(2,1)}', space=vmem, size = 0x32000, scoped, tag = 'scratch operand']
  #allocation3 [shape = 'f32[256,128]{1,0:T(8,128)}', space=vmem, size = 0x20000, scoped, tag = 'scratch operand']
  %s0 = inlined_call_operand.vmem [shape: bf16[2,256,4], index: 0, kind: input, shape index: {}]
  %s1 = inlined_call_operand.vmem [shape: bf16[4,128], index: 1, kind: input, shape index: {}]
  %s2 = inlined_call_operand.vmem [shape: f32[1,128], index: 2, kind: input, shape index: {}]
  %s3 = inlined_call_operand.vmem [shape: f32[1,128], index: 3, kind: input, shape index: {}]
  %s4 = inlined_call_operand.vmem [shape: bf16[4,128,128], index: 4, kind: input, shape index: {}]
  %s5 = inlined_call_operand.vmem [shape: f32[1,128], index: 5, kind: input, shape index: {}]
  %s6 = inlined_call_operand.vmem [shape: f32[1,128], index: 6, kind: input, shape index: {}]
  %s7 = inlined_call_operand.vmem [shape: bf16[2,256,128], index: 7, kind: output, shape index: {}]
  %s8 = sld [smem:[#allocation0]]
  $region61: #{sppf_forward_nhwc.1} parent=0
    _
  %s10 = ssub.s32 1, %s8
  %s11 = scalar_select 0, %s10, %s8
  loop: start=0, step=1, limit=4
  $region2: #{sppf_forward_nhwc.1} parent=0 // loop_pre_header
    _
  $region3: #{sppf_forward_nhwc.1} parent=0 // loop_header
    %s13 = sphi 0, %s17
    %p14 = scmp.ge.s32.totalorder %s13, 4
    %s23 = sphi 0, %s25
    %s26 = sphi 0, %s23
    %s27 = sphi 0, %s26
    %s43 = sphi 0, %s27
    %s47 = sphi 0, %s47
    %s49 = sphi 0, %s47
    %s50 = sphi 0, %s49
    %s64 = sphi 0, %s50
    %s68 = sphi 0, %s68
    %s70 = sphi 0, %s68
    %s71 = sphi 0, %s70
    %s85 = sphi 0, %s71
    %s89 = sphi 0, %s89
    %s91 = sphi 0, %s89
    %s92 = sphi 0, %s91
    %s106 = sphi 0, %s92
    %s110 = sphi 0, %s110
    %s112 = sphi 0, %s110
    %s113 = sphi 0, %s112
    %s127 = sphi 0, %s113
    %s131 = sphi 0, %s131
    %s133 = sphi 0, %s131
    %s134 = sphi 0, %s133
    %s148 = sphi 0, %s134
    %s152 = sphi 0, %s152
    %s154 = sphi 0, %s152
    %s155 = sphi 0, %s154
    %s169 = sphi 0, %s155
    %s175 = sphi 0, %s177
    %s178 = sphi 0, %s175
    %s179 = sphi 0, %s178
    %s195 = sphi 0, %s179
  $region4: #{sppf_forward_nhwc.1} parent=0 // loop_header_branch
    %16 = sbr.rel (%p14) target = $region8
  $region5: #{sppf_forward_nhwc.1} parent=0 // loop_body
    %s18 = ssub.s32 %s13, 1
    %s19 = ssub.s32 %s13, 2
    %s20 = sadd.s32 %s13, 1
    %s21 = ssub.s32 %s13, %s20
    %p22 = scmp.eq.s32.totalorder %s21, 0
    %s24 = sadd.s32 %s23, 1
    %s25 = scalar_select %p22, %s23, %s24
    %p28 = pneg %p22
    %p29 = scmp.eq.s32.totalorder %s13, 1
    %p30 = por %p28, %p29
    %p31 = scmp.ne.s32.totalorder %s23, %s26
    %p32 = scmp.eq.s32.totalorder %s13, 0
    %p33 = por %p31, %p32
    %p34 = scmp.ne.s32.totalorder %s23, %s26
    %p35 = scmp.eq.s32.totalorder %s18, 1
    %p36 = por %p34, %p35
    %p37 = scmp.ne.s32.totalorder %s26, %s27
    %p38 = scmp.eq.s32.totalorder %s18, 0
    %p39 = por %p37, %p38
    %p40 = scmp.ne.s32.totalorder %s26, %s27
    %p41 = scmp.eq.s32.totalorder %s19, 1
    %p42 = por %p40, %p41
    %p44 = scmp.ne.s32.totalorder %s27, %s43
    %p45 = scmp.eq.s32.totalorder %s19, 0
    %p46 = por %p44, %p45
    %s48 = sadd.s32 %s47, 1
    %p51 = scmp.eq.s32.totalorder %s13, 1
    %p52 = scmp.ne.s32.totalorder %s47, %s49
    %p53 = scmp.eq.s32.totalorder %s13, 0
    %p54 = por %p52, %p53
    %p55 = scmp.ne.s32.totalorder %s47, %s49
    %p56 = scmp.eq.s32.totalorder %s18, 1
    %p57 = por %p55, %p56
    %p58 = scmp.ne.s32.totalorder %s49, %s50
    %p59 = scmp.eq.s32.totalorder %s18, 0
    %p60 = por %p58, %p59
    %p61 = scmp.ne.s32.totalorder %s49, %s50
    %p62 = scmp.eq.s32.totalorder %s19, 1
    %p63 = por %p61, %p62
    %p65 = scmp.ne.s32.totalorder %s50, %s64
    %p66 = scmp.eq.s32.totalorder %s19, 0
    %p67 = por %p65, %p66
    %s69 = sadd.s32 %s68, 1
    %p72 = scmp.eq.s32.totalorder %s13, 1
    %p73 = scmp.ne.s32.totalorder %s68, %s70
    %p74 = scmp.eq.s32.totalorder %s13, 0
    %p75 = por %p73, %p74
    %p76 = scmp.ne.s32.totalorder %s68, %s70
    %p77 = scmp.eq.s32.totalorder %s18, 1
    %p78 = por %p76, %p77
    %p79 = scmp.ne.s32.totalorder %s70, %s71
    %p80 = scmp.eq.s32.totalorder %s18, 0
    %p81 = por %p79, %p80
    %p82 = scmp.ne.s32.totalorder %s70, %s71
    %p83 = scmp.eq.s32.totalorder %s19, 1
    %p84 = por %p82, %p83
    %p86 = scmp.ne.s32.totalorder %s71, %s85
    %p87 = scmp.eq.s32.totalorder %s19, 0
    %p88 = por %p86, %p87
    %s90 = sadd.s32 %s89, 1
    %p93 = scmp.eq.s32.totalorder %s13, 1
    %p94 = scmp.ne.s32.totalorder %s89, %s91
    %p95 = scmp.eq.s32.totalorder %s13, 0
    %p96 = por %p94, %p95
    %p97 = scmp.ne.s32.totalorder %s89, %s91
    %p98 = scmp.eq.s32.totalorder %s18, 1
    %p99 = por %p97, %p98
    %p100 = scmp.ne.s32.totalorder %s91, %s92
    %p101 = scmp.eq.s32.totalorder %s18, 0
    %p102 = por %p100, %p101
    %p103 = scmp.ne.s32.totalorder %s91, %s92
    %p104 = scmp.eq.s32.totalorder %s19, 1
    %p105 = por %p103, %p104
    %p107 = scmp.ne.s32.totalorder %s92, %s106
    %p108 = scmp.eq.s32.totalorder %s19, 0
    %p109 = por %p107, %p108
    %s111 = sadd.s32 %s110, 1
    %p114 = scmp.eq.s32.totalorder %s13, 1
    %p115 = scmp.ne.s32.totalorder %s110, %s112
    %p116 = scmp.eq.s32.totalorder %s13, 0
    %p117 = por %p115, %p116
    %p118 = scmp.ne.s32.totalorder %s110, %s112
    %p119 = scmp.eq.s32.totalorder %s18, 1
    %p120 = por %p118, %p119
    %p121 = scmp.ne.s32.totalorder %s112, %s113
    %p122 = scmp.eq.s32.totalorder %s18, 0
    %p123 = por %p121, %p122
    %p124 = scmp.ne.s32.totalorder %s112, %s113
    %p125 = scmp.eq.s32.totalorder %s19, 1
    %p126 = por %p124, %p125
    %p128 = scmp.ne.s32.totalorder %s113, %s127
    %p129 = scmp.eq.s32.totalorder %s19, 0
    %p130 = por %p128, %p129
    %s132 = sadd.s32 %s131, 1
    %p135 = scmp.eq.s32.totalorder %s13, 1
    %p136 = scmp.ne.s32.totalorder %s131, %s133
    %p137 = scmp.eq.s32.totalorder %s13, 0
    %p138 = por %p136, %p137
    %p139 = scmp.ne.s32.totalorder %s131, %s133
    %p140 = scmp.eq.s32.totalorder %s18, 1
    %p141 = por %p139, %p140
    %p142 = scmp.ne.s32.totalorder %s133, %s134
    %p143 = scmp.eq.s32.totalorder %s18, 0
    %p144 = por %p142, %p143
    %p145 = scmp.ne.s32.totalorder %s133, %s134
    %p146 = scmp.eq.s32.totalorder %s19, 1
    %p147 = por %p145, %p146
    %p149 = scmp.ne.s32.totalorder %s134, %s148
    %p150 = scmp.eq.s32.totalorder %s19, 0
    %p151 = por %p149, %p150
    %s153 = sadd.s32 %s152, 1
    %p156 = scmp.eq.s32.totalorder %s13, 1
    %p157 = scmp.ne.s32.totalorder %s152, %s154
    %p158 = scmp.eq.s32.totalorder %s13, 0
    %p159 = por %p157, %p158
    %p160 = scmp.ne.s32.totalorder %s152, %s154
    %p161 = scmp.eq.s32.totalorder %s18, 1
    %p162 = por %p160, %p161
    %p163 = scmp.ne.s32.totalorder %s154, %s155
    %p164 = scmp.eq.s32.totalorder %s18, 0
    %p165 = por %p163, %p164
    %p166 = scmp.ne.s32.totalorder %s154, %s155
    %p167 = scmp.eq.s32.totalorder %s19, 1
    %p168 = por %p166, %p167
    %p170 = scmp.ne.s32.totalorder %s155, %s169
    %p171 = scmp.eq.s32.totalorder %s19, 0
    %p172 = por %p170, %p171
    %s173 = ssub.s32 %s13, %s20
    %p174 = scmp.eq.s32.totalorder %s173, 0
    %s176 = sadd.s32 %s175, 1
    %s177 = scalar_select %p174, %s175, %s176
    %p180 = pneg %p174
    %p181 = scmp.eq.s32.totalorder %s13, 1
    %p182 = por %p180, %p181
    %p183 = scmp.ne.s32.totalorder %s175, %s178
    %p184 = scmp.eq.s32.totalorder %s13, 0
    %p185 = por %p183, %p184
    %p186 = scmp.ne.s32.totalorder %s175, %s178
    %p187 = scmp.eq.s32.totalorder %s18, 1
    %p188 = por %p186, %p187
    %p189 = scmp.ne.s32.totalorder %s178, %s179
    %p190 = scmp.eq.s32.totalorder %s18, 0
    %p191 = por %p189, %p190
    %p192 = scmp.ne.s32.totalorder %s178, %s179
    %p193 = scmp.eq.s32.totalorder %s19, 1
    %p194 = por %p192, %p193
    %p196 = scmp.ne.s32.totalorder %s179, %s195
    %p197 = scmp.eq.s32.totalorder %s19, 0
    %p198 = por %p196, %p197
    %p199 = scmp.le.s32.totalorder 1, %s13
    %p200 = scmp.lt.s32.totalorder %s13, 3
    %p201 = pnand %p199, %p200
    %p202 = pneg %p201
    // Predicated region
    $region9: #{sppf_forward_nhwc.1} parent=5 // pred_check
      _
    $region10: #{sppf_forward_nhwc.1} parent=5 // pred_check_branch
      %204 = sbr.rel (%p201) target = $region12
    $region11: #{sppf_forward_nhwc.1} parent=5 // pred_region
      %s205 = ssub.s32 %s13, 1
      // Predicated region
      $region13: #{sppf_forward_nhwc.1} parent=11 // pred_check
        %p206 = pneg %p60
      $region14: #{sppf_forward_nhwc.1} parent=11 // pred_check_branch
        %208 = sbr.rel (%p206) target = $region16
      $region15: #{sppf_forward_nhwc.1} parent=11 // pred_region
        _
      $region16: #{sppf_forward_nhwc.1} parent=11 // pred_fallthru
        _
      // Predicated region
      $region17: #{sppf_forward_nhwc.1} parent=11 // pred_check
        %p209 = pneg %p81
      $region18: #{sppf_forward_nhwc.1} parent=11 // pred_check_branch
        %211 = sbr.rel (%p209) target = $region20
      $region19: #{sppf_forward_nhwc.1} parent=11 // pred_region
        _
      $region20: #{sppf_forward_nhwc.1} parent=11 // pred_fallthru
        _
      // Predicated region
      $region21: #{sppf_forward_nhwc.1} parent=11 // pred_check
        %p212 = pneg %p102
      $region22: #{sppf_forward_nhwc.1} parent=11 // pred_check_branch
        %214 = sbr.rel (%p212) target = $region24
      $region23: #{sppf_forward_nhwc.1} parent=11 // pred_region
        _
      $region24: #{sppf_forward_nhwc.1} parent=11 // pred_fallthru
        _
      // Predicated region
      $region25: #{sppf_forward_nhwc.1} parent=11 // pred_check
        %p215 = pneg %p123
      $region26: #{sppf_forward_nhwc.1} parent=11 // pred_check_branch
        %217 = sbr.rel (%p215) target = $region28
      $region27: #{sppf_forward_nhwc.1} parent=11 // pred_region
        _
      $region28: #{sppf_forward_nhwc.1} parent=11 // pred_fallthru
        _
      // Predicated region
      $region29: #{sppf_forward_nhwc.1} parent=11 // pred_check
        %p218 = pneg %p144
      $region30: #{sppf_forward_nhwc.1} parent=11 // pred_check_branch
        %220 = sbr.rel (%p218) target = $region32
      $region31: #{sppf_forward_nhwc.1} parent=11 // pred_region
        _
      $region32: #{sppf_forward_nhwc.1} parent=11 // pred_fallthru
        _
      // Predicated region
      $region33: #{sppf_forward_nhwc.1} parent=11 // pred_check
        %p221 = pneg %p165
      $region34: #{sppf_forward_nhwc.1} parent=11 // pred_check_branch
        %223 = sbr.rel (%p221) target = $region36
      $region35: #{sppf_forward_nhwc.1} parent=11 // pred_region
        _
      $region36: #{sppf_forward_nhwc.1} parent=11 // pred_fallthru
        _
    $region12: #{sppf_forward_nhwc.1} parent=5 // pred_fallthru
      _
    %p224 = scmp.lt.s32.totalorder %s13, 2
    // Predicated region
    $region37: #{sppf_forward_nhwc.1} parent=5 // pred_check
      %p225 = pneg %p224
    $region38: #{sppf_forward_nhwc.1} parent=5 // pred_check_branch
      %227 = sbr.rel (%p225) target = $region40
    $region39: #{sppf_forward_nhwc.1} parent=5 // pred_region
      // Predicated region
      $region41: #{sppf_forward_nhwc.1} parent=39 // pred_check
        %p228 = pneg %p33
      $region42: #{sppf_forward_nhwc.1} parent=39 // pred_check_branch
        %230 = sbr.rel (%p228) target = $region44
      $region43: #{sppf_forward_nhwc.1} parent=39 // pred_region
        %p231 = scmp.lt.s32.totalorder %s13, 1
        %s232 = scalar_select %p231, %s13, 1
        %s233 = smul.addr %s232, 32
        %s234 = smul.addr %s233, 4
        %s235 = scalar_lea.vmem %s0, %s234
      $region44: #{sppf_forward_nhwc.1} parent=39 // pred_fallthru
        _
    $region40: #{sppf_forward_nhwc.1} parent=5 // pred_fallthru
      _
    %p236 = scmp.le.s32.totalorder 1, %s13
    %p237 = scmp.lt.s32.totalorder %s13, 3
    %p238 = pnand %p236, %p237
    %p239 = pneg %p238
    // Predicated region
    $region45: #{sppf_forward_nhwc.1} parent=5 // pred_check
      _
    $region46: #{sppf_forward_nhwc.1} parent=5 // pred_check_branch
      %241 = sbr.rel (%p238) target = $region48
    $region47: #{sppf_forward_nhwc.1} parent=5 // pred_region
      %s242 = ssub.s32 %s13, 1
      %p243 = scmp.lt.s32.totalorder %s18, 1
      %s244 = scalar_select %p243, %s18, 1
      %s245 = smul.addr %s244, 32
      %s246 = smul.addr %s245, 4
      %s247 = scalar_lea.vmem %s0, %s246
      %p248 = pneg %p39
      %p249 = pneg %p36
      %p250 = pneg %p60
      %p251 = pneg %p57
      %p252 = pneg %p81
      %p253 = pneg %p78
      %p254 = pneg %p102
      %p255 = pneg %p99
      %p256 = pneg %p123
      %p257 = pneg %p120
      %p258 = pneg %p144
      %p259 = pneg %p141
      %p260 = pneg %p165
      %p261 = pneg %p162
      %p262 = pneg %p191
      %p263 = pneg %p188
      %p264 = scmp.lt.s32.totalorder %s18, 1
      %s265 = scalar_select %p264, %s18, 1
      %s266 = smul.addr %s265, 32
      %s267 = smul.addr %s266, 4
      %s268 = scalar_lea.vmem %s7, %s267
      %p269 = scmp.lt.s32.totalorder %s18, 1
      %s270 = scalar_select %p269, %s18, 1
      %s271 = smul.addr %s270, 32
      %s272 = smul.addr %s271, 4
      %s273 = scalar_lea.vmem %s0, %s272
      %p274 = scmp.lt.s32.totalorder %s18, 1
      %s275 = scalar_select %p274, %s18, 1
      %s276 = smul.addr %s275, 32
      %s277 = smul.addr %s276, 4
      %s278 = scalar_lea.vmem %s7, %s277
      %v281 = vld [vmem:[%s273] sm:$0xf]
      %v282 = vld [vmem:[%s273 + $0x4] sm:$0xf]
      %v283 = vld [vmem:[%s273 + $0x8] sm:$0xf]
      %v284 = vld [vmem:[%s273 + $0xc] sm:$0xf]
      %v285 = vld [vmem:[%s273 + $0x10] sm:$0xf]
      %v286 = vld [vmem:[%s273 + $0x14] sm:$0xf]
      %v287 = vld [vmem:[%s273 + $0x18] sm:$0xf]
      %v288 = vld [vmem:[%s273 + $0x1c] sm:$0xf]
      %v289 = vld [vmem:[%s273 + $0x20] sm:$0xf]
      %v290 = vld [vmem:[%s273 + $0x24] sm:$0xf]
      %v291 = vld [vmem:[%s273 + $0x28] sm:$0xf]
      %v292 = vld [vmem:[%s273 + $0x2c] sm:$0xf]
      %v293 = vld [vmem:[%s273 + $0x30] sm:$0xf]
      %v294 = vld [vmem:[%s273 + $0x34] sm:$0xf]
      %v295 = vld [vmem:[%s273 + $0x38] sm:$0xf]
      %v296 = vld [vmem:[%s273 + $0x3c] sm:$0xf]
      %v297 = vld [vmem:[%s273 + $0x40] sm:$0xf]
      %v298 = vld [vmem:[%s273 + $0x44] sm:$0xf]
      %v299 = vld [vmem:[%s273 + $0x48] sm:$0xf]
      %v300 = vld [vmem:[%s273 + $0x4c] sm:$0xf]
      %v301 = vld [vmem:[%s273 + $0x50] sm:$0xf]
      %v302 = vld [vmem:[%s273 + $0x54] sm:$0xf]
      %v303 = vld [vmem:[%s273 + $0x58] sm:$0xf]
      %v304 = vld [vmem:[%s273 + $0x5c] sm:$0xf]
      %v305 = vld [vmem:[%s273 + $0x60] sm:$0xf]
      %v306 = vld [vmem:[%s273 + $0x64] sm:$0xf]
      %v307 = vld [vmem:[%s273 + $0x68] sm:$0xf]
      %v308 = vld [vmem:[%s273 + $0x6c] sm:$0xf]
      %v309 = vld [vmem:[%s273 + $0x70] sm:$0xf]
      %v310 = vld [vmem:[%s273 + $0x74] sm:$0xf]
      %v311 = vld [vmem:[%s273 + $0x78] sm:$0xf]
      %v312 = vld [vmem:[%s273 + $0x7c] sm:$0xf]
      %v313 = vld [vmem:[%s1] sm:$0x3]
      %v346 = vunpack.c.l.b16 %v281
      %v347 = vunpack.c.l.b16 %v282
      %v348 = vunpack.c.l.b16 %v283
      %v349 = vunpack.c.l.b16 %v284
      %v350 = vunpack.c.l.b16 %v285
      %v351 = vunpack.c.l.b16 %v286
      %v352 = vunpack.c.l.b16 %v287
      %v353 = vunpack.c.l.b16 %v288
      %v354 = vunpack.c.l.b16 %v289
      %v355 = vunpack.c.l.b16 %v290
      %v356 = vunpack.c.l.b16 %v291
      %v357 = vunpack.c.l.b16 %v292
      %v358 = vunpack.c.l.b16 %v293
      %v359 = vunpack.c.l.b16 %v294
      %v360 = vunpack.c.l.b16 %v295
      %v361 = vunpack.c.l.b16 %v296
      %v362 = vunpack.c.l.b16 %v297
      %v363 = vunpack.c.l.b16 %v298
      %v364 = vunpack.c.l.b16 %v299
      %v365 = vunpack.c.l.b16 %v300
      %v366 = vunpack.c.l.b16 %v301
      %v367 = vunpack.c.l.b16 %v302
      %v368 = vunpack.c.l.b16 %v303
      %v369 = vunpack.c.l.b16 %v304
      %v370 = vunpack.c.l.b16 %v305
      %v371 = vunpack.c.l.b16 %v306
      %v372 = vunpack.c.l.b16 %v307
      %v373 = vunpack.c.l.b16 %v308
      %v374 = vunpack.c.l.b16 %v309
      %v375 = vunpack.c.l.b16 %v310
      %v376 = vunpack.c.l.b16 %v311
      %v377 = vunpack.c.l.b16 %v312
      %v378 = vpack.c.b16 %v347, %v346
      %v379 = vpack.c.b16 %v349, %v348
      %v380 = vpack.c.b16 %v351, %v350
      %v381 = vpack.c.b16 %v353, %v352
      %v382 = vpack.c.b16 %v355, %v354
      %v383 = vpack.c.b16 %v357, %v356
      %v384 = vpack.c.b16 %v359, %v358
      %v385 = vpack.c.b16 %v361, %v360
      %v386 = vpack.c.b16 %v363, %v362
      %v387 = vpack.c.b16 %v365, %v364
      %v388 = vpack.c.b16 %v367, %v366
      %v389 = vpack.c.b16 %v369, %v368
      %v390 = vpack.c.b16 %v371, %v370
      %v391 = vpack.c.b16 %v373, %v372
      %v392 = vpack.c.b16 %v375, %v374
      %v393 = vpack.c.b16 %v377, %v376
      %vm394 = vcmask 31744
      %v396 = vsel %vm394, %v378, 0
      %v399 = vsel %vm394, %v379, 0
      %v402 = vsel %vm394, %v380, 0
      %v405 = vsel %vm394, %v381, 0
      %v408 = vsel %vm394, %v382, 0
      %v411 = vsel %vm394, %v383, 0
      %v414 = vsel %vm394, %v384, 0
      %v417 = vsel %vm394, %v385, 0
      %v420 = vsel %vm394, %v386, 0
      %v423 = vsel %vm394, %v387, 0
      %v426 = vsel %vm394, %v388, 0
      %v429 = vsel %vm394, %v389, 0
      %v432 = vsel %vm394, %v390, 0
      %v435 = vsel %vm394, %v391, 0
      %v438 = vsel %vm394, %v392, 0
      %v441 = vsel %vm394, %v393, 0
      %vm443 = vcmask 1041408
      %v445 = vsel %vm443, %v313, 0
      %447 = vmatprep.subr.bf16.mxu0 0
      %448 = vmatpush1.bf16.msra.mxu0 %v445
      %449 = vmatprep.subr.bf16.mxu0 0
      %450 = vmatpush1.bf16.msra.mxu0 0
      %451 = vmatprep.subr.bf16.mxu0 0
      %452 = vmatpush1.bf16.msra.mxu0 0
      %453 = vmatprep.subr.bf16.mxu0 0
      %454 = vmatpush1.bf16.msra.mxu0 0
      %455 = vmatprep.subr.bf16.mxu0 0
      %456 = vmatpush1.bf16.msra.mxu0 0
      %457 = vmatprep.subr.bf16.mxu0 0
      %458 = vmatpush1.bf16.msra.mxu0 0
      %459 = vmatprep.subr.bf16.mxu0 0
      %460 = vmatpush1.bf16.msra.mxu0 0
      %461 = vmatprep.subr.bf16.mxu0 0
      %462 = vmatpush1.bf16.msra.mxu0 0
      %463 = vmatprep.subr.bf16.mxu0 0
      %464 = vmatpush1.bf16.msra.mxu0 0
      %465 = vmatprep.subr.bf16.mxu0 0
      %466 = vmatpush1.bf16.msra.mxu0 0
      %467 = vmatprep.subr.bf16.mxu0 0
      %468 = vmatpush1.bf16.msra.mxu0 0
      %469 = vmatprep.subr.bf16.mxu0 0
      %470 = vmatpush1.bf16.msra.mxu0 0
      %471 = vmatprep.subr.bf16.mxu0 0
      %472 = vmatpush1.bf16.msra.mxu0 0
      %473 = vmatprep.subr.bf16.mxu0 0
      %474 = vmatpush1.bf16.msra.mxu0 0
      %475 = vmatprep.subr.bf16.mxu0 0
      %476 = vmatpush1.bf16.msra.mxu0 0
      %477 = vmatprep.subr.bf16.mxu0 0
      %478 = vmatpush1.bf16.msra.mxu0 0
      %479 = vmatprep.mubr.bf16.mxu0 0
      %480 = vmatmul.mubr.bf16.gmra.mrb[0].mxu0 %v396
      %v481 = vpop.f32.mrb[0].mxu0
      %v482 = vadd.f32 0.0, %v481
      %v483 = vpop.f32.mrb[0].mxu0
      %v484 = vpop.f32.mrb[0].mxu0
      %v485 = vadd.f32 0.0, %v484
      %v486 = vpop.f32.mrb[0].mxu0
      %487 = vmatprep.mubr.bf16.mxu0 0
      %488 = vmatmul.mubr.bf16.gmra.mrb[0].mxu0 %v399
      %v489 = vpop.f32.mrb[0].mxu0
      %v490 = vadd.f32 0.0, %v489
      %v491 = vpop.f32.mrb[0].mxu0
      %v492 = vpop.f32.mrb[0].mxu0
      %v493 = vadd.f32 0.0, %v492
      %v494 = vpop.f32.mrb[0].mxu0
      %495 = vmatprep.mubr.bf16.mxu0 0
      %496 = vmatmul.mubr.bf16.gmra.mrb[0].mxu0 %v402
      %v497 = vpop.f32.mrb[0].mxu0
      %v498 = vadd.f32 0.0, %v497
      %v499 = vpop.f32.mrb[0].mxu0
      %v500 = vpop.f32.mrb[0].mxu0
      %v501 = vadd.f32 0.0, %v500
      %v502 = vpop.f32.mrb[0].mxu0
      %503 = vmatprep.mubr.bf16.mxu0 0
      %504 = vmatmul.mubr.bf16.gmra.mrb[0].mxu0 %v405
      %v505 = vpop.f32.mrb[0].mxu0
      %v506 = vadd.f32 0.0, %v505
      %v507 = vpop.f32.mrb[0].mxu0
      %v508 = vpop.f32.mrb[0].mxu0
      %v509 = vadd.f32 0.0, %v508
      %v510 = vpop.f32.mrb[0].mxu0
      %511 = vmatprep.mubr.bf16.mxu0 0
      %512 = vmatmul.mubr.bf16.gmra.mrb[0].mxu0 %v408
      %v513 = vpop.f32.mrb[0].mxu0
      %v514 = vadd.f32 0.0, %v513
      %v515 = vpop.f32.mrb[0].mxu0
      %v516 = vpop.f32.mrb[0].mxu0
      %v517 = vadd.f32 0.0, %v516
      %v518 = vpop.f32.mrb[0].mxu0
      %519 = vmatprep.mubr.bf16.mxu0 0
      %520 = vmatmul.mubr.bf16.gmra.mrb[0].mxu0 %v411
      %v521 = vpop.f32.mrb[0].mxu0
      %v522 = vadd.f32 0.0, %v521
      %v523 = vpop.f32.mrb[0].mxu0
      %v524 = vpop.f32.mrb[0].mxu0
      %v525 = vadd.f32 0.0, %v524
      %v526 = vpop.f32.mrb[0].mxu0
      %527 = vmatprep.mubr.bf16.mxu0 0
      %528 = vmatmul.mubr.bf16.gmra.mrb[0].mxu0 %v414
      %v529 = vpop.f32.mrb[0].mxu0
      %v530 = vadd.f32 0.0, %v529
      %v531 = vpop.f32.mrb[0].mxu0
      %v532 = vpop.f32.mrb[0].mxu0
      %v533 = vadd.f32 0.0, %v532
      %v534 = vpop.f32.mrb[0].mxu0
      %535 = vmatprep.mubr.bf16.mxu0 0
      %536 = vmatmul.mubr.bf16.gmra.mrb[0].mxu0 %v417
      %v537 = vpop.f32.mrb[0].mxu0
      %v538 = vadd.f32 0.0, %v537
      %v539 = vpop.f32.mrb[0].mxu0
      %v540 = vpop.f32.mrb[0].mxu0
      %v541 = vadd.f32 0.0, %v540
      %v542 = vpop.f32.mrb[0].mxu0
      %543 = vmatprep.mubr.bf16.mxu0 0
      %544 = vmatmul.mubr.bf16.gmra.mrb[0].mxu0 %v420
      %v545 = vpop.f32.mrb[0].mxu0
      %v546 = vadd.f32 0.0, %v545
      %v547 = vpop.f32.mrb[0].mxu0
      %v548 = vpop.f32.mrb[0].mxu0
      %v549 = vadd.f32 0.0, %v548
      %v550 = vpop.f32.mrb[0].mxu0
      %551 = vmatprep.mubr.bf16.mxu0 0
      %552 = vmatmul.mubr.bf16.gmra.mrb[0].mxu0 %v423
      %v553 = vpop.f32.mrb[0].mxu0
      %v554 = vadd.f32 0.0, %v553
      %v555 = vpop.f32.mrb[0].mxu0
      %v556 = vpop.f32.mrb[0].mxu0
      %v557 = vadd.f32 0.0, %v556
      %v558 = vpop.f32.mrb[0].mxu0
      %559 = vmatprep.mubr.bf16.mxu0 0
      %560 = vmatmul.mubr.bf16.gmra.mrb[0].mxu0 %v426
      %v561 = vpop.f32.mrb[0].mxu0
      %v562 = vadd.f32 0.0, %v561
      %v563 = vpop.f32.mrb[0].mxu0
      %v564 = vpop.f32.mrb[0].mxu0
      %v565 = vadd.f32 0.0, %v564
      %v566 = vpop.f32.mrb[0].mxu0
      %567 = vmatprep.mubr.bf16.mxu0 0
      %568 = vmatmul.mubr.bf16.gmra.mrb[0].mxu0 %v429
      %v569 = vpop.f32.mrb[0].mxu0
      %v570 = vadd.f32 0.0, %v569
      %v571 = vpop.f32.mrb[0].mxu0
      %v572 = vpop.f32.mrb[0].mxu0
      %v573 = vadd.f32 0.0, %v572
      %v574 = vpop.f32.mrb[0].mxu0
      %575 = vmatprep.mubr.bf16.mxu0 0
      %576 = vmatmul.mubr.bf16.gmra.mrb[0].mxu0 %v432
      %v577 = vpop.f32.mrb[0].mxu0
      %v578 = vadd.f32 0.0, %v577
      %v579 = vpop.f32.mrb[0].mxu0
      %v580 = vpop.f32.mrb[0].mxu0
      %v581 = vadd.f32 0.0, %v580
      %v582 = vpop.f32.mrb[0].mxu0
      %583 = vmatprep.mubr.bf16.mxu0 0
      %584 = vmatmul.mubr.bf16.gmra.mrb[0].mxu0 %v435
      %v585 = vpop.f32.mrb[0].mxu0
      %v586 = vadd.f32 0.0, %v585
      %v587 = vpop.f32.mrb[0].mxu0
      %v588 = vpop.f32.mrb[0].mxu0
      %v589 = vadd.f32 0.0, %v588
      %v590 = vpop.f32.mrb[0].mxu0
      %591 = vmatprep.mubr.bf16.mxu0 0
      %592 = vmatmul.mubr.bf16.gmra.mrb[0].mxu0 %v438
      %v593 = vpop.f32.mrb[0].mxu0
      %v594 = vadd.f32 0.0, %v593
      %v595 = vpop.f32.mrb[0].mxu0
      %v596 = vpop.f32.mrb[0].mxu0
      %v597 = vadd.f32 0.0, %v596
      %v598 = vpop.f32.mrb[0].mxu0
      %599 = vmatprep.mubr.bf16.mxu0 0
      %600 = vmatmul.mubr.bf16.gmra.mrb[0].mxu0 %v441
      %v601 = vpop.f32.mrb[0].mxu0
      %v602 = vadd.f32 0.0, %v601
      %v603 = vpop.f32.mrb[0].mxu0
      %v604 = vpop.f32.mrb[0].mxu0
      %v605 = vadd.f32 0.0, %v604
      %v606 = vpop.f32.mrb[0].mxu0
      %607 = vdwg.mxu0
      %v608 = vld [vmem:[%s2] sm:$0x1]
      %v610 = vlaneseq
      %v611 = vshrl.u32 %v610, 7
      %v612 = vsub.s32 0, %v611
      %v613 = vrot.slane %v608, %v612
      %v615 = vmul.f32 %v482, %v613
      %v616 = vmul.f32 %v485, %v613
      %v617 = vmul.f32 %v490, %v613
      %v618 = vmul.f32 %v493, %v613
      %v619 = vmul.f32 %v498, %v613
      %v620 = vmul.f32 %v501, %v613
      %v621 = vmul.f32 %v506, %v613
      %v622 = vmul.f32 %v509, %v613
      %v623 = vmul.f32 %v514, %v613
      %v624 = vmul.f32 %v517, %v613
      %v625 = vmul.f32 %v522, %v613
      %v626 = vmul.f32 %v525, %v613
      %v627 = vmul.f32 %v530, %v613
      %v628 = vmul.f32 %v533, %v613
      %v629 = vmul.f32 %v538, %v613
      %v630 = vmul.f32 %v541, %v613
      %v631 = vmul.f32 %v546, %v613
      %v632 = vmul.f32 %v549, %v613
      %v633 = vmul.f32 %v554, %v613
      %v634 = vmul.f32 %v557, %v613
      %v635 = vmul.f32 %v562, %v613
      %v636 = vmul.f32 %v565, %v613
      %v637 = vmul.f32 %v570, %v613
      %v638 = vmul.f32 %v573, %v613
      %v639 = vmul.f32 %v578, %v613
      %v640 = vmul.f32 %v581, %v613
      %v641 = vmul.f32 %v586, %v613
      %v642 = vmul.f32 %v589, %v613
      %v643 = vmul.f32 %v594, %v613
      %v644 = vmul.f32 %v597, %v613
      %v645 = vmul.f32 %v602, %v613
      %v646 = vmul.f32 %v605, %v613
      %v647 = vld [vmem:[%s3] sm:$0x1]
      %v649 = vlaneseq
      %v650 = vshrl.u32 %v649, 7
      %v651 = vsub.s32 0, %v650
      %v652 = vrot.slane %v647, %v651
      %v654 = vadd.f32 %v615, %v652
      %v655 = vadd.f32 %v616, %v652
      %v656 = vadd.f32 %v617, %v652
      %v657 = vadd.f32 %v618, %v652
      %v658 = vadd.f32 %v619, %v652
      %v659 = vadd.f32 %v620, %v652
      %v660 = vadd.f32 %v621, %v652
      %v661 = vadd.f32 %v622, %v652
      %v662 = vadd.f32 %v623, %v652
      %v663 = vadd.f32 %v624, %v652
      %v664 = vadd.f32 %v625, %v652
      %v665 = vadd.f32 %v626, %v652
      %v666 = vadd.f32 %v627, %v652
      %v667 = vadd.f32 %v628, %v652
      %v668 = vadd.f32 %v629, %v652
      %v669 = vadd.f32 %v630, %v652
      %v670 = vadd.f32 %v631, %v652
      %v671 = vadd.f32 %v632, %v652
      %v672 = vadd.f32 %v633, %v652
      %v673 = vadd.f32 %v634, %v652
      %v674 = vadd.f32 %v635, %v652
      %v675 = vadd.f32 %v636, %v652
      %v676 = vadd.f32 %v637, %v652
      %v677 = vadd.f32 %v638, %v652
      %v678 = vadd.f32 %v639, %v652
      %v679 = vadd.f32 %v640, %v652
      %v680 = vadd.f32 %v641, %v652
      %v681 = vadd.f32 %v642, %v652
      %v682 = vadd.f32 %v643, %v652
      %v683 = vadd.f32 %v644, %v652
      %v684 = vadd.f32 %v645, %v652
      %v685 = vadd.f32 %v646, %v652
      %v686 = vsub.f32 0.0, %v654
      %v687 = vsub.f32 0.0, %v655
      %v688 = vsub.f32 0.0, %v656
      %v689 = vsub.f32 0.0, %v657
      %v690 = vsub.f32 0.0, %v658
      %v691 = vsub.f32 0.0, %v659
      %v692 = vsub.f32 0.0, %v660
      %v693 = vsub.f32 0.0, %v661
      %v694 = vsub.f32 0.0, %v662
      %v695 = vsub.f32 0.0, %v663
      %v696 = vsub.f32 0.0, %v664
      %v697 = vsub.f32 0.0, %v665
      %v698 = vsub.f32 0.0, %v666
      %v699 = vsub.f32 0.0, %v667
      %v700 = vsub.f32 0.0, %v668
      %v701 = vsub.f32 0.0, %v669
      %v702 = vsub.f32 0.0, %v670
      %v703 = vsub.f32 0.0, %v671
      %v704 = vsub.f32 0.0, %v672
      %v705 = vsub.f32 0.0, %v673
      %v706 = vsub.f32 0.0, %v674
      %v707 = vsub.f32 0.0, %v675
      %v708 = vsub.f32 0.0, %v676
      %v709 = vsub.f32 0.0, %v677
      %v710 = vsub.f32 0.0, %v678
      %v711 = vsub.f32 0.0, %v679
      %v712 = vsub.f32 0.0, %v680
      %v713 = vsub.f32 0.0, %v681
      %v714 = vsub.f32 0.0, %v682
      %v715 = vsub.f32 0.0, %v683
      %v716 = vsub.f32 0.0, %v684
      %v717 = vsub.f32 0.0, %v685
      %v718 = vmul.f32 %v686, 1.442695
      %v719 = vpow.pop %v718
      %v720 = vmul.f32 %v687, 1.442695
      %v721 = vpow.pop %v720
      %v722 = vmul.f32 %v688, 1.442695
      %v723 = vpow.pop %v722
      %v724 = vmul.f32 %v689, 1.442695
      %v725 = vpow.pop %v724
      %v726 = vmul.f32 %v690, 1.442695
      %v727 = vpow.pop %v726
      %v728 = vmul.f32 %v691, 1.442695
      %v729 = vpow.pop %v728
      %v730 = vmul.f32 %v692, 1.442695
      %v731 = vpow.pop %v730
      %v732 = vmul.f32 %v693, 1.442695
      %v733 = vpow.pop %v732
      %v734 = vmul.f32 %v694, 1.442695
      %v735 = vpow.pop %v734
      %v736 = vmul.f32 %v695, 1.442695
      %v737 = vpow.pop %v736
      %v738 = vmul.f32 %v696, 1.442695
      %v739 = vpow.pop %v738
      %v740 = vmul.f32 %v697, 1.442695
      %v741 = vpow.pop %v740
      %v742 = vmul.f32 %v698, 1.442695
      %v743 = vpow.pop %v742
      %v744 = vmul.f32 %v699, 1.442695
      %v745 = vpow.pop %v744
      %v746 = vmul.f32 %v700, 1.442695
      %v747 = vpow.pop %v746
      %v748 = vmul.f32 %v701, 1.442695
      %v749 = vpow.pop %v748
      %v750 = vmul.f32 %v702, 1.442695
      %v751 = vpow.pop %v750
      %v752 = vmul.f32 %v703, 1.442695
      %v753 = vpow.pop %v752
      %v754 = vmul.f32 %v704, 1.442695
      %v755 = vpow.pop %v754
      %v756 = vmul.f32 %v705, 1.442695
      %v757 = vpow.pop %v756
      %v758 = vmul.f32 %v706, 1.442695
      %v759 = vpow.pop %v758
      %v760 = vmul.f32 %v707, 1.442695
      %v761 = vpow.pop %v760
      %v762 = vmul.f32 %v708, 1.442695
      %v763 = vpow.pop %v762
      %v764 = vmul.f32 %v709, 1.442695
      %v765 = vpow.pop %v764
      %v766 = vmul.f32 %v710, 1.442695
      %v767 = vpow.pop %v766
      %v768 = vmul.f32 %v711, 1.442695
      %v769 = vpow.pop %v768
      %v770 = vmul.f32 %v712, 1.442695
      %v771 = vpow.pop %v770
      %v772 = vmul.f32 %v713, 1.442695
      %v773 = vpow.pop %v772
      %v774 = vmul.f32 %v714, 1.442695
      %v775 = vpow.pop %v774
      %v776 = vmul.f32 %v715, 1.442695
      %v777 = vpow.pop %v776
      %v778 = vmul.f32 %v716, 1.442695
      %v779 = vpow.pop %v778
      %v780 = vmul.f32 %v717, 1.442695
      %v781 = vpow.pop %v780
      %v782 = vadd.f32 %v719, 1.0
      %v783 = vadd.f32 %v721, 1.0
      %v784 = vadd.f32 %v723, 1.0
      %v785 = vadd.f32 %v725, 1.0
      %v786 = vadd.f32 %v727, 1.0
      %v787 = vadd.f32 %v729, 1.0
      %v788 = vadd.f32 %v731, 1.0
      %v789 = vadd.f32 %v733, 1.0
      %v790 = vadd.f32 %v735, 1.0
      %v791 = vadd.f32 %v737, 1.0
      %v792 = vadd.f32 %v739, 1.0
      %v793 = vadd.f32 %v741, 1.0
      %v794 = vadd.f32 %v743, 1.0
      %v795 = vadd.f32 %v745, 1.0
      %v796 = vadd.f32 %v747, 1.0
      %v797 = vadd.f32 %v749, 1.0
      %v798 = vadd.f32 %v751, 1.0
      %v799 = vadd.f32 %v753, 1.0
      %v800 = vadd.f32 %v755, 1.0
      %v801 = vadd.f32 %v757, 1.0
      %v802 = vadd.f32 %v759, 1.0
      %v803 = vadd.f32 %v761, 1.0
      %v804 = vadd.f32 %v763, 1.0
      %v805 = vadd.f32 %v765, 1.0
      %v806 = vadd.f32 %v767, 1.0
      %v807 = vadd.f32 %v769, 1.0
      %v808 = vadd.f32 %v771, 1.0
      %v809 = vadd.f32 %v773, 1.0
      %v810 = vadd.f32 %v775, 1.0
      %v811 = vadd.f32 %v777, 1.0
      %v812 = vadd.f32 %v779, 1.0
      %v813 = vadd.f32 %v781, 1.0
      %v814 = vrcp.pop %v782
      %v815 = vrcp.pop %v783
      %v816 = vrcp.pop %v784
      %v817 = vrcp.pop %v785
      %v818 = vrcp.pop %v786
      %v819 = vrcp.pop %v787
      %v820 = vrcp.pop %v788
      %v821 = vrcp.pop %v789
      %v822 = vrcp.pop %v790
      %v823 = vrcp.pop %v791
      %v824 = vrcp.pop %v792
      %v825 = vrcp.pop %v793
      %v826 = vrcp.pop %v794
      %v827 = vrcp.pop %v795
      %v828 = vrcp.pop %v796
      %v829 = vrcp.pop %v797
      %v830 = vrcp.pop %v798
      %v831 = vrcp.pop %v799
      %v832 = vrcp.pop %v800
      %v833 = vrcp.pop %v801
      %v834 = vrcp.pop %v802
      %v835 = vrcp.pop %v803
      %v836 = vrcp.pop %v804
      %v837 = vrcp.pop %v805
      %v838 = vrcp.pop %v806
      %v839 = vrcp.pop %v807
      %v840 = vrcp.pop %v808
      %v841 = vrcp.pop %v809
      %v842 = vrcp.pop %v810
      %v843 = vrcp.pop %v811
      %v844 = vrcp.pop %v812
      %v845 = vrcp.pop %v813
      %v846 = vmul.f32 %v654, %v814
      %v847 = vmul.f32 %v655, %v815
      %v848 = vmul.f32 %v656, %v816
      %v849 = vmul.f32 %v657, %v817
      %v850 = vmul.f32 %v658, %v818
      %v851 = vmul.f32 %v659, %v819
      %v852 = vmul.f32 %v660, %v820
      %v853 = vmul.f32 %v661, %v821
      %v854 = vmul.f32 %v662, %v822
      %v855 = vmul.f32 %v663, %v823
      %v856 = vmul.f32 %v664, %v824
      %v857 = vmul.f32 %v665, %v825
      %v858 = vmul.f32 %v666, %v826
      %v859 = vmul.f32 %v667, %v827
      %v860 = vmul.f32 %v668, %v828
      %v861 = vmul.f32 %v669, %v829
      %v862 = vmul.f32 %v670, %v830
      %v863 = vmul.f32 %v671, %v831
      %v864 = vmul.f32 %v672, %v832
      %v865 = vmul.f32 %v673, %v833
      %v866 = vmul.f32 %v674, %v834
      %v867 = vmul.f32 %v675, %v835
      %v868 = vmul.f32 %v676, %v836
      %v869 = vmul.f32 %v677, %v837
      %v870 = vmul.f32 %v678, %v838
      %v871 = vmul.f32 %v679, %v839
      %v872 = vmul.f32 %v680, %v840
      %v873 = vmul.f32 %v681, %v841
      %v874 = vmul.f32 %v682, %v842
      %v875 = vmul.f32 %v683, %v843
      %v876 = vmul.f32 %v684, %v844
      %v877 = vmul.f32 %v685, %v845
      %v878 = vpack.c.bf16 %v847, %v846
      %v879 = vpack.c.bf16 %v849, %v848
      %v880 = vpack.c.bf16 %v851, %v850
      %v881 = vpack.c.bf16 %v853, %v852
      %v882 = vpack.c.bf16 %v855, %v854
      %v883 = vpack.c.bf16 %v857, %v856
      %v884 = vpack.c.bf16 %v859, %v858
      %v885 = vpack.c.bf16 %v861, %v860
      %v886 = vpack.c.bf16 %v863, %v862
      %v887 = vpack.c.bf16 %v865, %v864
      %v888 = vpack.c.bf16 %v867, %v866
      %v889 = vpack.c.bf16 %v869, %v868
      %v890 = vpack.c.bf16 %v871, %v870
      %v891 = vpack.c.bf16 %v873, %v872
      %v892 = vpack.c.bf16 %v875, %v874
      %v893 = vpack.c.bf16 %v877, %v876
      %v894 = vld [vmem:[%s4] sm:$0xf]
      %v895 = vld [vmem:[%s4 + $0x4] sm:$0xf]
      %v896 = vld [vmem:[%s4 + $0x8] sm:$0xf]
      %v897 = vld [vmem:[%s4 + $0xc] sm:$0xf]
      %v898 = vld [vmem:[%s4 + $0x10] sm:$0xf]
      %v899 = vld [vmem:[%s4 + $0x14] sm:$0xf]
      %v900 = vld [vmem:[%s4 + $0x18] sm:$0xf]
      %v901 = vld [vmem:[%s4 + $0x1c] sm:$0xf]
      %v902 = vld [vmem:[%s4 + $0x20] sm:$0xf]
      %v903 = vld [vmem:[%s4 + $0x24] sm:$0xf]
      %v904 = vld [vmem:[%s4 + $0x28] sm:$0xf]
      %v905 = vld [vmem:[%s4 + $0x2c] sm:$0xf]
      %v906 = vld [vmem:[%s4 + $0x30] sm:$0xf]
      %v907 = vld [vmem:[%s4 + $0x34] sm:$0xf]
      %v908 = vld [vmem:[%s4 + $0x38] sm:$0xf]
      %v909 = vld [vmem:[%s4 + $0x3c] sm:$0xf]
      %v926 = vunpack.c.l.b16 %v894
      %v927 = vunpack.c.l.b16 %v895
      %v928 = vunpack.c.l.b16 %v896
      %v929 = vunpack.c.l.b16 %v897
      %v930 = vunpack.c.l.b16 %v898
      %v931 = vunpack.c.l.b16 %v899
      %v932 = vunpack.c.l.b16 %v900
      %v933 = vunpack.c.l.b16 %v901
      %v934 = vunpack.c.l.b16 %v902
      %v935 = vunpack.c.l.b16 %v903
      %v936 = vunpack.c.l.b16 %v904
      %v937 = vunpack.c.l.b16 %v905
      %v938 = vunpack.c.l.b16 %v906
      %v939 = vunpack.c.l.b16 %v907
      %v940 = vunpack.c.l.b16 %v908
      %v941 = vunpack.c.l.b16 %v909
      %v942 = vpack.c.b16 %v927, %v926
      %v943 = vpack.c.b16 %v929, %v928
      %v944 = vpack.c.b16 %v931, %v930
      %v945 = vpack.c.b16 %v933, %v932
      %v946 = vpack.c.b16 %v935, %v934
      %v947 = vpack.c.b16 %v937, %v936
      %v948 = vpack.c.b16 %v939, %v938
      %v949 = vpack.c.b16 %v941, %v940
      %958 = vmatprep.subr.bf16.mxu0 0
      %959 = vmatpush1.bf16.msra.mxu0 %v942
      %960 = vmatprep.subr.bf16.mxu0 0
      %961 = vmatpush1.bf16.msra.mxu0 %v943
      %962 = vmatprep.subr.bf16.mxu0 0
      %963 = vmatpush1.bf16.msra.mxu0 %v944
      %964 = vmatprep.subr.bf16.mxu0 0
      %965 = vmatpush1.bf16.msra.mxu0 %v945
      %966 = vmatprep.subr.bf16.mxu0 0
      %967 = vmatpush1.bf16.msra.mxu0 %v946
      %968 = vmatprep.subr.bf16.mxu0 0
      %969 = vmatpush1.bf16.msra.mxu0 %v947
      %970 = vmatprep.subr.bf16.mxu0 0
      %971 = vmatpush1.bf16.msra.mxu0 %v948
      %972 = vmatprep.subr.bf16.mxu0 0
      %973 = vmatpush1.bf16.msra.mxu0 %v949
      %974 = vmatprep.subr.bf16.mxu0 0
      %975 = vmatpush1.bf16.msra.mxu0 0
      %976 = vmatprep.subr.bf16.mxu0 0
      %977 = vmatpush1.bf16.msra.mxu0 0
      %978 = vmatprep.subr.bf16.mxu0 0
      %979 = vmatpush1.bf16.msra.mxu0 0
      %980 = vmatprep.subr.bf16.mxu0 0
      %981 = vmatpush1.bf16.msra.mxu0 0
      %982 = vmatprep.subr.bf16.mxu0 0
      %983 = vmatpush1.bf16.msra.mxu0 0
      %984 = vmatprep.subr.bf16.mxu0 0
      %985 = vmatpush1.bf16.msra.mxu0 0
      %986 = vmatprep.subr.bf16.mxu0 0
      %987 = vmatpush1.bf16.msra.mxu0 0
      %988 = vmatprep.subr.bf16.mxu0 0
      %989 = vmatpush1.bf16.msra.mxu0 0
      %990 = vmatprep.mubr.bf16.mxu0 0
      %991 = vmatmul.mubr.bf16.gmra.mrb[0].mxu0 %v878
      %v992 = vpop.f32.mrb[0].mxu0
      %v993 = vadd.f32 0.0, %v992
      %v994 = vpop.f32.mrb[0].mxu0
      %v995 = vpop.f32.mrb[0].mxu0
      %v996 = vadd.f32 0.0, %v995
      %v997 = vpop.f32.mrb[0].mxu0
      %998 = vmatprep.mubr.bf16.mxu0 0
      %999 = vmatmul.mubr.bf16.gmra.mrb[0].mxu0 %v879
      %v1000 = vpop.f32.mrb[0].mxu0
      %v1001 = vadd.f32 0.0, %v1000
      %v1002 = vpop.f32.mrb[0].mxu0
      %v1003 = vpop.f32.mrb[0].mxu0
      %v1004 = vadd.f32 0.0, %v1003
      %v1005 = vpop.f32.mrb[0].mxu0
      %1006 = vmatprep.mubr.bf16.mxu0 0
      %1007 = vmatmul.mubr.bf16.gmra.mrb[0].mxu0 %v880
      %v1008 = vpop.f32.mrb[0].mxu0
      %v1009 = vadd.f32 0.0, %v1008
      %v1010 = vpop.f32.mrb[0].mxu0
      %v1011 = vpop.f32.mrb[0].mxu0
      %v1012 = vadd.f32 0.0, %v1011
      %v1013 = vpop.f32.mrb[0].mxu0
      %1014 = vmatprep.mubr.bf16.mxu0 0
      %1015 = vmatmul.mubr.bf16.gmra.mrb[0].mxu0 %v881
      %v1016 = vpop.f32.mrb[0].mxu0
      %v1017 = vadd.f32 0.0, %v1016
      %v1018 = vpop.f32.mrb[0].mxu0
      %v1019 = vpop.f32.mrb[0].mxu0
      %v1020 = vadd.f32 0.0, %v1019
      %v1021 = vpop.f32.mrb[0].mxu0
      %1022 = vmatprep.mubr.bf16.mxu0 0
      %1023 = vmatmul.mubr.bf16.gmra.mrb[0].mxu0 %v882
      %v1024 = vpop.f32.mrb[0].mxu0
      %v1025 = vadd.f32 0.0, %v1024
      %v1026 = vpop.f32.mrb[0].mxu0
      %v1027 = vpop.f32.mrb[0].mxu0
      %v1028 = vadd.f32 0.0, %v1027
      %v1029 = vpop.f32.mrb[0].mxu0
      %1030 = vmatprep.mubr.bf16.mxu0 0
      %1031 = vmatmul.mubr.bf16.gmra.mrb[0].mxu0 %v883
      %v1032 = vpop.f32.mrb[0].mxu0
      %v1033 = vadd.f32 0.0, %v1032
      %v1034 = vpop.f32.mrb[0].mxu0
      %v1035 = vpop.f32.mrb[0].mxu0
      %v1036 = vadd.f32 0.0, %v1035
      %v1037 = vpop.f32.mrb[0].mxu0
      %1038 = vmatprep.mubr.bf16.mxu0 0
      %1039 = vmatmul.mubr.bf16.gmra.mrb[0].mxu0 %v884
      %v1040 = vpop.f32.mrb[0].mxu0
      %v1041 = vadd.f32 0.0, %v1040
      %v1042 = vpop.f32.mrb[0].mxu0
      %v1043 = vpop.f32.mrb[0].mxu0
      %v1044 = vadd.f32 0.0, %v1043
      %v1045 = vpop.f32.mrb[0].mxu0
      %1046 = vmatprep.mubr.bf16.mxu0 0
      %1047 = vmatmul.mubr.bf16.gmra.mrb[0].mxu0 %v885
      %v1048 = vpop.f32.mrb[0].mxu0
      %v1049 = vadd.f32 0.0, %v1048
      %v1050 = vpop.f32.mrb[0].mxu0
      %v1051 = vpop.f32.mrb[0].mxu0
      %v1052 = vadd.f32 0.0, %v1051
      %v1053 = vpop.f32.mrb[0].mxu0
      %1054 = vmatprep.mubr.bf16.mxu0 0
      %1055 = vmatmul.mubr.bf16.gmra.mrb[0].mxu0 %v886
      %v1056 = vpop.f32.mrb[0].mxu0
      %v1057 = vadd.f32 0.0, %v1056
      %v1058 = vpop.f32.mrb[0].mxu0
      %v1059 = vpop.f32.mrb[0].mxu0
      %v1060 = vadd.f32 0.0, %v1059
      %v1061 = vpop.f32.mrb[0].mxu0
      %1062 = vmatprep.mubr.bf16.mxu0 0
      %1063 = vmatmul.mubr.bf16.gmra.mrb[0].mxu0 %v887
      %v1064 = vpop.f32.mrb[0].mxu0
      %v1065 = vadd.f32 0.0, %v1064
      %v1066 = vpop.f32.mrb[0].mxu0
      %v1067 = vpop.f32.mrb[0].mxu0
      %v1068 = vadd.f32 0.0, %v1067
      %v1069 = vpop.f32.mrb[0].mxu0
      %1070 = vmatprep.mubr.bf16.mxu0 0
      %1071 = vmatmul.mubr.bf16.gmra.mrb[0].mxu0 %v888
      %v1072 = vpop.f32.mrb[0].mxu0
      %v1073 = vadd.f32 0.0, %v1072
      %v1074 = vpop.f32.mrb[0].mxu0
      %v1075 = vpop.f32.mrb[0].mxu0
      %v1076 = vadd.f32 0.0, %v1075
      %v1077 = vpop.f32.mrb[0].mxu0
      %1078 = vmatprep.mubr.bf16.mxu0 0
      %1079 = vmatmul.mubr.bf16.gmra.mrb[0].mxu0 %v889
      %v1080 = vpop.f32.mrb[0].mxu0
      %v1081 = vadd.f32 0.0, %v1080
      %v1082 = vpop.f32.mrb[0].mxu0
      %v1083 = vpop.f32.mrb[0].mxu0
      %v1084 = vadd.f32 0.0, %v1083
      %v1085 = vpop.f32.mrb[0].mxu0
      %1086 = vmatprep.mubr.bf16.mxu0 0
      %1087 = vmatmul.mubr.bf16.gmra.mrb[0].mxu0 %v890
      %v1088 = vpop.f32.mrb[0].mxu0
      %v1089 = vadd.f32 0.0, %v1088
      %v1090 = vpop.f32.mrb[0].mxu0
      %v1091 = vpop.f32.mrb[0].mxu0
      %v1092 = vadd.f32 0.0, %v1091
      %v1093 = vpop.f32.mrb[0].mxu0
      %1094 = vmatprep.mubr.bf16.mxu0 0
      %1095 = vmatmul.mubr.bf16.gmra.mrb[0].mxu0 %v891
      %v1096 = vpop.f32.mrb[0].mxu0
      %v1097 = vadd.f32 0.0, %v1096
      %v1098 = vpop.f32.mrb[0].mxu0
      %v1099 = vpop.f32.mrb[0].mxu0
      %v1100 = vadd.f32 0.0, %v1099
      %v1101 = vpop.f32.mrb[0].mxu0
      %1102 = vmatprep.mubr.bf16.mxu0 0
      %1103 = vmatmul.mubr.bf16.gmra.mrb[0].mxu0 %v892
      %v1104 = vpop.f32.mrb[0].mxu0
      %v1105 = vadd.f32 0.0, %v1104
      %v1106 = vpop.f32.mrb[0].mxu0
      %v1107 = vpop.f32.mrb[0].mxu0
      %v1108 = vadd.f32 0.0, %v1107
      %v1109 = vpop.f32.mrb[0].mxu0
      %1110 = vmatprep.mubr.bf16.mxu0 0
      %1111 = vmatmul.mubr.bf16.gmra.mrb[0].mxu0 %v893
      %v1112 = vpop.f32.mrb[0].mxu0
      %v1113 = vadd.f32 0.0, %v1112
      %v1114 = vpop.f32.mrb[0].mxu0
      %v1115 = vpop.f32.mrb[0].mxu0
      %v1116 = vadd.f32 0.0, %v1115
      %v1117 = vpop.f32.mrb[0].mxu0
      %1118 = vdwg.mxu0
      %1119 = vst [vmem:[#allocation3] sm:$0xff] %v993
      %1120 = vst [vmem:[#allocation3 + $0x8] sm:$0xff] %v996
      %1121 = vst [vmem:[#allocation3 + $0x10] sm:$0xff] %v1001
      %1122 = vst [vmem:[#allocation3 + $0x18] sm:$0xff] %v1004
      %1123 = vst [vmem:[#allocation3 + $0x20] sm:$0xff] %v1009
      %1124 = vst [vmem:[#allocation3 + $0x28] sm:$0xff] %v1012
      %1125 = vst [vmem:[#allocation3 + $0x30] sm:$0xff] %v1017
      %1126 = vst [vmem:[#allocation3 + $0x38] sm:$0xff] %v1020
      %1127 = vst [vmem:[#allocation3 + $0x40] sm:$0xff] %v1025
      %1128 = vst [vmem:[#allocation3 + $0x48] sm:$0xff] %v1028
      %1129 = vst [vmem:[#allocation3 + $0x50] sm:$0xff] %v1033
      %1130 = vst [vmem:[#allocation3 + $0x58] sm:$0xff] %v1036
      %1131 = vst [vmem:[#allocation3 + $0x60] sm:$0xff] %v1041
      %1132 = vst [vmem:[#allocation3 + $0x68] sm:$0xff] %v1044
      %1133 = vst [vmem:[#allocation3 + $0x70] sm:$0xff] %v1049
      %1134 = vst [vmem:[#allocation3 + $0x78] sm:$0xff] %v1052
      %1135 = vst [vmem:[#allocation3 + $0x80] sm:$0xff] %v1057
      %1136 = vst [vmem:[#allocation3 + $0x88] sm:$0xff] %v1060
      %1137 = vst [vmem:[#allocation3 + $0x90] sm:$0xff] %v1065
      %1138 = vst [vmem:[#allocation3 + $0x98] sm:$0xff] %v1068
      %1139 = vst [vmem:[#allocation3 + $0xa0] sm:$0xff] %v1073
      %1140 = vst [vmem:[#allocation3 + $0xa8] sm:$0xff] %v1076
      %1141 = vst [vmem:[#allocation3 + $0xb0] sm:$0xff] %v1081
      %1142 = vst [vmem:[#allocation3 + $0xb8] sm:$0xff] %v1084
      %1143 = vst [vmem:[#allocation3 + $0xc0] sm:$0xff] %v1089
      %1144 = vst [vmem:[#allocation3 + $0xc8] sm:$0xff] %v1092
      %1145 = vst [vmem:[#allocation3 + $0xd0] sm:$0xff] %v1097
      %1146 = vst [vmem:[#allocation3 + $0xd8] sm:$0xff] %v1100
      %1147 = vst [vmem:[#allocation3 + $0xe0] sm:$0xff] %v1105
      %1148 = vst [vmem:[#allocation3 + $0xe8] sm:$0xff] %v1108
      %1149 = vst [vmem:[#allocation3 + $0xf0] sm:$0xff] %v1113
      %1150 = vst [vmem:[#allocation3 + $0xf8] sm:$0xff] %v1116
      %1151 = vst [vmem:[#allocation2 + $0x4] sm:$0x8] 4286644096
      %1152 = vst [vmem:[#allocation2 + $0x18] sm:$0x8] 4286644096
      %1153 = vst [vmem:[#allocation2 + $0x2c] sm:$0x8] 4286644096
      %1154 = vst [vmem:[#allocation2 + $0x40] sm:$0x8] 4286644096
      %1155 = vst [vmem:[#allocation2 + $0x54] sm:$0x8] 4286644096
      %1156 = vst [vmem:[#allocation2 + $0x68] sm:$0x8] 4286644096
      %1157 = vst [vmem:[#allocation2 + $0x7c] sm:$0x8] 4286644096
      %1158 = vst [vmem:[#allocation2 + $0x90] sm:$0x8] 4286644096
      %1159 = vst [vmem:[#allocation2 + $0xa4] sm:$0x8] 4286644096
      %1160 = vst [vmem:[#allocation2 + $0xb8] sm:$0x8] 4286644096
      %1161 = vst [vmem:[#allocation2 + $0xcc] sm:$0x8] 4286644096
      %1162 = vst [vmem:[#allocation2 + $0xe0] sm:$0x8] 4286644096
      %1163 = vst [vmem:[#allocation2 + $0xf4] sm:$0x8] 4286644096
      %1164 = vst [vmem:[#allocation2 + $0x108] sm:$0x8] 4286644096
      %1165 = vst [vmem:[#allocation2 + $0x11c] sm:$0x8] 4286644096
      %1166 = vst [vmem:[#allocation2 + $0x130] sm:$0x8] 4286644096
      %1167 = vst [vmem:[#allocation2 + $0x144] sm:$0x8] 4286644096
      %1168 = vst [vmem:[#allocation2 + $0x158] sm:$0x8] 4286644096
      %1169 = vst [vmem:[#allocation2 + $0x16c] sm:$0x8] 4286644096
      %1170 = vst [vmem:[#allocation2 + $0x180] sm:$0x8] 4286644096
      %1171 = vst [vmem:[#allocation2 + $0x10] sm:$0x1] 4286644096
      %1172 = vst [vmem:[#allocation2 + $0x24] sm:$0x1] 4286644096
      %1173 = vst [vmem:[#allocation2 + $0x38] sm:$0x1] 4286644096
      %1174 = vst [vmem:[#allocation2 + $0x4c] sm:$0x1] 4286644096
      %1175 = vst [vmem:[#allocation2 + $0x60] sm:$0x1] 4286644096
      %1176 = vst [vmem:[#allocation2 + $0x74] sm:$0x1] 4286644096
      %1177 = vst [vmem:[#allocation2 + $0x88] sm:$0x1] 4286644096
      %1178 = vst [vmem:[#allocation2 + $0x9c] sm:$0x1] 4286644096
      %1179 = vst [vmem:[#allocation2 + $0xb0] sm:$0x1] 4286644096
      %1180 = vst [vmem:[#allocation2 + $0xc4] sm:$0x1] 4286644096
      %1181 = vst [vmem:[#allocation2 + $0xd8] sm:$0x1] 4286644096
      %1182 = vst [vmem:[#allocation2 + $0xec] sm:$0x1] 4286644096
      %1183 = vst [vmem:[#allocation2 + $0x100] sm:$0x1] 4286644096
      %1184 = vst [vmem:[#allocation2 + $0x114] sm:$0x1] 4286644096
      %1185 = vst [vmem:[#allocation2 + $0x128] sm:$0x1] 4286644096
      %1186 = vst [vmem:[#allocation2 + $0x13c] sm:$0x1] 4286644096
      %1187 = vst [vmem:[#allocation2 + $0x150] sm:$0x1] 4286644096
      %1188 = vst [vmem:[#allocation2 + $0x164] sm:$0x1] 4286644096
      %1189 = vst [vmem:[#allocation2 + $0x178] sm:$0x1] 4286644096
      %1190 = vst [vmem:[#allocation2 + $0x18c] sm:$0x1] 4286644096
      %1191 = vst [vmem:[#allocation2 + $0x4] sm:$0x8] 4286644096
      %1192 = vst [vmem:[#allocation2 + $0x8] sm:$0xf] 4286644096
      %1193 = vst [vmem:[#allocation2 + $0xc] sm:$0xf] 4286644096
      %1194 = vst [vmem:[#allocation2 + $0x10] sm:$0x1] 4286644096
      %1195 = vst [vmem:[#allocation2 + $0x18] sm:$0x8] 4286644096
      %1196 = vst [vmem:[#allocation2 + $0x1c] sm:$0xf] 4286644096
      %1197 = vst [vmem:[#allocation2 + $0x20] sm:$0xf] 4286644096
      %1198 = vst [vmem:[#allocation2 + $0x24] sm:$0x1] 4286644096
      %s1199 = scalar_lea.vmem [#allocation2], 360
      %1200 = vst [vmem:[%s1199 + $0x4] sm:$0x8] 4286644096
      %1201 = vst [vmem:[%s1199 + $0x8] sm:$0xf] 4286644096
      %1202 = vst [vmem:[%s1199 + $0xc] sm:$0xf] 4286644096
      %1203 = vst [vmem:[%s1199 + $0x10] sm:$0x1] 4286644096
      %1204 = vst [vmem:[%s1199 + $0x18] sm:$0x8] 4286644096
      %1205 = vst [vmem:[%s1199 + $0x1c] sm:$0xf] 4286644096
      %1206 = vst [vmem:[%s1199 + $0x20] sm:$0xf] 4286644096
      %1207 = vst [vmem:[%s1199 + $0x24] sm:$0x1] 4286644096
      %v1224 = vunpack.c.l.b16 %v878
      %v1225 = vunpack.c.h.b16 %v878
      %v1226 = vunpack.c.l.b16 %v879
      %v1227 = vunpack.c.h.b16 %v879
      %v1228 = vunpack.c.l.b16 %v880
      %v1229 = vunpack.c.h.b16 %v880
      %v1230 = vunpack.c.l.b16 %v881
      %v1231 = vunpack.c.h.b16 %v881
      %v1232 = vunpack.c.l.b16 %v882
      %v1233 = vunpack.c.h.b16 %v882
      %v1234 = vunpack.c.l.b16 %v883
      %v1235 = vunpack.c.h.b16 %v883
      %v1236 = vunpack.c.l.b16 %v884
      %v1237 = vunpack.c.h.b16 %v884
      %v1238 = vunpack.c.l.b16 %v885
      %v1239 = vunpack.c.h.b16 %v885
      %v1240 = vunpack.c.l.b16 %v886
      %v1241 = vunpack.c.h.b16 %v886
      %v1242 = vunpack.c.l.b16 %v887
      %v1243 = vunpack.c.h.b16 %v887
      %v1244 = vunpack.c.l.b16 %v888
      %v1245 = vunpack.c.h.b16 %v888
      %v1246 = vunpack.c.l.b16 %v889
      %v1247 = vunpack.c.h.b16 %v889
      %v1248 = vunpack.c.l.b16 %v890
      %v1249 = vunpack.c.h.b16 %v890
      %v1250 = vunpack.c.l.b16 %v891
      %v1251 = vunpack.c.h.b16 %v891
      %v1252 = vunpack.c.l.b16 %v892
      %v1253 = vunpack.c.h.b16 %v892
      %v1254 = vunpack.c.l.b16 %v893
      %v1255 = vunpack.c.h.b16 %v893
      %v1256 = vpack.c.b16 %v1224, %v1224
      %v1257 = vpack.c.b16 %v1225, %v1225
      %v1258 = vpack.c.b16 %v1226, %v1226
      %v1259 = vpack.c.b16 %v1227, %v1227
      %v1260 = vpack.c.b16 %v1228, %v1228
      %v1261 = vpack.c.b16 %v1229, %v1229
      %v1262 = vpack.c.b16 %v1230, %v1230
      %v1263 = vpack.c.b16 %v1231, %v1231
      %v1264 = vpack.c.b16 %v1232, %v1232
      %v1265 = vpack.c.b16 %v1233, %v1233
      %v1266 = vpack.c.b16 %v1234, %v1234
      %v1267 = vpack.c.b16 %v1235, %v1235
      %v1268 = vpack.c.b16 %v1236, %v1236
      %v1269 = vpack.c.b16 %v1237, %v1237
      %v1270 = vpack.c.b16 %v1238, %v1238
      %v1271 = vpack.c.b16 %v1239, %v1239
      %v1272 = vpack.c.b16 %v1240, %v1240
      %v1273 = vpack.c.b16 %v1241, %v1241
      %v1274 = vpack.c.b16 %v1242, %v1242
      %v1275 = vpack.c.b16 %v1243, %v1243
      %v1276 = vpack.c.b16 %v1244, %v1244
      %v1277 = vpack.c.b16 %v1245, %v1245
      %v1278 = vpack.c.b16 %v1246, %v1246
      %v1279 = vpack.c.b16 %v1247, %v1247
      %v1280 = vpack.c.b16 %v1248, %v1248
      %v1281 = vpack.c.b16 %v1249, %v1249
      %v1282 = vpack.c.b16 %v1250, %v1250
      %v1283 = vpack.c.b16 %v1251, %v1251
      %v1284 = vpack.c.b16 %v1252, %v1252
      %v1285 = vpack.c.b16 %v1253, %v1253
      %v1286 = vpack.c.b16 %v1254, %v1254
      %v1287 = vpack.c.b16 %v1255, %v1255
      %s1320 = scalar_lea.vmem [#allocation2], 40
      %1321 = vst [vmem:[%s1320 + $0x8] sm:$0xf] %v1256
      %1322 = vst [vmem:[%s1320 + $0xc] sm:$0xf] %v1257
      %1323 = vst [vmem:[%s1320 + $0x1c] sm:$0xf] %v1258
      %1324 = vst [vmem:[%s1320 + $0x20] sm:$0xf] %v1259
      %1325 = vst [vmem:[%s1320 + $0x30] sm:$0xf] %v1260
      %1326 = vst [vmem:[%s1320 + $0x34] sm:$0xf] %v1261
      %1327 = vst [vmem:[%s1320 + $0x44] sm:$0xf] %v1262
      %1328 = vst [vmem:[%s1320 + $0x48] sm:$0xf] %v1263
      %1329 = vst [vmem:[%s1320 + $0x58] sm:$0xf] %v1264
      %1330 = vst [vmem:[%s1320 + $0x5c] sm:$0xf] %v1265
      %1331 = vst [vmem:[%s1320 + $0x6c] sm:$0xf] %v1266
      %1332 = vst [vmem:[%s1320 + $0x70] sm:$0xf] %v1267
      %1333 = vst [vmem:[%s1320 + $0x80] sm:$0xf] %v1268
      %1334 = vst [vmem:[%s1320 + $0x84] sm:$0xf] %v1269
      %1335 = vst [vmem:[%s1320 + $0x94] sm:$0xf] %v1270
      %1336 = vst [vmem:[%s1320 + $0x98] sm:$0xf] %v1271
      %1337 = vst [vmem:[%s1320 + $0xa8] sm:$0xf] %v1272
      %1338 = vst [vmem:[%s1320 + $0xac] sm:$0xf] %v1273
      %1339 = vst [vmem:[%s1320 + $0xbc] sm:$0xf] %v1274
      %1340 = vst [vmem:[%s1320 + $0xc0] sm:$0xf] %v1275
      %1341 = vst [vmem:[%s1320 + $0xd0] sm:$0xf] %v1276
      %1342 = vst [vmem:[%s1320 + $0xd4] sm:$0xf] %v1277
      %1343 = vst [vmem:[%s1320 + $0xe4] sm:$0xf] %v1278
      %1344 = vst [vmem:[%s1320 + $0xe8] sm:$0xf] %v1279
      %1345 = vst [vmem:[%s1320 + $0xf8] sm:$0xf] %v1280
      %1346 = vst [vmem:[%s1320 + $0xfc] sm:$0xf] %v1281
      %1347 = vst [vmem:[%s1320 + $0x10c] sm:$0xf] %v1282
      %1348 = vst [vmem:[%s1320 + $0x110] sm:$0xf] %v1283
      %1349 = vst [vmem:[%s1320 + $0x120] sm:$0xf] %v1284
      %1350 = vst [vmem:[%s1320 + $0x124] sm:$0xf] %v1285
      %1351 = vst [vmem:[%s1320 + $0x134] sm:$0xf] %v1286
      %1352 = vst [vmem:[%s1320 + $0x138] sm:$0xf] %v1287
      %v1353 = vld [vmem:[#allocation2 + $0x4] sm:$0x8]
      %v1354 = vld [vmem:[#allocation2 + $0x8] sm:$0xf]
      %v1355 = vld [vmem:[#allocation2 + $0xc] sm:$0xf]
      %v1356 = vld [vmem:[#allocation2 + $0x10] sm:$0x1]
      %v1357 = vld [vmem:[#allocation2 + $0x18] sm:$0x8]
      %v1358 = vld [vmem:[#allocation2 + $0x1c] sm:$0xf]
      %v1359 = vld [vmem:[#allocation2 + $0x20] sm:$0xf]
      %v1360 = vld [vmem:[#allocation2 + $0x24] sm:$0x1]
      %v1361 = vld [vmem:[#allocation2 + $0x2c] sm:$0x8]
      %v1362 = vld [vmem:[#allocation2 + $0x30] sm:$0xf]
      %v1363 = vld [vmem:[#allocation2 + $0x34] sm:$0xf]
      %v1364 = vld [vmem:[#allocation2 + $0x38] sm:$0x1]
      %v1365 = vld [vmem:[#allocation2 + $0x40] sm:$0x8]
      %v1366 = vld [vmem:[#allocation2 + $0x44] sm:$0xf]
      %v1367 = vld [vmem:[#allocation2 + $0x48] sm:$0xf]
      %v1368 = vld [vmem:[#allocation2 + $0x4c] sm:$0x1]
      %v1369 = vld [vmem:[#allocation2 + $0x54] sm:$0x8]
      %v1370 = vld [vmem:[#allocation2 + $0x58] sm:$0xf]
      %v1371 = vld [vmem:[#allocation2 + $0x5c] sm:$0xf]
      %v1372 = vld [vmem:[#allocation2 + $0x60] sm:$0x1]
      %v1373 = vld [vmem:[#allocation2 + $0x68] sm:$0x8]
      %v1374 = vld [vmem:[#allocation2 + $0x6c] sm:$0xf]
      %v1375 = vld [vmem:[#allocation2 + $0x70] sm:$0xf]
      %v1376 = vld [vmem:[#allocation2 + $0x74] sm:$0x1]
      %v1377 = vld [vmem:[#allocation2 + $0x7c] sm:$0x8]
      %v1378 = vld [vmem:[#allocation2 + $0x80] sm:$0xf]
      %v1379 = vld [vmem:[#allocation2 + $0x84] sm:$0xf]
      %v1380 = vld [vmem:[#allocation2 + $0x88] sm:$0x1]
      %v1381 = vld [vmem:[#allocation2 + $0x90] sm:$0x8]
      %v1382 = vld [vmem:[#allocation2 + $0x94] sm:$0xf]
      %v1383 = vld [vmem:[#allocation2 + $0x98] sm:$0xf]
      %v1384 = vld [vmem:[#allocation2 + $0x9c] sm:$0x1]
      %v1385 = vld [vmem:[#allocation2 + $0xa4] sm:$0x8]
      %v1386 = vld [vmem:[#allocation2 + $0xa8] sm:$0xf]
      %v1387 = vld [vmem:[#allocation2 + $0xac] sm:$0xf]
      %v1388 = vld [vmem:[#allocation2 + $0xb0] sm:$0x1]
      %v1389 = vld [vmem:[#allocation2 + $0xb8] sm:$0x8]
      %v1390 = vld [vmem:[#allocation2 + $0xbc] sm:$0xf]
      %v1391 = vld [vmem:[#allocation2 + $0xc0] sm:$0xf]
      %v1392 = vld [vmem:[#allocation2 + $0xc4] sm:$0x1]
      %v1393 = vld [vmem:[#allocation2 + $0xcc] sm:$0x8]
      %v1394 = vld [vmem:[#allocation2 + $0xd0] sm:$0xf]
      %v1395 = vld [vmem:[#allocation2 + $0xd4] sm:$0xf]
      %v1396 = vld [vmem:[#allocation2 + $0xd8] sm:$0x1]
      %v1397 = vld [vmem:[#allocation2 + $0xe0] sm:$0x8]
      %v1398 = vld [vmem:[#allocation2 + $0xe4] sm:$0xf]
      %v1399 = vld [vmem:[#allocation2 + $0xe8] sm:$0xf]
      %v1400 = vld [vmem:[#allocation2 + $0xec] sm:$0x1]
      %v1401 = vld [vmem:[#allocation2 + $0xf4] sm:$0x8]
      %v1402 = vld [vmem:[#allocation2 + $0xf8] sm:$0xf]
      %v1403 = vld [vmem:[#allocation2 + $0xfc] sm:$0xf]
      %v1404 = vld [vmem:[#allocation2 + $0x100] sm:$0x1]
      %v1405 = vld [vmem:[#allocation2 + $0x108] sm:$0x8]
      %v1406 = vld [vmem:[#allocation2 + $0x10c] sm:$0xf]
      %v1407 = vld [vmem:[#allocation2 + $0x110] sm:$0xf]
      %v1408 = vld [vmem:[#allocation2 + $0x114] sm:$0x1]
      %v1409 = vld [vmem:[#allocation2 + $0x11c] sm:$0x8]
      %v1410 = vld [vmem:[#allocation2 + $0x120] sm:$0xf]
      %v1411 = vld [vmem:[#allocation2 + $0x124] sm:$0xf]
      %v1412 = vld [vmem:[#allocation2 + $0x128] sm:$0x1]
      %v1413 = vld [vmem:[#allocation2 + $0x130] sm:$0x8]
      %v1414 = vld [vmem:[#allocation2 + $0x134] sm:$0xf]
      %v1415 = vld [vmem:[#allocation2 + $0x138] sm:$0xf]
      %v1416 = vld [vmem:[#allocation2 + $0x13c] sm:$0x1]
      %v1417 = vld [vmem:[#allocation2 + $0x144] sm:$0x8]
      %v1418 = vld [vmem:[#allocation2 + $0x148] sm:$0xf]
      %v1419 = vld [vmem:[#allocation2 + $0x14c] sm:$0xf]
      %v1420 = vld [vmem:[#allocation2 + $0x150] sm:$0x1]
      %v1421 = vld [vmem:[#allocation2 + $0x158] sm:$0x8]
      %v1422 = vld [vmem:[#allocation2 + $0x15c] sm:$0xf]
      %v1423 = vld [vmem:[#allocation2 + $0x160] sm:$0xf]
      %v1424 = vld [vmem:[#allocation2 + $0x164] sm:$0x1]
      %v1425 = vld [vmem:[#allocation2 + $0x16c] sm:$0x8]
      %v1426 = vld [vmem:[#allocation2 + $0x170] sm:$0xf]
      %v1427 = vld [vmem:[#allocation2 + $0x174] sm:$0xf]
      %v1428 = vld [vmem:[#allocation2 + $0x178] sm:$0x1]
      %v1429 = vld [vmem:[#allocation2 + $0x180] sm:$0x8]
      %v1430 = vld [vmem:[#allocation2 + $0x184] sm:$0xf]
      %v1431 = vld [vmem:[#allocation2 + $0x188] sm:$0xf]
      %v1432 = vld [vmem:[#allocation2 + $0x18c] sm:$0x1]
      %vm1433 = vsmask.f32 3328
      %vm1434 = vsmask.f32 7440
      %vm1435 = vmor %vm1433, %vm1434
      %v1437 = vshrl.u32 %v1353, 16
      %v1439 = vrot.slane %v1437, 4
      %v1440 = vrot.slane %v1439, 4
      %v1442 = vshll.u32 %v1354, 16
      %v1444 = vrot.slane %v1442, 5
      %v1445 = vsel %vm1435, %v1440, %v1444
      %v1446 = vshrl.u32 %v1354, 16
      %v1448 = vrot.slane %v1446, 4
      %v1449 = vor.u32 %v1448, %v1444
      %v1450 = vrot.slane %v1449, 4
      %v1452 = vshll.u32 %v1355, 16
      %v1454 = vrot.slane %v1452, 5
      %v1455 = vsel %vm1435, %v1450, %v1454
      %v1456 = vshrl.u32 %v1355, 16
      %v1458 = vrot.slane %v1456, 4
      %v1459 = vor.u32 %v1458, %v1454
      %v1460 = vrot.slane %v1459, 4
      %v1462 = vshrl.u32 %v1357, 16
      %v1464 = vrot.slane %v1462, 4
      %v1465 = vrot.slane %v1464, 4
      %v1467 = vshll.u32 %v1358, 16
      %v1469 = vrot.slane %v1467, 5
      %v1470 = vsel %vm1435, %v1465, %v1469
      %v1471 = vshrl.u32 %v1358, 16
      %v1473 = vrot.slane %v1471, 4
      %v1474 = vor.u32 %v1473, %v1469
      %v1475 = vrot.slane %v1474, 4
      %v1477 = vshll.u32 %v1359, 16
      %v1479 = vrot.slane %v1477, 5
      %v1480 = vsel %vm1435, %v1475, %v1479
      %v1481 = vshrl.u32 %v1359, 16
      %v1483 = vrot.slane %v1481, 4
      %v1484 = vor.u32 %v1483, %v1479
      %v1485 = vrot.slane %v1484, 4
      %v1487 = vshrl.u32 %v1361, 16
      %v1489 = vrot.slane %v1487, 4
      %v1490 = vrot.slane %v1489, 4
      %v1492 = vshll.u32 %v1362, 16
      %v1494 = vrot.slane %v1492, 5
      %v1495 = vsel %vm1435, %v1490, %v1494
      %v1496 = vshrl.u32 %v1362, 16
      %v1498 = vrot.slane %v1496, 4
      %v1499 = vor.u32 %v1498, %v1494
      %v1500 = vrot.slane %v1499, 4
      %v1502 = vshll.u32 %v1363, 16
      %v1504 = vrot.slane %v1502, 5
      %v1505 = vsel %vm1435, %v1500, %v1504
      %v1506 = vshrl.u32 %v1363, 16
      %v1508 = vrot.slane %v1506, 4
      %v1509 = vor.u32 %v1508, %v1504
      %v1510 = vrot.slane %v1509, 4
      %v1512 = vshrl.u32 %v1365, 16
      %v1514 = vrot.slane %v1512, 4
      %v1515 = vrot.slane %v1514, 4
      %v1517 = vshll.u32 %v1366, 16
      %v1519 = vrot.slane %v1517, 5
      %v1520 = vsel %vm1435, %v1515, %v1519
      %v1521 = vshrl.u32 %v1366, 16
      %v1523 = vrot.slane %v1521, 4
      %v1524 = vor.u32 %v1523, %v1519
      %v1525 = vrot.slane %v1524, 4
      %v1527 = vshll.u32 %v1367, 16
      %v1529 = vrot.slane %v1527, 5
      %v1530 = vsel %vm1435, %v1525, %v1529
      %v1531 = vshrl.u32 %v1367, 16
      %v1533 = vrot.slane %v1531, 4
      %v1534 = vor.u32 %v1533, %v1529
      %v1535 = vrot.slane %v1534, 4
      %v1537 = vshrl.u32 %v1369, 16
      %v1539 = vrot.slane %v1537, 4
      %v1540 = vrot.slane %v1539, 4
      %v1542 = vshll.u32 %v1370, 16
      %v1544 = vrot.slane %v1542, 5
      %v1545 = vsel %vm1435, %v1540, %v1544
      %v1546 = vshrl.u32 %v1370, 16
      %v1548 = vrot.slane %v1546, 4
      %v1549 = vor.u32 %v1548, %v1544
      %v1550 = vrot.slane %v1549, 4
      %v1552 = vshll.u32 %v1371, 16
      %v1554 = vrot.slane %v1552, 5
      %v1555 = vsel %vm1435, %v1550, %v1554
      %v1556 = vshrl.u32 %v1371, 16
      %v1558 = vrot.slane %v1556, 4
      %v1559 = vor.u32 %v1558, %v1554
      %v1560 = vrot.slane %v1559, 4
      %v1562 = vshrl.u32 %v1373, 16
      %v1564 = vrot.slane %v1562, 4
      %v1565 = vrot.slane %v1564, 4
      %v1567 = vshll.u32 %v1374, 16
      %v1569 = vrot.slane %v1567, 5
      %v1570 = vsel %vm1435, %v1565, %v1569
      %v1571 = vshrl.u32 %v1374, 16
      %v1573 = vrot.slane %v1571, 4
      %v1574 = vor.u32 %v1573, %v1569
      %v1575 = vrot.slane %v1574, 4
      %v1577 = vshll.u32 %v1375, 16
      %v1579 = vrot.slane %v1577, 5
      %v1580 = vsel %vm1435, %v1575, %v1579
      %v1581 = vshrl.u32 %v1375, 16
      %v1583 = vrot.slane %v1581, 4
      %v1584 = vor.u32 %v1583, %v1579
      %v1585 = vrot.slane %v1584, 4
      %v1587 = vshrl.u32 %v1377, 16
      %v1589 = vrot.slane %v1587, 4
      %v1590 = vrot.slane %v1589, 4
      %v1592 = vshll.u32 %v1378, 16
      %v1594 = vrot.slane %v1592, 5
      %v1595 = vsel %vm1435, %v1590, %v1594
      %v1596 = vshrl.u32 %v1378, 16
      %v1598 = vrot.slane %v1596, 4
      %v1599 = vor.u32 %v1598, %v1594
      %v1600 = vrot.slane %v1599, 4
      %v1602 = vshll.u32 %v1379, 16
      %v1604 = vrot.slane %v1602, 5
      %v1605 = vsel %vm1435, %v1600, %v1604
      %v1606 = vshrl.u32 %v1379, 16
      %v1608 = vrot.slane %v1606, 4
      %v1609 = vor.u32 %v1608, %v1604
      %v1610 = vrot.slane %v1609, 4
      %v1612 = vshrl.u32 %v1381, 16
      %v1614 = vrot.slane %v1612, 4
      %v1615 = vrot.slane %v1614, 4
      %v1617 = vshll.u32 %v1382, 16
      %v1619 = vrot.slane %v1617, 5
      %v1620 = vsel %vm1435, %v1615, %v1619
      %v1621 = vshrl.u32 %v1382, 16
      %v1623 = vrot.slane %v1621, 4
      %v1624 = vor.u32 %v1623, %v1619
      %v1625 = vrot.slane %v1624, 4
      %v1627 = vshll.u32 %v1383, 16
      %v1629 = vrot.slane %v1627, 5
      %v1630 = vsel %vm1435, %v1625, %v1629
      %v1631 = vshrl.u32 %v1383, 16
      %v1633 = vrot.slane %v1631, 4
      %v1634 = vor.u32 %v1633, %v1629
      %v1635 = vrot.slane %v1634, 4
      %v1637 = vshrl.u32 %v1385, 16
      %v1639 = vrot.slane %v1637, 4
      %v1640 = vrot.slane %v1639, 4
      %v1642 = vshll.u32 %v1386, 16
      %v1644 = vrot.slane %v1642, 5
      %v1645 = vsel %vm1435, %v1640, %v1644
      %v1646 = vshrl.u32 %v1386, 16
      %v1648 = vrot.slane %v1646, 4
      %v1649 = vor.u32 %v1648, %v1644
      %v1650 = vrot.slane %v1649, 4
      %v1652 = vshll.u32 %v1387, 16
      %v1654 = vrot.slane %v1652, 5
      %v1655 = vsel %vm1435, %v1650, %v1654
      %v1656 = vshrl.u32 %v1387, 16
      %v1658 = vrot.slane %v1656, 4
      %v1659 = vor.u32 %v1658, %v1654
      %v1660 = vrot.slane %v1659, 4
      %v1662 = vshrl.u32 %v1389, 16
      %v1664 = vrot.slane %v1662, 4
      %v1665 = vrot.slane %v1664, 4
      %v1667 = vshll.u32 %v1390, 16
      %v1669 = vrot.slane %v1667, 5
      %v1670 = vsel %vm1435, %v1665, %v1669
      %v1671 = vshrl.u32 %v1390, 16
      %v1673 = vrot.slane %v1671, 4
      %v1674 = vor.u32 %v1673, %v1669
      %v1675 = vrot.slane %v1674, 4
      %v1677 = vshll.u32 %v1391, 16
      %v1679 = vrot.slane %v1677, 5
      %v1680 = vsel %vm1435, %v1675, %v1679
      %v1681 = vshrl.u32 %v1391, 16
      %v1683 = vrot.slane %v1681, 4
      %v1684 = vor.u32 %v1683, %v1679
      %v1685 = vrot.slane %v1684, 4
      %v1687 = vshrl.u32 %v1393, 16
      %v1689 = vrot.slane %v1687, 4
      %v1690 = vrot.slane %v1689, 4
      %v1692 = vshll.u32 %v1394, 16
      %v1694 = vrot.slane %v1692, 5
      %v1695 = vsel %vm1435, %v1690, %v1694
      %v1696 = vshrl.u32 %v1394, 16
      %v1698 = vrot.slane %v1696, 4
      %v1699 = vor.u32 %v1698, %v1694
      %v1700 = vrot.slane %v1699, 4
      %v1702 = vshll.u32 %v1395, 16
      %v1704 = vrot.slane %v1702, 5
      %v1705 = vsel %vm1435, %v1700, %v1704
      %v1706 = vshrl.u32 %v1395, 16
      %v1708 = vrot.slane %v1706, 4
      %v1709 = vor.u32 %v1708, %v1704
      %v1710 = vrot.slane %v1709, 4
      %v1712 = vshrl.u32 %v1397, 16
      %v1714 = vrot.slane %v1712, 4
      %v1715 = vrot.slane %v1714, 4
      %v1717 = vshll.u32 %v1398, 16
      %v1719 = vrot.slane %v1717, 5
      %v1720 = vsel %vm1435, %v1715, %v1719
      %v1721 = vshrl.u32 %v1398, 16
      %v1723 = vrot.slane %v1721, 4
      %v1724 = vor.u32 %v1723, %v1719
      %v1725 = vrot.slane %v1724, 4
      %v1727 = vshll.u32 %v1399, 16
      %v1729 = vrot.slane %v1727, 5
      %v1730 = vsel %vm1435, %v1725, %v1729
      %v1731 = vshrl.u32 %v1399, 16
      %v1733 = vrot.slane %v1731, 4
      %v1734 = vor.u32 %v1733, %v1729
      %v1735 = vrot.slane %v1734, 4
      %v1737 = vshrl.u32 %v1401, 16
      %v1739 = vrot.slane %v1737, 4
      %v1740 = vrot.slane %v1739, 4
      %v1742 = vshll.u32 %v1402, 16
      %v1744 = vrot.slane %v1742, 5
      %v1745 = vsel %vm1435, %v1740, %v1744
      %v1746 = vshrl.u32 %v1402, 16
      %v1748 = vrot.slane %v1746, 4
      %v1749 = vor.u32 %v1748, %v1744
      %v1750 = vrot.slane %v1749, 4
      %v1752 = vshll.u32 %v1403, 16
      %v1754 = vrot.slane %v1752, 5
      %v1755 = vsel %vm1435, %v1750, %v1754
      %v1756 = vshrl.u32 %v1403, 16
      %v1758 = vrot.slane %v1756, 4
      %v1759 = vor.u32 %v1758, %v1754
      %v1760 = vrot.slane %v1759, 4
      %v1762 = vshrl.u32 %v1405, 16
      %v1764 = vrot.slane %v1762, 4
      %v1765 = vrot.slane %v1764, 4
      %v1767 = vshll.u32 %v1406, 16
      %v1769 = vrot.slane %v1767, 5
      %v1770 = vsel %vm1435, %v1765, %v1769
      %v1771 = vshrl.u32 %v1406, 16
      %v1773 = vrot.slane %v1771, 4
      %v1774 = vor.u32 %v1773, %v1769
      %v1775 = vrot.slane %v1774, 4
      %v1777 = vshll.u32 %v1407, 16
      %v1779 = vrot.slane %v1777, 5
      %v1780 = vsel %vm1435, %v1775, %v1779
      %v1781 = vshrl.u32 %v1407, 16
      %v1783 = vrot.slane %v1781, 4
      %v1784 = vor.u32 %v1783, %v1779
      %v1785 = vrot.slane %v1784, 4
      %v1787 = vshrl.u32 %v1409, 16
      %v1789 = vrot.slane %v1787, 4
      %v1790 = vrot.slane %v1789, 4
      %v1792 = vshll.u32 %v1410, 16
      %v1794 = vrot.slane %v1792, 5
      %v1795 = vsel %vm1435, %v1790, %v1794
      %v1796 = vshrl.u32 %v1410, 16
      %v1798 = vrot.slane %v1796, 4
      %v1799 = vor.u32 %v1798, %v1794
      %v1800 = vrot.slane %v1799, 4
      %v1802 = vshll.u32 %v1411, 16
      %v1804 = vrot.slane %v1802, 5
      %v1805 = vsel %vm1435, %v1800, %v1804
      %v1806 = vshrl.u32 %v1411, 16
      %v1808 = vrot.slane %v1806, 4
      %v1809 = vor.u32 %v1808, %v1804
      %v1810 = vrot.slane %v1809, 4
      %v1812 = vshrl.u32 %v1413, 16
      %v1814 = vrot.slane %v1812, 4
      %v1815 = vrot.slane %v1814, 4
      %v1817 = vshll.u32 %v1414, 16
      %v1819 = vrot.slane %v1817, 5
      %v1820 = vsel %vm1435, %v1815, %v1819
      %v1821 = vshrl.u32 %v1414, 16
      %v1823 = vrot.slane %v1821, 4
      %v1824 = vor.u32 %v1823, %v1819
      %v1825 = vrot.slane %v1824, 4
      %v1827 = vshll.u32 %v1415, 16
      %v1829 = vrot.slane %v1827, 5
      %v1830 = vsel %vm1435, %v1825, %v1829
      %v1831 = vshrl.u32 %v1415, 16
      %v1833 = vrot.slane %v1831, 4
      %v1834 = vor.u32 %v1833, %v1829
      %v1835 = vrot.slane %v1834, 4
      %v1837 = vshrl.u32 %v1417, 16
      %v1839 = vrot.slane %v1837, 4
      %v1840 = vrot.slane %v1839, 4
      %v1842 = vshll.u32 %v1418, 16
      %v1844 = vrot.slane %v1842, 5
      %v1845 = vsel %vm1435, %v1840, %v1844
      %v1846 = vshrl.u32 %v1418, 16
      %v1848 = vrot.slane %v1846, 4
      %v1849 = vor.u32 %v1848, %v1844
      %v1850 = vrot.slane %v1849, 4
      %v1852 = vshll.u32 %v1419, 16
      %v1854 = vrot.slane %v1852, 5
      %v1855 = vsel %vm1435, %v1850, %v1854
      %v1856 = vshrl.u32 %v1419, 16
      %v1858 = vrot.slane %v1856, 4
      %v1859 = vor.u32 %v1858, %v1854
      %v1860 = vrot.slane %v1859, 4
      %v1862 = vshrl.u32 %v1421, 16
      %v1864 = vrot.slane %v1862, 4
      %v1865 = vrot.slane %v1864, 4
      %v1867 = vshll.u32 %v1422, 16
      %v1869 = vrot.slane %v1867, 5
      %v1870 = vsel %vm1435, %v1865, %v1869
      %v1871 = vshrl.u32 %v1422, 16
      %v1873 = vrot.slane %v1871, 4
      %v1874 = vor.u32 %v1873, %v1869
      %v1875 = vrot.slane %v1874, 4
      %v1877 = vshll.u32 %v1423, 16
      %v1879 = vrot.slane %v1877, 5
      %v1880 = vsel %vm1435, %v1875, %v1879
      %v1881 = vshrl.u32 %v1423, 16
      %v1883 = vrot.slane %v1881, 4
      %v1884 = vor.u32 %v1883, %v1879
      %v1885 = vrot.slane %v1884, 4
      %v1887 = vshrl.u32 %v1425, 16
      %v1889 = vrot.slane %v1887, 4
      %v1890 = vrot.slane %v1889, 4
      %v1892 = vshll.u32 %v1426, 16
      %v1894 = vrot.slane %v1892, 5
      %v1895 = vsel %vm1435, %v1890, %v1894
      %v1896 = vshrl.u32 %v1426, 16
      %v1898 = vrot.slane %v1896, 4
      %v1899 = vor.u32 %v1898, %v1894
      %v1900 = vrot.slane %v1899, 4
      %v1902 = vshll.u32 %v1427, 16
      %v1904 = vrot.slane %v1902, 5
      %v1905 = vsel %vm1435, %v1900, %v1904
      %v1906 = vshrl.u32 %v1427, 16
      %v1908 = vrot.slane %v1906, 4
      %v1909 = vor.u32 %v1908, %v1904
      %v1910 = vrot.slane %v1909, 4
      %v1912 = vshrl.u32 %v1429, 16
      %v1914 = vrot.slane %v1912, 4
      %v1915 = vrot.slane %v1914, 4
      %v1917 = vshll.u32 %v1430, 16
      %v1919 = vrot.slane %v1917, 5
      %v1920 = vsel %vm1435, %v1915, %v1919
      %v1921 = vshrl.u32 %v1430, 16
      %v1923 = vrot.slane %v1921, 4
      %v1924 = vor.u32 %v1923, %v1919
      %v1925 = vrot.slane %v1924, 4
      %v1927 = vshll.u32 %v1431, 16
      %v1929 = vrot.slane %v1927, 5
      %v1930 = vsel %vm1435, %v1925, %v1929
      %v1931 = vshrl.u32 %v1431, 16
      %v1933 = vrot.slane %v1931, 4
      %v1934 = vor.u32 %v1933, %v1929
      %v1935 = vrot.slane %v1934, 4
      %v1996 = vmax.bf16 %v1353, %v1445
      %v1997 = vmax.bf16 %v1354, %v1455
      %v1998 = vmax.bf16 %v1355, %v1460
      %v1999 = vmax.bf16 %v1357, %v1470
      %v2000 = vmax.bf16 %v1358, %v1480
      %v2001 = vmax.bf16 %v1359, %v1485
      %v2002 = vmax.bf16 %v1361, %v1495
      %v2003 = vmax.bf16 %v1362, %v1505
      %v2004 = vmax.bf16 %v1363, %v1510
      %v2005 = vmax.bf16 %v1365, %v1520
      %v2006 = vmax.bf16 %v1366, %v1530
      %v2007 = vmax.bf16 %v1367, %v1535
      %v2008 = vmax.bf16 %v1369, %v1545
      %v2009 = vmax.bf16 %v1370, %v1555
      %v2010 = vmax.bf16 %v1371, %v1560
      %v2011 = vmax.bf16 %v1373, %v1570
      %v2012 = vmax.bf16 %v1374, %v1580
      %v2013 = vmax.bf16 %v1375, %v1585
      %v2014 = vmax.bf16 %v1377, %v1595
      %v2015 = vmax.bf16 %v1378, %v1605
      %v2016 = vmax.bf16 %v1379, %v1610
      %v2017 = vmax.bf16 %v1381, %v1620
      %v2018 = vmax.bf16 %v1382, %v1630
      %v2019 = vmax.bf16 %v1383, %v1635
      %v2020 = vmax.bf16 %v1385, %v1645
      %v2021 = vmax.bf16 %v1386, %v1655
      %v2022 = vmax.bf16 %v1387, %v1660
      %v2023 = vmax.bf16 %v1389, %v1670
      %v2024 = vmax.bf16 %v1390, %v1680
      %v2025 = vmax.bf16 %v1391, %v1685
      %v2026 = vmax.bf16 %v1393, %v1695
      %v2027 = vmax.bf16 %v1394, %v1705
      %v2028 = vmax.bf16 %v1395, %v1710
      %v2029 = vmax.bf16 %v1397, %v1720
      %v2030 = vmax.bf16 %v1398, %v1730
      %v2031 = vmax.bf16 %v1399, %v1735
      %v2032 = vmax.bf16 %v1401, %v1745
      %v2033 = vmax.bf16 %v1402, %v1755
      %v2034 = vmax.bf16 %v1403, %v1760
      %v2035 = vmax.bf16 %v1405, %v1770
      %v2036 = vmax.bf16 %v1406, %v1780
      %v2037 = vmax.bf16 %v1407, %v1785
      %v2038 = vmax.bf16 %v1409, %v1795
      %v2039 = vmax.bf16 %v1410, %v1805
      %v2040 = vmax.bf16 %v1411, %v1810
      %v2041 = vmax.bf16 %v1413, %v1820
      %v2042 = vmax.bf16 %v1414, %v1830
      %v2043 = vmax.bf16 %v1415, %v1835
      %v2044 = vmax.bf16 %v1417, %v1845
      %v2045 = vmax.bf16 %v1418, %v1855
      %v2046 = vmax.bf16 %v1419, %v1860
      %v2047 = vmax.bf16 %v1421, %v1870
      %v2048 = vmax.bf16 %v1422, %v1880
      %v2049 = vmax.bf16 %v1423, %v1885
      %v2050 = vmax.bf16 %v1425, %v1895
      %v2051 = vmax.bf16 %v1426, %v1905
      %v2052 = vmax.bf16 %v1427, %v1910
      %v2053 = vmax.bf16 %v1429, %v1920
      %v2054 = vmax.bf16 %v1430, %v1930
      %v2055 = vmax.bf16 %v1431, %v1935
      %vm2096 = vcmask 1042432
      %vm2097 = vcmask 1046532
      %vm2098 = vmor %vm2096, %vm2097
      %v2099 = vrot.slane %v1354, 5
      %v2100 = vrot.slane %v2099, 4
      %v2101 = vrot.slane %v1355, 5
      %v2102 = vsel %vm2098, %v2100, %v2101
      %v2103 = vrot.slane %v2101, 4
      %v2104 = vrot.slane %v1358, 5
      %v2105 = vrot.slane %v2104, 4
      %v2106 = vrot.slane %v1359, 5
      %v2107 = vsel %vm2098, %v2105, %v2106
      %v2108 = vrot.slane %v2106, 4
      %v2109 = vrot.slane %v1362, 5
      %v2110 = vrot.slane %v2109, 4
      %v2111 = vrot.slane %v1363, 5
      %v2112 = vsel %vm2098, %v2110, %v2111
      %v2113 = vrot.slane %v2111, 4
      %v2114 = vrot.slane %v1366, 5
      %v2115 = vrot.slane %v2114, 4
      %v2116 = vrot.slane %v1367, 5
      %v2117 = vsel %vm2098, %v2115, %v2116
      %v2118 = vrot.slane %v2116, 4
      %v2119 = vrot.slane %v1370, 5
      %v2120 = vrot.slane %v2119, 4
      %v2121 = vrot.slane %v1371, 5
      %v2122 = vsel %vm2098, %v2120, %v2121
      %v2123 = vrot.slane %v2121, 4
      %v2124 = vrot.slane %v1374, 5
      %v2125 = vrot.slane %v2124, 4
      %v2126 = vrot.slane %v1375, 5
      %v2127 = vsel %vm2098, %v2125, %v2126
      %v2128 = vrot.slane %v2126, 4
      %v2129 = vrot.slane %v1378, 5
      %v2130 = vrot.slane %v2129, 4
      %v2131 = vrot.slane %v1379, 5
      %v2132 = vsel %vm2098, %v2130, %v2131
      %v2133 = vrot.slane %v2131, 4
      %v2134 = vrot.slane %v1382, 5
      %v2135 = vrot.slane %v2134, 4
      %v2136 = vrot.slane %v1383, 5
      %v2137 = vsel %vm2098, %v2135, %v2136
      %v2138 = vrot.slane %v2136, 4
      %v2139 = vrot.slane %v1386, 5
      %v2140 = vrot.slane %v2139, 4
      %v2141 = vrot.slane %v1387, 5
      %v2142 = vsel %vm2098, %v2140, %v2141
      %v2143 = vrot.slane %v2141, 4
      %v2144 = vrot.slane %v1390, 5
      %v2145 = vrot.slane %v2144, 4
      %v2146 = vrot.slane %v1391, 5
      %v2147 = vsel %vm2098, %v2145, %v2146
      %v2148 = vrot.slane %v2146, 4
      %v2149 = vrot.slane %v1394, 5
      %v2150 = vrot.slane %v2149, 4
      %v2151 = vrot.slane %v1395, 5
      %v2152 = vsel %vm2098, %v2150, %v2151
      %v2153 = vrot.slane %v2151, 4
      %v2154 = vrot.slane %v1398, 5
      %v2155 = vrot.slane %v2154, 4
      %v2156 = vrot.slane %v1399, 5
      %v2157 = vsel %vm2098, %v2155, %v2156
      %v2158 = vrot.slane %v2156, 4
      %v2159 = vrot.slane %v1402, 5
      %v2160 = vrot.slane %v2159, 4
      %v2161 = vrot.slane %v1403, 5
      %v2162 = vsel %vm2098, %v2160, %v2161
      %v2163 = vrot.slane %v2161, 4
      %v2164 = vrot.slane %v1406, 5
      %v2165 = vrot.slane %v2164, 4
      %v2166 = vrot.slane %v1407, 5
      %v2167 = vsel %vm2098, %v2165, %v2166
      %v2168 = vrot.slane %v2166, 4
      %v2169 = vrot.slane %v1410, 5
      %v2170 = vrot.slane %v2169, 4
      %v2171 = vrot.slane %v1411, 5
      %v2172 = vsel %vm2098, %v2170, %v2171
      %v2173 = vrot.slane %v2171, 4
      %v2174 = vrot.slane %v1414, 5
      %v2175 = vrot.slane %v2174, 4
      %v2176 = vrot.slane %v1415, 5
      %v2177 = vsel %vm2098, %v2175, %v2176
      %v2178 = vrot.slane %v2176, 4
      %v2179 = vrot.slane %v1418, 5
      %v2180 = vrot.slane %v2179, 4
      %v2181 = vrot.slane %v1419, 5
      %v2182 = vsel %vm2098, %v2180, %v2181
      %v2183 = vrot.slane %v2181, 4
      %v2184 = vrot.slane %v1422, 5
      %v2185 = vrot.slane %v2184, 4
      %v2186 = vrot.slane %v1423, 5
      %v2187 = vsel %vm2098, %v2185, %v2186
      %v2188 = vrot.slane %v2186, 4
      %v2189 = vrot.slane %v1426, 5
      %v2190 = vrot.slane %v2189, 4
      %v2191 = vrot.slane %v1427, 5
      %v2192 = vsel %vm2098, %v2190, %v2191
      %v2193 = vrot.slane %v2191, 4
      %v2194 = vrot.slane %v1430, 5
      %v2195 = vrot.slane %v2194, 4
      %v2196 = vrot.slane %v1431, 5
      %v2197 = vsel %vm2098, %v2195, %v2196
      %v2198 = vrot.slane %v2196, 4
      %v2259 = vmax.bf16 %v1996, %v2099
      %v2260 = vmax.bf16 %v1997, %v2102
      %v2261 = vmax.bf16 %v1998, %v2103
      %v2262 = vmax.bf16 %v1999, %v2104
      %v2263 = vmax.bf16 %v2000, %v2107
      %v2264 = vmax.bf16 %v2001, %v2108
      %v2265 = vmax.bf16 %v2002, %v2109
      %v2266 = vmax.bf16 %v2003, %v2112
      %v2267 = vmax.bf16 %v2004, %v2113
      %v2268 = vmax.bf16 %v2005, %v2114
      %v2269 = vmax.bf16 %v2006, %v2117
      %v2270 = vmax.bf16 %v2007, %v2118
      %v2271 = vmax.bf16 %v2008, %v2119
      %v2272 = vmax.bf16 %v2009, %v2122
      %v2273 = vmax.bf16 %v2010, %v2123
      %v2274 = vmax.bf16 %v2011, %v2124
      %v2275 = vmax.bf16 %v2012, %v2127
      %v2276 = vmax.bf16 %v2013, %v2128
      %v2277 = vmax.bf16 %v2014, %v2129
      %v2278 = vmax.bf16 %v2015, %v2132
      %v2279 = vmax.bf16 %v2016, %v2133
      %v2280 = vmax.bf16 %v2017, %v2134
      %v2281 = vmax.bf16 %v2018, %v2137
      %v2282 = vmax.bf16 %v2019, %v2138
      %v2283 = vmax.bf16 %v2020, %v2139
      %v2284 = vmax.bf16 %v2021, %v2142
      %v2285 = vmax.bf16 %v2022, %v2143
      %v2286 = vmax.bf16 %v2023, %v2144
      %v2287 = vmax.bf16 %v2024, %v2147
      %v2288 = vmax.bf16 %v2025, %v2148
      %v2289 = vmax.bf16 %v2026, %v2149
      %v2290 = vmax.bf16 %v2027, %v2152
      %v2291 = vmax.bf16 %v2028, %v2153
      %v2292 = vmax.bf16 %v2029, %v2154
      %v2293 = vmax.bf16 %v2030, %v2157
      %v2294 = vmax.bf16 %v2031, %v2158
      %v2295 = vmax.bf16 %v2032, %v2159
      %v2296 = vmax.bf16 %v2033, %v2162
      %v2297 = vmax.bf16 %v2034, %v2163
      %v2298 = vmax.bf16 %v2035, %v2164
      %v2299 = vmax.bf16 %v2036, %v2167
      %v2300 = vmax.bf16 %v2037, %v2168
      %v2301 = vmax.bf16 %v2038, %v2169
      %v2302 = vmax.bf16 %v2039, %v2172
      %v2303 = vmax.bf16 %v2040, %v2173
      %v2304 = vmax.bf16 %v2041, %v2174
      %v2305 = vmax.bf16 %v2042, %v2177
      %v2306 = vmax.bf16 %v2043, %v2178
      %v2307 = vmax.bf16 %v2044, %v2179
      %v2308 = vmax.bf16 %v2045, %v2182
      %v2309 = vmax.bf16 %v2046, %v2183
      %v2310 = vmax.bf16 %v2047, %v2184
      %v2311 = vmax.bf16 %v2048, %v2187
      %v2312 = vmax.bf16 %v2049, %v2188
      %v2313 = vmax.bf16 %v2050, %v2189
      %v2314 = vmax.bf16 %v2051, %v2192
      %v2315 = vmax.bf16 %v2052, %v2193
      %v2316 = vmax.bf16 %v2053, %v2194
      %v2317 = vmax.bf16 %v2054, %v2197
      %v2318 = vmax.bf16 %v2055, %v2198
      %vm2319 = vsmask.f32 2304
      %vm2320 = vsmask.f32 6416
      %vm2321 = vmor %vm2319, %vm2320
      %v2322 = vrot.slane %v1446, 5
      %v2323 = vrot.slane %v1442, 6
      %v2324 = vor.u32 %v2322, %v2323
      %v2325 = vrot.slane %v2324, 4
      %v2326 = vrot.slane %v1456, 5
      %v2327 = vrot.slane %v1452, 6
      %v2328 = vor.u32 %v2326, %v2327
      %v2329 = vsel %vm2321, %v2325, %v2328
      %v2330 = vrot.slane %v2328, 4
      %v2332 = vshll.u32 %v1356, 16
      %v2334 = vrot.slane %v2332, 6
      %v2335 = vsel %vm2321, %v2330, %v2334
      %v2336 = vrot.slane %v1471, 5
      %v2337 = vrot.slane %v1467, 6
      %v2338 = vor.u32 %v2336, %v2337
      %v2339 = vrot.slane %v2338, 4
      %v2340 = vrot.slane %v1481, 5
      %v2341 = vrot.slane %v1477, 6
      %v2342 = vor.u32 %v2340, %v2341
      %v2343 = vsel %vm2321, %v2339, %v2342
      %v2344 = vrot.slane %v2342, 4
      %v2346 = vshll.u32 %v1360, 16
      %v2348 = vrot.slane %v2346, 6
      %v2349 = vsel %vm2321, %v2344, %v2348
      %v2350 = vrot.slane %v1496, 5
      %v2351 = vrot.slane %v1492, 6
      %v2352 = vor.u32 %v2350, %v2351
      %v2353 = vrot.slane %v2352, 4
      %v2354 = vrot.slane %v1506, 5
      %v2355 = vrot.slane %v1502, 6
      %v2356 = vor.u32 %v2354, %v2355
      %v2357 = vsel %vm2321, %v2353, %v2356
      %v2358 = vrot.slane %v2356, 4
      %v2360 = vshll.u32 %v1364, 16
      %v2362 = vrot.slane %v2360, 6
      %v2363 = vsel %vm2321, %v2358, %v2362
      %v2364 = vrot.slane %v1521, 5
      %v2365 = vrot.slane %v1517, 6
      %v2366 = vor.u32 %v2364, %v2365
      %v2367 = vrot.slane %v2366, 4
      %v2368 = vrot.slane %v1531, 5
      %v2369 = vrot.slane %v1527, 6
      %v2370 = vor.u32 %v2368, %v2369
      %v2371 = vsel %vm2321, %v2367, %v2370
      %v2372 = vrot.slane %v2370, 4
      %v2374 = vshll.u32 %v1368, 16
      %v2376 = vrot.slane %v2374, 6
      %v2377 = vsel %vm2321, %v2372, %v2376
      %v2378 = vrot.slane %v1546, 5
      %v2379 = vrot.slane %v1542, 6
      %v2380 = vor.u32 %v2378, %v2379
      %v2381 = vrot.slane %v2380, 4
      %v2382 = vrot.slane %v1556, 5
      %v2383 = vrot.slane %v1552, 6
      %v2384 = vor.u32 %v2382, %v2383
      %v2385 = vsel %vm2321, %v2381, %v2384
      %v2386 = vrot.slane %v2384, 4
      %v2388 = vshll.u32 %v1372, 16
      %v2390 = vrot.slane %v2388, 6
      %v2391 = vsel %vm2321, %v2386, %v2390
      %v2392 = vrot.slane %v1571, 5
      %v2393 = vrot.slane %v1567, 6
      %v2394 = vor.u32 %v2392, %v2393
      %v2395 = vrot.slane %v2394, 4
      %v2396 = vrot.slane %v1581, 5
      %v2397 = vrot.slane %v1577, 6
      %v2398 = vor.u32 %v2396, %v2397
      %v2399 = vsel %vm2321, %v2395, %v2398
      %v2400 = vrot.slane %v2398, 4
      %v2402 = vshll.u32 %v1376, 16
      %v2404 = vrot.slane %v2402, 6
      %v2405 = vsel %vm2321, %v2400, %v2404
      %v2406 = vrot.slane %v1596, 5
      %v2407 = vrot.slane %v1592, 6
      %v2408 = vor.u32 %v2406, %v2407
      %v2409 = vrot.slane %v2408, 4
      %v2410 = vrot.slane %v1606, 5
      %v2411 = vrot.slane %v1602, 6
      %v2412 = vor.u32 %v2410, %v2411
      %v2413 = vsel %vm2321, %v2409, %v2412
      %v2414 = vrot.slane %v2412, 4
      %v2416 = vshll.u32 %v1380, 16
      %v2418 = vrot.slane %v2416, 6
      %v2419 = vsel %vm2321, %v2414, %v2418
      %v2420 = vrot.slane %v1621, 5
      %v2421 = vrot.slane %v1617, 6
      %v2422 = vor.u32 %v2420, %v2421
      %v2423 = vrot.slane %v2422, 4
      %v2424 = vrot.slane %v1631, 5
      %v2425 = vrot.slane %v1627, 6
      %v2426 = vor.u32 %v2424, %v2425
      %v2427 = vsel %vm2321, %v2423, %v2426
      %v2428 = vrot.slane %v2426, 4
      %v2430 = vshll.u32 %v1384, 16
      %v2432 = vrot.slane %v2430, 6
      %v2433 = vsel %vm2321, %v2428, %v2432
      %v2434 = vrot.slane %v1646, 5
      %v2435 = vrot.slane %v1642, 6
      %v2436 = vor.u32 %v2434, %v2435
      %v2437 = vrot.slane %v2436, 4
      %v2438 = vrot.slane %v1656, 5
      %v2439 = vrot.slane %v1652, 6
      %v2440 = vor.u32 %v2438, %v2439
      %v2441 = vsel %vm2321, %v2437, %v2440
      %v2442 = vrot.slane %v2440, 4
      %v2444 = vshll.u32 %v1388, 16
      %v2446 = vrot.slane %v2444, 6
      %v2447 = vsel %vm2321, %v2442, %v2446
      %v2448 = vrot.slane %v1671, 5
      %v2449 = vrot.slane %v1667, 6
      %v2450 = vor.u32 %v2448, %v2449
      %v2451 = vrot.slane %v2450, 4
      %v2452 = vrot.slane %v1681, 5
      %v2453 = vrot.slane %v1677, 6
      %v2454 = vor.u32 %v2452, %v2453
      %v2455 = vsel %vm2321, %v2451, %v2454
      %v2456 = vrot.slane %v2454, 4
      %v2458 = vshll.u32 %v1392, 16
      %v2460 = vrot.slane %v2458, 6
      %v2461 = vsel %vm2321, %v2456, %v2460
      %v2462 = vrot.slane %v1696, 5
      %v2463 = vrot.slane %v1692, 6
      %v2464 = vor.u32 %v2462, %v2463
      %v2465 = vrot.slane %v2464, 4
      %v2466 = vrot.slane %v1706, 5
      %v2467 = vrot.slane %v1702, 6
      %v2468 = vor.u32 %v2466, %v2467
      %v2469 = vsel %vm2321, %v2465, %v2468
      %v2470 = vrot.slane %v2468, 4
      %v2472 = vshll.u32 %v1396, 16
      %v2474 = vrot.slane %v2472, 6
      %v2475 = vsel %vm2321, %v2470, %v2474
      %v2476 = vrot.slane %v1721, 5
      %v2477 = vrot.slane %v1717, 6
      %v2478 = vor.u32 %v2476, %v2477
      %v2479 = vrot.slane %v2478, 4
      %v2480 = vrot.slane %v1731, 5
      %v2481 = vrot.slane %v1727, 6
      %v2482 = vor.u32 %v2480, %v2481
      %v2483 = vsel %vm2321, %v2479, %v2482
      %v2484 = vrot.slane %v2482, 4
      %v2486 = vshll.u32 %v1400, 16
      %v2488 = vrot.slane %v2486, 6
      %v2489 = vsel %vm2321, %v2484, %v2488
      %v2490 = vrot.slane %v1746, 5
      %v2491 = vrot.slane %v1742, 6
      %v2492 = vor.u32 %v2490, %v2491
      %v2493 = vrot.slane %v2492, 4
      %v2494 = vrot.slane %v1756, 5
      %v2495 = vrot.slane %v1752, 6
      %v2496 = vor.u32 %v2494, %v2495
      %v2497 = vsel %vm2321, %v2493, %v2496
      %v2498 = vrot.slane %v2496, 4
      %v2500 = vshll.u32 %v1404, 16
      %v2502 = vrot.slane %v2500, 6
      %v2503 = vsel %vm2321, %v2498, %v2502
      %v2504 = vrot.slane %v1771, 5
      %v2505 = vrot.slane %v1767, 6
      %v2506 = vor.u32 %v2504, %v2505
      %v2507 = vrot.slane %v2506, 4
      %v2508 = vrot.slane %v1781, 5
      %v2509 = vrot.slane %v1777, 6
      %v2510 = vor.u32 %v2508, %v2509
      %v2511 = vsel %vm2321, %v2507, %v2510
      %v2512 = vrot.slane %v2510, 4
      %v2514 = vshll.u32 %v1408, 16
      %v2516 = vrot.slane %v2514, 6
      %v2517 = vsel %vm2321, %v2512, %v2516
      %v2518 = vrot.slane %v1796, 5
      %v2519 = vrot.slane %v1792, 6
      %v2520 = vor.u32 %v2518, %v2519
      %v2521 = vrot.slane %v2520, 4
      %v2522 = vrot.slane %v1806, 5
      %v2523 = vrot.slane %v1802, 6
      %v2524 = vor.u32 %v2522, %v2523
      %v2525 = vsel %vm2321, %v2521, %v2524
      %v2526 = vrot.slane %v2524, 4
      %v2528 = vshll.u32 %v1412, 16
      %v2530 = vrot.slane %v2528, 6
      %v2531 = vsel %vm2321, %v2526, %v2530
      %v2532 = vrot.slane %v1821, 5
      %v2533 = vrot.slane %v1817, 6
      %v2534 = vor.u32 %v2532, %v2533
      %v2535 = vrot.slane %v2534, 4
      %v2536 = vrot.slane %v1831, 5
      %v2537 = vrot.slane %v1827, 6
      %v2538 = vor.u32 %v2536, %v2537
      %v2539 = vsel %vm2321, %v2535, %v2538
      %v2540 = vrot.slane %v2538, 4
      %v2542 = vshll.u32 %v1416, 16
      %v2544 = vrot.slane %v2542, 6
      %v2545 = vsel %vm2321, %v2540, %v2544
      %v2546 = vrot.slane %v1846, 5
      %v2547 = vrot.slane %v1842, 6
      %v2548 = vor.u32 %v2546, %v2547
      %v2549 = vrot.slane %v2548, 4
      %v2550 = vrot.slane %v1856, 5
      %v2551 = vrot.slane %v1852, 6
      %v2552 = vor.u32 %v2550, %v2551
      %v2553 = vsel %vm2321, %v2549, %v2552
      %v2554 = vrot.slane %v2552, 4
      %v2556 = vshll.u32 %v1420, 16
      %v2558 = vrot.slane %v2556, 6
      %v2559 = vsel %vm2321, %v2554, %v2558
      %v2560 = vrot.slane %v1871, 5
      %v2561 = vrot.slane %v1867, 6
      %v2562 = vor.u32 %v2560, %v2561
      %v2563 = vrot.slane %v2562, 4
      %v2564 = vrot.slane %v1881, 5
      %v2565 = vrot.slane %v1877, 6
      %v2566 = vor.u32 %v2564, %v2565
      %v2567 = vsel %vm2321, %v2563, %v2566
      %v2568 = vrot.slane %v2566, 4
      %v2570 = vshll.u32 %v1424, 16
      %v2572 = vrot.slane %v2570, 6
      %v2573 = vsel %vm2321, %v2568, %v2572
      %v2574 = vrot.slane %v1896, 5
      %v2575 = vrot.slane %v1892, 6
      %v2576 = vor.u32 %v2574, %v2575
      %v2577 = vrot.slane %v2576, 4
      %v2578 = vrot.slane %v1906, 5
      %v2579 = vrot.slane %v1902, 6
      %v2580 = vor.u32 %v2578, %v2579
      %v2581 = vsel %vm2321, %v2577, %v2580
      %v2582 = vrot.slane %v2580, 4
      %v2584 = vshll.u32 %v1428, 16
      %v2586 = vrot.slane %v2584, 6
      %v2587 = vsel %vm2321, %v2582, %v2586
      %v2588 = vrot.slane %v1921, 5
      %v2589 = vrot.slane %v1917, 6
      %v2590 = vor.u32 %v2588, %v2589
      %v2591 = vrot.slane %v2590, 4
      %v2592 = vrot.slane %v1931, 5
      %v2593 = vrot.slane %v1927, 6
      %v2594 = vor.u32 %v2592, %v2593
      %v2595 = vsel %vm2321, %v2591, %v2594
      %v2596 = vrot.slane %v2594, 4
      %v2598 = vshll.u32 %v1432, 16
      %v2600 = vrot.slane %v2598, 6
      %v2601 = vsel %vm2321, %v2596, %v2600
      %v2662 = vmax.bf16 %v2259, %v2324
      %v2663 = vmax.bf16 %v2260, %v2329
      %v2664 = vmax.bf16 %v2261, %v2335
      %v2665 = vmax.bf16 %v2262, %v2338
      %v2666 = vmax.bf16 %v2263, %v2343
      %v2667 = vmax.bf16 %v2264, %v2349
      %v2668 = vmax.bf16 %v2265, %v2352
      %v2669 = vmax.bf16 %v2266, %v2357
      %v2670 = vmax.bf16 %v2267, %v2363
      %v2671 = vmax.bf16 %v2268, %v2366
      %v2672 = vmax.bf16 %v2269, %v2371
      %v2673 = vmax.bf16 %v2270, %v2377
      %v2674 = vmax.bf16 %v2271, %v2380
      %v2675 = vmax.bf16 %v2272, %v2385
      %v2676 = vmax.bf16 %v2273, %v2391
      %v2677 = vmax.bf16 %v2274, %v2394
      %v2678 = vmax.bf16 %v2275, %v2399
      %v2679 = vmax.bf16 %v2276, %v2405
      %v2680 = vmax.bf16 %v2277, %v2408
      %v2681 = vmax.bf16 %v2278, %v2413
      %v2682 = vmax.bf16 %v2279, %v2419
      %v2683 = vmax.bf16 %v2280, %v2422
      %v2684 = vmax.bf16 %v2281, %v2427
      %v2685 = vmax.bf16 %v2282, %v2433
      %v2686 = vmax.bf16 %v2283, %v2436
      %v2687 = vmax.bf16 %v2284, %v2441
      %v2688 = vmax.bf16 %v2285, %v2447
      %v2689 = vmax.bf16 %v2286, %v2450
      %v2690 = vmax.bf16 %v2287, %v2455
      %v2691 = vmax.bf16 %v2288, %v2461
      %v2692 = vmax.bf16 %v2289, %v2464
      %v2693 = vmax.bf16 %v2290, %v2469
      %v2694 = vmax.bf16 %v2291, %v2475
      %v2695 = vmax.bf16 %v2292, %v2478
      %v2696 = vmax.bf16 %v2293, %v2483
      %v2697 = vmax.bf16 %v2294, %v2489
      %v2698 = vmax.bf16 %v2295, %v2492
      %v2699 = vmax.bf16 %v2296, %v2497
      %v2700 = vmax.bf16 %v2297, %v2503
      %v2701 = vmax.bf16 %v2298, %v2506
      %v2702 = vmax.bf16 %v2299, %v2511
      %v2703 = vmax.bf16 %v2300, %v2517
      %v2704 = vmax.bf16 %v2301, %v2520
      %v2705 = vmax.bf16 %v2302, %v2525
      %v2706 = vmax.bf16 %v2303, %v2531
      %v2707 = vmax.bf16 %v2304, %v2534
      %v2708 = vmax.bf16 %v2305, %v2539
      %v2709 = vmax.bf16 %v2306, %v2545
      %v2710 = vmax.bf16 %v2307, %v2548
      %v2711 = vmax.bf16 %v2308, %v2553
      %v2712 = vmax.bf16 %v2309, %v2559
      %v2713 = vmax.bf16 %v2310, %v2562
      %v2714 = vmax.bf16 %v2311, %v2567
      %v2715 = vmax.bf16 %v2312, %v2573
      %v2716 = vmax.bf16 %v2313, %v2576
      %v2717 = vmax.bf16 %v2314, %v2581
      %v2718 = vmax.bf16 %v2315, %v2587
      %v2719 = vmax.bf16 %v2316, %v2590
      %v2720 = vmax.bf16 %v2317, %v2595
      %v2721 = vmax.bf16 %v2318, %v2601
      %vm2742 = vcmask 1041408
      %vm2743 = vcmask 1045508
      %vm2744 = vmor %vm2742, %vm2743
      %v2745 = vrot.slane %v1354, 6
      %v2746 = vrot.slane %v2745, 4
      %v2747 = vrot.slane %v1355, 6
      %v2748 = vsel %vm2744, %v2746, %v2747
      %v2749 = vrot.slane %v2747, 4
      %v2750 = vrot.slane %v1356, 6
      %v2751 = vsel %vm2744, %v2749, %v2750
      %v2752 = vrot.slane %v1358, 6
      %v2753 = vrot.slane %v2752, 4
      %v2754 = vrot.slane %v1359, 6
      %v2755 = vsel %vm2744, %v2753, %v2754
      %v2756 = vrot.slane %v2754, 4
      %v2757 = vrot.slane %v1360, 6
      %v2758 = vsel %vm2744, %v2756, %v2757
      %v2759 = vrot.slane %v1362, 6
      %v2760 = vrot.slane %v2759, 4
      %v2761 = vrot.slane %v1363, 6
      %v2762 = vsel %vm2744, %v2760, %v2761
      %v2763 = vrot.slane %v2761, 4
      %v2764 = vrot.slane %v1364, 6
      %v2765 = vsel %vm2744, %v2763, %v2764
      %v2766 = vrot.slane %v1366, 6
      %v2767 = vrot.slane %v2766, 4
      %v2768 = vrot.slane %v1367, 6
      %v2769 = vsel %vm2744, %v2767, %v2768
      %v2770 = vrot.slane %v2768, 4
      %v2771 = vrot.slane %v1368, 6
      %v2772 = vsel %vm2744, %v2770, %v2771
      %v2773 = vrot.slane %v1370, 6
      %v2774 = vrot.slane %v2773, 4
      %v2775 = vrot.slane %v1371, 6
      %v2776 = vsel %vm2744, %v2774, %v2775
      %v2777 = vrot.slane %v2775, 4
      %v2778 = vrot.slane %v1372, 6
      %v2779 = vsel %vm2744, %v2777, %v2778
      %v2780 = vrot.slane %v1374, 6
      %v2781 = vrot.slane %v2780, 4
      %v2782 = vrot.slane %v1375, 6
      %v2783 = vsel %vm2744, %v2781, %v2782
      %v2784 = vrot.slane %v2782, 4
      %v2785 = vrot.slane %v1376, 6
      %v2786 = vsel %vm2744, %v2784, %v2785
      %v2787 = vrot.slane %v1378, 6
      %v2788 = vrot.slane %v2787, 4
      %v2789 = vrot.slane %v1379, 6
      %v2790 = vsel %vm2744, %v2788, %v2789
      %v2791 = vrot.slane %v2789, 4
      %v2792 = vrot.slane %v1380, 6
      %v2793 = vsel %vm2744, %v2791, %v2792
      %v2794 = vrot.slane %v1382, 6
      %v2795 = vrot.slane %v2794, 4
      %v2796 = vrot.slane %v1383, 6
      %v2797 = vsel %vm2744, %v2795, %v2796
      %v2798 = vrot.slane %v2796, 4
      %v2799 = vrot.slane %v1384, 6
      %v2800 = vsel %vm2744, %v2798, %v2799
      %v2801 = vrot.slane %v1386, 6
      %v2802 = vrot.slane %v2801, 4
      %v2803 = vrot.slane %v1387, 6
      %v2804 = vsel %vm2744, %v2802, %v2803
      %v2805 = vrot.slane %v2803, 4
      %v2806 = vrot.slane %v1388, 6
      %v2807 = vsel %vm2744, %v2805, %v2806
      %v2808 = vrot.slane %v1390, 6
      %v2809 = vrot.slane %v2808, 4
      %v2810 = vrot.slane %v1391, 6
      %v2811 = vsel %vm2744, %v2809, %v2810
      %v2812 = vrot.slane %v2810, 4
      %v2813 = vrot.slane %v1392, 6
      %v2814 = vsel %vm2744, %v2812, %v2813
      %v2815 = vrot.slane %v1394, 6
      %v2816 = vrot.slane %v2815, 4
      %v2817 = vrot.slane %v1395, 6
      %v2818 = vsel %vm2744, %v2816, %v2817
      %v2819 = vrot.slane %v2817, 4
      %v2820 = vrot.slane %v1396, 6
      %v2821 = vsel %vm2744, %v2819, %v2820
      %v2822 = vrot.slane %v1398, 6
      %v2823 = vrot.slane %v2822, 4
      %v2824 = vrot.slane %v1399, 6
      %v2825 = vsel %vm2744, %v2823, %v2824
      %v2826 = vrot.slane %v2824, 4
      %v2827 = vrot.slane %v1400, 6
      %v2828 = vsel %vm2744, %v2826, %v2827
      %v2829 = vrot.slane %v1402, 6
      %v2830 = vrot.slane %v2829, 4
      %v2831 = vrot.slane %v1403, 6
      %v2832 = vsel %vm2744, %v2830, %v2831
      %v2833 = vrot.slane %v2831, 4
      %v2834 = vrot.slane %v1404, 6
      %v2835 = vsel %vm2744, %v2833, %v2834
      %v2836 = vrot.slane %v1406, 6
      %v2837 = vrot.slane %v2836, 4
      %v2838 = vrot.slane %v1407, 6
      %v2839 = vsel %vm2744, %v2837, %v2838
      %v2840 = vrot.slane %v2838, 4
      %v2841 = vrot.slane %v1408, 6
      %v2842 = vsel %vm2744, %v2840, %v2841
      %v2843 = vrot.slane %v1410, 6
      %v2844 = vrot.slane %v2843, 4
      %v2845 = vrot.slane %v1411, 6
      %v2846 = vsel %vm2744, %v2844, %v2845
      %v2847 = vrot.slane %v2845, 4
      %v2848 = vrot.slane %v1412, 6
      %v2849 = vsel %vm2744, %v2847, %v2848
      %v2850 = vrot.slane %v1414, 6
      %v2851 = vrot.slane %v2850, 4
      %v2852 = vrot.slane %v1415, 6
      %v2853 = vsel %vm2744, %v2851, %v2852
      %v2854 = vrot.slane %v2852, 4
      %v2855 = vrot.slane %v1416, 6
      %v2856 = vsel %vm2744, %v2854, %v2855
      %v2857 = vrot.slane %v1418, 6
      %v2858 = vrot.slane %v2857, 4
      %v2859 = vrot.slane %v1419, 6
      %v2860 = vsel %vm2744, %v2858, %v2859
      %v2861 = vrot.slane %v2859, 4
      %v2862 = vrot.slane %v1420, 6
      %v2863 = vsel %vm2744, %v2861, %v2862
      %v2864 = vrot.slane %v1422, 6
      %v2865 = vrot.slane %v2864, 4
      %v2866 = vrot.slane %v1423, 6
      %v2867 = vsel %vm2744, %v2865, %v2866
      %v2868 = vrot.slane %v2866, 4
      %v2869 = vrot.slane %v1424, 6
      %v2870 = vsel %vm2744, %v2868, %v2869
      %v2871 = vrot.slane %v1426, 6
      %v2872 = vrot.slane %v2871, 4
      %v2873 = vrot.slane %v1427, 6
      %v2874 = vsel %vm2744, %v2872, %v2873
      %v2875 = vrot.slane %v2873, 4
      %v2876 = vrot.slane %v1428, 6
      %v2877 = vsel %vm2744, %v2875, %v2876
      %v2878 = vrot.slane %v1430, 6
      %v2879 = vrot.slane %v2878, 4
      %v2880 = vrot.slane %v1431, 6
      %v2881 = vsel %vm2744, %v2879, %v2880
      %v2882 = vrot.slane %v2880, 4
      %v2883 = vrot.slane %v1432, 6
      %v2884 = vsel %vm2744, %v2882, %v2883
      %v2945 = vmax.bf16 %v2662, %v2745
      %v2946 = vmax.bf16 %v2663, %v2748
      %v2947 = vmax.bf16 %v2664, %v2751
      %v2948 = vmax.bf16 %v2665, %v2752
      %v2949 = vmax.bf16 %v2666, %v2755
      %v2950 = vmax.bf16 %v2667, %v2758
      %v2951 = vmax.bf16 %v2668, %v2759
      %v2952 = vmax.bf16 %v2669, %v2762
      %v2953 = vmax.bf16 %v2670, %v2765
      %v2954 = vmax.bf16 %v2671, %v2766
      %v2955 = vmax.bf16 %v2672, %v2769
      %v2956 = vmax.bf16 %v2673, %v2772
      %v2957 = vmax.bf16 %v2674, %v2773
      %v2958 = vmax.bf16 %v2675, %v2776
      %v2959 = vmax.bf16 %v2676, %v2779
      %v2960 = vmax.bf16 %v2677, %v2780
      %v2961 = vmax.bf16 %v2678, %v2783
      %v2962 = vmax.bf16 %v2679, %v2786
      %v2963 = vmax.bf16 %v2680, %v2787
      %v2964 = vmax.bf16 %v2681, %v2790
      %v2965 = vmax.bf16 %v2682, %v2793
      %v2966 = vmax.bf16 %v2683, %v2794
      %v2967 = vmax.bf16 %v2684, %v2797
      %v2968 = vmax.bf16 %v2685, %v2800
      %v2969 = vmax.bf16 %v2686, %v2801
      %v2970 = vmax.bf16 %v2687, %v2804
      %v2971 = vmax.bf16 %v2688, %v2807
      %v2972 = vmax.bf16 %v2689, %v2808
      %v2973 = vmax.bf16 %v2690, %v2811
      %v2974 = vmax.bf16 %v2691, %v2814
      %v2975 = vmax.bf16 %v2692, %v2815
      %v2976 = vmax.bf16 %v2693, %v2818
      %v2977 = vmax.bf16 %v2694, %v2821
      %v2978 = vmax.bf16 %v2695, %v2822
      %v2979 = vmax.bf16 %v2696, %v2825
      %v2980 = vmax.bf16 %v2697, %v2828
      %v2981 = vmax.bf16 %v2698, %v2829
      %v2982 = vmax.bf16 %v2699, %v2832
      %v2983 = vmax.bf16 %v2700, %v2835
      %v2984 = vmax.bf16 %v2701, %v2836
      %v2985 = vmax.bf16 %v2702, %v2839
      %v2986 = vmax.bf16 %v2703, %v2842
      %v2987 = vmax.bf16 %v2704, %v2843
      %v2988 = vmax.bf16 %v2705, %v2846
      %v2989 = vmax.bf16 %v2706, %v2849
      %v2990 = vmax.bf16 %v2707, %v2850
      %v2991 = vmax.bf16 %v2708, %v2853
      %v2992 = vmax.bf16 %v2709, %v2856
      %v2993 = vmax.bf16 %v2710, %v2857
      %v2994 = vmax.bf16 %v2711, %v2860
      %v2995 = vmax.bf16 %v2712, %v2863
      %v2996 = vmax.bf16 %v2713, %v2864
      %v2997 = vmax.bf16 %v2714, %v2867
      %v2998 = vmax.bf16 %v2715, %v2870
      %v2999 = vmax.bf16 %v2716, %v2871
      %v3000 = vmax.bf16 %v2717, %v2874
      %v3001 = vmax.bf16 %v2718, %v2877
      %v3002 = vmax.bf16 %v2719, %v2878
      %v3003 = vmax.bf16 %v2720, %v2881
      %v3004 = vmax.bf16 %v2721, %v2884
      %v3005 = vmax.bf16 %v2945, %v2948
      %v3006 = vmax.bf16 %v2946, %v2949
      %v3007 = vmax.bf16 %v2947, %v2950
      %v3008 = vmax.bf16 %v2948, %v2951
      %v3009 = vmax.bf16 %v2949, %v2952
      %v3010 = vmax.bf16 %v2950, %v2953
      %v3011 = vmax.bf16 %v2951, %v2954
      %v3012 = vmax.bf16 %v2952, %v2955
      %v3013 = vmax.bf16 %v2953, %v2956
      %v3014 = vmax.bf16 %v2954, %v2957
      %v3015 = vmax.bf16 %v2955, %v2958
      %v3016 = vmax.bf16 %v2956, %v2959
      %v3017 = vmax.bf16 %v2957, %v2960
      %v3018 = vmax.bf16 %v2958, %v2961
      %v3019 = vmax.bf16 %v2959, %v2962
      %v3020 = vmax.bf16 %v2960, %v2963
      %v3021 = vmax.bf16 %v2961, %v2964
      %v3022 = vmax.bf16 %v2962, %v2965
      %v3023 = vmax.bf16 %v2963, %v2966
      %v3024 = vmax.bf16 %v2964, %v2967
      %v3025 = vmax.bf16 %v2965, %v2968
      %v3026 = vmax.bf16 %v2966, %v2969
      %v3027 = vmax.bf16 %v2967, %v2970
      %v3028 = vmax.bf16 %v2968, %v2971
      %v3029 = vmax.bf16 %v2969, %v2972
      %v3030 = vmax.bf16 %v2970, %v2973
      %v3031 = vmax.bf16 %v2971, %v2974
      %v3032 = vmax.bf16 %v2972, %v2975
      %v3033 = vmax.bf16 %v2973, %v2976
      %v3034 = vmax.bf16 %v2974, %v2977
      %v3035 = vmax.bf16 %v2975, %v2978
      %v3036 = vmax.bf16 %v2976, %v2979
      %v3037 = vmax.bf16 %v2977, %v2980
      %v3038 = vmax.bf16 %v2978, %v2981
      %v3039 = vmax.bf16 %v2979, %v2982
      %v3040 = vmax.bf16 %v2980, %v2983
      %v3041 = vmax.bf16 %v2981, %v2984
      %v3042 = vmax.bf16 %v2982, %v2985
      %v3043 = vmax.bf16 %v2983, %v2986
      %v3044 = vmax.bf16 %v2984, %v2987
      %v3045 = vmax.bf16 %v2985, %v2988
      %v3046 = vmax.bf16 %v2986, %v2989
      %v3047 = vmax.bf16 %v2987, %v2990
      %v3048 = vmax.bf16 %v2988, %v2991
      %v3049 = vmax.bf16 %v2989, %v2992
      %v3050 = vmax.bf16 %v2990, %v2993
      %v3051 = vmax.bf16 %v2991, %v2994
      %v3052 = vmax.bf16 %v2992, %v2995
      %v3053 = vmax.bf16 %v3005, %v2951
      %v3054 = vmax.bf16 %v3006, %v2952
      %v3055 = vmax.bf16 %v3007, %v2953
      %v3056 = vmax.bf16 %v3008, %v2954
      %v3057 = vmax.bf16 %v3009, %v2955
      %v3058 = vmax.bf16 %v3010, %v2956
      %v3059 = vmax.bf16 %v3011, %v2957
      %v3060 = vmax.bf16 %v3012, %v2958
      %v3061 = vmax.bf16 %v3013, %v2959
      %v3062 = vmax.bf16 %v3014, %v2960
      %v3063 = vmax.bf16 %v3015, %v2961
      %v3064 = vmax.bf16 %v3016, %v2962
      %v3065 = vmax.bf16 %v3017, %v2963
      %v3066 = vmax.bf16 %v3018, %v2964
      %v3067 = vmax.bf16 %v3019, %v2965
      %v3068 = vmax.bf16 %v3020, %v2966
      %v3069 = vmax.bf16 %v3021, %v2967
      %v3070 = vmax.bf16 %v3022, %v2968
      %v3071 = vmax.bf16 %v3023, %v2969
      %v3072 = vmax.bf16 %v3024, %v2970
      %v3073 = vmax.bf16 %v3025, %v2971
      %v3074 = vmax.bf16 %v3026, %v2972
      %v3075 = vmax.bf16 %v3027, %v2973
      %v3076 = vmax.bf16 %v3028, %v2974
      %v3077 = vmax.bf16 %v3029, %v2975
      %v3078 = vmax.bf16 %v3030, %v2976
      %v3079 = vmax.bf16 %v3031, %v2977
      %v3080 = vmax.bf16 %v3032, %v2978
      %v3081 = vmax.bf16 %v3033, %v2979
      %v3082 = vmax.bf16 %v3034, %v2980
      %v3083 = vmax.bf16 %v3035, %v2981
      %v3084 = vmax.bf16 %v3036, %v2982
      %v3085 = vmax.bf16 %v3037, %v2983
      %v3086 = vmax.bf16 %v3038, %v2984
      %v3087 = vmax.bf16 %v3039, %v2985
      %v3088 = vmax.bf16 %v3040, %v2986
      %v3089 = vmax.bf16 %v3041, %v2987
      %v3090 = vmax.bf16 %v3042, %v2988
      %v3091 = vmax.bf16 %v3043, %v2989
      %v3092 = vmax.bf16 %v3044, %v2990
      %v3093 = vmax.bf16 %v3045, %v2991
      %v3094 = vmax.bf16 %v3046, %v2992
      %v3095 = vmax.bf16 %v3047, %v2993
      %v3096 = vmax.bf16 %v3048, %v2994
      %v3097 = vmax.bf16 %v3049, %v2995
      %v3098 = vmax.bf16 %v3050, %v2996
      %v3099 = vmax.bf16 %v3051, %v2997
      %v3100 = vmax.bf16 %v3052, %v2998
      %v3101 = vmax.bf16 %v3053, %v2954
      %v3102 = vmax.bf16 %v3054, %v2955
      %v3103 = vmax.bf16 %v3055, %v2956
      %v3104 = vmax.bf16 %v3056, %v2957
      %v3105 = vmax.bf16 %v3057, %v2958
      %v3106 = vmax.bf16 %v3058, %v2959
      %v3107 = vmax.bf16 %v3059, %v2960
      %v3108 = vmax.bf16 %v3060, %v2961
      %v3109 = vmax.bf16 %v3061, %v2962
      %v3110 = vmax.bf16 %v3062, %v2963
      %v3111 = vmax.bf16 %v3063, %v2964
      %v3112 = vmax.bf16 %v3064, %v2965
      %v3113 = vmax.bf16 %v3065, %v2966
      %v3114 = vmax.bf16 %v3066, %v2967
      %v3115 = vmax.bf16 %v3067, %v2968
      %v3116 = vmax.bf16 %v3068, %v2969
      %v3117 = vmax.bf16 %v3069, %v2970
      %v3118 = vmax.bf16 %v3070, %v2971
      %v3119 = vmax.bf16 %v3071, %v2972
      %v3120 = vmax.bf16 %v3072, %v2973
      %v3121 = vmax.bf16 %v3073, %v2974
      %v3122 = vmax.bf16 %v3074, %v2975
      %v3123 = vmax.bf16 %v3075, %v2976
      %v3124 = vmax.bf16 %v3076, %v2977
      %v3125 = vmax.bf16 %v3077, %v2978
      %v3126 = vmax.bf16 %v3078, %v2979
      %v3127 = vmax.bf16 %v3079, %v2980
      %v3128 = vmax.bf16 %v3080, %v2981
      %v3129 = vmax.bf16 %v3081, %v2982
      %v3130 = vmax.bf16 %v3082, %v2983
      %v3131 = vmax.bf16 %v3083, %v2984
      %v3132 = vmax.bf16 %v3084, %v2985
      %v3133 = vmax.bf16 %v3085, %v2986
      %v3134 = vmax.bf16 %v3086, %v2987
      %v3135 = vmax.bf16 %v3087, %v2988
      %v3136 = vmax.bf16 %v3088, %v2989
      %v3137 = vmax.bf16 %v3089, %v2990
      %v3138 = vmax.bf16 %v3090, %v2991
      %v3139 = vmax.bf16 %v3091, %v2992
      %v3140 = vmax.bf16 %v3092, %v2993
      %v3141 = vmax.bf16 %v3093, %v2994
      %v3142 = vmax.bf16 %v3094, %v2995
      %v3143 = vmax.bf16 %v3095, %v2996
      %v3144 = vmax.bf16 %v3096, %v2997
      %v3145 = vmax.bf16 %v3097, %v2998
      %v3146 = vmax.bf16 %v3098, %v2999
      %v3147 = vmax.bf16 %v3099, %v3000
      %v3148 = vmax.bf16 %v3100, %v3001
      %v3149 = vmax.bf16 %v3101, %v2957
      %v3150 = vmax.bf16 %v3102, %v2958
      %v3151 = vmax.bf16 %v3103, %v2959
      %v3152 = vmax.bf16 %v3104, %v2960
      %v3153 = vmax.bf16 %v3105, %v2961
      %v3154 = vmax.bf16 %v3106, %v2962
      %v3155 = vmax.bf16 %v3107, %v2963
      %v3156 = vmax.bf16 %v3108, %v2964
      %v3157 = vmax.bf16 %v3109, %v2965
      %v3158 = vmax.bf16 %v3110, %v2966
      %v3159 = vmax.bf16 %v3111, %v2967
      %v3160 = vmax.bf16 %v3112, %v2968
      %v3161 = vmax.bf16 %v3113, %v2969
      %v3162 = vmax.bf16 %v3114, %v2970
      %v3163 = vmax.bf16 %v3115, %v2971
      %v3164 = vmax.bf16 %v3116, %v2972
      %v3165 = vmax.bf16 %v3117, %v2973
      %v3166 = vmax.bf16 %v3118, %v2974
      %v3167 = vmax.bf16 %v3119, %v2975
      %v3168 = vmax.bf16 %v3120, %v2976
      %v3169 = vmax.bf16 %v3121, %v2977
      %v3170 = vmax.bf16 %v3122, %v2978
      %v3171 = vmax.bf16 %v3123, %v2979
      %v3172 = vmax.bf16 %v3124, %v2980
      %v3173 = vmax.bf16 %v3125, %v2981
      %v3174 = vmax.bf16 %v3126, %v2982
      %v3175 = vmax.bf16 %v3127, %v2983
      %v3176 = vmax.bf16 %v3128, %v2984
      %v3177 = vmax.bf16 %v3129, %v2985
      %v3178 = vmax.bf16 %v3130, %v2986
      %v3179 = vmax.bf16 %v3131, %v2987
      %v3180 = vmax.bf16 %v3132, %v2988
      %v3181 = vmax.bf16 %v3133, %v2989
      %v3182 = vmax.bf16 %v3134, %v2990
      %v3183 = vmax.bf16 %v3135, %v2991
      %v3184 = vmax.bf16 %v3136, %v2992
      %v3185 = vmax.bf16 %v3137, %v2993
      %v3186 = vmax.bf16 %v3138, %v2994
      %v3187 = vmax.bf16 %v3139, %v2995
      %v3188 = vmax.bf16 %v3140, %v2996
      %v3189 = vmax.bf16 %v3141, %v2997
      %v3190 = vmax.bf16 %v3142, %v2998
      %v3191 = vmax.bf16 %v3143, %v2999
      %v3192 = vmax.bf16 %v3144, %v3000
      %v3193 = vmax.bf16 %v3145, %v3001
      %v3194 = vmax.bf16 %v3146, %v3002
      %v3195 = vmax.bf16 %v3147, %v3003
      %v3196 = vmax.bf16 %v3148, %v3004
      %v3197 = vld [vmem:[#allocation3] sm:$0xff]
      %v3198 = vld [vmem:[#allocation3 + $0x8] sm:$0xff]
      %v3199 = vld [vmem:[#allocation3 + $0x10] sm:$0xff]
      %v3200 = vld [vmem:[#allocation3 + $0x18] sm:$0xff]
      %v3201 = vld [vmem:[#allocation3 + $0x20] sm:$0xff]
      %v3202 = vld [vmem:[#allocation3 + $0x28] sm:$0xff]
      %v3203 = vld [vmem:[#allocation3 + $0x30] sm:$0xff]
      %v3204 = vld [vmem:[#allocation3 + $0x38] sm:$0xff]
      %v3205 = vld [vmem:[#allocation3 + $0x40] sm:$0xff]
      %v3206 = vld [vmem:[#allocation3 + $0x48] sm:$0xff]
      %v3207 = vld [vmem:[#allocation3 + $0x50] sm:$0xff]
      %v3208 = vld [vmem:[#allocation3 + $0x58] sm:$0xff]
      %v3209 = vld [vmem:[#allocation3 + $0x60] sm:$0xff]
      %v3210 = vld [vmem:[#allocation3 + $0x68] sm:$0xff]
      %v3211 = vld [vmem:[#allocation3 + $0x70] sm:$0xff]
      %v3212 = vld [vmem:[#allocation3 + $0x78] sm:$0xff]
      %v3213 = vld [vmem:[#allocation3 + $0x80] sm:$0xff]
      %v3214 = vld [vmem:[#allocation3 + $0x88] sm:$0xff]
      %v3215 = vld [vmem:[#allocation3 + $0x90] sm:$0xff]
      %v3216 = vld [vmem:[#allocation3 + $0x98] sm:$0xff]
      %v3217 = vld [vmem:[#allocation3 + $0xa0] sm:$0xff]
      %v3218 = vld [vmem:[#allocation3 + $0xa8] sm:$0xff]
      %v3219 = vld [vmem:[#allocation3 + $0xb0] sm:$0xff]
      %v3220 = vld [vmem:[#allocation3 + $0xb8] sm:$0xff]
      %v3221 = vld [vmem:[#allocation3 + $0xc0] sm:$0xff]
      %v3222 = vld [vmem:[#allocation3 + $0xc8] sm:$0xff]
      %v3223 = vld [vmem:[#allocation3 + $0xd0] sm:$0xff]
      %v3224 = vld [vmem:[#allocation3 + $0xd8] sm:$0xff]
      %v3225 = vld [vmem:[#allocation3 + $0xe0] sm:$0xff]
      %v3226 = vld [vmem:[#allocation3 + $0xe8] sm:$0xff]
      %v3227 = vld [vmem:[#allocation3 + $0xf0] sm:$0xff]
      %v3228 = vld [vmem:[#allocation3 + $0xf8] sm:$0xff]
      %vm3277 = vcmask 1040384
      %vm3278 = vcmask 1044484
      %vm3279 = vmor %vm3277, %vm3278
      %v3280 = vrot.slane %v3149, 7
      %v3281 = vrot.slane %v3280, 4
      %v3282 = vrot.slane %v3150, 7
      %v3283 = vsel %vm3279, %v3281, %v3282
      %v3284 = vrot.slane %v3282, 4
      %v3285 = vrot.slane %v3151, 7
      %v3286 = vsel %vm3279, %v3284, %v3285
      %v3287 = vrot.slane %v3152, 7
      %v3288 = vrot.slane %v3287, 4
      %v3289 = vrot.slane %v3153, 7
      %v3290 = vsel %vm3279, %v3288, %v3289
      %v3291 = vrot.slane %v3289, 4
      %v3292 = vrot.slane %v3154, 7
      %v3293 = vsel %vm3279, %v3291, %v3292
      %v3294 = vrot.slane %v3155, 7
      %v3295 = vrot.slane %v3294, 4
      %v3296 = vrot.slane %v3156, 7
      %v3297 = vsel %vm3279, %v3295, %v3296
      %v3298 = vrot.slane %v3296, 4
      %v3299 = vrot.slane %v3157, 7
      %v3300 = vsel %vm3279, %v3298, %v3299
      %v3301 = vrot.slane %v3158, 7
      %v3302 = vrot.slane %v3301, 4
      %v3303 = vrot.slane %v3159, 7
      %v3304 = vsel %vm3279, %v3302, %v3303
      %v3305 = vrot.slane %v3303, 4
      %v3306 = vrot.slane %v3160, 7
      %v3307 = vsel %vm3279, %v3305, %v3306
      %v3308 = vrot.slane %v3161, 7
      %v3309 = vrot.slane %v3308, 4
      %v3310 = vrot.slane %v3162, 7
      %v3311 = vsel %vm3279, %v3309, %v3310
      %v3312 = vrot.slane %v3310, 4
      %v3313 = vrot.slane %v3163, 7
      %v3314 = vsel %vm3279, %v3312, %v3313
      %v3315 = vrot.slane %v3164, 7
      %v3316 = vrot.slane %v3315, 4
      %v3317 = vrot.slane %v3165, 7
      %v3318 = vsel %vm3279, %v3316, %v3317
      %v3319 = vrot.slane %v3317, 4
      %v3320 = vrot.slane %v3166, 7
      %v3321 = vsel %vm3279, %v3319, %v3320
      %v3322 = vrot.slane %v3167, 7
      %v3323 = vrot.slane %v3322, 4
      %v3324 = vrot.slane %v3168, 7
      %v3325 = vsel %vm3279, %v3323, %v3324
      %v3326 = vrot.slane %v3324, 4
      %v3327 = vrot.slane %v3169, 7
      %v3328 = vsel %vm3279, %v3326, %v3327
      %v3329 = vrot.slane %v3170, 7
      %v3330 = vrot.slane %v3329, 4
      %v3331 = vrot.slane %v3171, 7
      %v3332 = vsel %vm3279, %v3330, %v3331
      %v3333 = vrot.slane %v3331, 4
      %v3334 = vrot.slane %v3172, 7
      %v3335 = vsel %vm3279, %v3333, %v3334
      %v3336 = vrot.slane %v3173, 7
      %v3337 = vrot.slane %v3336, 4
      %v3338 = vrot.slane %v3174, 7
      %v3339 = vsel %vm3279, %v3337, %v3338
      %v3340 = vrot.slane %v3338, 4
      %v3341 = vrot.slane %v3175, 7
      %v3342 = vsel %vm3279, %v3340, %v3341
      %v3343 = vrot.slane %v3176, 7
      %v3344 = vrot.slane %v3343, 4
      %v3345 = vrot.slane %v3177, 7
      %v3346 = vsel %vm3279, %v3344, %v3345
      %v3347 = vrot.slane %v3345, 4
      %v3348 = vrot.slane %v3178, 7
      %v3349 = vsel %vm3279, %v3347, %v3348
      %v3350 = vrot.slane %v3179, 7
      %v3351 = vrot.slane %v3350, 4
      %v3352 = vrot.slane %v3180, 7
      %v3353 = vsel %vm3279, %v3351, %v3352
      %v3354 = vrot.slane %v3352, 4
      %v3355 = vrot.slane %v3181, 7
      %v3356 = vsel %vm3279, %v3354, %v3355
      %v3357 = vrot.slane %v3182, 7
      %v3358 = vrot.slane %v3357, 4
      %v3359 = vrot.slane %v3183, 7
      %v3360 = vsel %vm3279, %v3358, %v3359
      %v3361 = vrot.slane %v3359, 4
      %v3362 = vrot.slane %v3184, 7
      %v3363 = vsel %vm3279, %v3361, %v3362
      %v3364 = vrot.slane %v3185, 7
      %v3365 = vrot.slane %v3364, 4
      %v3366 = vrot.slane %v3186, 7
      %v3367 = vsel %vm3279, %v3365, %v3366
      %v3368 = vrot.slane %v3366, 4
      %v3369 = vrot.slane %v3187, 7
      %v3370 = vsel %vm3279, %v3368, %v3369
      %v3371 = vrot.slane %v3188, 7
      %v3372 = vrot.slane %v3371, 4
      %v3373 = vrot.slane %v3189, 7
      %v3374 = vsel %vm3279, %v3372, %v3373
      %v3375 = vrot.slane %v3373, 4
      %v3376 = vrot.slane %v3190, 7
      %v3377 = vsel %vm3279, %v3375, %v3376
      %v3378 = vrot.slane %v3191, 7
      %v3379 = vrot.slane %v3378, 4
      %v3380 = vrot.slane %v3192, 7
      %v3381 = vsel %vm3279, %v3379, %v3380
      %v3382 = vrot.slane %v3380, 4
      %v3383 = vrot.slane %v3193, 7
      %v3384 = vsel %vm3279, %v3382, %v3383
      %v3385 = vrot.slane %v3194, 7
      %v3386 = vrot.slane %v3385, 4
      %v3387 = vrot.slane %v3195, 7
      %v3388 = vsel %vm3279, %v3386, %v3387
      %v3389 = vrot.slane %v3387, 4
      %v3390 = vrot.slane %v3196, 7
      %v3391 = vsel %vm3279, %v3389, %v3390
      %s3392 = scalar_lea.vmem %s4, 64
      %v3393 = vld [vmem:[%s3392] sm:$0xf]
      %v3394 = vld [vmem:[%s3392 + $0x4] sm:$0xf]
      %v3395 = vld [vmem:[%s3392 + $0x8] sm:$0xf]
      %v3396 = vld [vmem:[%s3392 + $0xc] sm:$0xf]
      %v3397 = vld [vmem:[%s3392 + $0x10] sm:$0xf]
      %v3398 = vld [vmem:[%s3392 + $0x14] sm:$0xf]
      %v3399 = vld [vmem:[%s3392 + $0x18] sm:$0xf]
      %v3400 = vld [vmem:[%s3392 + $0x1c] sm:$0xf]
      %v3401 = vld [vmem:[%s3392 + $0x20] sm:$0xf]
      %v3402 = vld [vmem:[%s3392 + $0x24] sm:$0xf]
      %v3403 = vld [vmem:[%s3392 + $0x28] sm:$0xf]
      %v3404 = vld [vmem:[%s3392 + $0x2c] sm:$0xf]
      %v3405 = vld [vmem:[%s3392 + $0x30] sm:$0xf]
      %v3406 = vld [vmem:[%s3392 + $0x34] sm:$0xf]
      %v3407 = vld [vmem:[%s3392 + $0x38] sm:$0xf]
      %v3408 = vld [vmem:[%s3392 + $0x3c] sm:$0xf]
      %v3409 = vunpack.c.l.b16 %v3283
      %v3410 = vunpack.c.l.b16 %v3286
      %v3411 = vunpack.c.l.b16 %v3290
      %v3412 = vunpack.c.l.b16 %v3293
      %v3413 = vunpack.c.l.b16 %v3297
      %v3414 = vunpack.c.l.b16 %v3300
      %v3415 = vunpack.c.l.b16 %v3304
      %v3416 = vunpack.c.l.b16 %v3307
      %v3417 = vunpack.c.l.b16 %v3311
      %v3418 = vunpack.c.l.b16 %v3314
      %v3419 = vunpack.c.l.b16 %v3318
      %v3420 = vunpack.c.l.b16 %v3321
      %v3421 = vunpack.c.l.b16 %v3325
      %v3422 = vunpack.c.l.b16 %v3328
      %v3423 = vunpack.c.l.b16 %v3332
      %v3424 = vunpack.c.l.b16 %v3335
      %v3425 = vunpack.c.l.b16 %v3339
      %v3426 = vunpack.c.l.b16 %v3342
      %v3427 = vunpack.c.l.b16 %v3346
      %v3428 = vunpack.c.l.b16 %v3349
      %v3429 = vunpack.c.l.b16 %v3353
      %v3430 = vunpack.c.l.b16 %v3356
      %v3431 = vunpack.c.l.b16 %v3360
      %v3432 = vunpack.c.l.b16 %v3363
      %v3433 = vunpack.c.l.b16 %v3367
      %v3434 = vunpack.c.l.b16 %v3370
      %v3435 = vunpack.c.l.b16 %v3374
      %v3436 = vunpack.c.l.b16 %v3377
      %v3437 = vunpack.c.l.b16 %v3381
      %v3438 = vunpack.c.l.b16 %v3384
      %v3439 = vunpack.c.l.b16 %v3388
      %v3440 = vunpack.c.l.b16 %v3391
      %v3441 = vpack.c.b16 %v3410, %v3409
      %v3442 = vpack.c.b16 %v3412, %v3411
      %v3443 = vpack.c.b16 %v3414, %v3413
      %v3444 = vpack.c.b16 %v3416, %v3415
      %v3445 = vpack.c.b16 %v3418, %v3417
      %v3446 = vpack.c.b16 %v3420, %v3419
      %v3447 = vpack.c.b16 %v3422, %v3421
      %v3448 = vpack.c.b16 %v3424, %v3423
      %v3449 = vpack.c.b16 %v3426, %v3425
      %v3450 = vpack.c.b16 %v3428, %v3427
      %v3451 = vpack.c.b16 %v3430, %v3429
      %v3452 = vpack.c.b16 %v3432, %v3431
      %v3453 = vpack.c.b16 %v3434, %v3433
      %v3454 = vpack.c.b16 %v3436, %v3435
      %v3455 = vpack.c.b16 %v3438, %v3437
      %v3456 = vpack.c.b16 %v3440, %v3439
      %v3489 = vunpack.c.l.b16 %v3393
      %v3490 = vunpack.c.l.b16 %v3394
      %v3491 = vunpack.c.l.b16 %v3395
      %v3492 = vunpack.c.l.b16 %v3396
      %v3493 = vunpack.c.l.b16 %v3397
      %v3494 = vunpack.c.l.b16 %v3398
      %v3495 = vunpack.c.l.b16 %v3399
      %v3496 = vunpack.c.l.b16 %v3400
      %v3497 = vunpack.c.l.b16 %v3401
      %v3498 = vunpack.c.l.b16 %v3402
      %v3499 = vunpack.c.l.b16 %v3403
      %v3500 = vunpack.c.l.b16 %v3404
      %v3501 = vunpack.c.l.b16 %v3405
      %v3502 = vunpack.c.l.b16 %v3406
      %v3503 = vunpack.c.l.b16 %v3407
      %v3504 = vunpack.c.l.b16 %v3408
      %v3505 = vpack.c.b16 %v3490, %v3489
      %v3506 = vpack.c.b16 %v3492, %v3491
      %v3507 = vpack.c.b16 %v3494, %v3493
      %v3508 = vpack.c.b16 %v3496, %v3495
      %v3509 = vpack.c.b16 %v3498, %v3497
      %v3510 = vpack.c.b16 %v3500, %v3499
      %v3511 = vpack.c.b16 %v3502, %v3501
      %v3512 = vpack.c.b16 %v3504, %v3503
      %3521 = vmatprep.subr.bf16.mxu0 0
      %3522 = vmatpush1.bf16.msra.mxu0 %v3505
      %3523 = vmatprep.subr.bf16.mxu0 0
      %3524 = vmatpush1.bf16.msra.mxu0 %v3506
      %3525 = vmatprep.subr.bf16.mxu0 0
      %3526 = vmatpush1.bf16.msra.mxu0 %v3507
      %3527 = vmatprep.subr.bf16.mxu0 0
      %3528 = vmatpush1.bf16.msra.mxu0 %v3508
      %3529 = vmatprep.subr.bf16.mxu0 0
      %3530 = vmatpush1.bf16.msra.mxu0 %v3509
      %3531 = vmatprep.subr.bf16.mxu0 0
      %3532 = vmatpush1.bf16.msra.mxu0 %v3510
      %3533 = vmatprep.subr.bf16.mxu0 0
      %3534 = vmatpush1.bf16.msra.mxu0 %v3511
      %3535 = vmatprep.subr.bf16.mxu0 0
      %3536 = vmatpush1.bf16.msra.mxu0 %v3512
      %3537 = vmatprep.subr.bf16.mxu0 0
      %3538 = vmatpush1.bf16.msra.mxu0 0
      %3539 = vmatprep.subr.bf16.mxu0 0
      %3540 = vmatpush1.bf16.msra.mxu0 0
      %3541 = vmatprep.subr.bf16.mxu0 0
      %3542 = vmatpush1.bf16.msra.mxu0 0
      %3543 = vmatprep.subr.bf16.mxu0 0
      %3544 = vmatpush1.bf16.msra.mxu0 0
      %3545 = vmatprep.subr.bf16.mxu0 0
      %3546 = vmatpush1.bf16.msra.mxu0 0
      %3547 = vmatprep.subr.bf16.mxu0 0
      %3548 = vmatpush1.bf16.msra.mxu0 0
      %3549 = vmatprep.subr.bf16.mxu0 0
      %3550 = vmatpush1.bf16.msra.mxu0 0
      %3551 = vmatprep.subr.bf16.mxu0 0
      %3552 = vmatpush1.bf16.msra.mxu0 0
      %3553 = vmatprep.mubr.bf16.mxu0 0
      %3554 = vmatmul.mubr.bf16.gmra.mrb[0].mxu0 %v3441
      %v3555 = vpop.f32.mrb[0].mxu0
      %v3556 = vadd.f32 0.0, %v3555
      %v3557 = vpop.f32.mrb[0].mxu0
      %v3558 = vpop.f32.mrb[0].mxu0
      %v3559 = vadd.f32 0.0, %v3558
      %v3560 = vpop.f32.mrb[0].mxu0
      %3561 = vmatprep.mubr.bf16.mxu0 0
      %3562 = vmatmul.mubr.bf16.gmra.mrb[0].mxu0 %v3442
      %v3563 = vpop.f32.mrb[0].mxu0
      %v3564 = vadd.f32 0.0, %v3563
      %v3565 = vpop.f32.mrb[0].mxu0
      %v3566 = vpop.f32.mrb[0].mxu0
      %v3567 = vadd.f32 0.0, %v3566
      %v3568 = vpop.f32.mrb[0].mxu0
      %3569 = vmatprep.mubr.bf16.mxu0 0
      %3570 = vmatmul.mubr.bf16.gmra.mrb[0].mxu0 %v3443
      %v3571 = vpop.f32.mrb[0].mxu0
      %v3572 = vadd.f32 0.0, %v3571
      %v3573 = vpop.f32.mrb[0].mxu0
      %v3574 = vpop.f32.mrb[0].mxu0
      %v3575 = vadd.f32 0.0, %v3574
      %v3576 = vpop.f32.mrb[0].mxu0
      %3577 = vmatprep.mubr.bf16.mxu0 0
      %3578 = vmatmul.mubr.bf16.gmra.mrb[0].mxu0 %v3444
      %v3579 = vpop.f32.mrb[0].mxu0
      %v3580 = vadd.f32 0.0, %v3579
      %v3581 = vpop.f32.mrb[0].mxu0
      %v3582 = vpop.f32.mrb[0].mxu0
      %v3583 = vadd.f32 0.0, %v3582
      %v3584 = vpop.f32.mrb[0].mxu0
      %3585 = vmatprep.mubr.bf16.mxu0 0
      %3586 = vmatmul.mubr.bf16.gmra.mrb[0].mxu0 %v3445
      %v3587 = vpop.f32.mrb[0].mxu0
      %v3588 = vadd.f32 0.0, %v3587
      %v3589 = vpop.f32.mrb[0].mxu0
      %v3590 = vpop.f32.mrb[0].mxu0
      %v3591 = vadd.f32 0.0, %v3590
      %v3592 = vpop.f32.mrb[0].mxu0
      %3593 = vmatprep.mubr.bf16.mxu0 0
      %3594 = vmatmul.mubr.bf16.gmra.mrb[0].mxu0 %v3446
      %v3595 = vpop.f32.mrb[0].mxu0
      %v3596 = vadd.f32 0.0, %v3595
      %v3597 = vpop.f32.mrb[0].mxu0
      %v3598 = vpop.f32.mrb[0].mxu0
      %v3599 = vadd.f32 0.0, %v3598
      %v3600 = vpop.f32.mrb[0].mxu0
      %3601 = vmatprep.mubr.bf16.mxu0 0
      %3602 = vmatmul.mubr.bf16.gmra.mrb[0].mxu0 %v3447
      %v3603 = vpop.f32.mrb[0].mxu0
      %v3604 = vadd.f32 0.0, %v3603
      %v3605 = vpop.f32.mrb[0].mxu0
      %v3606 = vpop.f32.mrb[0].mxu0
      %v3607 = vadd.f32 0.0, %v3606
      %v3608 = vpop.f32.mrb[0].mxu0
      %3609 = vmatprep.mubr.bf16.mxu0 0
      %3610 = vmatmul.mubr.bf16.gmra.mrb[0].mxu0 %v3448
      %v3611 = vpop.f32.mrb[0].mxu0
      %v3612 = vadd.f32 0.0, %v3611
      %v3613 = vpop.f32.mrb[0].mxu0
      %v3614 = vpop.f32.mrb[0].mxu0
      %v3615 = vadd.f32 0.0, %v3614
      %v3616 = vpop.f32.mrb[0].mxu0
      %3617 = vmatprep.mubr.bf16.mxu0 0
      %3618 = vmatmul.mubr.bf16.gmra.mrb[0].mxu0 %v3449
      %v3619 = vpop.f32.mrb[0].mxu0
      %v3620 = vadd.f32 0.0, %v3619
      %v3621 = vpop.f32.mrb[0].mxu0
      %v3622 = vpop.f32.mrb[0].mxu0
      %v3623 = vadd.f32 0.0, %v3622
      %v3624 = vpop.f32.mrb[0].mxu0
      %3625 = vmatprep.mubr.bf16.mxu0 0
      %3626 = vmatmul.mubr.bf16.gmra.mrb[0].mxu0 %v3450
      %v3627 = vpop.f32.mrb[0].mxu0
      %v3628 = vadd.f32 0.0, %v3627
      %v3629 = vpop.f32.mrb[0].mxu0
      %v3630 = vpop.f32.mrb[0].mxu0
      %v3631 = vadd.f32 0.0, %v3630
      %v3632 = vpop.f32.mrb[0].mxu0
      %3633 = vmatprep.mubr.bf16.mxu0 0
      %3634 = vmatmul.mubr.bf16.gmra.mrb[0].mxu0 %v3451
      %v3635 = vpop.f32.mrb[0].mxu0
      %v3636 = vadd.f32 0.0, %v3635
      %v3637 = vpop.f32.mrb[0].mxu0
      %v3638 = vpop.f32.mrb[0].mxu0
      %v3639 = vadd.f32 0.0, %v3638
      %v3640 = vpop.f32.mrb[0].mxu0
      %3641 = vmatprep.mubr.bf16.mxu0 0
      %3642 = vmatmul.mubr.bf16.gmra.mrb[0].mxu0 %v3452
      %v3643 = vpop.f32.mrb[0].mxu0
      %v3644 = vadd.f32 0.0, %v3643
      %v3645 = vpop.f32.mrb[0].mxu0
      %v3646 = vpop.f32.mrb[0].mxu0
      %v3647 = vadd.f32 0.0, %v3646
      %v3648 = vpop.f32.mrb[0].mxu0
      %3649 = vmatprep.mubr.bf16.mxu0 0
      %3650 = vmatmul.mubr.bf16.gmra.mrb[0].mxu0 %v3453
      %v3651 = vpop.f32.mrb[0].mxu0
      %v3652 = vadd.f32 0.0, %v3651
      %v3653 = vpop.f32.mrb[0].mxu0
      %v3654 = vpop.f32.mrb[0].mxu0
      %v3655 = vadd.f32 0.0, %v3654
      %v3656 = vpop.f32.mrb[0].mxu0
      %3657 = vmatprep.mubr.bf16.mxu0 0
      %3658 = vmatmul.mubr.bf16.gmra.mrb[0].mxu0 %v3454
      %v3659 = vpop.f32.mrb[0].mxu0
      %v3660 = vadd.f32 0.0, %v3659
      %v3661 = vpop.f32.mrb[0].mxu0
      %v3662 = vpop.f32.mrb[0].mxu0
      %v3663 = vadd.f32 0.0, %v3662
      %v3664 = vpop.f32.mrb[0].mxu0
      %3665 = vmatprep.mubr.bf16.mxu0 0
      %3666 = vmatmul.mubr.bf16.gmra.mrb[0].mxu0 %v3455
      %v3667 = vpop.f32.mrb[0].mxu0
      %v3668 = vadd.f32 0.0, %v3667
      %v3669 = vpop.f32.mrb[0].mxu0
      %v3670 = vpop.f32.mrb[0].mxu0
      %v3671 = vadd.f32 0.0, %v3670
      %v3672 = vpop.f32.mrb[0].mxu0
      %3673 = vmatprep.mubr.bf16.mxu0 0
      %3674 = vmatmul.mubr.bf16.gmra.mrb[0].mxu0 %v3456
      %v3675 = vpop.f32.mrb[0].mxu0
      %v3676 = vadd.f32 0.0, %v3675
      %v3677 = vpop.f32.mrb[0].mxu0
      %v3678 = vpop.f32.mrb[0].mxu0
      %v3679 = vadd.f32 0.0, %v3678
      %v3680 = vpop.f32.mrb[0].mxu0
      %3681 = vdwg.mxu0
      %v3682 = vadd.f32 %v3197, %v3556
      %v3683 = vadd.f32 %v3198, %v3559
      %v3684 = vadd.f32 %v3199, %v3564
      %v3685 = vadd.f32 %v3200, %v3567
      %v3686 = vadd.f32 %v3201, %v3572
      %v3687 = vadd.f32 %v3202, %v3575
      %v3688 = vadd.f32 %v3203, %v3580
      %v3689 = vadd.f32 %v3204, %v3583
      %v3690 = vadd.f32 %v3205, %v3588
      %v3691 = vadd.f32 %v3206, %v3591
      %v3692 = vadd.f32 %v3207, %v3596
      %v3693 = vadd.f32 %v3208, %v3599
      %v3694 = vadd.f32 %v3209, %v3604
      %v3695 = vadd.f32 %v3210, %v3607
      %v3696 = vadd.f32 %v3211, %v3612
      %v3697 = vadd.f32 %v3212, %v3615
      %v3698 = vadd.f32 %v3213, %v3620
      %v3699 = vadd.f32 %v3214, %v3623
      %v3700 = vadd.f32 %v3215, %v3628
      %v3701 = vadd.f32 %v3216, %v3631
      %v3702 = vadd.f32 %v3217, %v3636
      %v3703 = vadd.f32 %v3218, %v3639
      %v3704 = vadd.f32 %v3219, %v3644
      %v3705 = vadd.f32 %v3220, %v3647
      %v3706 = vadd.f32 %v3221, %v3652
      %v3707 = vadd.f32 %v3222, %v3655
      %v3708 = vadd.f32 %v3223, %v3660
      %v3709 = vadd.f32 %v3224, %v3663
      %v3710 = vadd.f32 %v3225, %v3668
      %v3711 = vadd.f32 %v3226, %v3671
      %v3712 = vadd.f32 %v3227, %v3676
      %v3713 = vadd.f32 %v3228, %v3679
      %3714 = vst [vmem:[#allocation3] sm:$0xff] %v3682
      %3715 = vst [vmem:[#allocation3 + $0x8] sm:$0xff] %v3683
      %3716 = vst [vmem:[#allocation3 + $0x10] sm:$0xff] %v3684
      %3717 = vst [vmem:[#allocation3 + $0x18] sm:$0xff] %v3685
      %3718 = vst [vmem:[#allocation3 + $0x20] sm:$0xff] %v3686
      %3719 = vst [vmem:[#allocation3 + $0x28] sm:$0xff] %v3687
      %3720 = vst [vmem:[#allocation3 + $0x30] sm:$0xff] %v3688
      %3721 = vst [vmem:[#allocation3 + $0x38] sm:$0xff] %v3689
      %3722 = vst [vmem:[#allocation3 + $0x40] sm:$0xff] %v3690
      %3723 = vst [vmem:[#allocation3 + $0x48] sm:$0xff] %v3691
      %3724 = vst [vmem:[#allocation3 + $0x50] sm:$0xff] %v3692
      %3725 = vst [vmem:[#allocation3 + $0x58] sm:$0xff] %v3693
      %3726 = vst [vmem:[#allocation3 + $0x60] sm:$0xff] %v3694
      %3727 = vst [vmem:[#allocation3 + $0x68] sm:$0xff] %v3695
      %3728 = vst [vmem:[#allocation3 + $0x70] sm:$0xff] %v3696
      %3729 = vst [vmem:[#allocation3 + $0x78] sm:$0xff] %v3697
      %3730 = vst [vmem:[#allocation3 + $0x80] sm:$0xff] %v3698
      %3731 = vst [vmem:[#allocation3 + $0x88] sm:$0xff] %v3699
      %3732 = vst [vmem:[#allocation3 + $0x90] sm:$0xff] %v3700
      %3733 = vst [vmem:[#allocation3 + $0x98] sm:$0xff] %v3701
      %3734 = vst [vmem:[#allocation3 + $0xa0] sm:$0xff] %v3702
      %3735 = vst [vmem:[#allocation3 + $0xa8] sm:$0xff] %v3703
      %3736 = vst [vmem:[#allocation3 + $0xb0] sm:$0xff] %v3704
      %3737 = vst [vmem:[#allocation3 + $0xb8] sm:$0xff] %v3705
      %3738 = vst [vmem:[#allocation3 + $0xc0] sm:$0xff] %v3706
      %3739 = vst [vmem:[#allocation3 + $0xc8] sm:$0xff] %v3707
      %3740 = vst [vmem:[#allocation3 + $0xd0] sm:$0xff] %v3708
      %3741 = vst [vmem:[#allocation3 + $0xd8] sm:$0xff] %v3709
      %3742 = vst [vmem:[#allocation3 + $0xe0] sm:$0xff] %v3710
      %3743 = vst [vmem:[#allocation3 + $0xe8] sm:$0xff] %v3711
      %3744 = vst [vmem:[#allocation3 + $0xf0] sm:$0xff] %v3712
      %3745 = vst [vmem:[#allocation3 + $0xf8] sm:$0xff] %v3713
      %3778 = vst [vmem:[%s1320 + $0x8] sm:$0xf] %v3283
      %3779 = vst [vmem:[%s1320 + $0xc] sm:$0xf] %v3286
      %3780 = vst [vmem:[%s1320 + $0x1c] sm:$0xf] %v3290
      %3781 = vst [vmem:[%s1320 + $0x20] sm:$0xf] %v3293
      %3782 = vst [vmem:[%s1320 + $0x30] sm:$0xf] %v3297
      %3783 = vst [vmem:[%s1320 + $0x34] sm:$0xf] %v3300
      %3784 = vst [vmem:[%s1320 + $0x44] sm:$0xf] %v3304
      %3785 = vst [vmem:[%s1320 + $0x48] sm:$0xf] %v3307
      %3786 = vst [vmem:[%s1320 + $0x58] sm:$0xf] %v3311
      %3787 = vst [vmem:[%s1320 + $0x5c] sm:$0xf] %v3314
      %3788 = vst [vmem:[%s1320 + $0x6c] sm:$0xf] %v3318
      %3789 = vst [vmem:[%s1320 + $0x70] sm:$0xf] %v3321
      %3790 = vst [vmem:[%s1320 + $0x80] sm:$0xf] %v3325
      %3791 = vst [vmem:[%s1320 + $0x84] sm:$0xf] %v3328
      %3792 = vst [vmem:[%s1320 + $0x94] sm:$0xf] %v3332
      %3793 = vst [vmem:[%s1320 + $0x98] sm:$0xf] %v3335
      %3794 = vst [vmem:[%s1320 + $0xa8] sm:$0xf] %v3339
      %3795 = vst [vmem:[%s1320 + $0xac] sm:$0xf] %v3342
      %3796 = vst [vmem:[%s1320 + $0xbc] sm:$0xf] %v3346
      %3797 = vst [vmem:[%s1320 + $0xc0] sm:$0xf] %v3349
      %3798 = vst [vmem:[%s1320 + $0xd0] sm:$0xf] %v3353
      %3799 = vst [vmem:[%s1320 + $0xd4] sm:$0xf] %v3356
      %3800 = vst [vmem:[%s1320 + $0xe4] sm:$0xf] %v3360
      %3801 = vst [vmem:[%s1320 + $0xe8] sm:$0xf] %v3363
      %3802 = vst [vmem:[%s1320 + $0xf8] sm:$0xf] %v3367
      %3803 = vst [vmem:[%s1320 + $0xfc] sm:$0xf] %v3370
      %3804 = vst [vmem:[%s1320 + $0x10c] sm:$0xf] %v3374
      %3805 = vst [vmem:[%s1320 + $0x110] sm:$0xf] %v3377
      %3806 = vst [vmem:[%s1320 + $0x120] sm:$0xf] %v3381
      %3807 = vst [vmem:[%s1320 + $0x124] sm:$0xf] %v3384
      %3808 = vst [vmem:[%s1320 + $0x134] sm:$0xf] %v3388
      %3809 = vst [vmem:[%s1320 + $0x138] sm:$0xf] %v3391
      %v3810 = vld [vmem:[#allocation2 + $0x4] sm:$0x8]
      %v3811 = vld [vmem:[#allocation2 + $0x8] sm:$0xf]
      %v3812 = vld [vmem:[#allocation2 + $0xc] sm:$0xf]
      %v3813 = vld [vmem:[#allocation2 + $0x10] sm:$0x1]
      %v3814 = vld [vmem:[#allocation2 + $0x18] sm:$0x8]
      %v3815 = vld [vmem:[#allocation2 + $0x1c] sm:$0xf]
      %v3816 = vld [vmem:[#allocation2 + $0x20] sm:$0xf]
      %v3817 = vld [vmem:[#allocation2 + $0x24] sm:$0x1]
      %v3818 = vld [vmem:[#allocation2 + $0x2c] sm:$0x8]
      %v3819 = vld [vmem:[#allocation2 + $0x30] sm:$0xf]
      %v3820 = vld [vmem:[#allocation2 + $0x34] sm:$0xf]
      %v3821 = vld [vmem:[#allocation2 + $0x38] sm:$0x1]
      %v3822 = vld [vmem:[#allocation2 + $0x40] sm:$0x8]
      %v3823 = vld [vmem:[#allocation2 + $0x44] sm:$0xf]
      %v3824 = vld [vmem:[#allocation2 + $0x48] sm:$0xf]
      %v3825 = vld [vmem:[#allocation2 + $0x4c] sm:$0x1]
      %v3826 = vld [vmem:[#allocation2 + $0x54] sm:$0x8]
      %v3827 = vld [vmem:[#allocation2 + $0x58] sm:$0xf]
      %v3828 = vld [vmem:[#allocation2 + $0x5c] sm:$0xf]
      %v3829 = vld [vmem:[#allocation2 + $0x60] sm:$0x1]
      %v3830 = vld [vmem:[#allocation2 + $0x68] sm:$0x8]
      %v3831 = vld [vmem:[#allocation2 + $0x6c] sm:$0xf]
      %v3832 = vld [vmem:[#allocation2 + $0x70] sm:$0xf]
      %v3833 = vld [vmem:[#allocation2 + $0x74] sm:$0x1]
      %v3834 = vld [vmem:[#allocation2 + $0x7c] sm:$0x8]
      %v3835 = vld [vmem:[#allocation2 + $0x80] sm:$0xf]
      %v3836 = vld [vmem:[#allocation2 + $0x84] sm:$0xf]
      %v3837 = vld [vmem:[#allocation2 + $0x88] sm:$0x1]
      %v3838 = vld [vmem:[#allocation2 + $0x90] sm:$0x8]
      %v3839 = vld [vmem:[#allocation2 + $0x94] sm:$0xf]
      %v3840 = vld [vmem:[#allocation2 + $0x98] sm:$0xf]
      %v3841 = vld [vmem:[#allocation2 + $0x9c] sm:$0x1]
      %v3842 = vld [vmem:[#allocation2 + $0xa4] sm:$0x8]
      %v3843 = vld [vmem:[#allocation2 + $0xa8] sm:$0xf]
      %v3844 = vld [vmem:[#allocation2 + $0xac] sm:$0xf]
      %v3845 = vld [vmem:[#allocation2 + $0xb0] sm:$0x1]
      %v3846 = vld [vmem:[#allocation2 + $0xb8] sm:$0x8]
      %v3847 = vld [vmem:[#allocation2 + $0xbc] sm:$0xf]
      %v3848 = vld [vmem:[#allocation2 + $0xc0] sm:$0xf]
      %v3849 = vld [vmem:[#allocation2 + $0xc4] sm:$0x1]
      %v3850 = vld [vmem:[#allocation2 + $0xcc] sm:$0x8]
      %v3851 = vld [vmem:[#allocation2 + $0xd0] sm:$0xf]
      %v3852 = vld [vmem:[#allocation2 + $0xd4] sm:$0xf]
      %v3853 = vld [vmem:[#allocation2 + $0xd8] sm:$0x1]
      %v3854 = vld [vmem:[#allocation2 + $0xe0] sm:$0x8]
      %v3855 = vld [vmem:[#allocation2 + $0xe4] sm:$0xf]
      %v3856 = vld [vmem:[#allocation2 + $0xe8] sm:$0xf]
      %v3857 = vld [vmem:[#allocation2 + $0xec] sm:$0x1]
      %v3858 = vld [vmem:[#allocation2 + $0xf4] sm:$0x8]
      %v3859 = vld [vmem:[#allocation2 + $0xf8] sm:$0xf]
      %v3860 = vld [vmem:[#allocation2 + $0xfc] sm:$0xf]
      %v3861 = vld [vmem:[#allocation2 + $0x100] sm:$0x1]
      %v3862 = vld [vmem:[#allocation2 + $0x108] sm:$0x8]
      %v3863 = vld [vmem:[#allocation2 + $0x10c] sm:$0xf]
      %v3864 = vld [vmem:[#allocation2 + $0x110] sm:$0xf]
      %v3865 = vld [vmem:[#allocation2 + $0x114] sm:$0x1]
      %v3866 = vld [vmem:[#allocation2 + $0x11c] sm:$0x8]
      %v3867 = vld [vmem:[#allocation2 + $0x120] sm:$0xf]
      %v3868 = vld [vmem:[#allocation2 + $0x124] sm:$0xf]
      %v3869 = vld [vmem:[#allocation2 + $0x128] sm:$0x1]
      %v3870 = vld [vmem:[#allocation2 + $0x130] sm:$0x8]
      %v3871 = vld [vmem:[#allocation2 + $0x134] sm:$0xf]
      %v3872 = vld [vmem:[#allocation2 + $0x138] sm:$0xf]
      %v3873 = vld [vmem:[#allocation2 + $0x13c] sm:$0x1]
      %v3874 = vld [vmem:[#allocation2 + $0x144] sm:$0x8]
      %v3875 = vld [vmem:[#allocation2 + $0x148] sm:$0xf]
      %v3876 = vld [vmem:[#allocation2 + $0x14c] sm:$0xf]
      %v3877 = vld [vmem:[#allocation2 + $0x150] sm:$0x1]
      %v3878 = vld [vmem:[#allocation2 + $0x158] sm:$0x8]
      %v3879 = vld [vmem:[#allocation2 + $0x15c] sm:$0xf]
      %v3880 = vld [vmem:[#allocation2 + $0x160] sm:$0xf]
      %v3881 = vld [vmem:[#allocation2 + $0x164] sm:$0x1]
      %v3882 = vld [vmem:[#allocation2 + $0x16c] sm:$0x8]
      %v3883 = vld [vmem:[#allocation2 + $0x170] sm:$0xf]
      %v3884 = vld [vmem:[#allocation2 + $0x174] sm:$0xf]
      %v3885 = vld [vmem:[#allocation2 + $0x178] sm:$0x1]
      %v3886 = vld [vmem:[#allocation2 + $0x180] sm:$0x8]
      %v3887 = vld [vmem:[#allocation2 + $0x184] sm:$0xf]
      %v3888 = vld [vmem:[#allocation2 + $0x188] sm:$0xf]
      %v3889 = vld [vmem:[#allocation2 + $0x18c] sm:$0x1]
      %v3891 = vshrl.u32 %v3810, 16
      %v3893 = vrot.slane %v3891, 4
      %v3894 = vrot.slane %v3893, 4
      %v3896 = vshll.u32 %v3811, 16
      %v3898 = vrot.slane %v3896, 5
      %v3899 = vsel %vm1435, %v3894, %v3898
      %v3900 = vshrl.u32 %v3811, 16
      %v3902 = vrot.slane %v3900, 4
      %v3903 = vor.u32 %v3902, %v3898
      %v3904 = vrot.slane %v3903, 4
      %v3906 = vshll.u32 %v3812, 16
      %v3908 = vrot.slane %v3906, 5
      %v3909 = vsel %vm1435, %v3904, %v3908
      %v3910 = vshrl.u32 %v3812, 16
      %v3912 = vrot.slane %v3910, 4
      %v3913 = vor.u32 %v3912, %v3908
      %v3914 = vrot.slane %v3913, 4
      %v3916 = vshrl.u32 %v3814, 16
      %v3918 = vrot.slane %v3916, 4
      %v3919 = vrot.slane %v3918, 4
      %v3921 = vshll.u32 %v3815, 16
      %v3923 = vrot.slane %v3921, 5
      %v3924 = vsel %vm1435, %v3919, %v3923
      %v3925 = vshrl.u32 %v3815, 16
      %v3927 = vrot.slane %v3925, 4
      %v3928 = vor.u32 %v3927, %v3923
      %v3929 = vrot.slane %v3928, 4
      %v3931 = vshll.u32 %v3816, 16
      %v3933 = vrot.slane %v3931, 5
      %v3934 = vsel %vm1435, %v3929, %v3933
      %v3935 = vshrl.u32 %v3816, 16
      %v3937 = vrot.slane %v3935, 4
      %v3938 = vor.u32 %v3937, %v3933
      %v3939 = vrot.slane %v3938, 4
      %v3941 = vshrl.u32 %v3818, 16
      %v3943 = vrot.slane %v3941, 4
      %v3944 = vrot.slane %v3943, 4
      %v3946 = vshll.u32 %v3819, 16
      %v3948 = vrot.slane %v3946, 5
      %v3949 = vsel %vm1435, %v3944, %v3948
      %v3950 = vshrl.u32 %v3819, 16
      %v3952 = vrot.slane %v3950, 4
      %v3953 = vor.u32 %v3952, %v3948
      %v3954 = vrot.slane %v3953, 4
      %v3956 = vshll.u32 %v3820, 16
      %v3958 = vrot.slane %v3956, 5
      %v3959 = vsel %vm1435, %v3954, %v3958
      %v3960 = vshrl.u32 %v3820, 16
      %v3962 = vrot.slane %v3960, 4
      %v3963 = vor.u32 %v3962, %v3958
      %v3964 = vrot.slane %v3963, 4
      %v3966 = vshrl.u32 %v3822, 16
      %v3968 = vrot.slane %v3966, 4
      %v3969 = vrot.slane %v3968, 4
      %v3971 = vshll.u32 %v3823, 16
      %v3973 = vrot.slane %v3971, 5
      %v3974 = vsel %vm1435, %v3969, %v3973
      %v3975 = vshrl.u32 %v3823, 16
      %v3977 = vrot.slane %v3975, 4
      %v3978 = vor.u32 %v3977, %v3973
      %v3979 = vrot.slane %v3978, 4
      %v3981 = vshll.u32 %v3824, 16
      %v3983 = vrot.slane %v3981, 5
      %v3984 = vsel %vm1435, %v3979, %v3983
      %v3985 = vshrl.u32 %v3824, 16
      %v3987 = vrot.slane %v3985, 4
      %v3988 = vor.u32 %v3987, %v3983
      %v3989 = vrot.slane %v3988, 4
      %v3991 = vshrl.u32 %v3826, 16
      %v3993 = vrot.slane %v3991, 4
      %v3994 = vrot.slane %v3993, 4
      %v3996 = vshll.u32 %v3827, 16
      %v3998 = vrot.slane %v3996, 5
      %v3999 = vsel %vm1435, %v3994, %v3998
      %v4000 = vshrl.u32 %v3827, 16
      %v4002 = vrot.slane %v4000, 4
      %v4003 = vor.u32 %v4002, %v3998
      %v4004 = vrot.slane %v4003, 4
      %v4006 = vshll.u32 %v3828, 16
      %v4008 = vrot.slane %v4006, 5
      %v4009 = vsel %vm1435, %v4004, %v4008
      %v4010 = vshrl.u32 %v3828, 16
      %v4012 = vrot.slane %v4010, 4
      %v4013 = vor.u32 %v4012, %v4008
      %v4014 = vrot.slane %v4013, 4
      %v4016 = vshrl.u32 %v3830, 16
      %v4018 = vrot.slane %v4016, 4
      %v4019 = vrot.slane %v4018, 4
      %v4021 = vshll.u32 %v3831, 16
      %v4023 = vrot.slane %v4021, 5
      %v4024 = vsel %vm1435, %v4019, %v4023
      %v4025 = vshrl.u32 %v3831, 16
      %v4027 = vrot.slane %v4025, 4
      %v4028 = vor.u32 %v4027, %v4023
      %v4029 = vrot.slane %v4028, 4
      %v4031 = vshll.u32 %v3832, 16
      %v4033 = vrot.slane %v4031, 5
      %v4034 = vsel %vm1435, %v4029, %v4033
      %v4035 = vshrl.u32 %v3832, 16
      %v4037 = vrot.slane %v4035, 4
      %v4038 = vor.u32 %v4037, %v4033
      %v4039 = vrot.slane %v4038, 4
      %v4041 = vshrl.u32 %v3834, 16
      %v4043 = vrot.slane %v4041, 4
      %v4044 = vrot.slane %v4043, 4
      %v4046 = vshll.u32 %v3835, 16
      %v4048 = vrot.slane %v4046, 5
      %v4049 = vsel %vm1435, %v4044, %v4048
      %v4050 = vshrl.u32 %v3835, 16
      %v4052 = vrot.slane %v4050, 4
      %v4053 = vor.u32 %v4052, %v4048
      %v4054 = vrot.slane %v4053, 4
      %v4056 = vshll.u32 %v3836, 16
      %v4058 = vrot.slane %v4056, 5
      %v4059 = vsel %vm1435, %v4054, %v4058
      %v4060 = vshrl.u32 %v3836, 16
      %v4062 = vrot.slane %v4060, 4
      %v4063 = vor.u32 %v4062, %v4058
      %v4064 = vrot.slane %v4063, 4
      %v4066 = vshrl.u32 %v3838, 16
      %v4068 = vrot.slane %v4066, 4
      %v4069 = vrot.slane %v4068, 4
      %v4071 = vshll.u32 %v3839, 16
      %v4073 = vrot.slane %v4071, 5
      %v4074 = vsel %vm1435, %v4069, %v4073
      %v4075 = vshrl.u32 %v3839, 16
      %v4077 = vrot.slane %v4075, 4
      %v4078 = vor.u32 %v4077, %v4073
      %v4079 = vrot.slane %v4078, 4
      %v4081 = vshll.u32 %v3840, 16
      %v4083 = vrot.slane %v4081, 5
      %v4084 = vsel %vm1435, %v4079, %v4083
      %v4085 = vshrl.u32 %v3840, 16
      %v4087 = vrot.slane %v4085, 4
      %v4088 = vor.u32 %v4087, %v4083
      %v4089 = vrot.slane %v4088, 4
      %v4091 = vshrl.u32 %v3842, 16
      %v4093 = vrot.slane %v4091, 4
      %v4094 = vrot.slane %v4093, 4
      %v4096 = vshll.u32 %v3843, 16
      %v4098 = vrot.slane %v4096, 5
      %v4099 = vsel %vm1435, %v4094, %v4098
      %v4100 = vshrl.u32 %v3843, 16
      %v4102 = vrot.slane %v4100, 4
      %v4103 = vor.u32 %v4102, %v4098
      %v4104 = vrot.slane %v4103, 4
      %v4106 = vshll.u32 %v3844, 16
      %v4108 = vrot.slane %v4106, 5
      %v4109 = vsel %vm1435, %v4104, %v4108
      %v4110 = vshrl.u32 %v3844, 16
      %v4112 = vrot.slane %v4110, 4
      %v4113 = vor.u32 %v4112, %v4108
      %v4114 = vrot.slane %v4113, 4
      %v4116 = vshrl.u32 %v3846, 16
      %v4118 = vrot.slane %v4116, 4
      %v4119 = vrot.slane %v4118, 4
      %v4121 = vshll.u32 %v3847, 16
      %v4123 = vrot.slane %v4121, 5
      %v4124 = vsel %vm1435, %v4119, %v4123
      %v4125 = vshrl.u32 %v3847, 16
      %v4127 = vrot.slane %v4125, 4
      %v4128 = vor.u32 %v4127, %v4123
      %v4129 = vrot.slane %v4128, 4
      %v4131 = vshll.u32 %v3848, 16
      %v4133 = vrot.slane %v4131, 5
      %v4134 = vsel %vm1435, %v4129, %v4133
      %v4135 = vshrl.u32 %v3848, 16
      %v4137 = vrot.slane %v4135, 4
      %v4138 = vor.u32 %v4137, %v4133
      %v4139 = vrot.slane %v4138, 4
      %v4141 = vshrl.u32 %v3850, 16
      %v4143 = vrot.slane %v4141, 4
      %v4144 = vrot.slane %v4143, 4
      %v4146 = vshll.u32 %v3851, 16
      %v4148 = vrot.slane %v4146, 5
      %v4149 = vsel %vm1435, %v4144, %v4148
      %v4150 = vshrl.u32 %v3851, 16
      %v4152 = vrot.slane %v4150, 4
      %v4153 = vor.u32 %v4152, %v4148
      %v4154 = vrot.slane %v4153, 4
      %v4156 = vshll.u32 %v3852, 16
      %v4158 = vrot.slane %v4156, 5
      %v4159 = vsel %vm1435, %v4154, %v4158
      %v4160 = vshrl.u32 %v3852, 16
      %v4162 = vrot.slane %v4160, 4
      %v4163 = vor.u32 %v4162, %v4158
      %v4164 = vrot.slane %v4163, 4
      %v4166 = vshrl.u32 %v3854, 16
      %v4168 = vrot.slane %v4166, 4
      %v4169 = vrot.slane %v4168, 4
      %v4171 = vshll.u32 %v3855, 16
      %v4173 = vrot.slane %v4171, 5
      %v4174 = vsel %vm1435, %v4169, %v4173
      %v4175 = vshrl.u32 %v3855, 16
      %v4177 = vrot.slane %v4175, 4
      %v4178 = vor.u32 %v4177, %v4173
      %v4179 = vrot.slane %v4178, 4
      %v4181 = vshll.u32 %v3856, 16
      %v4183 = vrot.slane %v4181, 5
      %v4184 = vsel %vm1435, %v4179, %v4183
      %v4185 = vshrl.u32 %v3856, 16
      %v4187 = vrot.slane %v4185, 4
      %v4188 = vor.u32 %v4187, %v4183
      %v4189 = vrot.slane %v4188, 4
      %v4191 = vshrl.u32 %v3858, 16
      %v4193 = vrot.slane %v4191, 4
      %v4194 = vrot.slane %v4193, 4
      %v4196 = vshll.u32 %v3859, 16
      %v4198 = vrot.slane %v4196, 5
      %v4199 = vsel %vm1435, %v4194, %v4198
      %v4200 = vshrl.u32 %v3859, 16
      %v4202 = vrot.slane %v4200, 4
      %v4203 = vor.u32 %v4202, %v4198
      %v4204 = vrot.slane %v4203, 4
      %v4206 = vshll.u32 %v3860, 16
      %v4208 = vrot.slane %v4206, 5
      %v4209 = vsel %vm1435, %v4204, %v4208
      %v4210 = vshrl.u32 %v3860, 16
      %v4212 = vrot.slane %v4210, 4
      %v4213 = vor.u32 %v4212, %v4208
      %v4214 = vrot.slane %v4213, 4
      %v4216 = vshrl.u32 %v3862, 16
      %v4218 = vrot.slane %v4216, 4
      %v4219 = vrot.slane %v4218, 4
      %v4221 = vshll.u32 %v3863, 16
      %v4223 = vrot.slane %v4221, 5
      %v4224 = vsel %vm1435, %v4219, %v4223
      %v4225 = vshrl.u32 %v3863, 16
      %v4227 = vrot.slane %v4225, 4
      %v4228 = vor.u32 %v4227, %v4223
      %v4229 = vrot.slane %v4228, 4
      %v4231 = vshll.u32 %v3864, 16
      %v4233 = vrot.slane %v4231, 5
      %v4234 = vsel %vm1435, %v4229, %v4233
      %v4235 = vshrl.u32 %v3864, 16
      %v4237 = vrot.slane %v4235, 4
      %v4238 = vor.u32 %v4237, %v4233
      %v4239 = vrot.slane %v4238, 4
      %v4241 = vshrl.u32 %v3866, 16
      %v4243 = vrot.slane %v4241, 4
      %v4244 = vrot.slane %v4243, 4
      %v4246 = vshll.u32 %v3867, 16
      %v4248 = vrot.slane %v4246, 5
      %v4249 = vsel %vm1435, %v4244, %v4248
      %v4250 = vshrl.u32 %v3867, 16
      %v4252 = vrot.slane %v4250, 4
      %v4253 = vor.u32 %v4252, %v4248
      %v4254 = vrot.slane %v4253, 4
      %v4256 = vshll.u32 %v3868, 16
      %v4258 = vrot.slane %v4256, 5
      %v4259 = vsel %vm1435, %v4254, %v4258
      %v4260 = vshrl.u32 %v3868, 16
      %v4262 = vrot.slane %v4260, 4
      %v4263 = vor.u32 %v4262, %v4258
      %v4264 = vrot.slane %v4263, 4
      %v4266 = vshrl.u32 %v3870, 16
      %v4268 = vrot.slane %v4266, 4
      %v4269 = vrot.slane %v4268, 4
      %v4271 = vshll.u32 %v3871, 16
      %v4273 = vrot.slane %v4271, 5
      %v4274 = vsel %vm1435, %v4269, %v4273
      %v4275 = vshrl.u32 %v3871, 16
      %v4277 = vrot.slane %v4275, 4
      %v4278 = vor.u32 %v4277, %v4273
      %v4279 = vrot.slane %v4278, 4
      %v4281 = vshll.u32 %v3872, 16
      %v4283 = vrot.slane %v4281, 5
      %v4284 = vsel %vm1435, %v4279, %v4283
      %v4285 = vshrl.u32 %v3872, 16
      %v4287 = vrot.slane %v4285, 4
      %v4288 = vor.u32 %v4287, %v4283
      %v4289 = vrot.slane %v4288, 4
      %v4291 = vshrl.u32 %v3874, 16
      %v4293 = vrot.slane %v4291, 4
      %v4294 = vrot.slane %v4293, 4
      %v4296 = vshll.u32 %v3875, 16
      %v4298 = vrot.slane %v4296, 5
      %v4299 = vsel %vm1435, %v4294, %v4298
      %v4300 = vshrl.u32 %v3875, 16
      %v4302 = vrot.slane %v4300, 4
      %v4303 = vor.u32 %v4302, %v4298
      %v4304 = vrot.slane %v4303, 4
      %v4306 = vshll.u32 %v3876, 16
      %v4308 = vrot.slane %v4306, 5
      %v4309 = vsel %vm1435, %v4304, %v4308
      %v4310 = vshrl.u32 %v3876, 16
      %v4312 = vrot.slane %v4310, 4
      %v4313 = vor.u32 %v4312, %v4308
      %v4314 = vrot.slane %v4313, 4
      %v4316 = vshrl.u32 %v3878, 16
      %v4318 = vrot.slane %v4316, 4
      %v4319 = vrot.slane %v4318, 4
      %v4321 = vshll.u32 %v3879, 16
      %v4323 = vrot.slane %v4321, 5
      %v4324 = vsel %vm1435, %v4319, %v4323
      %v4325 = vshrl.u32 %v3879, 16
      %v4327 = vrot.slane %v4325, 4
      %v4328 = vor.u32 %v4327, %v4323
      %v4329 = vrot.slane %v4328, 4
      %v4331 = vshll.u32 %v3880, 16
      %v4333 = vrot.slane %v4331, 5
      %v4334 = vsel %vm1435, %v4329, %v4333
      %v4335 = vshrl.u32 %v3880, 16
      %v4337 = vrot.slane %v4335, 4
      %v4338 = vor.u32 %v4337, %v4333
      %v4339 = vrot.slane %v4338, 4
      %v4341 = vshrl.u32 %v3882, 16
      %v4343 = vrot.slane %v4341, 4
      %v4344 = vrot.slane %v4343, 4
      %v4346 = vshll.u32 %v3883, 16
      %v4348 = vrot.slane %v4346, 5
      %v4349 = vsel %vm1435, %v4344, %v4348
      %v4350 = vshrl.u32 %v3883, 16
      %v4352 = vrot.slane %v4350, 4
      %v4353 = vor.u32 %v4352, %v4348
      %v4354 = vrot.slane %v4353, 4
      %v4356 = vshll.u32 %v3884, 16
      %v4358 = vrot.slane %v4356, 5
      %v4359 = vsel %vm1435, %v4354, %v4358
      %v4360 = vshrl.u32 %v3884, 16
      %v4362 = vrot.slane %v4360, 4
      %v4363 = vor.u32 %v4362, %v4358
      %v4364 = vrot.slane %v4363, 4
      %v4366 = vshrl.u32 %v3886, 16
      %v4368 = vrot.slane %v4366, 4
      %v4369 = vrot.slane %v4368, 4
      %v4371 = vshll.u32 %v3887, 16
      %v4373 = vrot.slane %v4371, 5
      %v4374 = vsel %vm1435, %v4369, %v4373
      %v4375 = vshrl.u32 %v3887, 16
      %v4377 = vrot.slane %v4375, 4
      %v4378 = vor.u32 %v4377, %v4373
      %v4379 = vrot.slane %v4378, 4
      %v4381 = vshll.u32 %v3888, 16
      %v4383 = vrot.slane %v4381, 5
      %v4384 = vsel %vm1435, %v4379, %v4383
      %v4385 = vshrl.u32 %v3888, 16
      %v4387 = vrot.slane %v4385, 4
      %v4388 = vor.u32 %v4387, %v4383
      %v4389 = vrot.slane %v4388, 4
      %v4450 = vmax.bf16 %v3810, %v3899
      %v4451 = vmax.bf16 %v3811, %v3909
      %v4452 = vmax.bf16 %v3812, %v3914
      %v4453 = vmax.bf16 %v3814, %v3924
      %v4454 = vmax.bf16 %v3815, %v3934
      %v4455 = vmax.bf16 %v3816, %v3939
      %v4456 = vmax.bf16 %v3818, %v3949
      %v4457 = vmax.bf16 %v3819, %v3959
      %v4458 = vmax.bf16 %v3820, %v3964
      %v4459 = vmax.bf16 %v3822, %v3974
      %v4460 = vmax.bf16 %v3823, %v3984
      %v4461 = vmax.bf16 %v3824, %v3989
      %v4462 = vmax.bf16 %v3826, %v3999
      %v4463 = vmax.bf16 %v3827, %v4009
      %v4464 = vmax.bf16 %v3828, %v4014
      %v4465 = vmax.bf16 %v3830, %v4024
      %v4466 = vmax.bf16 %v3831, %v4034
      %v4467 = vmax.bf16 %v3832, %v4039
      %v4468 = vmax.bf16 %v3834, %v4049
      %v4469 = vmax.bf16 %v3835, %v4059
      %v4470 = vmax.bf16 %v3836, %v4064
      %v4471 = vmax.bf16 %v3838, %v4074
      %v4472 = vmax.bf16 %v3839, %v4084
      %v4473 = vmax.bf16 %v3840, %v4089
      %v4474 = vmax.bf16 %v3842, %v4099
      %v4475 = vmax.bf16 %v3843, %v4109
      %v4476 = vmax.bf16 %v3844, %v4114
      %v4477 = vmax.bf16 %v3846, %v4124
      %v4478 = vmax.bf16 %v3847, %v4134
      %v4479 = vmax.bf16 %v3848, %v4139
      %v4480 = vmax.bf16 %v3850, %v4149
      %v4481 = vmax.bf16 %v3851, %v4159
      %v4482 = vmax.bf16 %v3852, %v4164
      %v4483 = vmax.bf16 %v3854, %v4174
      %v4484 = vmax.bf16 %v3855, %v4184
      %v4485 = vmax.bf16 %v3856, %v4189
      %v4486 = vmax.bf16 %v3858, %v4199
      %v4487 = vmax.bf16 %v3859, %v4209
      %v4488 = vmax.bf16 %v3860, %v4214
      %v4489 = vmax.bf16 %v3862, %v4224
      %v4490 = vmax.bf16 %v3863, %v4234
      %v4491 = vmax.bf16 %v3864, %v4239
      %v4492 = vmax.bf16 %v3866, %v4249
      %v4493 = vmax.bf16 %v3867, %v4259
      %v4494 = vmax.bf16 %v3868, %v4264
      %v4495 = vmax.bf16 %v3870, %v4274
      %v4496 = vmax.bf16 %v3871, %v4284
      %v4497 = vmax.bf16 %v3872, %v4289
      %v4498 = vmax.bf16 %v3874, %v4299
      %v4499 = vmax.bf16 %v3875, %v4309
      %v4500 = vmax.bf16 %v3876, %v4314
      %v4501 = vmax.bf16 %v3878, %v4324
      %v4502 = vmax.bf16 %v3879, %v4334
      %v4503 = vmax.bf16 %v3880, %v4339
      %v4504 = vmax.bf16 %v3882, %v4349
      %v4505 = vmax.bf16 %v3883, %v4359
      %v4506 = vmax.bf16 %v3884, %v4364
      %v4507 = vmax.bf16 %v3886, %v4374
      %v4508 = vmax.bf16 %v3887, %v4384
      %v4509 = vmax.bf16 %v3888, %v4389
      %v4550 = vrot.slane %v3811, 5
      %v4551 = vrot.slane %v4550, 4
      %v4552 = vrot.slane %v3812, 5
      %v4553 = vsel %vm2098, %v4551, %v4552
      %v4554 = vrot.slane %v4552, 4
      %v4555 = vrot.slane %v3815, 5
      %v4556 = vrot.slane %v4555, 4
      %v4557 = vrot.slane %v3816, 5
      %v4558 = vsel %vm2098, %v4556, %v4557
      %v4559 = vrot.slane %v4557, 4
      %v4560 = vrot.slane %v3819, 5
      %v4561 = vrot.slane %v4560, 4
      %v4562 = vrot.slane %v3820, 5
      %v4563 = vsel %vm2098, %v4561, %v4562
      %v4564 = vrot.slane %v4562, 4
      %v4565 = vrot.slane %v3823, 5
      %v4566 = vrot.slane %v4565, 4
      %v4567 = vrot.slane %v3824, 5
      %v4568 = vsel %vm2098, %v4566, %v4567
      %v4569 = vrot.slane %v4567, 4
      %v4570 = vrot.slane %v3827, 5
      %v4571 = vrot.slane %v4570, 4
      %v4572 = vrot.slane %v3828, 5
      %v4573 = vsel %vm2098, %v4571, %v4572
      %v4574 = vrot.slane %v4572, 4
      %v4575 = vrot.slane %v3831, 5
      %v4576 = vrot.slane %v4575, 4
      %v4577 = vrot.slane %v3832, 5
      %v4578 = vsel %vm2098, %v4576, %v4577
      %v4579 = vrot.slane %v4577, 4
      %v4580 = vrot.slane %v3835, 5
      %v4581 = vrot.slane %v4580, 4
      %v4582 = vrot.slane %v3836, 5
      %v4583 = vsel %vm2098, %v4581, %v4582
      %v4584 = vrot.slane %v4582, 4
      %v4585 = vrot.slane %v3839, 5
      %v4586 = vrot.slane %v4585, 4
      %v4587 = vrot.slane %v3840, 5
      %v4588 = vsel %vm2098, %v4586, %v4587
      %v4589 = vrot.slane %v4587, 4
      %v4590 = vrot.slane %v3843, 5
      %v4591 = vrot.slane %v4590, 4
      %v4592 = vrot.slane %v3844, 5
      %v4593 = vsel %vm2098, %v4591, %v4592
      %v4594 = vrot.slane %v4592, 4
      %v4595 = vrot.slane %v3847, 5
      %v4596 = vrot.slane %v4595, 4
      %v4597 = vrot.slane %v3848, 5
      %v4598 = vsel %vm2098, %v4596, %v4597
      %v4599 = vrot.slane %v4597, 4
      %v4600 = vrot.slane %v3851, 5
      %v4601 = vrot.slane %v4600, 4
      %v4602 = vrot.slane %v3852, 5
      %v4603 = vsel %vm2098, %v4601, %v4602
      %v4604 = vrot.slane %v4602, 4
      %v4605 = vrot.slane %v3855, 5
      %v4606 = vrot.slane %v4605, 4
      %v4607 = vrot.slane %v3856, 5
      %v4608 = vsel %vm2098, %v4606, %v4607
      %v4609 = vrot.slane %v4607, 4
      %v4610 = vrot.slane %v3859, 5
      %v4611 = vrot.slane %v4610, 4
      %v4612 = vrot.slane %v3860, 5
      %v4613 = vsel %vm2098, %v4611, %v4612
      %v4614 = vrot.slane %v4612, 4
      %v4615 = vrot.slane %v3863, 5
      %v4616 = vrot.slane %v4615, 4
      %v4617 = vrot.slane %v3864, 5
      %v4618 = vsel %vm2098, %v4616, %v4617
      %v4619 = vrot.slane %v4617, 4
      %v4620 = vrot.slane %v3867, 5
      %v4621 = vrot.slane %v4620, 4
      %v4622 = vrot.slane %v3868, 5
      %v4623 = vsel %vm2098, %v4621, %v4622
      %v4624 = vrot.slane %v4622, 4
      %v4625 = vrot.slane %v3871, 5
      %v4626 = vrot.slane %v4625, 4
      %v4627 = vrot.slane %v3872, 5
      %v4628 = vsel %vm2098, %v4626, %v4627
      %v4629 = vrot.slane %v4627, 4
      %v4630 = vrot.slane %v3875, 5
      %v4631 = vrot.slane %v4630, 4
      %v4632 = vrot.slane %v3876, 5
      %v4633 = vsel %vm2098, %v4631, %v4632
      %v4634 = vrot.slane %v4632, 4
      %v4635 = vrot.slane %v3879, 5
      %v4636 = vrot.slane %v4635, 4
      %v4637 = vrot.slane %v3880, 5
      %v4638 = vsel %vm2098, %v4636, %v4637
      %v4639 = vrot.slane %v4637, 4
      %v4640 = vrot.slane %v3883, 5
      %v4641 = vrot.slane %v4640, 4
      %v4642 = vrot.slane %v3884, 5
      %v4643 = vsel %vm2098, %v4641, %v4642
      %v4644 = vrot.slane %v4642, 4
      %v4645 = vrot.slane %v3887, 5
      %v4646 = vrot.slane %v4645, 4
      %v4647 = vrot.slane %v3888, 5
      %v4648 = vsel %vm2098, %v4646, %v4647
      %v4649 = vrot.slane %v4647, 4
      %v4710 = vmax.bf16 %v4450, %v4550
      %v4711 = vmax.bf16 %v4451, %v4553
      %v4712 = vmax.bf16 %v4452, %v4554
      %v4713 = vmax.bf16 %v4453, %v4555
      %v4714 = vmax.bf16 %v4454, %v4558
      %v4715 = vmax.bf16 %v4455, %v4559
      %v4716 = vmax.bf16 %v4456, %v4560
      %v4717 = vmax.bf16 %v4457, %v4563
      %v4718 = vmax.bf16 %v4458, %v4564
      %v4719 = vmax.bf16 %v4459, %v4565
      %v4720 = vmax.bf16 %v4460, %v4568
      %v4721 = vmax.bf16 %v4461, %v4569
      %v4722 = vmax.bf16 %v4462, %v4570
      %v4723 = vmax.bf16 %v4463, %v4573
      %v4724 = vmax.bf16 %v4464, %v4574
      %v4725 = vmax.bf16 %v4465, %v4575
      %v4726 = vmax.bf16 %v4466, %v4578
      %v4727 = vmax.bf16 %v4467, %v4579
      %v4728 = vmax.bf16 %v4468, %v4580
      %v4729 = vmax.bf16 %v4469, %v4583
      %v4730 = vmax.bf16 %v4470, %v4584
      %v4731 = vmax.bf16 %v4471, %v4585
      %v4732 = vmax.bf16 %v4472, %v4588
      %v4733 = vmax.bf16 %v4473, %v4589
      %v4734 = vmax.bf16 %v4474, %v4590
      %v4735 = vmax.bf16 %v4475, %v4593
      %v4736 = vmax.bf16 %v4476, %v4594
      %v4737 = vmax.bf16 %v4477, %v4595
      %v4738 = vmax.bf16 %v4478, %v4598
      %v4739 = vmax.bf16 %v4479, %v4599
      %v4740 = vmax.bf16 %v4480, %v4600
      %v4741 = vmax.bf16 %v4481, %v4603
      %v4742 = vmax.bf16 %v4482, %v4604
      %v4743 = vmax.bf16 %v4483, %v4605
      %v4744 = vmax.bf16 %v4484, %v4608
      %v4745 = vmax.bf16 %v4485, %v4609
      %v4746 = vmax.bf16 %v4486, %v4610
      %v4747 = vmax.bf16 %v4487, %v4613
      %v4748 = vmax.bf16 %v4488, %v4614
      %v4749 = vmax.bf16 %v4489, %v4615
      %v4750 = vmax.bf16 %v4490, %v4618
      %v4751 = vmax.bf16 %v4491, %v4619
      %v4752 = vmax.bf16 %v4492, %v4620
      %v4753 = vmax.bf16 %v4493, %v4623
      %v4754 = vmax.bf16 %v4494, %v4624
      %v4755 = vmax.bf16 %v4495, %v4625
      %v4756 = vmax.bf16 %v4496, %v4628
      %v4757 = vmax.bf16 %v4497, %v4629
      %v4758 = vmax.bf16 %v4498, %v4630
      %v4759 = vmax.bf16 %v4499, %v4633
      %v4760 = vmax.bf16 %v4500, %v4634
      %v4761 = vmax.bf16 %v4501, %v4635
      %v4762 = vmax.bf16 %v4502, %v4638
      %v4763 = vmax.bf16 %v4503, %v4639
      %v4764 = vmax.bf16 %v4504, %v4640
      %v4765 = vmax.bf16 %v4505, %v4643
      %v4766 = vmax.bf16 %v4506, %v4644
      %v4767 = vmax.bf16 %v4507, %v4645
      %v4768 = vmax.bf16 %v4508, %v4648
      %v4769 = vmax.bf16 %v4509, %v4649
      %v4770 = vrot.slane %v3900, 5
      %v4771 = vrot.slane %v3896, 6
      %v4772 = vor.u32 %v4770, %v4771
      %v4773 = vrot.slane %v4772, 4
      %v4774 = vrot.slane %v3910, 5
      %v4775 = vrot.slane %v3906, 6
      %v4776 = vor.u32 %v4774, %v4775
      %v4777 = vsel %vm2321, %v4773, %v4776
      %v4778 = vrot.slane %v4776, 4
      %v4780 = vshll.u32 %v3813, 16
      %v4782 = vrot.slane %v4780, 6
      %v4783 = vsel %vm2321, %v4778, %v4782
      %v4784 = vrot.slane %v3925, 5
      %v4785 = vrot.slane %v3921, 6
      %v4786 = vor.u32 %v4784, %v4785
      %v4787 = vrot.slane %v4786, 4
      %v4788 = vrot.slane %v3935, 5
      %v4789 = vrot.slane %v3931, 6
      %v4790 = vor.u32 %v4788, %v4789
      %v4791 = vsel %vm2321, %v4787, %v4790
      %v4792 = vrot.slane %v4790, 4
      %v4794 = vshll.u32 %v3817, 16
      %v4796 = vrot.slane %v4794, 6
      %v4797 = vsel %vm2321, %v4792, %v4796
      %v4798 = vrot.slane %v3950, 5
      %v4799 = vrot.slane %v3946, 6
      %v4800 = vor.u32 %v4798, %v4799
      %v4801 = vrot.slane %v4800, 4
      %v4802 = vrot.slane %v3960, 5
      %v4803 = vrot.slane %v3956, 6
      %v4804 = vor.u32 %v4802, %v4803
      %v4805 = vsel %vm2321, %v4801, %v4804
      %v4806 = vrot.slane %v4804, 4
      %v4808 = vshll.u32 %v3821, 16
      %v4810 = vrot.slane %v4808, 6
      %v4811 = vsel %vm2321, %v4806, %v4810
      %v4812 = vrot.slane %v3975, 5
      %v4813 = vrot.slane %v3971, 6
      %v4814 = vor.u32 %v4812, %v4813
      %v4815 = vrot.slane %v4814, 4
      %v4816 = vrot.slane %v3985, 5
      %v4817 = vrot.slane %v3981, 6
      %v4818 = vor.u32 %v4816, %v4817
      %v4819 = vsel %vm2321, %v4815, %v4818
      %v4820 = vrot.slane %v4818, 4
      %v4822 = vshll.u32 %v3825, 16
      %v4824 = vrot.slane %v4822, 6
      %v4825 = vsel %vm2321, %v4820, %v4824
      %v4826 = vrot.slane %v4000, 5
      %v4827 = vrot.slane %v3996, 6
      %v4828 = vor.u32 %v4826, %v4827
      %v4829 = vrot.slane %v4828, 4
      %v4830 = vrot.slane %v4010, 5
      %v4831 = vrot.slane %v4006, 6
      %v4832 = vor.u32 %v4830, %v4831
      %v4833 = vsel %vm2321, %v4829, %v4832
      %v4834 = vrot.slane %v4832, 4
      %v4836 = vshll.u32 %v3829, 16
      %v4838 = vrot.slane %v4836, 6
      %v4839 = vsel %vm2321, %v4834, %v4838
      %v4840 = vrot.slane %v4025, 5
      %v4841 = vrot.slane %v4021, 6
      %v4842 = vor.u32 %v4840, %v4841
      %v4843 = vrot.slane %v4842, 4
      %v4844 = vrot.slane %v4035, 5
      %v4845 = vrot.slane %v4031, 6
      %v4846 = vor.u32 %v4844, %v4845
      %v4847 = vsel %vm2321, %v4843, %v4846
      %v4848 = vrot.slane %v4846, 4
      %v4850 = vshll.u32 %v3833, 16
      %v4852 = vrot.slane %v4850, 6
      %v4853 = vsel %vm2321, %v4848, %v4852
      %v4854 = vrot.slane %v4050, 5
      %v4855 = vrot.slane %v4046, 6
      %v4856 = vor.u32 %v4854, %v4855
      %v4857 = vrot.slane %v4856, 4
      %v4858 = vrot.slane %v4060, 5
      %v4859 = vrot.slane %v4056, 6
      %v4860 = vor.u32 %v4858, %v4859
      %v4861 = vsel %vm2321, %v4857, %v4860
      %v4862 = vrot.slane %v4860, 4
      %v4864 = vshll.u32 %v3837, 16
      %v4866 = vrot.slane %v4864, 6
      %v4867 = vsel %vm2321, %v4862, %v4866
      %v4868 = vrot.slane %v4075, 5
      %v4869 = vrot.slane %v4071, 6
      %v4870 = vor.u32 %v4868, %v4869
      %v4871 = vrot.slane %v4870, 4
      %v4872 = vrot.slane %v4085, 5
      %v4873 = vrot.slane %v4081, 6
      %v4874 = vor.u32 %v4872, %v4873
      %v4875 = vsel %vm2321, %v4871, %v4874
      %v4876 = vrot.slane %v4874, 4
      %v4878 = vshll.u32 %v3841, 16
      %v4880 = vrot.slane %v4878, 6
      %v4881 = vsel %vm2321, %v4876, %v4880
      %v4882 = vrot.slane %v4100, 5
      %v4883 = vrot.slane %v4096, 6
      %v4884 = vor.u32 %v4882, %v4883
      %v4885 = vrot.slane %v4884, 4
      %v4886 = vrot.slane %v4110, 5
      %v4887 = vrot.slane %v4106, 6
      %v4888 = vor.u32 %v4886, %v4887
      %v4889 = vsel %vm2321, %v4885, %v4888
      %v4890 = vrot.slane %v4888, 4
      %v4892 = vshll.u32 %v3845, 16
      %v4894 = vrot.slane %v4892, 6
      %v4895 = vsel %vm2321, %v4890, %v4894
      %v4896 = vrot.slane %v4125, 5
      %v4897 = vrot.slane %v4121, 6
      %v4898 = vor.u32 %v4896, %v4897
      %v4899 = vrot.slane %v4898, 4
      %v4900 = vrot.slane %v4135, 5
      %v4901 = vrot.slane %v4131, 6
      %v4902 = vor.u32 %v4900, %v4901
      %v4903 = vsel %vm2321, %v4899, %v4902
      %v4904 = vrot.slane %v4902, 4
      %v4906 = vshll.u32 %v3849, 16
      %v4908 = vrot.slane %v4906, 6
      %v4909 = vsel %vm2321, %v4904, %v4908
      %v4910 = vrot.slane %v4150, 5
      %v4911 = vrot.slane %v4146, 6
      %v4912 = vor.u32 %v4910, %v4911
      %v4913 = vrot.slane %v4912, 4
      %v4914 = vrot.slane %v4160, 5
      %v4915 = vrot.slane %v4156, 6
      %v4916 = vor.u32 %v4914, %v4915
      %v4917 = vsel %vm2321, %v4913, %v4916
      %v4918 = vrot.slane %v4916, 4
      %v4920 = vshll.u32 %v3853, 16
      %v4922 = vrot.slane %v4920, 6
      %v4923 = vsel %vm2321, %v4918, %v4922
      %v4924 = vrot.slane %v4175, 5
      %v4925 = vrot.slane %v4171, 6
      %v4926 = vor.u32 %v4924, %v4925
      %v4927 = vrot.slane %v4926, 4
      %v4928 = vrot.slane %v4185, 5
      %v4929 = vrot.slane %v4181, 6
      %v4930 = vor.u32 %v4928, %v4929
      %v4931 = vsel %vm2321, %v4927, %v4930
      %v4932 = vrot.slane %v4930, 4
      %v4934 = vshll.u32 %v3857, 16
      %v4936 = vrot.slane %v4934, 6
      %v4937 = vsel %vm2321, %v4932, %v4936
      %v4938 = vrot.slane %v4200, 5
      %v4939 = vrot.slane %v4196, 6
      %v4940 = vor.u32 %v4938, %v4939
      %v4941 = vrot.slane %v4940, 4
      %v4942 = vrot.slane %v4210, 5
      %v4943 = vrot.slane %v4206, 6
      %v4944 = vor.u32 %v4942, %v4943
      %v4945 = vsel %vm2321, %v4941, %v4944
      %v4946 = vrot.slane %v4944, 4
      %v4948 = vshll.u32 %v3861, 16
      %v4950 = vrot.slane %v4948, 6
      %v4951 = vsel %vm2321, %v4946, %v4950
      %v4952 = vrot.slane %v4225, 5
      %v4953 = vrot.slane %v4221, 6
      %v4954 = vor.u32 %v4952, %v4953
      %v4955 = vrot.slane %v4954, 4
      %v4956 = vrot.slane %v4235, 5
      %v4957 = vrot.slane %v4231, 6
      %v4958 = vor.u32 %v4956, %v4957
      %v4959 = vsel %vm2321, %v4955, %v4958
      %v4960 = vrot.slane %v4958, 4
      %v4962 = vshll.u32 %v3865, 16
      %v4964 = vrot.slane %v4962, 6
      %v4965 = vsel %vm2321, %v4960, %v4964
      %v4966 = vrot.slane %v4250, 5
      %v4967 = vrot.slane %v4246, 6
      %v4968 = vor.u32 %v4966, %v4967
      %v4969 = vrot.slane %v4968, 4
      %v4970 = vrot.slane %v4260, 5
      %v4971 = vrot.slane %v4256, 6
      %v4972 = vor.u32 %v4970, %v4971
      %v4973 = vsel %vm2321, %v4969, %v4972
      %v4974 = vrot.slane %v4972, 4
      %v4976 = vshll.u32 %v3869, 16
      %v4978 = vrot.slane %v4976, 6
      %v4979 = vsel %vm2321, %v4974, %v4978
      %v4980 = vrot.slane %v4275, 5
      %v4981 = vrot.slane %v4271, 6
      %v4982 = vor.u32 %v4980, %v4981
      %v4983 = vrot.slane %v4982, 4
      %v4984 = vrot.slane %v4285, 5
      %v4985 = vrot.slane %v4281, 6
      %v4986 = vor.u32 %v4984, %v4985
      %v4987 = vsel %vm2321, %v4983, %v4986
      %v4988 = vrot.slane %v4986, 4
      %v4990 = vshll.u32 %v3873, 16
      %v4992 = vrot.slane %v4990, 6
      %v4993 = vsel %vm2321, %v4988, %v4992
      %v4994 = vrot.slane %v4300, 5
      %v4995 = vrot.slane %v4296, 6
      %v4996 = vor.u32 %v4994, %v4995
      %v4997 = vrot.slane %v4996, 4
      %v4998 = vrot.slane %v4310, 5
      %v4999 = vrot.slane %v4306, 6
      %v5000 = vor.u32 %v4998, %v4999
      %v5001 = vsel %vm2321, %v4997, %v5000
      %v5002 = vrot.slane %v5000, 4
      %v5004 = vshll.u32 %v3877, 16
      %v5006 = vrot.slane %v5004, 6
      %v5007 = vsel %vm2321, %v5002, %v5006
      %v5008 = vrot.slane %v4325, 5
      %v5009 = vrot.slane %v4321, 6
      %v5010 = vor.u32 %v5008, %v5009
      %v5011 = vrot.slane %v5010, 4
      %v5012 = vrot.slane %v4335, 5
      %v5013 = vrot.slane %v4331, 6
      %v5014 = vor.u32 %v5012, %v5013
      %v5015 = vsel %vm2321, %v5011, %v5014
      %v5016 = vrot.slane %v5014, 4
      %v5018 = vshll.u32 %v3881, 16
      %v5020 = vrot.slane %v5018, 6
      %v5021 = vsel %vm2321, %v5016, %v5020
      %v5022 = vrot.slane %v4350, 5
      %v5023 = vrot.slane %v4346, 6
      %v5024 = vor.u32 %v5022, %v5023
      %v5025 = vrot.slane %v5024, 4
      %v5026 = vrot.slane %v4360, 5
      %v5027 = vrot.slane %v4356, 6
      %v5028 = vor.u32 %v5026, %v5027
      %v5029 = vsel %vm2321, %v5025, %v5028
      %v5030 = vrot.slane %v5028, 4
      %v5032 = vshll.u32 %v3885, 16
      %v5034 = vrot.slane %v5032, 6
      %v5035 = vsel %vm2321, %v5030, %v5034
      %v5036 = vrot.slane %v4375, 5
      %v5037 = vrot.slane %v4371, 6
      %v5038 = vor.u32 %v5036, %v5037
      %v5039 = vrot.slane %v5038, 4
      %v5040 = vrot.slane %v4385, 5
      %v5041 = vrot.slane %v4381, 6
      %v5042 = vor.u32 %v5040, %v5041
      %v5043 = vsel %vm2321, %v5039, %v5042
      %v5044 = vrot.slane %v5042, 4
      %v5046 = vshll.u32 %v3889, 16
      %v5048 = vrot.slane %v5046, 6
      %v5049 = vsel %vm2321, %v5044, %v5048
      %v5110 = vmax.bf16 %v4710, %v4772
      %v5111 = vmax.bf16 %v4711, %v4777
      %v5112 = vmax.bf16 %v4712, %v4783
      %v5113 = vmax.bf16 %v4713, %v4786
      %v5114 = vmax.bf16 %v4714, %v4791
      %v5115 = vmax.bf16 %v4715, %v4797
      %v5116 = vmax.bf16 %v4716, %v4800
      %v5117 = vmax.bf16 %v4717, %v4805
      %v5118 = vmax.bf16 %v4718, %v4811
      %v5119 = vmax.bf16 %v4719, %v4814
      %v5120 = vmax.bf16 %v4720, %v4819
      %v5121 = vmax.bf16 %v4721, %v4825
      %v5122 = vmax.bf16 %v4722, %v4828
      %v5123 = vmax.bf16 %v4723, %v4833
      %v5124 = vmax.bf16 %v4724, %v4839
      %v5125 = vmax.bf16 %v4725, %v4842
      %v5126 = vmax.bf16 %v4726, %v4847
      %v5127 = vmax.bf16 %v4727, %v4853
      %v5128 = vmax.bf16 %v4728, %v4856
      %v5129 = vmax.bf16 %v4729, %v4861
      %v5130 = vmax.bf16 %v4730, %v4867
      %v5131 = vmax.bf16 %v4731, %v4870
      %v5132 = vmax.bf16 %v4732, %v4875
      %v5133 = vmax.bf16 %v4733, %v4881
      %v5134 = vmax.bf16 %v4734, %v4884
      %v5135 = vmax.bf16 %v4735, %v4889
      %v5136 = vmax.bf16 %v4736, %v4895
      %v5137 = vmax.bf16 %v4737, %v4898
      %v5138 = vmax.bf16 %v4738, %v4903
      %v5139 = vmax.bf16 %v4739, %v4909
      %v5140 = vmax.bf16 %v4740, %v4912
      %v5141 = vmax.bf16 %v4741, %v4917
      %v5142 = vmax.bf16 %v4742, %v4923
      %v5143 = vmax.bf16 %v4743, %v4926
      %v5144 = vmax.bf16 %v4744, %v4931
      %v5145 = vmax.bf16 %v4745, %v4937
      %v5146 = vmax.bf16 %v4746, %v4940
      %v5147 = vmax.bf16 %v4747, %v4945
      %v5148 = vmax.bf16 %v4748, %v4951
      %v5149 = vmax.bf16 %v4749, %v4954
      %v5150 = vmax.bf16 %v4750, %v4959
      %v5151 = vmax.bf16 %v4751, %v4965
      %v5152 = vmax.bf16 %v4752, %v4968
      %v5153 = vmax.bf16 %v4753, %v4973
      %v5154 = vmax.bf16 %v4754, %v4979
      %v5155 = vmax.bf16 %v4755, %v4982
      %v5156 = vmax.bf16 %v4756, %v4987
      %v5157 = vmax.bf16 %v4757, %v4993
      %v5158 = vmax.bf16 %v4758, %v4996
      %v5159 = vmax.bf16 %v4759, %v5001
      %v5160 = vmax.bf16 %v4760, %v5007
      %v5161 = vmax.bf16 %v4761, %v5010
      %v5162 = vmax.bf16 %v4762, %v5015
      %v5163 = vmax.bf16 %v4763, %v5021
      %v5164 = vmax.bf16 %v4764, %v5024
      %v5165 = vmax.bf16 %v4765, %v5029
      %v5166 = vmax.bf16 %v4766, %v5035
      %v5167 = vmax.bf16 %v4767, %v5038
      %v5168 = vmax.bf16 %v4768, %v5043
      %v5169 = vmax.bf16 %v4769, %v5049
      %v5190 = vrot.slane %v3811, 6
      %v5191 = vrot.slane %v5190, 4
      %v5192 = vrot.slane %v3812, 6
      %v5193 = vsel %vm2744, %v5191, %v5192
      %v5194 = vrot.slane %v5192, 4
      %v5195 = vrot.slane %v3813, 6
      %v5196 = vsel %vm2744, %v5194, %v5195
      %v5197 = vrot.slane %v3815, 6
      %v5198 = vrot.slane %v5197, 4
      %v5199 = vrot.slane %v3816, 6
      %v5200 = vsel %vm2744, %v5198, %v5199
      %v5201 = vrot.slane %v5199, 4
      %v5202 = vrot.slane %v3817, 6
      %v5203 = vsel %vm2744, %v5201, %v5202
      %v5204 = vrot.slane %v3819, 6
      %v5205 = vrot.slane %v5204, 4
      %v5206 = vrot.slane %v3820, 6
      %v5207 = vsel %vm2744, %v5205, %v5206
      %v5208 = vrot.slane %v5206, 4
      %v5209 = vrot.slane %v3821, 6
      %v5210 = vsel %vm2744, %v5208, %v5209
      %v5211 = vrot.slane %v3823, 6
      %v5212 = vrot.slane %v5211, 4
      %v5213 = vrot.slane %v3824, 6
      %v5214 = vsel %vm2744, %v5212, %v5213
      %v5215 = vrot.slane %v5213, 4
      %v5216 = vrot.slane %v3825, 6
      %v5217 = vsel %vm2744, %v5215, %v5216
      %v5218 = vrot.slane %v3827, 6
      %v5219 = vrot.slane %v5218, 4
      %v5220 = vrot.slane %v3828, 6
      %v5221 = vsel %vm2744, %v5219, %v5220
      %v5222 = vrot.slane %v5220, 4
      %v5223 = vrot.slane %v3829, 6
      %v5224 = vsel %vm2744, %v5222, %v5223
      %v5225 = vrot.slane %v3831, 6
      %v5226 = vrot.slane %v5225, 4
      %v5227 = vrot.slane %v3832, 6
      %v5228 = vsel %vm2744, %v5226, %v5227
      %v5229 = vrot.slane %v5227, 4
      %v5230 = vrot.slane %v3833, 6
      %v5231 = vsel %vm2744, %v5229, %v5230
      %v5232 = vrot.slane %v3835, 6
      %v5233 = vrot.slane %v5232, 4
      %v5234 = vrot.slane %v3836, 6
      %v5235 = vsel %vm2744, %v5233, %v5234
      %v5236 = vrot.slane %v5234, 4
      %v5237 = vrot.slane %v3837, 6
      %v5238 = vsel %vm2744, %v5236, %v5237
      %v5239 = vrot.slane %v3839, 6
      %v5240 = vrot.slane %v5239, 4
      %v5241 = vrot.slane %v3840, 6
      %v5242 = vsel %vm2744, %v5240, %v5241
      %v5243 = vrot.slane %v5241, 4
      %v5244 = vrot.slane %v3841, 6
      %v5245 = vsel %vm2744, %v5243, %v5244
      %v5246 = vrot.slane %v3843, 6
      %v5247 = vrot.slane %v5246, 4
      %v5248 = vrot.slane %v3844, 6
      %v5249 = vsel %vm2744, %v5247, %v5248
      %v5250 = vrot.slane %v5248, 4
      %v5251 = vrot.slane %v3845, 6
      %v5252 = vsel %vm2744, %v5250, %v5251
      %v5253 = vrot.slane %v3847, 6
      %v5254 = vrot.slane %v5253, 4
      %v5255 = vrot.slane %v3848, 6
      %v5256 = vsel %vm2744, %v5254, %v5255
      %v5257 = vrot.slane %v5255, 4
      %v5258 = vrot.slane %v3849, 6
      %v5259 = vsel %vm2744, %v5257, %v5258
      %v5260 = vrot.slane %v3851, 6
      %v5261 = vrot.slane %v5260, 4
      %v5262 = vrot.slane %v3852, 6
      %v5263 = vsel %vm2744, %v5261, %v5262
      %v5264 = vrot.slane %v5262, 4
      %v5265 = vrot.slane %v3853, 6
      %v5266 = vsel %vm2744, %v5264, %v5265
      %v5267 = vrot.slane %v3855, 6
      %v5268 = vrot.slane %v5267, 4
      %v5269 = vrot.slane %v3856, 6
      %v5270 = vsel %vm2744, %v5268, %v5269
      %v5271 = vrot.slane %v5269, 4
      %v5272 = vrot.slane %v3857, 6
      %v5273 = vsel %vm2744, %v5271, %v5272
      %v5274 = vrot.slane %v3859, 6
      %v5275 = vrot.slane %v5274, 4
      %v5276 = vrot.slane %v3860, 6
      %v5277 = vsel %vm2744, %v5275, %v5276
      %v5278 = vrot.slane %v5276, 4
      %v5279 = vrot.slane %v3861, 6
      %v5280 = vsel %vm2744, %v5278, %v5279
      %v5281 = vrot.slane %v3863, 6
      %v5282 = vrot.slane %v5281, 4
      %v5283 = vrot.slane %v3864, 6
      %v5284 = vsel %vm2744, %v5282, %v5283
      %v5285 = vrot.slane %v5283, 4
      %v5286 = vrot.slane %v3865, 6
      %v5287 = vsel %vm2744, %v5285, %v5286
      %v5288 = vrot.slane %v3867, 6
      %v5289 = vrot.slane %v5288, 4
      %v5290 = vrot.slane %v3868, 6
      %v5291 = vsel %vm2744, %v5289, %v5290
      %v5292 = vrot.slane %v5290, 4
      %v5293 = vrot.slane %v3869, 6
      %v5294 = vsel %vm2744, %v5292, %v5293
      %v5295 = vrot.slane %v3871, 6
      %v5296 = vrot.slane %v5295, 4
      %v5297 = vrot.slane %v3872, 6
      %v5298 = vsel %vm2744, %v5296, %v5297
      %v5299 = vrot.slane %v5297, 4
      %v5300 = vrot.slane %v3873, 6
      %v5301 = vsel %vm2744, %v5299, %v5300
      %v5302 = vrot.slane %v3875, 6
      %v5303 = vrot.slane %v5302, 4
      %v5304 = vrot.slane %v3876, 6
      %v5305 = vsel %vm2744, %v5303, %v5304
      %v5306 = vrot.slane %v5304, 4
      %v5307 = vrot.slane %v3877, 6
      %v5308 = vsel %vm2744, %v5306, %v5307
      %v5309 = vrot.slane %v3879, 6
      %v5310 = vrot.slane %v5309, 4
      %v5311 = vrot.slane %v3880, 6
      %v5312 = vsel %vm2744, %v5310, %v5311
      %v5313 = vrot.slane %v5311, 4
      %v5314 = vrot.slane %v3881, 6
      %v5315 = vsel %vm2744, %v5313, %v5314
      %v5316 = vrot.slane %v3883, 6
      %v5317 = vrot.slane %v5316, 4
      %v5318 = vrot.slane %v3884, 6
      %v5319 = vsel %vm2744, %v5317, %v5318
      %v5320 = vrot.slane %v5318, 4
      %v5321 = vrot.slane %v3885, 6
      %v5322 = vsel %vm2744, %v5320, %v5321
      %v5323 = vrot.slane %v3887, 6
      %v5324 = vrot.slane %v5323, 4
      %v5325 = vrot.slane %v3888, 6
      %v5326 = vsel %vm2744, %v5324, %v5325
      %v5327 = vrot.slane %v5325, 4
      %v5328 = vrot.slane %v3889, 6
      %v5329 = vsel %vm2744, %v5327, %v5328
      %v5390 = vmax.bf16 %v5110, %v5190
      %v5391 = vmax.bf16 %v5111, %v5193
      %v5392 = vmax.bf16 %v5112, %v5196
      %v5393 = vmax.bf16 %v5113, %v5197
      %v5394 = vmax.bf16 %v5114, %v5200
      %v5395 = vmax.bf16 %v5115, %v5203
      %v5396 = vmax.bf16 %v5116, %v5204
      %v5397 = vmax.bf16 %v5117, %v5207
      %v5398 = vmax.bf16 %v5118, %v5210
      %v5399 = vmax.bf16 %v5119, %v5211
      %v5400 = vmax.bf16 %v5120, %v5214
      %v5401 = vmax.bf16 %v5121, %v5217
      %v5402 = vmax.bf16 %v5122, %v5218
      %v5403 = vmax.bf16 %v5123, %v5221
      %v5404 = vmax.bf16 %v5124, %v5224
      %v5405 = vmax.bf16 %v5125, %v5225
      %v5406 = vmax.bf16 %v5126, %v5228
      %v5407 = vmax.bf16 %v5127, %v5231
      %v5408 = vmax.bf16 %v5128, %v5232
      %v5409 = vmax.bf16 %v5129, %v5235
      %v5410 = vmax.bf16 %v5130, %v5238
      %v5411 = vmax.bf16 %v5131, %v5239
      %v5412 = vmax.bf16 %v5132, %v5242
      %v5413 = vmax.bf16 %v5133, %v5245
      %v5414 = vmax.bf16 %v5134, %v5246
      %v5415 = vmax.bf16 %v5135, %v5249
      %v5416 = vmax.bf16 %v5136, %v5252
      %v5417 = vmax.bf16 %v5137, %v5253
      %v5418 = vmax.bf16 %v5138, %v5256
      %v5419 = vmax.bf16 %v5139, %v5259
      %v5420 = vmax.bf16 %v5140, %v5260
      %v5421 = vmax.bf16 %v5141, %v5263
      %v5422 = vmax.bf16 %v5142, %v5266
      %v5423 = vmax.bf16 %v5143, %v5267
      %v5424 = vmax.bf16 %v5144, %v5270
      %v5425 = vmax.bf16 %v5145, %v5273
      %v5426 = vmax.bf16 %v5146, %v5274
      %v5427 = vmax.bf16 %v5147, %v5277
      %v5428 = vmax.bf16 %v5148, %v5280
      %v5429 = vmax.bf16 %v5149, %v5281
      %v5430 = vmax.bf16 %v5150, %v5284
      %v5431 = vmax.bf16 %v5151, %v5287
      %v5432 = vmax.bf16 %v5152, %v5288
      %v5433 = vmax.bf16 %v5153, %v5291
      %v5434 = vmax.bf16 %v5154, %v5294
      %v5435 = vmax.bf16 %v5155, %v5295
      %v5436 = vmax.bf16 %v5156, %v5298
      %v5437 = vmax.bf16 %v5157, %v5301
      %v5438 = vmax.bf16 %v5158, %v5302
      %v5439 = vmax.bf16 %v5159, %v5305
      %v5440 = vmax.bf16 %v5160, %v5308
      %v5441 = vmax.bf16 %v5161, %v5309
      %v5442 = vmax.bf16 %v5162, %v5312
      %v5443 = vmax.bf16 %v5163, %v5315
      %v5444 = vmax.bf16 %v5164, %v5316
      %v5445 = vmax.bf16 %v5165, %v5319
      %v5446 = vmax.bf16 %v5166, %v5322
      %v5447 = vmax.bf16 %v5167, %v5323
      %v5448 = vmax.bf16 %v5168, %v5326
      %v5449 = vmax.bf16 %v5169, %v5329
      %v5450 = vmax.bf16 %v5390, %v5393
      %v5451 = vmax.bf16 %v5391, %v5394
      %v5452 = vmax.bf16 %v5392, %v5395
      %v5453 = vmax.bf16 %v5393, %v5396
      %v5454 = vmax.bf16 %v5394, %v5397
      %v5455 = vmax.bf16 %v5395, %v5398
      %v5456 = vmax.bf16 %v5396, %v5399
      %v5457 = vmax.bf16 %v5397, %v5400
      %v5458 = vmax.bf16 %v5398, %v5401
      %v5459 = vmax.bf16 %v5399, %v5402
      %v5460 = vmax.bf16 %v5400, %v5403
      %v5461 = vmax.bf16 %v5401, %v5404
      %v5462 = vmax.bf16 %v5402, %v5405
      %v5463 = vmax.bf16 %v5403, %v5406
      %v5464 = vmax.bf16 %v5404, %v5407
      %v5465 = vmax.bf16 %v5405, %v5408
      %v5466 = vmax.bf16 %v5406, %v5409
      %v5467 = vmax.bf16 %v5407, %v5410
      %v5468 = vmax.bf16 %v5408, %v5411
      %v5469 = vmax.bf16 %v5409, %v5412
      %v5470 = vmax.bf16 %v5410, %v5413
      %v5471 = vmax.bf16 %v5411, %v5414
      %v5472 = vmax.bf16 %v5412, %v5415
      %v5473 = vmax.bf16 %v5413, %v5416
      %v5474 = vmax.bf16 %v5414, %v5417
      %v5475 = vmax.bf16 %v5415, %v5418
      %v5476 = vmax.bf16 %v5416, %v5419
      %v5477 = vmax.bf16 %v5417, %v5420
      %v5478 = vmax.bf16 %v5418, %v5421
      %v5479 = vmax.bf16 %v5419, %v5422
      %v5480 = vmax.bf16 %v5420, %v5423
      %v5481 = vmax.bf16 %v5421, %v5424
      %v5482 = vmax.bf16 %v5422, %v5425
      %v5483 = vmax.bf16 %v5423, %v5426
      %v5484 = vmax.bf16 %v5424, %v5427
      %v5485 = vmax.bf16 %v5425, %v5428
      %v5486 = vmax.bf16 %v5426, %v5429
      %v5487 = vmax.bf16 %v5427, %v5430
      %v5488 = vmax.bf16 %v5428, %v5431
      %v5489 = vmax.bf16 %v5429, %v5432
      %v5490 = vmax.bf16 %v5430, %v5433
      %v5491 = vmax.bf16 %v5431, %v5434
      %v5492 = vmax.bf16 %v5432, %v5435
      %v5493 = vmax.bf16 %v5433, %v5436
      %v5494 = vmax.bf16 %v5434, %v5437
      %v5495 = vmax.bf16 %v5435, %v5438
      %v5496 = vmax.bf16 %v5436, %v5439
      %v5497 = vmax.bf16 %v5437, %v5440
      %v5498 = vmax.bf16 %v5450, %v5396
      %v5499 = vmax.bf16 %v5451, %v5397
      %v5500 = vmax.bf16 %v5452, %v5398
      %v5501 = vmax.bf16 %v5453, %v5399
      %v5502 = vmax.bf16 %v5454, %v5400
      %v5503 = vmax.bf16 %v5455, %v5401
      %v5504 = vmax.bf16 %v5456, %v5402
      %v5505 = vmax.bf16 %v5457, %v5403
      %v5506 = vmax.bf16 %v5458, %v5404
      %v5507 = vmax.bf16 %v5459, %v5405
      %v5508 = vmax.bf16 %v5460, %v5406
      %v5509 = vmax.bf16 %v5461, %v5407
      %v5510 = vmax.bf16 %v5462, %v5408
      %v5511 = vmax.bf16 %v5463, %v5409
      %v5512 = vmax.bf16 %v5464, %v5410
      %v5513 = vmax.bf16 %v5465, %v5411
      %v5514 = vmax.bf16 %v5466, %v5412
      %v5515 = vmax.bf16 %v5467, %v5413
      %v5516 = vmax.bf16 %v5468, %v5414
      %v5517 = vmax.bf16 %v5469, %v5415
      %v5518 = vmax.bf16 %v5470, %v5416
      %v5519 = vmax.bf16 %v5471, %v5417
      %v5520 = vmax.bf16 %v5472, %v5418
      %v5521 = vmax.bf16 %v5473, %v5419
      %v5522 = vmax.bf16 %v5474, %v5420
      %v5523 = vmax.bf16 %v5475, %v5421
      %v5524 = vmax.bf16 %v5476, %v5422
      %v5525 = vmax.bf16 %v5477, %v5423
      %v5526 = vmax.bf16 %v5478, %v5424
      %v5527 = vmax.bf16 %v5479, %v5425
      %v5528 = vmax.bf16 %v5480, %v5426
      %v5529 = vmax.bf16 %v5481, %v5427
      %v5530 = vmax.bf16 %v5482, %v5428
      %v5531 = vmax.bf16 %v5483, %v5429
      %v5532 = vmax.bf16 %v5484, %v5430
      %v5533 = vmax.bf16 %v5485, %v5431
      %v5534 = vmax.bf16 %v5486, %v5432
      %v5535 = vmax.bf16 %v5487, %v5433
      %v5536 = vmax.bf16 %v5488, %v5434
      %v5537 = vmax.bf16 %v5489, %v5435
      %v5538 = vmax.bf16 %v5490, %v5436
      %v5539 = vmax.bf16 %v5491, %v5437
      %v5540 = vmax.bf16 %v5492, %v5438
      %v5541 = vmax.bf16 %v5493, %v5439
      %v5542 = vmax.bf16 %v5494, %v5440
      %v5543 = vmax.bf16 %v5495, %v5441
      %v5544 = vmax.bf16 %v5496, %v5442
      %v5545 = vmax.bf16 %v5497, %v5443
      %v5546 = vmax.bf16 %v5498, %v5399
      %v5547 = vmax.bf16 %v5499, %v5400
      %v5548 = vmax.bf16 %v5500, %v5401
      %v5549 = vmax.bf16 %v5501, %v5402
      %v5550 = vmax.bf16 %v5502, %v5403
      %v5551 = vmax.bf16 %v5503, %v5404
      %v5552 = vmax.bf16 %v5504, %v5405
      %v5553 = vmax.bf16 %v5505, %v5406
      %v5554 = vmax.bf16 %v5506, %v5407
      %v5555 = vmax.bf16 %v5507, %v5408
      %v5556 = vmax.bf16 %v5508, %v5409
      %v5557 = vmax.bf16 %v5509, %v5410
      %v5558 = vmax.bf16 %v5510, %v5411
      %v5559 = vmax.bf16 %v5511, %v5412
      %v5560 = vmax.bf16 %v5512, %v5413
      %v5561 = vmax.bf16 %v5513, %v5414
      %v5562 = vmax.bf16 %v5514, %v5415
      %v5563 = vmax.bf16 %v5515, %v5416
      %v5564 = vmax.bf16 %v5516, %v5417
      %v5565 = vmax.bf16 %v5517, %v5418
      %v5566 = vmax.bf16 %v5518, %v5419
      %v5567 = vmax.bf16 %v5519, %v5420
      %v5568 = vmax.bf16 %v5520, %v5421
      %v5569 = vmax.bf16 %v5521, %v5422
      %v5570 = vmax.bf16 %v5522, %v5423
      %v5571 = vmax.bf16 %v5523, %v5424
      %v5572 = vmax.bf16 %v5524, %v5425
      %v5573 = vmax.bf16 %v5525, %v5426
      %v5574 = vmax.bf16 %v5526, %v5427
      %v5575 = vmax.bf16 %v5527, %v5428
      %v5576 = vmax.bf16 %v5528, %v5429
      %v5577 = vmax.bf16 %v5529, %v5430
      %v5578 = vmax.bf16 %v5530, %v5431
      %v5579 = vmax.bf16 %v5531, %v5432
      %v5580 = vmax.bf16 %v5532, %v5433
      %v5581 = vmax.bf16 %v5533, %v5434
      %v5582 = vmax.bf16 %v5534, %v5435
      %v5583 = vmax.bf16 %v5535, %v5436
      %v5584 = vmax.bf16 %v5536, %v5437
      %v5585 = vmax.bf16 %v5537, %v5438
      %v5586 = vmax.bf16 %v5538, %v5439
      %v5587 = vmax.bf16 %v5539, %v5440
      %v5588 = vmax.bf16 %v5540, %v5441
      %v5589 = vmax.bf16 %v5541, %v5442
      %v5590 = vmax.bf16 %v5542, %v5443
      %v5591 = vmax.bf16 %v5543, %v5444
      %v5592 = vmax.bf16 %v5544, %v5445
      %v5593 = vmax.bf16 %v5545, %v5446
      %v5594 = vmax.bf16 %v5546, %v5402
      %v5595 = vmax.bf16 %v5547, %v5403
      %v5596 = vmax.bf16 %v5548, %v5404
      %v5597 = vmax.bf16 %v5549, %v5405
      %v5598 = vmax.bf16 %v5550, %v5406
      %v5599 = vmax.bf16 %v5551, %v5407
      %v5600 = vmax.bf16 %v5552, %v5408
      %v5601 = vmax.bf16 %v5553, %v5409
      %v5602 = vmax.bf16 %v5554, %v5410
      %v5603 = vmax.bf16 %v5555, %v5411
      %v5604 = vmax.bf16 %v5556, %v5412
      %v5605 = vmax.bf16 %v5557, %v5413
      %v5606 = vmax.bf16 %v5558, %v5414
      %v5607 = vmax.bf16 %v5559, %v5415
      %v5608 = vmax.bf16 %v5560, %v5416
      %v5609 = vmax.bf16 %v5561, %v5417
      %v5610 = vmax.bf16 %v5562, %v5418
      %v5611 = vmax.bf16 %v5563, %v5419
      %v5612 = vmax.bf16 %v5564, %v5420
      %v5613 = vmax.bf16 %v5565, %v5421
      %v5614 = vmax.bf16 %v5566, %v5422
      %v5615 = vmax.bf16 %v5567, %v5423
      %v5616 = vmax.bf16 %v5568, %v5424
      %v5617 = vmax.bf16 %v5569, %v5425
      %v5618 = vmax.bf16 %v5570, %v5426
      %v5619 = vmax.bf16 %v5571, %v5427
      %v5620 = vmax.bf16 %v5572, %v5428
      %v5621 = vmax.bf16 %v5573, %v5429
      %v5622 = vmax.bf16 %v5574, %v5430
      %v5623 = vmax.bf16 %v5575, %v5431
      %v5624 = vmax.bf16 %v5576, %v5432
      %v5625 = vmax.bf16 %v5577, %v5433
      %v5626 = vmax.bf16 %v5578, %v5434
      %v5627 = vmax.bf16 %v5579, %v5435
      %v5628 = vmax.bf16 %v5580, %v5436
      %v5629 = vmax.bf16 %v5581, %v5437
      %v5630 = vmax.bf16 %v5582, %v5438
      %v5631 = vmax.bf16 %v5583, %v5439
      %v5632 = vmax.bf16 %v5584, %v5440
      %v5633 = vmax.bf16 %v5585, %v5441
      %v5634 = vmax.bf16 %v5586, %v5442
      %v5635 = vmax.bf16 %v5587, %v5443
      %v5636 = vmax.bf16 %v5588, %v5444
      %v5637 = vmax.bf16 %v5589, %v5445
      %v5638 = vmax.bf16 %v5590, %v5446
      %v5639 = vmax.bf16 %v5591, %v5447
      %v5640 = vmax.bf16 %v5592, %v5448
      %v5641 = vmax.bf16 %v5593, %v5449
      %v5642 = vld [vmem:[#allocation3] sm:$0xff]
      %v5643 = vld [vmem:[#allocation3 + $0x8] sm:$0xff]
      %v5644 = vld [vmem:[#allocation3 + $0x10] sm:$0xff]
      %v5645 = vld [vmem:[#allocation3 + $0x18] sm:$0xff]
      %v5646 = vld [vmem:[#allocation3 + $0x20] sm:$0xff]
      %v5647 = vld [vmem:[#allocation3 + $0x28] sm:$0xff]
      %v5648 = vld [vmem:[#allocation3 + $0x30] sm:$0xff]
      %v5649 = vld [vmem:[#allocation3 + $0x38] sm:$0xff]
      %v5650 = vld [vmem:[#allocation3 + $0x40] sm:$0xff]
      %v5651 = vld [vmem:[#allocation3 + $0x48] sm:$0xff]
      %v5652 = vld [vmem:[#allocation3 + $0x50] sm:$0xff]
      %v5653 = vld [vmem:[#allocation3 + $0x58] sm:$0xff]
      %v5654 = vld [vmem:[#allocation3 + $0x60] sm:$0xff]
      %v5655 = vld [vmem:[#allocation3 + $0x68] sm:$0xff]
      %v5656 = vld [vmem:[#allocation3 + $0x70] sm:$0xff]
      %v5657 = vld [vmem:[#allocation3 + $0x78] sm:$0xff]
      %v5658 = vld [vmem:[#allocation3 + $0x80] sm:$0xff]
      %v5659 = vld [vmem:[#allocation3 + $0x88] sm:$0xff]
      %v5660 = vld [vmem:[#allocation3 + $0x90] sm:$0xff]
      %v5661 = vld [vmem:[#allocation3 + $0x98] sm:$0xff]
      %v5662 = vld [vmem:[#allocation3 + $0xa0] sm:$0xff]
      %v5663 = vld [vmem:[#allocation3 + $0xa8] sm:$0xff]
      %v5664 = vld [vmem:[#allocation3 + $0xb0] sm:$0xff]
      %v5665 = vld [vmem:[#allocation3 + $0xb8] sm:$0xff]
      %v5666 = vld [vmem:[#allocation3 + $0xc0] sm:$0xff]
      %v5667 = vld [vmem:[#allocation3 + $0xc8] sm:$0xff]
      %v5668 = vld [vmem:[#allocation3 + $0xd0] sm:$0xff]
      %v5669 = vld [vmem:[#allocation3 + $0xd8] sm:$0xff]
      %v5670 = vld [vmem:[#allocation3 + $0xe0] sm:$0xff]
      %v5671 = vld [vmem:[#allocation3 + $0xe8] sm:$0xff]
      %v5672 = vld [vmem:[#allocation3 + $0xf0] sm:$0xff]
      %v5673 = vld [vmem:[#allocation3 + $0xf8] sm:$0xff]
      %v5722 = vrot.slane %v5594, 7
      %v5723 = vrot.slane %v5722, 4
      %v5724 = vrot.slane %v5595, 7
      %v5725 = vsel %vm3279, %v5723, %v5724
      %v5726 = vrot.slane %v5724, 4
      %v5727 = vrot.slane %v5596, 7
      %v5728 = vsel %vm3279, %v5726, %v5727
      %v5729 = vrot.slane %v5597, 7
      %v5730 = vrot.slane %v5729, 4
      %v5731 = vrot.slane %v5598, 7
      %v5732 = vsel %vm3279, %v5730, %v5731
      %v5733 = vrot.slane %v5731, 4
      %v5734 = vrot.slane %v5599, 7
      %v5735 = vsel %vm3279, %v5733, %v5734
      %v5736 = vrot.slane %v5600, 7
      %v5737 = vrot.slane %v5736, 4
      %v5738 = vrot.slane %v5601, 7
      %v5739 = vsel %vm3279, %v5737, %v5738
      %v5740 = vrot.slane %v5738, 4
      %v5741 = vrot.slane %v5602, 7
      %v5742 = vsel %vm3279, %v5740, %v5741
      %v5743 = vrot.slane %v5603, 7
      %v5744 = vrot.slane %v5743, 4
      %v5745 = vrot.slane %v5604, 7
      %v5746 = vsel %vm3279, %v5744, %v5745
      %v5747 = vrot.slane %v5745, 4
      %v5748 = vrot.slane %v5605, 7
      %v5749 = vsel %vm3279, %v5747, %v5748
      %v5750 = vrot.slane %v5606, 7
      %v5751 = vrot.slane %v5750, 4
      %v5752 = vrot.slane %v5607, 7
      %v5753 = vsel %vm3279, %v5751, %v5752
      %v5754 = vrot.slane %v5752, 4
      %v5755 = vrot.slane %v5608, 7
      %v5756 = vsel %vm3279, %v5754, %v5755
      %v5757 = vrot.slane %v5609, 7
      %v5758 = vrot.slane %v5757, 4
      %v5759 = vrot.slane %v5610, 7
      %v5760 = vsel %vm3279, %v5758, %v5759
      %v5761 = vrot.slane %v5759, 4
      %v5762 = vrot.slane %v5611, 7
      %v5763 = vsel %vm3279, %v5761, %v5762
      %v5764 = vrot.slane %v5612, 7
      %v5765 = vrot.slane %v5764, 4
      %v5766 = vrot.slane %v5613, 7
      %v5767 = vsel %vm3279, %v5765, %v5766
      %v5768 = vrot.slane %v5766, 4
      %v5769 = vrot.slane %v5614, 7
      %v5770 = vsel %vm3279, %v5768, %v5769
      %v5771 = vrot.slane %v5615, 7
      %v5772 = vrot.slane %v5771, 4
      %v5773 = vrot.slane %v5616, 7
      %v5774 = vsel %vm3279, %v5772, %v5773
      %v5775 = vrot.slane %v5773, 4
      %v5776 = vrot.slane %v5617, 7
      %v5777 = vsel %vm3279, %v5775, %v5776
      %v5778 = vrot.slane %v5618, 7
      %v5779 = vrot.slane %v5778, 4
      %v5780 = vrot.slane %v5619, 7
      %v5781 = vsel %vm3279, %v5779, %v5780
      %v5782 = vrot.slane %v5780, 4
      %v5783 = vrot.slane %v5620, 7
      %v5784 = vsel %vm3279, %v5782, %v5783
      %v5785 = vrot.slane %v5621, 7
      %v5786 = vrot.slane %v5785, 4
      %v5787 = vrot.slane %v5622, 7
      %v5788 = vsel %vm3279, %v5786, %v5787
      %v5789 = vrot.slane %v5787, 4
      %v5790 = vrot.slane %v5623, 7
      %v5791 = vsel %vm3279, %v5789, %v5790
      %v5792 = vrot.slane %v5624, 7
      %v5793 = vrot.slane %v5792, 4
      %v5794 = vrot.slane %v5625, 7
      %v5795 = vsel %vm3279, %v5793, %v5794
      %v5796 = vrot.slane %v5794, 4
      %v5797 = vrot.slane %v5626, 7
      %v5798 = vsel %vm3279, %v5796, %v5797
      %v5799 = vrot.slane %v5627, 7
      %v5800 = vrot.slane %v5799, 4
      %v5801 = vrot.slane %v5628, 7
      %v5802 = vsel %vm3279, %v5800, %v5801
      %v5803 = vrot.slane %v5801, 4
      %v5804 = vrot.slane %v5629, 7
      %v5805 = vsel %vm3279, %v5803, %v5804
      %v5806 = vrot.slane %v5630, 7
      %v5807 = vrot.slane %v5806, 4
      %v5808 = vrot.slane %v5631, 7
      %v5809 = vsel %vm3279, %v5807, %v5808
      %v5810 = vrot.slane %v5808, 4
      %v5811 = vrot.slane %v5632, 7
      %v5812 = vsel %vm3279, %v5810, %v5811
      %v5813 = vrot.slane %v5633, 7
      %v5814 = vrot.slane %v5813, 4
      %v5815 = vrot.slane %v5634, 7
      %v5816 = vsel %vm3279, %v5814, %v5815
      %v5817 = vrot.slane %v5815, 4
      %v5818 = vrot.slane %v5635, 7
      %v5819 = vsel %vm3279, %v5817, %v5818
      %v5820 = vrot.slane %v5636, 7
      %v5821 = vrot.slane %v5820, 4
      %v5822 = vrot.slane %v5637, 7
      %v5823 = vsel %vm3279, %v5821, %v5822
      %v5824 = vrot.slane %v5822, 4
      %v5825 = vrot.slane %v5638, 7
      %v5826 = vsel %vm3279, %v5824, %v5825
      %v5827 = vrot.slane %v5639, 7
      %v5828 = vrot.slane %v5827, 4
      %v5829 = vrot.slane %v5640, 7
      %v5830 = vsel %vm3279, %v5828, %v5829
      %v5831 = vrot.slane %v5829, 4
      %v5832 = vrot.slane %v5641, 7
      %v5833 = vsel %vm3279, %v5831, %v5832
      %s5834 = scalar_lea.vmem %s4, 128
      %v5835 = vld [vmem:[%s5834] sm:$0xf]
      %v5836 = vld [vmem:[%s5834 + $0x4] sm:$0xf]
      %v5837 = vld [vmem:[%s5834 + $0x8] sm:$0xf]
      %v5838 = vld [vmem:[%s5834 + $0xc] sm:$0xf]
      %v5839 = vld [vmem:[%s5834 + $0x10] sm:$0xf]
      %v5840 = vld [vmem:[%s5834 + $0x14] sm:$0xf]
      %v5841 = vld [vmem:[%s5834 + $0x18] sm:$0xf]
      %v5842 = vld [vmem:[%s5834 + $0x1c] sm:$0xf]
      %v5843 = vld [vmem:[%s5834 + $0x20] sm:$0xf]
      %v5844 = vld [vmem:[%s5834 + $0x24] sm:$0xf]
      %v5845 = vld [vmem:[%s5834 + $0x28] sm:$0xf]
      %v5846 = vld [vmem:[%s5834 + $0x2c] sm:$0xf]
      %v5847 = vld [vmem:[%s5834 + $0x30] sm:$0xf]
      %v5848 = vld [vmem:[%s5834 + $0x34] sm:$0xf]
      %v5849 = vld [vmem:[%s5834 + $0x38] sm:$0xf]
      %v5850 = vld [vmem:[%s5834 + $0x3c] sm:$0xf]
      %v5851 = vunpack.c.l.b16 %v5725
      %v5852 = vunpack.c.l.b16 %v5728
      %v5853 = vunpack.c.l.b16 %v5732
      %v5854 = vunpack.c.l.b16 %v5735
      %v5855 = vunpack.c.l.b16 %v5739
      %v5856 = vunpack.c.l.b16 %v5742
      %v5857 = vunpack.c.l.b16 %v5746
      %v5858 = vunpack.c.l.b16 %v5749
      %v5859 = vunpack.c.l.b16 %v5753
      %v5860 = vunpack.c.l.b16 %v5756
      %v5861 = vunpack.c.l.b16 %v5760
      %v5862 = vunpack.c.l.b16 %v5763
      %v5863 = vunpack.c.l.b16 %v5767
      %v5864 = vunpack.c.l.b16 %v5770
      %v5865 = vunpack.c.l.b16 %v5774
      %v5866 = vunpack.c.l.b16 %v5777
      %v5867 = vunpack.c.l.b16 %v5781
      %v5868 = vunpack.c.l.b16 %v5784
      %v5869 = vunpack.c.l.b16 %v5788
      %v5870 = vunpack.c.l.b16 %v5791
      %v5871 = vunpack.c.l.b16 %v5795
      %v5872 = vunpack.c.l.b16 %v5798
      %v5873 = vunpack.c.l.b16 %v5802
      %v5874 = vunpack.c.l.b16 %v5805
      %v5875 = vunpack.c.l.b16 %v5809
      %v5876 = vunpack.c.l.b16 %v5812
      %v5877 = vunpack.c.l.b16 %v5816
      %v5878 = vunpack.c.l.b16 %v5819
      %v5879 = vunpack.c.l.b16 %v5823
      %v5880 = vunpack.c.l.b16 %v5826
      %v5881 = vunpack.c.l.b16 %v5830
      %v5882 = vunpack.c.l.b16 %v5833
      %v5883 = vpack.c.b16 %v5852, %v5851
      %v5884 = vpack.c.b16 %v5854, %v5853
      %v5885 = vpack.c.b16 %v5856, %v5855
      %v5886 = vpack.c.b16 %v5858, %v5857
      %v5887 = vpack.c.b16 %v5860, %v5859
      %v5888 = vpack.c.b16 %v5862, %v5861
      %v5889 = vpack.c.b16 %v5864, %v5863
      %v5890 = vpack.c.b16 %v5866, %v5865
      %v5891 = vpack.c.b16 %v5868, %v5867
      %v5892 = vpack.c.b16 %v5870, %v5869
      %v5893 = vpack.c.b16 %v5872, %v5871
      %v5894 = vpack.c.b16 %v5874, %v5873
      %v5895 = vpack.c.b16 %v5876, %v5875
      %v5896 = vpack.c.b16 %v5878, %v5877
      %v5897 = vpack.c.b16 %v5880, %v5879
      %v5898 = vpack.c.b16 %v5882, %v5881
      %v5931 = vunpack.c.l.b16 %v5835
      %v5932 = vunpack.c.l.b16 %v5836
      %v5933 = vunpack.c.l.b16 %v5837
      %v5934 = vunpack.c.l.b16 %v5838
      %v5935 = vunpack.c.l.b16 %v5839
      %v5936 = vunpack.c.l.b16 %v5840
      %v5937 = vunpack.c.l.b16 %v5841
      %v5938 = vunpack.c.l.b16 %v5842
      %v5939 = vunpack.c.l.b16 %v5843
      %v5940 = vunpack.c.l.b16 %v5844
      %v5941 = vunpack.c.l.b16 %v5845
      %v5942 = vunpack.c.l.b16 %v5846
      %v5943 = vunpack.c.l.b16 %v5847
      %v5944 = vunpack.c.l.b16 %v5848
      %v5945 = vunpack.c.l.b16 %v5849
      %v5946 = vunpack.c.l.b16 %v5850
      %v5947 = vpack.c.b16 %v5932, %v5931
      %v5948 = vpack.c.b16 %v5934, %v5933
      %v5949 = vpack.c.b16 %v5936, %v5935
      %v5950 = vpack.c.b16 %v5938, %v5937
      %v5951 = vpack.c.b16 %v5940, %v5939
      %v5952 = vpack.c.b16 %v5942, %v5941
      %v5953 = vpack.c.b16 %v5944, %v5943
      %v5954 = vpack.c.b16 %v5946, %v5945
      %5963 = vmatprep.subr.bf16.mxu0 0
      %5964 = vmatpush1.bf16.msra.mxu0 %v5947
      %5965 = vmatprep.subr.bf16.mxu0 0
      %5966 = vmatpush1.bf16.msra.mxu0 %v5948
      %5967 = vmatprep.subr.bf16.mxu0 0
      %5968 = vmatpush1.bf16.msra.mxu0 %v5949
      %5969 = vmatprep.subr.bf16.mxu0 0
      %5970 = vmatpush1.bf16.msra.mxu0 %v5950
      %5971 = vmatprep.subr.bf16.mxu0 0
      %5972 = vmatpush1.bf16.msra.mxu0 %v5951
      %5973 = vmatprep.subr.bf16.mxu0 0
      %5974 = vmatpush1.bf16.msra.mxu0 %v5952
      %5975 = vmatprep.subr.bf16.mxu0 0
      %5976 = vmatpush1.bf16.msra.mxu0 %v5953
      %5977 = vmatprep.subr.bf16.mxu0 0
      %5978 = vmatpush1.bf16.msra.mxu0 %v5954
      %5979 = vmatprep.subr.bf16.mxu0 0
      %5980 = vmatpush1.bf16.msra.mxu0 0
      %5981 = vmatprep.subr.bf16.mxu0 0
      %5982 = vmatpush1.bf16.msra.mxu0 0
      %5983 = vmatprep.subr.bf16.mxu0 0
      %5984 = vmatpush1.bf16.msra.mxu0 0
      %5985 = vmatprep.subr.bf16.mxu0 0
      %5986 = vmatpush1.bf16.msra.mxu0 0
      %5987 = vmatprep.subr.bf16.mxu0 0
      %5988 = vmatpush1.bf16.msra.mxu0 0
      %5989 = vmatprep.subr.bf16.mxu0 0
      %5990 = vmatpush1.bf16.msra.mxu0 0
      %5991 = vmatprep.subr.bf16.mxu0 0
      %5992 = vmatpush1.bf16.msra.mxu0 0
      %5993 = vmatprep.subr.bf16.mxu0 0
      %5994 = vmatpush1.bf16.msra.mxu0 0
      %5995 = vmatprep.mubr.bf16.mxu0 0
      %5996 = vmatmul.mubr.bf16.gmra.mrb[0].mxu0 %v5883
      %v5997 = vpop.f32.mrb[0].mxu0
      %v5998 = vadd.f32 0.0, %v5997
      %v5999 = vpop.f32.mrb[0].mxu0
      %v6000 = vpop.f32.mrb[0].mxu0
      %v6001 = vadd.f32 0.0, %v6000
      %v6002 = vpop.f32.mrb[0].mxu0
      %6003 = vmatprep.mubr.bf16.mxu0 0
      %6004 = vmatmul.mubr.bf16.gmra.mrb[0].mxu0 %v5884
      %v6005 = vpop.f32.mrb[0].mxu0
      %v6006 = vadd.f32 0.0, %v6005
      %v6007 = vpop.f32.mrb[0].mxu0
      %v6008 = vpop.f32.mrb[0].mxu0
      %v6009 = vadd.f32 0.0, %v6008
      %v6010 = vpop.f32.mrb[0].mxu0
      %6011 = vmatprep.mubr.bf16.mxu0 0
      %6012 = vmatmul.mubr.bf16.gmra.mrb[0].mxu0 %v5885
      %v6013 = vpop.f32.mrb[0].mxu0
      %v6014 = vadd.f32 0.0, %v6013
      %v6015 = vpop.f32.mrb[0].mxu0
      %v6016 = vpop.f32.mrb[0].mxu0
      %v6017 = vadd.f32 0.0, %v6016
      %v6018 = vpop.f32.mrb[0].mxu0
      %6019 = vmatprep.mubr.bf16.mxu0 0
      %6020 = vmatmul.mubr.bf16.gmra.mrb[0].mxu0 %v5886
      %v6021 = vpop.f32.mrb[0].mxu0
      %v6022 = vadd.f32 0.0, %v6021
      %v6023 = vpop.f32.mrb[0].mxu0
      %v6024 = vpop.f32.mrb[0].mxu0
      %v6025 = vadd.f32 0.0, %v6024
      %v6026 = vpop.f32.mrb[0].mxu0
      %6027 = vmatprep.mubr.bf16.mxu0 0
      %6028 = vmatmul.mubr.bf16.gmra.mrb[0].mxu0 %v5887
      %v6029 = vpop.f32.mrb[0].mxu0
      %v6030 = vadd.f32 0.0, %v6029
      %v6031 = vpop.f32.mrb[0].mxu0
      %v6032 = vpop.f32.mrb[0].mxu0
      %v6033 = vadd.f32 0.0, %v6032
      %v6034 = vpop.f32.mrb[0].mxu0
      %6035 = vmatprep.mubr.bf16.mxu0 0
      %6036 = vmatmul.mubr.bf16.gmra.mrb[0].mxu0 %v5888
      %v6037 = vpop.f32.mrb[0].mxu0
      %v6038 = vadd.f32 0.0, %v6037
      %v6039 = vpop.f32.mrb[0].mxu0
      %v6040 = vpop.f32.mrb[0].mxu0
      %v6041 = vadd.f32 0.0, %v6040
      %v6042 = vpop.f32.mrb[0].mxu0
      %6043 = vmatprep.mubr.bf16.mxu0 0
      %6044 = vmatmul.mubr.bf16.gmra.mrb[0].mxu0 %v5889
      %v6045 = vpop.f32.mrb[0].mxu0
      %v6046 = vadd.f32 0.0, %v6045
      %v6047 = vpop.f32.mrb[0].mxu0
      %v6048 = vpop.f32.mrb[0].mxu0
      %v6049 = vadd.f32 0.0, %v6048
      %v6050 = vpop.f32.mrb[0].mxu0
      %6051 = vmatprep.mubr.bf16.mxu0 0
      %6052 = vmatmul.mubr.bf16.gmra.mrb[0].mxu0 %v5890
      %v6053 = vpop.f32.mrb[0].mxu0
      %v6054 = vadd.f32 0.0, %v6053
      %v6055 = vpop.f32.mrb[0].mxu0
      %v6056 = vpop.f32.mrb[0].mxu0
      %v6057 = vadd.f32 0.0, %v6056
      %v6058 = vpop.f32.mrb[0].mxu0
      %6059 = vmatprep.mubr.bf16.mxu0 0
      %6060 = vmatmul.mubr.bf16.gmra.mrb[0].mxu0 %v5891
      %v6061 = vpop.f32.mrb[0].mxu0
      %v6062 = vadd.f32 0.0, %v6061
      %v6063 = vpop.f32.mrb[0].mxu0
      %v6064 = vpop.f32.mrb[0].mxu0
      %v6065 = vadd.f32 0.0, %v6064
      %v6066 = vpop.f32.mrb[0].mxu0
      %6067 = vmatprep.mubr.bf16.mxu0 0
      %6068 = vmatmul.mubr.bf16.gmra.mrb[0].mxu0 %v5892
      %v6069 = vpop.f32.mrb[0].mxu0
      %v6070 = vadd.f32 0.0, %v6069
      %v6071 = vpop.f32.mrb[0].mxu0
      %v6072 = vpop.f32.mrb[0].mxu0
      %v6073 = vadd.f32 0.0, %v6072
      %v6074 = vpop.f32.mrb[0].mxu0
      %6075 = vmatprep.mubr.bf16.mxu0 0
      %6076 = vmatmul.mubr.bf16.gmra.mrb[0].mxu0 %v5893
      %v6077 = vpop.f32.mrb[0].mxu0
      %v6078 = vadd.f32 0.0, %v6077
      %v6079 = vpop.f32.mrb[0].mxu0
      %v6080 = vpop.f32.mrb[0].mxu0
      %v6081 = vadd.f32 0.0, %v6080
      %v6082 = vpop.f32.mrb[0].mxu0
      %6083 = vmatprep.mubr.bf16.mxu0 0
      %6084 = vmatmul.mubr.bf16.gmra.mrb[0].mxu0 %v5894
      %v6085 = vpop.f32.mrb[0].mxu0
      %v6086 = vadd.f32 0.0, %v6085
      %v6087 = vpop.f32.mrb[0].mxu0
      %v6088 = vpop.f32.mrb[0].mxu0
      %v6089 = vadd.f32 0.0, %v6088
      %v6090 = vpop.f32.mrb[0].mxu0
      %6091 = vmatprep.mubr.bf16.mxu0 0
      %6092 = vmatmul.mubr.bf16.gmra.mrb[0].mxu0 %v5895
      %v6093 = vpop.f32.mrb[0].mxu0
      %v6094 = vadd.f32 0.0, %v6093
      %v6095 = vpop.f32.mrb[0].mxu0
      %v6096 = vpop.f32.mrb[0].mxu0
      %v6097 = vadd.f32 0.0, %v6096
      %v6098 = vpop.f32.mrb[0].mxu0
      %6099 = vmatprep.mubr.bf16.mxu0 0
      %6100 = vmatmul.mubr.bf16.gmra.mrb[0].mxu0 %v5896
      %v6101 = vpop.f32.mrb[0].mxu0
      %v6102 = vadd.f32 0.0, %v6101
      %v6103 = vpop.f32.mrb[0].mxu0
      %v6104 = vpop.f32.mrb[0].mxu0
      %v6105 = vadd.f32 0.0, %v6104
      %v6106 = vpop.f32.mrb[0].mxu0
      %6107 = vmatprep.mubr.bf16.mxu0 0
      %6108 = vmatmul.mubr.bf16.gmra.mrb[0].mxu0 %v5897
      %v6109 = vpop.f32.mrb[0].mxu0
      %v6110 = vadd.f32 0.0, %v6109
      %v6111 = vpop.f32.mrb[0].mxu0
      %v6112 = vpop.f32.mrb[0].mxu0
      %v6113 = vadd.f32 0.0, %v6112
      %v6114 = vpop.f32.mrb[0].mxu0
      %6115 = vmatprep.mubr.bf16.mxu0 0
      %6116 = vmatmul.mubr.bf16.gmra.mrb[0].mxu0 %v5898
      %v6117 = vpop.f32.mrb[0].mxu0
      %v6118 = vadd.f32 0.0, %v6117
      %v6119 = vpop.f32.mrb[0].mxu0
      %v6120 = vpop.f32.mrb[0].mxu0
      %v6121 = vadd.f32 0.0, %v6120
      %v6122 = vpop.f32.mrb[0].mxu0
      %6123 = vdwg.mxu0
      %v6124 = vadd.f32 %v5642, %v5998
      %v6125 = vadd.f32 %v5643, %v6001
      %v6126 = vadd.f32 %v5644, %v6006
      %v6127 = vadd.f32 %v5645, %v6009
      %v6128 = vadd.f32 %v5646, %v6014
      %v6129 = vadd.f32 %v5647, %v6017
      %v6130 = vadd.f32 %v5648, %v6022
      %v6131 = vadd.f32 %v5649, %v6025
      %v6132 = vadd.f32 %v5650, %v6030
      %v6133 = vadd.f32 %v5651, %v6033
      %v6134 = vadd.f32 %v5652, %v6038
      %v6135 = vadd.f32 %v5653, %v6041
      %v6136 = vadd.f32 %v5654, %v6046
      %v6137 = vadd.f32 %v5655, %v6049
      %v6138 = vadd.f32 %v5656, %v6054
      %v6139 = vadd.f32 %v5657, %v6057
      %v6140 = vadd.f32 %v5658, %v6062
      %v6141 = vadd.f32 %v5659, %v6065
      %v6142 = vadd.f32 %v5660, %v6070
      %v6143 = vadd.f32 %v5661, %v6073
      %v6144 = vadd.f32 %v5662, %v6078
      %v6145 = vadd.f32 %v5663, %v6081
      %v6146 = vadd.f32 %v5664, %v6086
      %v6147 = vadd.f32 %v5665, %v6089
      %v6148 = vadd.f32 %v5666, %v6094
      %v6149 = vadd.f32 %v5667, %v6097
      %v6150 = vadd.f32 %v5668, %v6102
      %v6151 = vadd.f32 %v5669, %v6105
      %v6152 = vadd.f32 %v5670, %v6110
      %v6153 = vadd.f32 %v5671, %v6113
      %v6154 = vadd.f32 %v5672, %v6118
      %v6155 = vadd.f32 %v5673, %v6121
      %6156 = vst [vmem:[#allocation3] sm:$0xff] %v6124
      %6157 = vst [vmem:[#allocation3 + $0x8] sm:$0xff] %v6125
      %6158 = vst [vmem:[#allocation3 + $0x10] sm:$0xff] %v6126
      %6159 = vst [vmem:[#allocation3 + $0x18] sm:$0xff] %v6127
      %6160 = vst [vmem:[#allocation3 + $0x20] sm:$0xff] %v6128
      %6161 = vst [vmem:[#allocation3 + $0x28] sm:$0xff] %v6129
      %6162 = vst [vmem:[#allocation3 + $0x30] sm:$0xff] %v6130
      %6163 = vst [vmem:[#allocation3 + $0x38] sm:$0xff] %v6131
      %6164 = vst [vmem:[#allocation3 + $0x40] sm:$0xff] %v6132
      %6165 = vst [vmem:[#allocation3 + $0x48] sm:$0xff] %v6133
      %6166 = vst [vmem:[#allocation3 + $0x50] sm:$0xff] %v6134
      %6167 = vst [vmem:[#allocation3 + $0x58] sm:$0xff] %v6135
      %6168 = vst [vmem:[#allocation3 + $0x60] sm:$0xff] %v6136
      %6169 = vst [vmem:[#allocation3 + $0x68] sm:$0xff] %v6137
      %6170 = vst [vmem:[#allocation3 + $0x70] sm:$0xff] %v6138
      %6171 = vst [vmem:[#allocation3 + $0x78] sm:$0xff] %v6139
      %6172 = vst [vmem:[#allocation3 + $0x80] sm:$0xff] %v6140
      %6173 = vst [vmem:[#allocation3 + $0x88] sm:$0xff] %v6141
      %6174 = vst [vmem:[#allocation3 + $0x90] sm:$0xff] %v6142
      %6175 = vst [vmem:[#allocation3 + $0x98] sm:$0xff] %v6143
      %6176 = vst [vmem:[#allocation3 + $0xa0] sm:$0xff] %v6144
      %6177 = vst [vmem:[#allocation3 + $0xa8] sm:$0xff] %v6145
      %6178 = vst [vmem:[#allocation3 + $0xb0] sm:$0xff] %v6146
      %6179 = vst [vmem:[#allocation3 + $0xb8] sm:$0xff] %v6147
      %6180 = vst [vmem:[#allocation3 + $0xc0] sm:$0xff] %v6148
      %6181 = vst [vmem:[#allocation3 + $0xc8] sm:$0xff] %v6149
      %6182 = vst [vmem:[#allocation3 + $0xd0] sm:$0xff] %v6150
      %6183 = vst [vmem:[#allocation3 + $0xd8] sm:$0xff] %v6151
      %6184 = vst [vmem:[#allocation3 + $0xe0] sm:$0xff] %v6152
      %6185 = vst [vmem:[#allocation3 + $0xe8] sm:$0xff] %v6153
      %6186 = vst [vmem:[#allocation3 + $0xf0] sm:$0xff] %v6154
      %6187 = vst [vmem:[#allocation3 + $0xf8] sm:$0xff] %v6155
      %6220 = vst [vmem:[%s1320 + $0x8] sm:$0xf] %v5725
      %6221 = vst [vmem:[%s1320 + $0xc] sm:$0xf] %v5728
      %6222 = vst [vmem:[%s1320 + $0x1c] sm:$0xf] %v5732
      %6223 = vst [vmem:[%s1320 + $0x20] sm:$0xf] %v5735
      %6224 = vst [vmem:[%s1320 + $0x30] sm:$0xf] %v5739
      %6225 = vst [vmem:[%s1320 + $0x34] sm:$0xf] %v5742
      %6226 = vst [vmem:[%s1320 + $0x44] sm:$0xf] %v5746
      %6227 = vst [vmem:[%s1320 + $0x48] sm:$0xf] %v5749
      %6228 = vst [vmem:[%s1320 + $0x58] sm:$0xf] %v5753
      %6229 = vst [vmem:[%s1320 + $0x5c] sm:$0xf] %v5756
      %6230 = vst [vmem:[%s1320 + $0x6c] sm:$0xf] %v5760
      %6231 = vst [vmem:[%s1320 + $0x70] sm:$0xf] %v5763
      %6232 = vst [vmem:[%s1320 + $0x80] sm:$0xf] %v5767
      %6233 = vst [vmem:[%s1320 + $0x84] sm:$0xf] %v5770
      %6234 = vst [vmem:[%s1320 + $0x94] sm:$0xf] %v5774
      %6235 = vst [vmem:[%s1320 + $0x98] sm:$0xf] %v5777
      %6236 = vst [vmem:[%s1320 + $0xa8] sm:$0xf] %v5781
      %6237 = vst [vmem:[%s1320 + $0xac] sm:$0xf] %v5784
      %6238 = vst [vmem:[%s1320 + $0xbc] sm:$0xf] %v5788
      %6239 = vst [vmem:[%s1320 + $0xc0] sm:$0xf] %v5791
      %6240 = vst [vmem:[%s1320 + $0xd0] sm:$0xf] %v5795
      %6241 = vst [vmem:[%s1320 + $0xd4] sm:$0xf] %v5798
      %6242 = vst [vmem:[%s1320 + $0xe4] sm:$0xf] %v5802
      %6243 = vst [vmem:[%s1320 + $0xe8] sm:$0xf] %v5805
      %6244 = vst [vmem:[%s1320 + $0xf8] sm:$0xf] %v5809
      %6245 = vst [vmem:[%s1320 + $0xfc] sm:$0xf] %v5812
      %6246 = vst [vmem:[%s1320 + $0x10c] sm:$0xf] %v5816
      %6247 = vst [vmem:[%s1320 + $0x110] sm:$0xf] %v5819
      %6248 = vst [vmem:[%s1320 + $0x120] sm:$0xf] %v5823
      %6249 = vst [vmem:[%s1320 + $0x124] sm:$0xf] %v5826
      %6250 = vst [vmem:[%s1320 + $0x134] sm:$0xf] %v5830
      %6251 = vst [vmem:[%s1320 + $0x138] sm:$0xf] %v5833
      %v6252 = vld [vmem:[#allocation2 + $0x4] sm:$0x8]
      %v6253 = vld [vmem:[#allocation2 + $0x8] sm:$0xf]
      %v6254 = vld [vmem:[#allocation2 + $0xc] sm:$0xf]
      %v6255 = vld [vmem:[#allocation2 + $0x10] sm:$0x1]
      %v6256 = vld [vmem:[#allocation2 + $0x18] sm:$0x8]
      %v6257 = vld [vmem:[#allocation2 + $0x1c] sm:$0xf]
      %v6258 = vld [vmem:[#allocation2 + $0x20] sm:$0xf]
      %v6259 = vld [vmem:[#allocation2 + $0x24] sm:$0x1]
      %v6260 = vld [vmem:[#allocation2 + $0x2c] sm:$0x8]
      %v6261 = vld [vmem:[#allocation2 + $0x30] sm:$0xf]
      %v6262 = vld [vmem:[#allocation2 + $0x34] sm:$0xf]
      %v6263 = vld [vmem:[#allocation2 + $0x38] sm:$0x1]
      %v6264 = vld [vmem:[#allocation2 + $0x40] sm:$0x8]
      %v6265 = vld [vmem:[#allocation2 + $0x44] sm:$0xf]
      %v6266 = vld [vmem:[#allocation2 + $0x48] sm:$0xf]
      %v6267 = vld [vmem:[#allocation2 + $0x4c] sm:$0x1]
      %v6268 = vld [vmem:[#allocation2 + $0x54] sm:$0x8]
      %v6269 = vld [vmem:[#allocation2 + $0x58] sm:$0xf]
      %v6270 = vld [vmem:[#allocation2 + $0x5c] sm:$0xf]
      %v6271 = vld [vmem:[#allocation2 + $0x60] sm:$0x1]
      %v6272 = vld [vmem:[#allocation2 + $0x68] sm:$0x8]
      %v6273 = vld [vmem:[#allocation2 + $0x6c] sm:$0xf]
      %v6274 = vld [vmem:[#allocation2 + $0x70] sm:$0xf]
      %v6275 = vld [vmem:[#allocation2 + $0x74] sm:$0x1]
      %v6276 = vld [vmem:[#allocation2 + $0x7c] sm:$0x8]
      %v6277 = vld [vmem:[#allocation2 + $0x80] sm:$0xf]
      %v6278 = vld [vmem:[#allocation2 + $0x84] sm:$0xf]
      %v6279 = vld [vmem:[#allocation2 + $0x88] sm:$0x1]
      %v6280 = vld [vmem:[#allocation2 + $0x90] sm:$0x8]
      %v6281 = vld [vmem:[#allocation2 + $0x94] sm:$0xf]
      %v6282 = vld [vmem:[#allocation2 + $0x98] sm:$0xf]
      %v6283 = vld [vmem:[#allocation2 + $0x9c] sm:$0x1]
      %v6284 = vld [vmem:[#allocation2 + $0xa4] sm:$0x8]
      %v6285 = vld [vmem:[#allocation2 + $0xa8] sm:$0xf]
      %v6286 = vld [vmem:[#allocation2 + $0xac] sm:$0xf]
      %v6287 = vld [vmem:[#allocation2 + $0xb0] sm:$0x1]
      %v6288 = vld [vmem:[#allocation2 + $0xb8] sm:$0x8]
      %v6289 = vld [vmem:[#allocation2 + $0xbc] sm:$0xf]
      %v6290 = vld [vmem:[#allocation2 + $0xc0] sm:$0xf]
      %v6291 = vld [vmem:[#allocation2 + $0xc4] sm:$0x1]
      %v6292 = vld [vmem:[#allocation2 + $0xcc] sm:$0x8]
      %v6293 = vld [vmem:[#allocation2 + $0xd0] sm:$0xf]
      %v6294 = vld [vmem:[#allocation2 + $0xd4] sm:$0xf]
      %v6295 = vld [vmem:[#allocation2 + $0xd8] sm:$0x1]
      %v6296 = vld [vmem:[#allocation2 + $0xe0] sm:$0x8]
      %v6297 = vld [vmem:[#allocation2 + $0xe4] sm:$0xf]
      %v6298 = vld [vmem:[#allocation2 + $0xe8] sm:$0xf]
      %v6299 = vld [vmem:[#allocation2 + $0xec] sm:$0x1]
      %v6300 = vld [vmem:[#allocation2 + $0xf4] sm:$0x8]
      %v6301 = vld [vmem:[#allocation2 + $0xf8] sm:$0xf]
      %v6302 = vld [vmem:[#allocation2 + $0xfc] sm:$0xf]
      %v6303 = vld [vmem:[#allocation2 + $0x100] sm:$0x1]
      %v6304 = vld [vmem:[#allocation2 + $0x108] sm:$0x8]
      %v6305 = vld [vmem:[#allocation2 + $0x10c] sm:$0xf]
      %v6306 = vld [vmem:[#allocation2 + $0x110] sm:$0xf]
      %v6307 = vld [vmem:[#allocation2 + $0x114] sm:$0x1]
      %v6308 = vld [vmem:[#allocation2 + $0x11c] sm:$0x8]
      %v6309 = vld [vmem:[#allocation2 + $0x120] sm:$0xf]
      %v6310 = vld [vmem:[#allocation2 + $0x124] sm:$0xf]
      %v6311 = vld [vmem:[#allocation2 + $0x128] sm:$0x1]
      %v6312 = vld [vmem:[#allocation2 + $0x130] sm:$0x8]
      %v6313 = vld [vmem:[#allocation2 + $0x134] sm:$0xf]
      %v6314 = vld [vmem:[#allocation2 + $0x138] sm:$0xf]
      %v6315 = vld [vmem:[#allocation2 + $0x13c] sm:$0x1]
      %v6316 = vld [vmem:[#allocation2 + $0x144] sm:$0x8]
      %v6317 = vld [vmem:[#allocation2 + $0x148] sm:$0xf]
      %v6318 = vld [vmem:[#allocation2 + $0x14c] sm:$0xf]
      %v6319 = vld [vmem:[#allocation2 + $0x150] sm:$0x1]
      %v6320 = vld [vmem:[#allocation2 + $0x158] sm:$0x8]
      %v6321 = vld [vmem:[#allocation2 + $0x15c] sm:$0xf]
      %v6322 = vld [vmem:[#allocation2 + $0x160] sm:$0xf]
      %v6323 = vld [vmem:[#allocation2 + $0x164] sm:$0x1]
      %v6324 = vld [vmem:[#allocation2 + $0x16c] sm:$0x8]
      %v6325 = vld [vmem:[#allocation2 + $0x170] sm:$0xf]
      %v6326 = vld [vmem:[#allocation2 + $0x174] sm:$0xf]
      %v6327 = vld [vmem:[#allocation2 + $0x178] sm:$0x1]
      %v6328 = vld [vmem:[#allocation2 + $0x180] sm:$0x8]
      %v6329 = vld [vmem:[#allocation2 + $0x184] sm:$0xf]
      %v6330 = vld [vmem:[#allocation2 + $0x188] sm:$0xf]
      %v6331 = vld [vmem:[#allocation2 + $0x18c] sm:$0x1]
      %v6333 = vshrl.u32 %v6252, 16
      %v6335 = vrot.slane %v6333, 4
      %v6336 = vrot.slane %v6335, 4
      %v6338 = vshll.u32 %v6253, 16
      %v6340 = vrot.slane %v6338, 5
      %v6341 = vsel %vm1435, %v6336, %v6340
      %v6342 = vshrl.u32 %v6253, 16
      %v6344 = vrot.slane %v6342, 4
      %v6345 = vor.u32 %v6344, %v6340
      %v6346 = vrot.slane %v6345, 4
      %v6348 = vshll.u32 %v6254, 16
      %v6350 = vrot.slane %v6348, 5
      %v6351 = vsel %vm1435, %v6346, %v6350
      %v6352 = vshrl.u32 %v6254, 16
      %v6354 = vrot.slane %v6352, 4
      %v6355 = vor.u32 %v6354, %v6350
      %v6356 = vrot.slane %v6355, 4
      %v6358 = vshrl.u32 %v6256, 16
      %v6360 = vrot.slane %v6358, 4
      %v6361 = vrot.slane %v6360, 4
      %v6363 = vshll.u32 %v6257, 16
      %v6365 = vrot.slane %v6363, 5
      %v6366 = vsel %vm1435, %v6361, %v6365
      %v6367 = vshrl.u32 %v6257, 16
      %v6369 = vrot.slane %v6367, 4
      %v6370 = vor.u32 %v6369, %v6365
      %v6371 = vrot.slane %v6370, 4
      %v6373 = vshll.u32 %v6258, 16
      %v6375 = vrot.slane %v6373, 5
      %v6376 = vsel %vm1435, %v6371, %v6375
      %v6377 = vshrl.u32 %v6258, 16
      %v6379 = vrot.slane %v6377, 4
      %v6380 = vor.u32 %v6379, %v6375
      %v6381 = vrot.slane %v6380, 4
      %v6383 = vshrl.u32 %v6260, 16
      %v6385 = vrot.slane %v6383, 4
      %v6386 = vrot.slane %v6385, 4
      %v6388 = vshll.u32 %v6261, 16
      %v6390 = vrot.slane %v6388, 5
      %v6391 = vsel %vm1435, %v6386, %v6390
      %v6392 = vshrl.u32 %v6261, 16
      %v6394 = vrot.slane %v6392, 4
      %v6395 = vor.u32 %v6394, %v6390
      %v6396 = vrot.slane %v6395, 4
      %v6398 = vshll.u32 %v6262, 16
      %v6400 = vrot.slane %v6398, 5
      %v6401 = vsel %vm1435, %v6396, %v6400
      %v6402 = vshrl.u32 %v6262, 16
      %v6404 = vrot.slane %v6402, 4
      %v6405 = vor.u32 %v6404, %v6400
      %v6406 = vrot.slane %v6405, 4
      %v6408 = vshrl.u32 %v6264, 16
      %v6410 = vrot.slane %v6408, 4
      %v6411 = vrot.slane %v6410, 4
      %v6413 = vshll.u32 %v6265, 16
      %v6415 = vrot.slane %v6413, 5
      %v6416 = vsel %vm1435, %v6411, %v6415
      %v6417 = vshrl.u32 %v6265, 16
      %v6419 = vrot.slane %v6417, 4
      %v6420 = vor.u32 %v6419, %v6415
      %v6421 = vrot.slane %v6420, 4
      %v6423 = vshll.u32 %v6266, 16
      %v6425 = vrot.slane %v6423, 5
      %v6426 = vsel %vm1435, %v6421, %v6425
      %v6427 = vshrl.u32 %v6266, 16
      %v6429 = vrot.slane %v6427, 4
      %v6430 = vor.u32 %v6429, %v6425
      %v6431 = vrot.slane %v6430, 4
      %v6433 = vshrl.u32 %v6268, 16
      %v6435 = vrot.slane %v6433, 4
      %v6436 = vrot.slane %v6435, 4
      %v6438 = vshll.u32 %v6269, 16
      %v6440 = vrot.slane %v6438, 5
      %v6441 = vsel %vm1435, %v6436, %v6440
      %v6442 = vshrl.u32 %v6269, 16
      %v6444 = vrot.slane %v6442, 4
      %v6445 = vor.u32 %v6444, %v6440
      %v6446 = vrot.slane %v6445, 4
      %v6448 = vshll.u32 %v6270, 16
      %v6450 = vrot.slane %v6448, 5
      %v6451 = vsel %vm1435, %v6446, %v6450
      %v6452 = vshrl.u32 %v6270, 16
      %v6454 = vrot.slane %v6452, 4
      %v6455 = vor.u32 %v6454, %v6450
      %v6456 = vrot.slane %v6455, 4
      %v6458 = vshrl.u32 %v6272, 16
      %v6460 = vrot.slane %v6458, 4
      %v6461 = vrot.slane %v6460, 4
      %v6463 = vshll.u32 %v6273, 16
      %v6465 = vrot.slane %v6463, 5
      %v6466 = vsel %vm1435, %v6461, %v6465
      %v6467 = vshrl.u32 %v6273, 16
      %v6469 = vrot.slane %v6467, 4
      %v6470 = vor.u32 %v6469, %v6465
      %v6471 = vrot.slane %v6470, 4
      %v6473 = vshll.u32 %v6274, 16
      %v6475 = vrot.slane %v6473, 5
      %v6476 = vsel %vm1435, %v6471, %v6475
      %v6477 = vshrl.u32 %v6274, 16
      %v6479 = vrot.slane %v6477, 4
      %v6480 = vor.u32 %v6479, %v6475
      %v6481 = vrot.slane %v6480, 4
      %v6483 = vshrl.u32 %v6276, 16
      %v6485 = vrot.slane %v6483, 4
      %v6486 = vrot.slane %v6485, 4
      %v6488 = vshll.u32 %v6277, 16
      %v6490 = vrot.slane %v6488, 5
      %v6491 = vsel %vm1435, %v6486, %v6490
      %v6492 = vshrl.u32 %v6277, 16
      %v6494 = vrot.slane %v6492, 4
      %v6495 = vor.u32 %v6494, %v6490
      %v6496 = vrot.slane %v6495, 4
      %v6498 = vshll.u32 %v6278, 16
      %v6500 = vrot.slane %v6498, 5
      %v6501 = vsel %vm1435, %v6496, %v6500
      %v6502 = vshrl.u32 %v6278, 16
      %v6504 = vrot.slane %v6502, 4
      %v6505 = vor.u32 %v6504, %v6500
      %v6506 = vrot.slane %v6505, 4
      %v6508 = vshrl.u32 %v6280, 16
      %v6510 = vrot.slane %v6508, 4
      %v6511 = vrot.slane %v6510, 4
      %v6513 = vshll.u32 %v6281, 16
      %v6515 = vrot.slane %v6513, 5
      %v6516 = vsel %vm1435, %v6511, %v6515
      %v6517 = vshrl.u32 %v6281, 16
      %v6519 = vrot.slane %v6517, 4
      %v6520 = vor.u32 %v6519, %v6515
      %v6521 = vrot.slane %v6520, 4
      %v6523 = vshll.u32 %v6282, 16
      %v6525 = vrot.slane %v6523, 5
      %v6526 = vsel %vm1435, %v6521, %v6525
      %v6527 = vshrl.u32 %v6282, 16
      %v6529 = vrot.slane %v6527, 4
      %v6530 = vor.u32 %v6529, %v6525
      %v6531 = vrot.slane %v6530, 4
      %v6533 = vshrl.u32 %v6284, 16
      %v6535 = vrot.slane %v6533, 4
      %v6536 = vrot.slane %v6535, 4
      %v6538 = vshll.u32 %v6285, 16
      %v6540 = vrot.slane %v6538, 5
      %v6541 = vsel %vm1435, %v6536, %v6540
      %v6542 = vshrl.u32 %v6285, 16
      %v6544 = vrot.slane %v6542, 4
      %v6545 = vor.u32 %v6544, %v6540
      %v6546 = vrot.slane %v6545, 4
      %v6548 = vshll.u32 %v6286, 16
      %v6550 = vrot.slane %v6548, 5
      %v6551 = vsel %vm1435, %v6546, %v6550
      %v6552 = vshrl.u32 %v6286, 16
      %v6554 = vrot.slane %v6552, 4
      %v6555 = vor.u32 %v6554, %v6550
      %v6556 = vrot.slane %v6555, 4
      %v6558 = vshrl.u32 %v6288, 16
      %v6560 = vrot.slane %v6558, 4
      %v6561 = vrot.slane %v6560, 4
      %v6563 = vshll.u32 %v6289, 16
      %v6565 = vrot.slane %v6563, 5
      %v6566 = vsel %vm1435, %v6561, %v6565
      %v6567 = vshrl.u32 %v6289, 16
      %v6569 = vrot.slane %v6567, 4
      %v6570 = vor.u32 %v6569, %v6565
      %v6571 = vrot.slane %v6570, 4
      %v6573 = vshll.u32 %v6290, 16
      %v6575 = vrot.slane %v6573, 5
      %v6576 = vsel %vm1435, %v6571, %v6575
      %v6577 = vshrl.u32 %v6290, 16
      %v6579 = vrot.slane %v6577, 4
      %v6580 = vor.u32 %v6579, %v6575
      %v6581 = vrot.slane %v6580, 4
      %v6583 = vshrl.u32 %v6292, 16
      %v6585 = vrot.slane %v6583, 4
      %v6586 = vrot.slane %v6585, 4
      %v6588 = vshll.u32 %v6293, 16
      %v6590 = vrot.slane %v6588, 5
      %v6591 = vsel %vm1435, %v6586, %v6590
      %v6592 = vshrl.u32 %v6293, 16
      %v6594 = vrot.slane %v6592, 4
      %v6595 = vor.u32 %v6594, %v6590
      %v6596 = vrot.slane %v6595, 4
      %v6598 = vshll.u32 %v6294, 16
      %v6600 = vrot.slane %v6598, 5
      %v6601 = vsel %vm1435, %v6596, %v6600
      %v6602 = vshrl.u32 %v6294, 16
      %v6604 = vrot.slane %v6602, 4
      %v6605 = vor.u32 %v6604, %v6600
      %v6606 = vrot.slane %v6605, 4
      %v6608 = vshrl.u32 %v6296, 16
      %v6610 = vrot.slane %v6608, 4
      %v6611 = vrot.slane %v6610, 4
      %v6613 = vshll.u32 %v6297, 16
      %v6615 = vrot.slane %v6613, 5
      %v6616 = vsel %vm1435, %v6611, %v6615
      %v6617 = vshrl.u32 %v6297, 16
      %v6619 = vrot.slane %v6617, 4
      %v6620 = vor.u32 %v6619, %v6615
      %v6621 = vrot.slane %v6620, 4
      %v6623 = vshll.u32 %v6298, 16
      %v6625 = vrot.slane %v6623, 5
      %v6626 = vsel %vm1435, %v6621, %v6625
      %v6627 = vshrl.u32 %v6298, 16
      %v6629 = vrot.slane %v6627, 4
      %v6630 = vor.u32 %v6629, %v6625
      %v6631 = vrot.slane %v6630, 4
      %v6633 = vshrl.u32 %v6300, 16
      %v6635 = vrot.slane %v6633, 4
      %v6636 = vrot.slane %v6635, 4
      %v6638 = vshll.u32 %v6301, 16
      %v6640 = vrot.slane %v6638, 5
      %v6641 = vsel %vm1435, %v6636, %v6640
      %v6642 = vshrl.u32 %v6301, 16
      %v6644 = vrot.slane %v6642, 4
      %v6645 = vor.u32 %v6644, %v6640
      %v6646 = vrot.slane %v6645, 4
      %v6648 = vshll.u32 %v6302, 16
      %v6650 = vrot.slane %v6648, 5
      %v6651 = vsel %vm1435, %v6646, %v6650
      %v6652 = vshrl.u32 %v6302, 16
      %v6654 = vrot.slane %v6652, 4
      %v6655 = vor.u32 %v6654, %v6650
      %v6656 = vrot.slane %v6655, 4
      %v6658 = vshrl.u32 %v6304, 16
      %v6660 = vrot.slane %v6658, 4
      %v6661 = vrot.slane %v6660, 4
      %v6663 = vshll.u32 %v6305, 16
      %v6665 = vrot.slane %v6663, 5
      %v6666 = vsel %vm1435, %v6661, %v6665
      %v6667 = vshrl.u32 %v6305, 16
      %v6669 = vrot.slane %v6667, 4
      %v6670 = vor.u32 %v6669, %v6665
      %v6671 = vrot.slane %v6670, 4
      %v6673 = vshll.u32 %v6306, 16
      %v6675 = vrot.slane %v6673, 5
      %v6676 = vsel %vm1435, %v6671, %v6675
      %v6677 = vshrl.u32 %v6306, 16
      %v6679 = vrot.slane %v6677, 4
      %v6680 = vor.u32 %v6679, %v6675
      %v6681 = vrot.slane %v6680, 4
      %v6683 = vshrl.u32 %v6308, 16
      %v6685 = vrot.slane %v6683, 4
      %v6686 = vrot.slane %v6685, 4
      %v6688 = vshll.u32 %v6309, 16
      %v6690 = vrot.slane %v6688, 5
      %v6691 = vsel %vm1435, %v6686, %v6690
      %v6692 = vshrl.u32 %v6309, 16
      %v6694 = vrot.slane %v6692, 4
      %v6695 = vor.u32 %v6694, %v6690
      %v6696 = vrot.slane %v6695, 4
      %v6698 = vshll.u32 %v6310, 16
      %v6700 = vrot.slane %v6698, 5
      %v6701 = vsel %vm1435, %v6696, %v6700
      %v6702 = vshrl.u32 %v6310, 16
      %v6704 = vrot.slane %v6702, 4
      %v6705 = vor.u32 %v6704, %v6700
      %v6706 = vrot.slane %v6705, 4
      %v6708 = vshrl.u32 %v6312, 16
      %v6710 = vrot.slane %v6708, 4
      %v6711 = vrot.slane %v6710, 4
      %v6713 = vshll.u32 %v6313, 16
      %v6715 = vrot.slane %v6713, 5
      %v6716 = vsel %vm1435, %v6711, %v6715
      %v6717 = vshrl.u32 %v6313, 16
      %v6719 = vrot.slane %v6717, 4
      %v6720 = vor.u32 %v6719, %v6715
      %v6721 = vrot.slane %v6720, 4
      %v6723 = vshll.u32 %v6314, 16
      %v6725 = vrot.slane %v6723, 5
      %v6726 = vsel %vm1435, %v6721, %v6725
      %v6727 = vshrl.u32 %v6314, 16
      %v6729 = vrot.slane %v6727, 4
      %v6730 = vor.u32 %v6729, %v6725
      %v6731 = vrot.slane %v6730, 4
      %v6733 = vshrl.u32 %v6316, 16
      %v6735 = vrot.slane %v6733, 4
      %v6736 = vrot.slane %v6735, 4
      %v6738 = vshll.u32 %v6317, 16
      %v6740 = vrot.slane %v6738, 5
      %v6741 = vsel %vm1435, %v6736, %v6740
      %v6742 = vshrl.u32 %v6317, 16
      %v6744 = vrot.slane %v6742, 4
      %v6745 = vor.u32 %v6744, %v6740
      %v6746 = vrot.slane %v6745, 4
      %v6748 = vshll.u32 %v6318, 16
      %v6750 = vrot.slane %v6748, 5
      %v6751 = vsel %vm1435, %v6746, %v6750
      %v6752 = vshrl.u32 %v6318, 16
      %v6754 = vrot.slane %v6752, 4
      %v6755 = vor.u32 %v6754, %v6750
      %v6756 = vrot.slane %v6755, 4
      %v6758 = vshrl.u32 %v6320, 16
      %v6760 = vrot.slane %v6758, 4
      %v6761 = vrot.slane %v6760, 4
      %v6763 = vshll.u32 %v6321, 16
      %v6765 = vrot.slane %v6763, 5
      %v6766 = vsel %vm1435, %v6761, %v6765
      %v6767 = vshrl.u32 %v6321, 16
      %v6769 = vrot.slane %v6767, 4
      %v6770 = vor.u32 %v6769, %v6765
      %v6771 = vrot.slane %v6770, 4
      %v6773 = vshll.u32 %v6322, 16
      %v6775 = vrot.slane %v6773, 5
      %v6776 = vsel %vm1435, %v6771, %v6775
      %v6777 = vshrl.u32 %v6322, 16
      %v6779 = vrot.slane %v6777, 4
      %v6780 = vor.u32 %v6779, %v6775
      %v6781 = vrot.slane %v6780, 4
      %v6783 = vshrl.u32 %v6324, 16
      %v6785 = vrot.slane %v6783, 4
      %v6786 = vrot.slane %v6785, 4
      %v6788 = vshll.u32 %v6325, 16
      %v6790 = vrot.slane %v6788, 5
      %v6791 = vsel %vm1435, %v6786, %v6790
      %v6792 = vshrl.u32 %v6325, 16
      %v6794 = vrot.slane %v6792, 4
      %v6795 = vor.u32 %v6794, %v6790
      %v6796 = vrot.slane %v6795, 4
      %v6798 = vshll.u32 %v6326, 16
      %v6800 = vrot.slane %v6798, 5
      %v6801 = vsel %vm1435, %v6796, %v6800
      %v6802 = vshrl.u32 %v6326, 16
      %v6804 = vrot.slane %v6802, 4
      %v6805 = vor.u32 %v6804, %v6800
      %v6806 = vrot.slane %v6805, 4
      %v6808 = vshrl.u32 %v6328, 16
      %v6810 = vrot.slane %v6808, 4
      %v6811 = vrot.slane %v6810, 4
      %v6813 = vshll.u32 %v6329, 16
      %v6815 = vrot.slane %v6813, 5
      %v6816 = vsel %vm1435, %v6811, %v6815
      %v6817 = vshrl.u32 %v6329, 16
      %v6819 = vrot.slane %v6817, 4
      %v6820 = vor.u32 %v6819, %v6815
      %v6821 = vrot.slane %v6820, 4
      %v6823 = vshll.u32 %v6330, 16
      %v6825 = vrot.slane %v6823, 5
      %v6826 = vsel %vm1435, %v6821, %v6825
      %v6827 = vshrl.u32 %v6330, 16
      %v6829 = vrot.slane %v6827, 4
      %v6830 = vor.u32 %v6829, %v6825
      %v6831 = vrot.slane %v6830, 4
      %v6892 = vmax.bf16 %v6252, %v6341
      %v6893 = vmax.bf16 %v6253, %v6351
      %v6894 = vmax.bf16 %v6254, %v6356
      %v6895 = vmax.bf16 %v6256, %v6366
      %v6896 = vmax.bf16 %v6257, %v6376
      %v6897 = vmax.bf16 %v6258, %v6381
      %v6898 = vmax.bf16 %v6260, %v6391
      %v6899 = vmax.bf16 %v6261, %v6401
      %v6900 = vmax.bf16 %v6262, %v6406
      %v6901 = vmax.bf16 %v6264, %v6416
      %v6902 = vmax.bf16 %v6265, %v6426
      %v6903 = vmax.bf16 %v6266, %v6431
      %v6904 = vmax.bf16 %v6268, %v6441
      %v6905 = vmax.bf16 %v6269, %v6451
      %v6906 = vmax.bf16 %v6270, %v6456
      %v6907 = vmax.bf16 %v6272, %v6466
      %v6908 = vmax.bf16 %v6273, %v6476
      %v6909 = vmax.bf16 %v6274, %v6481
      %v6910 = vmax.bf16 %v6276, %v6491
      %v6911 = vmax.bf16 %v6277, %v6501
      %v6912 = vmax.bf16 %v6278, %v6506
      %v6913 = vmax.bf16 %v6280, %v6516
      %v6914 = vmax.bf16 %v6281, %v6526
      %v6915 = vmax.bf16 %v6282, %v6531
      %v6916 = vmax.bf16 %v6284, %v6541
      %v6917 = vmax.bf16 %v6285, %v6551
      %v6918 = vmax.bf16 %v6286, %v6556
      %v6919 = vmax.bf16 %v6288, %v6566
      %v6920 = vmax.bf16 %v6289, %v6576
      %v6921 = vmax.bf16 %v6290, %v6581
      %v6922 = vmax.bf16 %v6292, %v6591
      %v6923 = vmax.bf16 %v6293, %v6601
      %v6924 = vmax.bf16 %v6294, %v6606
      %v6925 = vmax.bf16 %v6296, %v6616
      %v6926 = vmax.bf16 %v6297, %v6626
      %v6927 = vmax.bf16 %v6298, %v6631
      %v6928 = vmax.bf16 %v6300, %v6641
      %v6929 = vmax.bf16 %v6301, %v6651
      %v6930 = vmax.bf16 %v6302, %v6656
      %v6931 = vmax.bf16 %v6304, %v6666
      %v6932 = vmax.bf16 %v6305, %v6676
      %v6933 = vmax.bf16 %v6306, %v6681
      %v6934 = vmax.bf16 %v6308, %v6691
      %v6935 = vmax.bf16 %v6309, %v6701
      %v6936 = vmax.bf16 %v6310, %v6706
      %v6937 = vmax.bf16 %v6312, %v6716
      %v6938 = vmax.bf16 %v6313, %v6726
      %v6939 = vmax.bf16 %v6314, %v6731
      %v6940 = vmax.bf16 %v6316, %v6741
      %v6941 = vmax.bf16 %v6317, %v6751
      %v6942 = vmax.bf16 %v6318, %v6756
      %v6943 = vmax.bf16 %v6320, %v6766
      %v6944 = vmax.bf16 %v6321, %v6776
      %v6945 = vmax.bf16 %v6322, %v6781
      %v6946 = vmax.bf16 %v6324, %v6791
      %v6947 = vmax.bf16 %v6325, %v6801
      %v6948 = vmax.bf16 %v6326, %v6806
      %v6949 = vmax.bf16 %v6328, %v6816
      %v6950 = vmax.bf16 %v6329, %v6826
      %v6951 = vmax.bf16 %v6330, %v6831
      %v6992 = vrot.slane %v6253, 5
      %v6993 = vrot.slane %v6992, 4
      %v6994 = vrot.slane %v6254, 5
      %v6995 = vsel %vm2098, %v6993, %v6994
      %v6996 = vrot.slane %v6994, 4
      %v6997 = vrot.slane %v6257, 5
      %v6998 = vrot.slane %v6997, 4
      %v6999 = vrot.slane %v6258, 5
      %v7000 = vsel %vm2098, %v6998, %v6999
      %v7001 = vrot.slane %v6999, 4
      %v7002 = vrot.slane %v6261, 5
      %v7003 = vrot.slane %v7002, 4
      %v7004 = vrot.slane %v6262, 5
      %v7005 = vsel %vm2098, %v7003, %v7004
      %v7006 = vrot.slane %v7004, 4
      %v7007 = vrot.slane %v6265, 5
      %v7008 = vrot.slane %v7007, 4
      %v7009 = vrot.slane %v6266, 5
      %v7010 = vsel %vm2098, %v7008, %v7009
      %v7011 = vrot.slane %v7009, 4
      %v7012 = vrot.slane %v6269, 5
      %v7013 = vrot.slane %v7012, 4
      %v7014 = vrot.slane %v6270, 5
      %v7015 = vsel %vm2098, %v7013, %v7014
      %v7016 = vrot.slane %v7014, 4
      %v7017 = vrot.slane %v6273, 5
      %v7018 = vrot.slane %v7017, 4
      %v7019 = vrot.slane %v6274, 5
      %v7020 = vsel %vm2098, %v7018, %v7019
      %v7021 = vrot.slane %v7019, 4
      %v7022 = vrot.slane %v6277, 5
      %v7023 = vrot.slane %v7022, 4
      %v7024 = vrot.slane %v6278, 5
      %v7025 = vsel %vm2098, %v7023, %v7024
      %v7026 = vrot.slane %v7024, 4
      %v7027 = vrot.slane %v6281, 5
      %v7028 = vrot.slane %v7027, 4
      %v7029 = vrot.slane %v6282, 5
      %v7030 = vsel %vm2098, %v7028, %v7029
      %v7031 = vrot.slane %v7029, 4
      %v7032 = vrot.slane %v6285, 5
      %v7033 = vrot.slane %v7032, 4
      %v7034 = vrot.slane %v6286, 5
      %v7035 = vsel %vm2098, %v7033, %v7034
      %v7036 = vrot.slane %v7034, 4
      %v7037 = vrot.slane %v6289, 5
      %v7038 = vrot.slane %v7037, 4
      %v7039 = vrot.slane %v6290, 5
      %v7040 = vsel %vm2098, %v7038, %v7039
      %v7041 = vrot.slane %v7039, 4
      %v7042 = vrot.slane %v6293, 5
      %v7043 = vrot.slane %v7042, 4
      %v7044 = vrot.slane %v6294, 5
      %v7045 = vsel %vm2098, %v7043, %v7044
      %v7046 = vrot.slane %v7044, 4
      %v7047 = vrot.slane %v6297, 5
      %v7048 = vrot.slane %v7047, 4
      %v7049 = vrot.slane %v6298, 5
      %v7050 = vsel %vm2098, %v7048, %v7049
      %v7051 = vrot.slane %v7049, 4
      %v7052 = vrot.slane %v6301, 5
      %v7053 = vrot.slane %v7052, 4
      %v7054 = vrot.slane %v6302, 5
      %v7055 = vsel %vm2098, %v7053, %v7054
      %v7056 = vrot.slane %v7054, 4
      %v7057 = vrot.slane %v6305, 5
      %v7058 = vrot.slane %v7057, 4
      %v7059 = vrot.slane %v6306, 5
      %v7060 = vsel %vm2098, %v7058, %v7059
      %v7061 = vrot.slane %v7059, 4
      %v7062 = vrot.slane %v6309, 5
      %v7063 = vrot.slane %v7062, 4
      %v7064 = vrot.slane %v6310, 5
      %v7065 = vsel %vm2098, %v7063, %v7064
      %v7066 = vrot.slane %v7064, 4
      %v7067 = vrot.slane %v6313, 5
      %v7068 = vrot.slane %v7067, 4
      %v7069 = vrot.slane %v6314, 5
      %v7070 = vsel %vm2098, %v7068, %v7069
      %v7071 = vrot.slane %v7069, 4
      %v7072 = vrot.slane %v6317, 5
      %v7073 = vrot.slane %v7072, 4
      %v7074 = vrot.slane %v6318, 5
      %v7075 = vsel %vm2098, %v7073, %v7074
      %v7076 = vrot.slane %v7074, 4
      %v7077 = vrot.slane %v6321, 5
      %v7078 = vrot.slane %v7077, 4
      %v7079 = vrot.slane %v6322, 5
      %v7080 = vsel %vm2098, %v7078, %v7079
      %v7081 = vrot.slane %v7079, 4
      %v7082 = vrot.slane %v6325, 5
      %v7083 = vrot.slane %v7082, 4
      %v7084 = vrot.slane %v6326, 5
      %v7085 = vsel %vm2098, %v7083, %v7084
      %v7086 = vrot.slane %v7084, 4
      %v7087 = vrot.slane %v6329, 5
      %v7088 = vrot.slane %v7087, 4
      %v7089 = vrot.slane %v6330, 5
      %v7090 = vsel %vm2098, %v7088, %v7089
      %v7091 = vrot.slane %v7089, 4
      %v7152 = vmax.bf16 %v6892, %v6992
      %v7153 = vmax.bf16 %v6893, %v6995
      %v7154 = vmax.bf16 %v6894, %v6996
      %v7155 = vmax.bf16 %v6895, %v6997
      %v7156 = vmax.bf16 %v6896, %v7000
      %v7157 = vmax.bf16 %v6897, %v7001
      %v7158 = vmax.bf16 %v6898, %v7002
      %v7159 = vmax.bf16 %v6899, %v7005
      %v7160 = vmax.bf16 %v6900, %v7006
      %v7161 = vmax.bf16 %v6901, %v7007
      %v7162 = vmax.bf16 %v6902, %v7010
      %v7163 = vmax.bf16 %v6903, %v7011
      %v7164 = vmax.bf16 %v6904, %v7012
      %v7165 = vmax.bf16 %v6905, %v7015
      %v7166 = vmax.bf16 %v6906, %v7016
      %v7167 = vmax.bf16 %v6907, %v7017
      %v7168 = vmax.bf16 %v6908, %v7020
      %v7169 = vmax.bf16 %v6909, %v7021
      %v7170 = vmax.bf16 %v6910, %v7022
      %v7171 = vmax.bf16 %v6911, %v7025
      %v7172 = vmax.bf16 %v6912, %v7026
      %v7173 = vmax.bf16 %v6913, %v7027
      %v7174 = vmax.bf16 %v6914, %v7030
      %v7175 = vmax.bf16 %v6915, %v7031
      %v7176 = vmax.bf16 %v6916, %v7032
      %v7177 = vmax.bf16 %v6917, %v7035
      %v7178 = vmax.bf16 %v6918, %v7036
      %v7179 = vmax.bf16 %v6919, %v7037
      %v7180 = vmax.bf16 %v6920, %v7040
      %v7181 = vmax.bf16 %v6921, %v7041
      %v7182 = vmax.bf16 %v6922, %v7042
      %v7183 = vmax.bf16 %v6923, %v7045
      %v7184 = vmax.bf16 %v6924, %v7046
      %v7185 = vmax.bf16 %v6925, %v7047
      %v7186 = vmax.bf16 %v6926, %v7050
      %v7187 = vmax.bf16 %v6927, %v7051
      %v7188 = vmax.bf16 %v6928, %v7052
      %v7189 = vmax.bf16 %v6929, %v7055
      %v7190 = vmax.bf16 %v6930, %v7056
      %v7191 = vmax.bf16 %v6931, %v7057
      %v7192 = vmax.bf16 %v6932, %v7060
      %v7193 = vmax.bf16 %v6933, %v7061
      %v7194 = vmax.bf16 %v6934, %v7062
      %v7195 = vmax.bf16 %v6935, %v7065
      %v7196 = vmax.bf16 %v6936, %v7066
      %v7197 = vmax.bf16 %v6937, %v7067
      %v7198 = vmax.bf16 %v6938, %v7070
      %v7199 = vmax.bf16 %v6939, %v7071
      %v7200 = vmax.bf16 %v6940, %v7072
      %v7201 = vmax.bf16 %v6941, %v7075
      %v7202 = vmax.bf16 %v6942, %v7076
      %v7203 = vmax.bf16 %v6943, %v7077
      %v7204 = vmax.bf16 %v6944, %v7080
      %v7205 = vmax.bf16 %v6945, %v7081
      %v7206 = vmax.bf16 %v6946, %v7082
      %v7207 = vmax.bf16 %v6947, %v7085
      %v7208 = vmax.bf16 %v6948, %v7086
      %v7209 = vmax.bf16 %v6949, %v7087
      %v7210 = vmax.bf16 %v6950, %v7090
      %v7211 = vmax.bf16 %v6951, %v7091
      %v7212 = vrot.slane %v6342, 5
      %v7213 = vrot.slane %v6338, 6
      %v7214 = vor.u32 %v7212, %v7213
      %v7215 = vrot.slane %v7214, 4
      %v7216 = vrot.slane %v6352, 5
      %v7217 = vrot.slane %v6348, 6
      %v7218 = vor.u32 %v7216, %v7217
      %v7219 = vsel %vm2321, %v7215, %v7218
      %v7220 = vrot.slane %v7218, 4
      %v7222 = vshll.u32 %v6255, 16
      %v7224 = vrot.slane %v7222, 6
      %v7225 = vsel %vm2321, %v7220, %v7224
      %v7226 = vrot.slane %v6367, 5
      %v7227 = vrot.slane %v6363, 6
      %v7228 = vor.u32 %v7226, %v7227
      %v7229 = vrot.slane %v7228, 4
      %v7230 = vrot.slane %v6377, 5
      %v7231 = vrot.slane %v6373, 6
      %v7232 = vor.u32 %v7230, %v7231
      %v7233 = vsel %vm2321, %v7229, %v7232
      %v7234 = vrot.slane %v7232, 4
      %v7236 = vshll.u32 %v6259, 16
      %v7238 = vrot.slane %v7236, 6
      %v7239 = vsel %vm2321, %v7234, %v7238
      %v7240 = vrot.slane %v6392, 5
      %v7241 = vrot.slane %v6388, 6
      %v7242 = vor.u32 %v7240, %v7241
      %v7243 = vrot.slane %v7242, 4
      %v7244 = vrot.slane %v6402, 5
      %v7245 = vrot.slane %v6398, 6
      %v7246 = vor.u32 %v7244, %v7245
      %v7247 = vsel %vm2321, %v7243, %v7246
      %v7248 = vrot.slane %v7246, 4
      %v7250 = vshll.u32 %v6263, 16
      %v7252 = vrot.slane %v7250, 6
      %v7253 = vsel %vm2321, %v7248, %v7252
      %v7254 = vrot.slane %v6417, 5
      %v7255 = vrot.slane %v6413, 6
      %v7256 = vor.u32 %v7254, %v7255
      %v7257 = vrot.slane %v7256, 4
      %v7258 = vrot.slane %v6427, 5
      %v7259 = vrot.slane %v6423, 6
      %v7260 = vor.u32 %v7258, %v7259
      %v7261 = vsel %vm2321, %v7257, %v7260
      %v7262 = vrot.slane %v7260, 4
      %v7264 = vshll.u32 %v6267, 16
      %v7266 = vrot.slane %v7264, 6
      %v7267 = vsel %vm2321, %v7262, %v7266
      %v7268 = vrot.slane %v6442, 5
      %v7269 = vrot.slane %v6438, 6
      %v7270 = vor.u32 %v7268, %v7269
      %v7271 = vrot.slane %v7270, 4
      %v7272 = vrot.slane %v6452, 5
      %v7273 = vrot.slane %v6448, 6
      %v7274 = vor.u32 %v7272, %v7273
      %v7275 = vsel %vm2321, %v7271, %v7274
      %v7276 = vrot.slane %v7274, 4
      %v7278 = vshll.u32 %v6271, 16
      %v7280 = vrot.slane %v7278, 6
      %v7281 = vsel %vm2321, %v7276, %v7280
      %v7282 = vrot.slane %v6467, 5
      %v7283 = vrot.slane %v6463, 6
      %v7284 = vor.u32 %v7282, %v7283
      %v7285 = vrot.slane %v7284, 4
      %v7286 = vrot.slane %v6477, 5
      %v7287 = vrot.slane %v6473, 6
      %v7288 = vor.u32 %v7286, %v7287
      %v7289 = vsel %vm2321, %v7285, %v7288
      %v7290 = vrot.slane %v7288, 4
      %v7292 = vshll.u32 %v6275, 16
      %v7294 = vrot.slane %v7292, 6
      %v7295 = vsel %vm2321, %v7290, %v7294
      %v7296 = vrot.slane %v6492, 5
      %v7297 = vrot.slane %v6488, 6
      %v7298 = vor.u32 %v7296, %v7297
      %v7299 = vrot.slane %v7298, 4
      %v7300 = vrot.slane %v6502, 5
      %v7301 = vrot.slane %v6498, 6
      %v7302 = vor.u32 %v7300, %v7301
      %v7303 = vsel %vm2321, %v7299, %v7302
      %v7304 = vrot.slane %v7302, 4
      %v7306 = vshll.u32 %v6279, 16
      %v7308 = vrot.slane %v7306, 6
      %v7309 = vsel %vm2321, %v7304, %v7308
      %v7310 = vrot.slane %v6517, 5
      %v7311 = vrot.slane %v6513, 6
      %v7312 = vor.u32 %v7310, %v7311
      %v7313 = vrot.slane %v7312, 4
      %v7314 = vrot.slane %v6527, 5
      %v7315 = vrot.slane %v6523, 6
      %v7316 = vor.u32 %v7314, %v7315
      %v7317 = vsel %vm2321, %v7313, %v7316
      %v7318 = vrot.slane %v7316, 4
      %v7320 = vshll.u32 %v6283, 16
      %v7322 = vrot.slane %v7320, 6
      %v7323 = vsel %vm2321, %v7318, %v7322
      %v7324 = vrot.slane %v6542, 5
      %v7325 = vrot.slane %v6538, 6
      %v7326 = vor.u32 %v7324, %v7325
      %v7327 = vrot.slane %v7326, 4
      %v7328 = vrot.slane %v6552, 5
      %v7329 = vrot.slane %v6548, 6
      %v7330 = vor.u32 %v7328, %v7329
      %v7331 = vsel %vm2321, %v7327, %v7330
      %v7332 = vrot.slane %v7330, 4
      %v7334 = vshll.u32 %v6287, 16
      %v7336 = vrot.slane %v7334, 6
      %v7337 = vsel %vm2321, %v7332, %v7336
      %v7338 = vrot.slane %v6567, 5
      %v7339 = vrot.slane %v6563, 6
      %v7340 = vor.u32 %v7338, %v7339
      %v7341 = vrot.slane %v7340, 4
      %v7342 = vrot.slane %v6577, 5
      %v7343 = vrot.slane %v6573, 6
      %v7344 = vor.u32 %v7342, %v7343
      %v7345 = vsel %vm2321, %v7341, %v7344
      %v7346 = vrot.slane %v7344, 4
      %v7348 = vshll.u32 %v6291, 16
      %v7350 = vrot.slane %v7348, 6
      %v7351 = vsel %vm2321, %v7346, %v7350
      %v7352 = vrot.slane %v6592, 5
      %v7353 = vrot.slane %v6588, 6
      %v7354 = vor.u32 %v7352, %v7353
      %v7355 = vrot.slane %v7354, 4
      %v7356 = vrot.slane %v6602, 5
      %v7357 = vrot.slane %v6598, 6
      %v7358 = vor.u32 %v7356, %v7357
      %v7359 = vsel %vm2321, %v7355, %v7358
      %v7360 = vrot.slane %v7358, 4
      %v7362 = vshll.u32 %v6295, 16
      %v7364 = vrot.slane %v7362, 6
      %v7365 = vsel %vm2321, %v7360, %v7364
      %v7366 = vrot.slane %v6617, 5
      %v7367 = vrot.slane %v6613, 6
      %v7368 = vor.u32 %v7366, %v7367
      %v7369 = vrot.slane %v7368, 4
      %v7370 = vrot.slane %v6627, 5
      %v7371 = vrot.slane %v6623, 6
      %v7372 = vor.u32 %v7370, %v7371
      %v7373 = vsel %vm2321, %v7369, %v7372
      %v7374 = vrot.slane %v7372, 4
      %v7376 = vshll.u32 %v6299, 16
      %v7378 = vrot.slane %v7376, 6
      %v7379 = vsel %vm2321, %v7374, %v7378
      %v7380 = vrot.slane %v6642, 5
      %v7381 = vrot.slane %v6638, 6
      %v7382 = vor.u32 %v7380, %v7381
      %v7383 = vrot.slane %v7382, 4
      %v7384 = vrot.slane %v6652, 5
      %v7385 = vrot.slane %v6648, 6
      %v7386 = vor.u32 %v7384, %v7385
      %v7387 = vsel %vm2321, %v7383, %v7386
      %v7388 = vrot.slane %v7386, 4
      %v7390 = vshll.u32 %v6303, 16
      %v7392 = vrot.slane %v7390, 6
      %v7393 = vsel %vm2321, %v7388, %v7392
      %v7394 = vrot.slane %v6667, 5
      %v7395 = vrot.slane %v6663, 6
      %v7396 = vor.u32 %v7394, %v7395
      %v7397 = vrot.slane %v7396, 4
      %v7398 = vrot.slane %v6677, 5
      %v7399 = vrot.slane %v6673, 6
      %v7400 = vor.u32 %v7398, %v7399
      %v7401 = vsel %vm2321, %v7397, %v7400
      %v7402 = vrot.slane %v7400, 4
      %v7404 = vshll.u32 %v6307, 16
      %v7406 = vrot.slane %v7404, 6
      %v7407 = vsel %vm2321, %v7402, %v7406
      %v7408 = vrot.slane %v6692, 5
      %v7409 = vrot.slane %v6688, 6
      %v7410 = vor.u32 %v7408, %v7409
      %v7411 = vrot.slane %v7410, 4
      %v7412 = vrot.slane %v6702, 5
      %v7413 = vrot.slane %v6698, 6
      %v7414 = vor.u32 %v7412, %v7413
      %v7415 = vsel %vm2321, %v7411, %v7414
      %v7416 = vrot.slane %v7414, 4
      %v7418 = vshll.u32 %v6311, 16
      %v7420 = vrot.slane %v7418, 6
      %v7421 = vsel %vm2321, %v7416, %v7420
      %v7422 = vrot.slane %v6717, 5
      %v7423 = vrot.slane %v6713, 6
      %v7424 = vor.u32 %v7422, %v7423
      %v7425 = vrot.slane %v7424, 4
      %v7426 = vrot.slane %v6727, 5
      %v7427 = vrot.slane %v6723, 6
      %v7428 = vor.u32 %v7426, %v7427
      %v7429 = vsel %vm2321, %v7425, %v7428
      %v7430 = vrot.slane %v7428, 4
      %v7432 = vshll.u32 %v6315, 16
      %v7434 = vrot.slane %v7432, 6
      %v7435 = vsel %vm2321, %v7430, %v7434
      %v7436 = vrot.slane %v6742, 5
      %v7437 = vrot.slane %v6738, 6
      %v7438 = vor.u32 %v7436, %v7437
      %v7439 = vrot.slane %v7438, 4
      %v7440 = vrot.slane %v6752, 5
      %v7441 = vrot.slane %v6748, 6
      %v7442 = vor.u32 %v7440, %v7441
      %v7443 = vsel %vm2321, %v7439, %v7442
      %v7444 = vrot.slane %v7442, 4
      %v7446 = vshll.u32 %v6319, 16
      %v7448 = vrot.slane %v7446, 6
      %v7449 = vsel %vm2321, %v7444, %v7448
      %v7450 = vrot.slane %v6767, 5
      %v7451 = vrot.slane %v6763, 6
      %v7452 = vor.u32 %v7450, %v7451
      %v7453 = vrot.slane %v7452, 4
      %v7454 = vrot.slane %v6777, 5
      %v7455 = vrot.slane %v6773, 6
      %v7456 = vor.u32 %v7454, %v7455
      %v7457 = vsel %vm2321, %v7453, %v7456
      %v7458 = vrot.slane %v7456, 4
      %v7460 = vshll.u32 %v6323, 16
      %v7462 = vrot.slane %v7460, 6
      %v7463 = vsel %vm2321, %v7458, %v7462
      %v7464 = vrot.slane %v6792, 5
      %v7465 = vrot.slane %v6788, 6
      %v7466 = vor.u32 %v7464, %v7465
      %v7467 = vrot.slane %v7466, 4
      %v7468 = vrot.slane %v6802, 5
      %v7469 = vrot.slane %v6798, 6
      %v7470 = vor.u32 %v7468, %v7469
      %v7471 = vsel %vm2321, %v7467, %v7470
      %v7472 = vrot.slane %v7470, 4
      %v7474 = vshll.u32 %v6327, 16
      %v7476 = vrot.slane %v7474, 6
      %v7477 = vsel %vm2321, %v7472, %v7476
      %v7478 = vrot.slane %v6817, 5
      %v7479 = vrot.slane %v6813, 6
      %v7480 = vor.u32 %v7478, %v7479
      %v7481 = vrot.slane %v7480, 4
      %v7482 = vrot.slane %v6827, 5
      %v7483 = vrot.slane %v6823, 6
      %v7484 = vor.u32 %v7482, %v7483
      %v7485 = vsel %vm2321, %v7481, %v7484
      %v7486 = vrot.slane %v7484, 4
      %v7488 = vshll.u32 %v6331, 16
      %v7490 = vrot.slane %v7488, 6
      %v7491 = vsel %vm2321, %v7486, %v7490
      %v7552 = vmax.bf16 %v7152, %v7214
      %v7553 = vmax.bf16 %v7153, %v7219
      %v7554 = vmax.bf16 %v7154, %v7225
      %v7555 = vmax.bf16 %v7155, %v7228
      %v7556 = vmax.bf16 %v7156, %v7233
      %v7557 = vmax.bf16 %v7157, %v7239
      %v7558 = vmax.bf16 %v7158, %v7242
      %v7559 = vmax.bf16 %v7159, %v7247
      %v7560 = vmax.bf16 %v7160, %v7253
      %v7561 = vmax.bf16 %v7161, %v7256
      %v7562 = vmax.bf16 %v7162, %v7261
      %v7563 = vmax.bf16 %v7163, %v7267
      %v7564 = vmax.bf16 %v7164, %v7270
      %v7565 = vmax.bf16 %v7165, %v7275
      %v7566 = vmax.bf16 %v7166, %v7281
      %v7567 = vmax.bf16 %v7167, %v7284
      %v7568 = vmax.bf16 %v7168, %v7289
      %v7569 = vmax.bf16 %v7169, %v7295
      %v7570 = vmax.bf16 %v7170, %v7298
      %v7571 = vmax.bf16 %v7171, %v7303
      %v7572 = vmax.bf16 %v7172, %v7309
      %v7573 = vmax.bf16 %v7173, %v7312
      %v7574 = vmax.bf16 %v7174, %v7317
      %v7575 = vmax.bf16 %v7175, %v7323
      %v7576 = vmax.bf16 %v7176, %v7326
      %v7577 = vmax.bf16 %v7177, %v7331
      %v7578 = vmax.bf16 %v7178, %v7337
      %v7579 = vmax.bf16 %v7179, %v7340
      %v7580 = vmax.bf16 %v7180, %v7345
      %v7581 = vmax.bf16 %v7181, %v7351
      %v7582 = vmax.bf16 %v7182, %v7354
      %v7583 = vmax.bf16 %v7183, %v7359
      %v7584 = vmax.bf16 %v7184, %v7365
      %v7585 = vmax.bf16 %v7185, %v7368
      %v7586 = vmax.bf16 %v7186, %v7373
      %v7587 = vmax.bf16 %v7187, %v7379
      %v7588 = vmax.bf16 %v7188, %v7382
      %v7589 = vmax.bf16 %v7189, %v7387
      %v7590 = vmax.bf16 %v7190, %v7393
      %v7591 = vmax.bf16 %v7191, %v7396
      %v7592 = vmax.bf16 %v7192, %v7401
      %v7593 = vmax.bf16 %v7193, %v7407
      %v7594 = vmax.bf16 %v7194, %v7410
      %v7595 = vmax.bf16 %v7195, %v7415
      %v7596 = vmax.bf16 %v7196, %v7421
      %v7597 = vmax.bf16 %v7197, %v7424
      %v7598 = vmax.bf16 %v7198, %v7429
      %v7599 = vmax.bf16 %v7199, %v7435
      %v7600 = vmax.bf16 %v7200, %v7438
      %v7601 = vmax.bf16 %v7201, %v7443
      %v7602 = vmax.bf16 %v7202, %v7449
      %v7603 = vmax.bf16 %v7203, %v7452
      %v7604 = vmax.bf16 %v7204, %v7457
      %v7605 = vmax.bf16 %v7205, %v7463
      %v7606 = vmax.bf16 %v7206, %v7466
      %v7607 = vmax.bf16 %v7207, %v7471
      %v7608 = vmax.bf16 %v7208, %v7477
      %v7609 = vmax.bf16 %v7209, %v7480
      %v7610 = vmax.bf16 %v7210, %v7485
      %v7611 = vmax.bf16 %v7211, %v7491
      %v7632 = vrot.slane %v6253, 6
      %v7633 = vrot.slane %v7632, 4
      %v7634 = vrot.slane %v6254, 6
      %v7635 = vsel %vm2744, %v7633, %v7634
      %v7636 = vrot.slane %v7634, 4
      %v7637 = vrot.slane %v6255, 6
      %v7638 = vsel %vm2744, %v7636, %v7637
      %v7639 = vrot.slane %v6257, 6
      %v7640 = vrot.slane %v7639, 4
      %v7641 = vrot.slane %v6258, 6
      %v7642 = vsel %vm2744, %v7640, %v7641
      %v7643 = vrot.slane %v7641, 4
      %v7644 = vrot.slane %v6259, 6
      %v7645 = vsel %vm2744, %v7643, %v7644
      %v7646 = vrot.slane %v6261, 6
      %v7647 = vrot.slane %v7646, 4
      %v7648 = vrot.slane %v6262, 6
      %v7649 = vsel %vm2744, %v7647, %v7648
      %v7650 = vrot.slane %v7648, 4
      %v7651 = vrot.slane %v6263, 6
      %v7652 = vsel %vm2744, %v7650, %v7651
      %v7653 = vrot.slane %v6265, 6
      %v7654 = vrot.slane %v7653, 4
      %v7655 = vrot.slane %v6266, 6
      %v7656 = vsel %vm2744, %v7654, %v7655
      %v7657 = vrot.slane %v7655, 4
      %v7658 = vrot.slane %v6267, 6
      %v7659 = vsel %vm2744, %v7657, %v7658
      %v7660 = vrot.slane %v6269, 6
      %v7661 = vrot.slane %v7660, 4
      %v7662 = vrot.slane %v6270, 6
      %v7663 = vsel %vm2744, %v7661, %v7662
      %v7664 = vrot.slane %v7662, 4
      %v7665 = vrot.slane %v6271, 6
      %v7666 = vsel %vm2744, %v7664, %v7665
      %v7667 = vrot.slane %v6273, 6
      %v7668 = vrot.slane %v7667, 4
      %v7669 = vrot.slane %v6274, 6
      %v7670 = vsel %vm2744, %v7668, %v7669
      %v7671 = vrot.slane %v7669, 4
      %v7672 = vrot.slane %v6275, 6
      %v7673 = vsel %vm2744, %v7671, %v7672
      %v7674 = vrot.slane %v6277, 6
      %v7675 = vrot.slane %v7674, 4
      %v7676 = vrot.slane %v6278, 6
      %v7677 = vsel %vm2744, %v7675, %v7676
      %v7678 = vrot.slane %v7676, 4
      %v7679 = vrot.slane %v6279, 6
      %v7680 = vsel %vm2744, %v7678, %v7679
      %v7681 = vrot.slane %v6281, 6
      %v7682 = vrot.slane %v7681, 4
      %v7683 = vrot.slane %v6282, 6
      %v7684 = vsel %vm2744, %v7682, %v7683
      %v7685 = vrot.slane %v7683, 4
      %v7686 = vrot.slane %v6283, 6
      %v7687 = vsel %vm2744, %v7685, %v7686
      %v7688 = vrot.slane %v6285, 6
      %v7689 = vrot.slane %v7688, 4
      %v7690 = vrot.slane %v6286, 6
      %v7691 = vsel %vm2744, %v7689, %v7690
      %v7692 = vrot.slane %v7690, 4
      %v7693 = vrot.slane %v6287, 6
      %v7694 = vsel %vm2744, %v7692, %v7693
      %v7695 = vrot.slane %v6289, 6
      %v7696 = vrot.slane %v7695, 4
      %v7697 = vrot.slane %v6290, 6
      %v7698 = vsel %vm2744, %v7696, %v7697
      %v7699 = vrot.slane %v7697, 4
      %v7700 = vrot.slane %v6291, 6
      %v7701 = vsel %vm2744, %v7699, %v7700
      %v7702 = vrot.slane %v6293, 6
      %v7703 = vrot.slane %v7702, 4
      %v7704 = vrot.slane %v6294, 6
      %v7705 = vsel %vm2744, %v7703, %v7704
      %v7706 = vrot.slane %v7704, 4
      %v7707 = vrot.slane %v6295, 6
      %v7708 = vsel %vm2744, %v7706, %v7707
      %v7709 = vrot.slane %v6297, 6
      %v7710 = vrot.slane %v7709, 4
      %v7711 = vrot.slane %v6298, 6
      %v7712 = vsel %vm2744, %v7710, %v7711
      %v7713 = vrot.slane %v7711, 4
      %v7714 = vrot.slane %v6299, 6
      %v7715 = vsel %vm2744, %v7713, %v7714
      %v7716 = vrot.slane %v6301, 6
      %v7717 = vrot.slane %v7716, 4
      %v7718 = vrot.slane %v6302, 6
      %v7719 = vsel %vm2744, %v7717, %v7718
      %v7720 = vrot.slane %v7718, 4
      %v7721 = vrot.slane %v6303, 6
      %v7722 = vsel %vm2744, %v7720, %v7721
      %v7723 = vrot.slane %v6305, 6
      %v7724 = vrot.slane %v7723, 4
      %v7725 = vrot.slane %v6306, 6
      %v7726 = vsel %vm2744, %v7724, %v7725
      %v7727 = vrot.slane %v7725, 4
      %v7728 = vrot.slane %v6307, 6
      %v7729 = vsel %vm2744, %v7727, %v7728
      %v7730 = vrot.slane %v6309, 6
      %v7731 = vrot.slane %v7730, 4
      %v7732 = vrot.slane %v6310, 6
      %v7733 = vsel %vm2744, %v7731, %v7732
      %v7734 = vrot.slane %v7732, 4
      %v7735 = vrot.slane %v6311, 6
      %v7736 = vsel %vm2744, %v7734, %v7735
      %v7737 = vrot.slane %v6313, 6
      %v7738 = vrot.slane %v7737, 4
      %v7739 = vrot.slane %v6314, 6
      %v7740 = vsel %vm2744, %v7738, %v7739
      %v7741 = vrot.slane %v7739, 4
      %v7742 = vrot.slane %v6315, 6
      %v7743 = vsel %vm2744, %v7741, %v7742
      %v7744 = vrot.slane %v6317, 6
      %v7745 = vrot.slane %v7744, 4
      %v7746 = vrot.slane %v6318, 6
      %v7747 = vsel %vm2744, %v7745, %v7746
      %v7748 = vrot.slane %v7746, 4
      %v7749 = vrot.slane %v6319, 6
      %v7750 = vsel %vm2744, %v7748, %v7749
      %v7751 = vrot.slane %v6321, 6
      %v7752 = vrot.slane %v7751, 4
      %v7753 = vrot.slane %v6322, 6
      %v7754 = vsel %vm2744, %v7752, %v7753
      %v7755 = vrot.slane %v7753, 4
      %v7756 = vrot.slane %v6323, 6
      %v7757 = vsel %vm2744, %v7755, %v7756
      %v7758 = vrot.slane %v6325, 6
      %v7759 = vrot.slane %v7758, 4
      %v7760 = vrot.slane %v6326, 6
      %v7761 = vsel %vm2744, %v7759, %v7760
      %v7762 = vrot.slane %v7760, 4
      %v7763 = vrot.slane %v6327, 6
      %v7764 = vsel %vm2744, %v7762, %v7763
      %v7765 = vrot.slane %v6329, 6
      %v7766 = vrot.slane %v7765, 4
      %v7767 = vrot.slane %v6330, 6
      %v7768 = vsel %vm2744, %v7766, %v7767
      %v7769 = vrot.slane %v7767, 4
      %v7770 = vrot.slane %v6331, 6
      %v7771 = vsel %vm2744, %v7769, %v7770
      %v7832 = vmax.bf16 %v7552, %v7632
      %v7833 = vmax.bf16 %v7553, %v7635
      %v7834 = vmax.bf16 %v7554, %v7638
      %v7835 = vmax.bf16 %v7555, %v7639
      %v7836 = vmax.bf16 %v7556, %v7642
      %v7837 = vmax.bf16 %v7557, %v7645
      %v7838 = vmax.bf16 %v7558, %v7646
      %v7839 = vmax.bf16 %v7559, %v7649
      %v7840 = vmax.bf16 %v7560, %v7652
      %v7841 = vmax.bf16 %v7561, %v7653
      %v7842 = vmax.bf16 %v7562, %v7656
      %v7843 = vmax.bf16 %v7563, %v7659
      %v7844 = vmax.bf16 %v7564, %v7660
      %v7845 = vmax.bf16 %v7565, %v7663
      %v7846 = vmax.bf16 %v7566, %v7666
      %v7847 = vmax.bf16 %v7567, %v7667
      %v7848 = vmax.bf16 %v7568, %v7670
      %v7849 = vmax.bf16 %v7569, %v7673
      %v7850 = vmax.bf16 %v7570, %v7674
      %v7851 = vmax.bf16 %v7571, %v7677
      %v7852 = vmax.bf16 %v7572, %v7680
      %v7853 = vmax.bf16 %v7573, %v7681
      %v7854 = vmax.bf16 %v7574, %v7684
      %v7855 = vmax.bf16 %v7575, %v7687
      %v7856 = vmax.bf16 %v7576, %v7688
      %v7857 = vmax.bf16 %v7577, %v7691
      %v7858 = vmax.bf16 %v7578, %v7694
      %v7859 = vmax.bf16 %v7579, %v7695
      %v7860 = vmax.bf16 %v7580, %v7698
      %v7861 = vmax.bf16 %v7581, %v7701
      %v7862 = vmax.bf16 %v7582, %v7702
      %v7863 = vmax.bf16 %v7583, %v7705
      %v7864 = vmax.bf16 %v7584, %v7708
      %v7865 = vmax.bf16 %v7585, %v7709
      %v7866 = vmax.bf16 %v7586, %v7712
      %v7867 = vmax.bf16 %v7587, %v7715
      %v7868 = vmax.bf16 %v7588, %v7716
      %v7869 = vmax.bf16 %v7589, %v7719
      %v7870 = vmax.bf16 %v7590, %v7722
      %v7871 = vmax.bf16 %v7591, %v7723
      %v7872 = vmax.bf16 %v7592, %v7726
      %v7873 = vmax.bf16 %v7593, %v7729
      %v7874 = vmax.bf16 %v7594, %v7730
      %v7875 = vmax.bf16 %v7595, %v7733
      %v7876 = vmax.bf16 %v7596, %v7736
      %v7877 = vmax.bf16 %v7597, %v7737
      %v7878 = vmax.bf16 %v7598, %v7740
      %v7879 = vmax.bf16 %v7599, %v7743
      %v7880 = vmax.bf16 %v7600, %v7744
      %v7881 = vmax.bf16 %v7601, %v7747
      %v7882 = vmax.bf16 %v7602, %v7750
      %v7883 = vmax.bf16 %v7603, %v7751
      %v7884 = vmax.bf16 %v7604, %v7754
      %v7885 = vmax.bf16 %v7605, %v7757
      %v7886 = vmax.bf16 %v7606, %v7758
      %v7887 = vmax.bf16 %v7607, %v7761
      %v7888 = vmax.bf16 %v7608, %v7764
      %v7889 = vmax.bf16 %v7609, %v7765
      %v7890 = vmax.bf16 %v7610, %v7768
      %v7891 = vmax.bf16 %v7611, %v7771
      %v7892 = vmax.bf16 %v7832, %v7835
      %v7893 = vmax.bf16 %v7833, %v7836
      %v7894 = vmax.bf16 %v7834, %v7837
      %v7895 = vmax.bf16 %v7835, %v7838
      %v7896 = vmax.bf16 %v7836, %v7839
      %v7897 = vmax.bf16 %v7837, %v7840
      %v7898 = vmax.bf16 %v7838, %v7841
      %v7899 = vmax.bf16 %v7839, %v7842
      %v7900 = vmax.bf16 %v7840, %v7843
      %v7901 = vmax.bf16 %v7841, %v7844
      %v7902 = vmax.bf16 %v7842, %v7845
      %v7903 = vmax.bf16 %v7843, %v7846
      %v7904 = vmax.bf16 %v7844, %v7847
      %v7905 = vmax.bf16 %v7845, %v7848
      %v7906 = vmax.bf16 %v7846, %v7849
      %v7907 = vmax.bf16 %v7847, %v7850
      %v7908 = vmax.bf16 %v7848, %v7851
      %v7909 = vmax.bf16 %v7849, %v7852
      %v7910 = vmax.bf16 %v7850, %v7853
      %v7911 = vmax.bf16 %v7851, %v7854
      %v7912 = vmax.bf16 %v7852, %v7855
      %v7913 = vmax.bf16 %v7853, %v7856
      %v7914 = vmax.bf16 %v7854, %v7857
      %v7915 = vmax.bf16 %v7855, %v7858
      %v7916 = vmax.bf16 %v7856, %v7859
      %v7917 = vmax.bf16 %v7857, %v7860
      %v7918 = vmax.bf16 %v7858, %v7861
      %v7919 = vmax.bf16 %v7859, %v7862
      %v7920 = vmax.bf16 %v7860, %v7863
      %v7921 = vmax.bf16 %v7861, %v7864
      %v7922 = vmax.bf16 %v7862, %v7865
      %v7923 = vmax.bf16 %v7863, %v7866
      %v7924 = vmax.bf16 %v7864, %v7867
      %v7925 = vmax.bf16 %v7865, %v7868
      %v7926 = vmax.bf16 %v7866, %v7869
      %v7927 = vmax.bf16 %v7867, %v7870
      %v7928 = vmax.bf16 %v7868, %v7871
      %v7929 = vmax.bf16 %v7869, %v7872
      %v7930 = vmax.bf16 %v7870, %v7873
      %v7931 = vmax.bf16 %v7871, %v7874
      %v7932 = vmax.bf16 %v7872, %v7875
      %v7933 = vmax.bf16 %v7873, %v7876
      %v7934 = vmax.bf16 %v7874, %v7877
      %v7935 = vmax.bf16 %v7875, %v7878
      %v7936 = vmax.bf16 %v7876, %v7879
      %v7937 = vmax.bf16 %v7877, %v7880
      %v7938 = vmax.bf16 %v7878, %v7881
      %v7939 = vmax.bf16 %v7879, %v7882
      %v7940 = vmax.bf16 %v7892, %v7838
      %v7941 = vmax.bf16 %v7893, %v7839
      %v7942 = vmax.bf16 %v7894, %v7840
      %v7943 = vmax.bf16 %v7895, %v7841
      %v7944 = vmax.bf16 %v7896, %v7842
      %v7945 = vmax.bf16 %v7897, %v7843
      %v7946 = vmax.bf16 %v7898, %v7844
      %v7947 = vmax.bf16 %v7899, %v7845
      %v7948 = vmax.bf16 %v7900, %v7846
      %v7949 = vmax.bf16 %v7901, %v7847
      %v7950 = vmax.bf16 %v7902, %v7848
      %v7951 = vmax.bf16 %v7903, %v7849
      %v7952 = vmax.bf16 %v7904, %v7850
      %v7953 = vmax.bf16 %v7905, %v7851
      %v7954 = vmax.bf16 %v7906, %v7852
      %v7955 = vmax.bf16 %v7907, %v7853
      %v7956 = vmax.bf16 %v7908, %v7854
      %v7957 = vmax.bf16 %v7909, %v7855
      %v7958 = vmax.bf16 %v7910, %v7856
      %v7959 = vmax.bf16 %v7911, %v7857
      %v7960 = vmax.bf16 %v7912, %v7858
      %v7961 = vmax.bf16 %v7913, %v7859
      %v7962 = vmax.bf16 %v7914, %v7860
      %v7963 = vmax.bf16 %v7915, %v7861
      %v7964 = vmax.bf16 %v7916, %v7862
      %v7965 = vmax.bf16 %v7917, %v7863
      %v7966 = vmax.bf16 %v7918, %v7864
      %v7967 = vmax.bf16 %v7919, %v7865
      %v7968 = vmax.bf16 %v7920, %v7866
      %v7969 = vmax.bf16 %v7921, %v7867
      %v7970 = vmax.bf16 %v7922, %v7868
      %v7971 = vmax.bf16 %v7923, %v7869
      %v7972 = vmax.bf16 %v7924, %v7870
      %v7973 = vmax.bf16 %v7925, %v7871
      %v7974 = vmax.bf16 %v7926, %v7872
      %v7975 = vmax.bf16 %v7927, %v7873
      %v7976 = vmax.bf16 %v7928, %v7874
      %v7977 = vmax.bf16 %v7929, %v7875
      %v7978 = vmax.bf16 %v7930, %v7876
      %v7979 = vmax.bf16 %v7931, %v7877
      %v7980 = vmax.bf16 %v7932, %v7878
      %v7981 = vmax.bf16 %v7933, %v7879
      %v7982 = vmax.bf16 %v7934, %v7880
      %v7983 = vmax.bf16 %v7935, %v7881
      %v7984 = vmax.bf16 %v7936, %v7882
      %v7985 = vmax.bf16 %v7937, %v7883
      %v7986 = vmax.bf16 %v7938, %v7884
      %v7987 = vmax.bf16 %v7939, %v7885
      %v7988 = vmax.bf16 %v7940, %v7841
      %v7989 = vmax.bf16 %v7941, %v7842
      %v7990 = vmax.bf16 %v7942, %v7843
      %v7991 = vmax.bf16 %v7943, %v7844
      %v7992 = vmax.bf16 %v7944, %v7845
      %v7993 = vmax.bf16 %v7945, %v7846
      %v7994 = vmax.bf16 %v7946, %v7847
      %v7995 = vmax.bf16 %v7947, %v7848
      %v7996 = vmax.bf16 %v7948, %v7849
      %v7997 = vmax.bf16 %v7949, %v7850
      %v7998 = vmax.bf16 %v7950, %v7851
      %v7999 = vmax.bf16 %v7951, %v7852
      %v8000 = vmax.bf16 %v7952, %v7853
      %v8001 = vmax.bf16 %v7953, %v7854
      %v8002 = vmax.bf16 %v7954, %v7855
      %v8003 = vmax.bf16 %v7955, %v7856
      %v8004 = vmax.bf16 %v7956, %v7857
      %v8005 = vmax.bf16 %v7957, %v7858
      %v8006 = vmax.bf16 %v7958, %v7859
      %v8007 = vmax.bf16 %v7959, %v7860
      %v8008 = vmax.bf16 %v7960, %v7861
      %v8009 = vmax.bf16 %v7961, %v7862
      %v8010 = vmax.bf16 %v7962, %v7863
      %v8011 = vmax.bf16 %v7963, %v7864
      %v8012 = vmax.bf16 %v7964, %v7865
      %v8013 = vmax.bf16 %v7965, %v7866
      %v8014 = vmax.bf16 %v7966, %v7867
      %v8015 = vmax.bf16 %v7967, %v7868
      %v8016 = vmax.bf16 %v7968, %v7869
      %v8017 = vmax.bf16 %v7969, %v7870
      %v8018 = vmax.bf16 %v7970, %v7871
      %v8019 = vmax.bf16 %v7971, %v7872
      %v8020 = vmax.bf16 %v7972, %v7873
      %v8021 = vmax.bf16 %v7973, %v7874
      %v8022 = vmax.bf16 %v7974, %v7875
      %v8023 = vmax.bf16 %v7975, %v7876
      %v8024 = vmax.bf16 %v7976, %v7877
      %v8025 = vmax.bf16 %v7977, %v7878
      %v8026 = vmax.bf16 %v7978, %v7879
      %v8027 = vmax.bf16 %v7979, %v7880
      %v8028 = vmax.bf16 %v7980, %v7881
      %v8029 = vmax.bf16 %v7981, %v7882
      %v8030 = vmax.bf16 %v7982, %v7883
      %v8031 = vmax.bf16 %v7983, %v7884
      %v8032 = vmax.bf16 %v7984, %v7885
      %v8033 = vmax.bf16 %v7985, %v7886
      %v8034 = vmax.bf16 %v7986, %v7887
      %v8035 = vmax.bf16 %v7987, %v7888
      %v8036 = vmax.bf16 %v7988, %v7844
      %v8037 = vmax.bf16 %v7989, %v7845
      %v8038 = vmax.bf16 %v7990, %v7846
      %v8039 = vmax.bf16 %v7991, %v7847
      %v8040 = vmax.bf16 %v7992, %v7848
      %v8041 = vmax.bf16 %v7993, %v7849
      %v8042 = vmax.bf16 %v7994, %v7850
      %v8043 = vmax.bf16 %v7995, %v7851
      %v8044 = vmax.bf16 %v7996, %v7852
      %v8045 = vmax.bf16 %v7997, %v7853
      %v8046 = vmax.bf16 %v7998, %v7854
      %v8047 = vmax.bf16 %v7999, %v7855
      %v8048 = vmax.bf16 %v8000, %v7856
      %v8049 = vmax.bf16 %v8001, %v7857
      %v8050 = vmax.bf16 %v8002, %v7858
      %v8051 = vmax.bf16 %v8003, %v7859
      %v8052 = vmax.bf16 %v8004, %v7860
      %v8053 = vmax.bf16 %v8005, %v7861
      %v8054 = vmax.bf16 %v8006, %v7862
      %v8055 = vmax.bf16 %v8007, %v7863
      %v8056 = vmax.bf16 %v8008, %v7864
      %v8057 = vmax.bf16 %v8009, %v7865
      %v8058 = vmax.bf16 %v8010, %v7866
      %v8059 = vmax.bf16 %v8011, %v7867
      %v8060 = vmax.bf16 %v8012, %v7868
      %v8061 = vmax.bf16 %v8013, %v7869
      %v8062 = vmax.bf16 %v8014, %v7870
      %v8063 = vmax.bf16 %v8015, %v7871
      %v8064 = vmax.bf16 %v8016, %v7872
      %v8065 = vmax.bf16 %v8017, %v7873
      %v8066 = vmax.bf16 %v8018, %v7874
      %v8067 = vmax.bf16 %v8019, %v7875
      %v8068 = vmax.bf16 %v8020, %v7876
      %v8069 = vmax.bf16 %v8021, %v7877
      %v8070 = vmax.bf16 %v8022, %v7878
      %v8071 = vmax.bf16 %v8023, %v7879
      %v8072 = vmax.bf16 %v8024, %v7880
      %v8073 = vmax.bf16 %v8025, %v7881
      %v8074 = vmax.bf16 %v8026, %v7882
      %v8075 = vmax.bf16 %v8027, %v7883
      %v8076 = vmax.bf16 %v8028, %v7884
      %v8077 = vmax.bf16 %v8029, %v7885
      %v8078 = vmax.bf16 %v8030, %v7886
      %v8079 = vmax.bf16 %v8031, %v7887
      %v8080 = vmax.bf16 %v8032, %v7888
      %v8081 = vmax.bf16 %v8033, %v7889
      %v8082 = vmax.bf16 %v8034, %v7890
      %v8083 = vmax.bf16 %v8035, %v7891
      %v8084 = vld [vmem:[#allocation3] sm:$0xff]
      %v8085 = vld [vmem:[#allocation3 + $0x8] sm:$0xff]
      %v8086 = vld [vmem:[#allocation3 + $0x10] sm:$0xff]
      %v8087 = vld [vmem:[#allocation3 + $0x18] sm:$0xff]
      %v8088 = vld [vmem:[#allocation3 + $0x20] sm:$0xff]
      %v8089 = vld [vmem:[#allocation3 + $0x28] sm:$0xff]
      %v8090 = vld [vmem:[#allocation3 + $0x30] sm:$0xff]
      %v8091 = vld [vmem:[#allocation3 + $0x38] sm:$0xff]
      %v8092 = vld [vmem:[#allocation3 + $0x40] sm:$0xff]
      %v8093 = vld [vmem:[#allocation3 + $0x48] sm:$0xff]
      %v8094 = vld [vmem:[#allocation3 + $0x50] sm:$0xff]
      %v8095 = vld [vmem:[#allocation3 + $0x58] sm:$0xff]
      %v8096 = vld [vmem:[#allocation3 + $0x60] sm:$0xff]
      %v8097 = vld [vmem:[#allocation3 + $0x68] sm:$0xff]
      %v8098 = vld [vmem:[#allocation3 + $0x70] sm:$0xff]
      %v8099 = vld [vmem:[#allocation3 + $0x78] sm:$0xff]
      %v8100 = vld [vmem:[#allocation3 + $0x80] sm:$0xff]
      %v8101 = vld [vmem:[#allocation3 + $0x88] sm:$0xff]
      %v8102 = vld [vmem:[#allocation3 + $0x90] sm:$0xff]
      %v8103 = vld [vmem:[#allocation3 + $0x98] sm:$0xff]
      %v8104 = vld [vmem:[#allocation3 + $0xa0] sm:$0xff]
      %v8105 = vld [vmem:[#allocation3 + $0xa8] sm:$0xff]
      %v8106 = vld [vmem:[#allocation3 + $0xb0] sm:$0xff]
      %v8107 = vld [vmem:[#allocation3 + $0xb8] sm:$0xff]
      %v8108 = vld [vmem:[#allocation3 + $0xc0] sm:$0xff]
      %v8109 = vld [vmem:[#allocation3 + $0xc8] sm:$0xff]
      %v8110 = vld [vmem:[#allocation3 + $0xd0] sm:$0xff]
      %v8111 = vld [vmem:[#allocation3 + $0xd8] sm:$0xff]
      %v8112 = vld [vmem:[#allocation3 + $0xe0] sm:$0xff]
      %v8113 = vld [vmem:[#allocation3 + $0xe8] sm:$0xff]
      %v8114 = vld [vmem:[#allocation3 + $0xf0] sm:$0xff]
      %v8115 = vld [vmem:[#allocation3 + $0xf8] sm:$0xff]
      %v8164 = vrot.slane %v8036, 7
      %v8165 = vrot.slane %v8164, 4
      %v8166 = vrot.slane %v8037, 7
      %v8167 = vsel %vm3279, %v8165, %v8166
      %v8168 = vrot.slane %v8166, 4
      %v8169 = vrot.slane %v8038, 7
      %v8170 = vsel %vm3279, %v8168, %v8169
      %v8171 = vrot.slane %v8039, 7
      %v8172 = vrot.slane %v8171, 4
      %v8173 = vrot.slane %v8040, 7
      %v8174 = vsel %vm3279, %v8172, %v8173
      %v8175 = vrot.slane %v8173, 4
      %v8176 = vrot.slane %v8041, 7
      %v8177 = vsel %vm3279, %v8175, %v8176
      %v8178 = vrot.slane %v8042, 7
      %v8179 = vrot.slane %v8178, 4
      %v8180 = vrot.slane %v8043, 7
      %v8181 = vsel %vm3279, %v8179, %v8180
      %v8182 = vrot.slane %v8180, 4
      %v8183 = vrot.slane %v8044, 7
      %v8184 = vsel %vm3279, %v8182, %v8183
      %v8185 = vrot.slane %v8045, 7
      %v8186 = vrot.slane %v8185, 4
      %v8187 = vrot.slane %v8046, 7
      %v8188 = vsel %vm3279, %v8186, %v8187
      %v8189 = vrot.slane %v8187, 4
      %v8190 = vrot.slane %v8047, 7
      %v8191 = vsel %vm3279, %v8189, %v8190
      %v8192 = vrot.slane %v8048, 7
      %v8193 = vrot.slane %v8192, 4
      %v8194 = vrot.slane %v8049, 7
      %v8195 = vsel %vm3279, %v8193, %v8194
      %v8196 = vrot.slane %v8194, 4
      %v8197 = vrot.slane %v8050, 7
      %v8198 = vsel %vm3279, %v8196, %v8197
      %v8199 = vrot.slane %v8051, 7
      %v8200 = vrot.slane %v8199, 4
      %v8201 = vrot.slane %v8052, 7
      %v8202 = vsel %vm3279, %v8200, %v8201
      %v8203 = vrot.slane %v8201, 4
      %v8204 = vrot.slane %v8053, 7
      %v8205 = vsel %vm3279, %v8203, %v8204
      %v8206 = vrot.slane %v8054, 7
      %v8207 = vrot.slane %v8206, 4
      %v8208 = vrot.slane %v8055, 7
      %v8209 = vsel %vm3279, %v8207, %v8208
      %v8210 = vrot.slane %v8208, 4
      %v8211 = vrot.slane %v8056, 7
      %v8212 = vsel %vm3279, %v8210, %v8211
      %v8213 = vrot.slane %v8057, 7
      %v8214 = vrot.slane %v8213, 4
      %v8215 = vrot.slane %v8058, 7
      %v8216 = vsel %vm3279, %v8214, %v8215
      %v8217 = vrot.slane %v8215, 4
      %v8218 = vrot.slane %v8059, 7
      %v8219 = vsel %vm3279, %v8217, %v8218
      %v8220 = vrot.slane %v8060, 7
      %v8221 = vrot.slane %v8220, 4
      %v8222 = vrot.slane %v8061, 7
      %v8223 = vsel %vm3279, %v8221, %v8222
      %v8224 = vrot.slane %v8222, 4
      %v8225 = vrot.slane %v8062, 7
      %v8226 = vsel %vm3279, %v8224, %v8225
      %v8227 = vrot.slane %v8063, 7
      %v8228 = vrot.slane %v8227, 4
      %v8229 = vrot.slane %v8064, 7
      %v8230 = vsel %vm3279, %v8228, %v8229
      %v8231 = vrot.slane %v8229, 4
      %v8232 = vrot.slane %v8065, 7
      %v8233 = vsel %vm3279, %v8231, %v8232
      %v8234 = vrot.slane %v8066, 7
      %v8235 = vrot.slane %v8234, 4
      %v8236 = vrot.slane %v8067, 7
      %v8237 = vsel %vm3279, %v8235, %v8236
      %v8238 = vrot.slane %v8236, 4
      %v8239 = vrot.slane %v8068, 7
      %v8240 = vsel %vm3279, %v8238, %v8239
      %v8241 = vrot.slane %v8069, 7
      %v8242 = vrot.slane %v8241, 4
      %v8243 = vrot.slane %v8070, 7
      %v8244 = vsel %vm3279, %v8242, %v8243
      %v8245 = vrot.slane %v8243, 4
      %v8246 = vrot.slane %v8071, 7
      %v8247 = vsel %vm3279, %v8245, %v8246
      %v8248 = vrot.slane %v8072, 7
      %v8249 = vrot.slane %v8248, 4
      %v8250 = vrot.slane %v8073, 7
      %v8251 = vsel %vm3279, %v8249, %v8250
      %v8252 = vrot.slane %v8250, 4
      %v8253 = vrot.slane %v8074, 7
      %v8254 = vsel %vm3279, %v8252, %v8253
      %v8255 = vrot.slane %v8075, 7
      %v8256 = vrot.slane %v8255, 4
      %v8257 = vrot.slane %v8076, 7
      %v8258 = vsel %vm3279, %v8256, %v8257
      %v8259 = vrot.slane %v8257, 4
      %v8260 = vrot.slane %v8077, 7
      %v8261 = vsel %vm3279, %v8259, %v8260
      %v8262 = vrot.slane %v8078, 7
      %v8263 = vrot.slane %v8262, 4
      %v8264 = vrot.slane %v8079, 7
      %v8265 = vsel %vm3279, %v8263, %v8264
      %v8266 = vrot.slane %v8264, 4
      %v8267 = vrot.slane %v8080, 7
      %v8268 = vsel %vm3279, %v8266, %v8267
      %v8269 = vrot.slane %v8081, 7
      %v8270 = vrot.slane %v8269, 4
      %v8271 = vrot.slane %v8082, 7
      %v8272 = vsel %vm3279, %v8270, %v8271
      %v8273 = vrot.slane %v8271, 4
      %v8274 = vrot.slane %v8083, 7
      %v8275 = vsel %vm3279, %v8273, %v8274
      %s8276 = scalar_lea.vmem %s4, 192
      %v8277 = vld [vmem:[%s8276] sm:$0xf]
      %v8278 = vld [vmem:[%s8276 + $0x4] sm:$0xf]
      %v8279 = vld [vmem:[%s8276 + $0x8] sm:$0xf]
      %v8280 = vld [vmem:[%s8276 + $0xc] sm:$0xf]
      %v8281 = vld [vmem:[%s8276 + $0x10] sm:$0xf]
      %v8282 = vld [vmem:[%s8276 + $0x14] sm:$0xf]
      %v8283 = vld [vmem:[%s8276 + $0x18] sm:$0xf]
      %v8284 = vld [vmem:[%s8276 + $0x1c] sm:$0xf]
      %v8285 = vld [vmem:[%s8276 + $0x20] sm:$0xf]
      %v8286 = vld [vmem:[%s8276 + $0x24] sm:$0xf]
      %v8287 = vld [vmem:[%s8276 + $0x28] sm:$0xf]
      %v8288 = vld [vmem:[%s8276 + $0x2c] sm:$0xf]
      %v8289 = vld [vmem:[%s8276 + $0x30] sm:$0xf]
      %v8290 = vld [vmem:[%s8276 + $0x34] sm:$0xf]
      %v8291 = vld [vmem:[%s8276 + $0x38] sm:$0xf]
      %v8292 = vld [vmem:[%s8276 + $0x3c] sm:$0xf]
      %v8293 = vunpack.c.l.b16 %v8167
      %v8294 = vunpack.c.l.b16 %v8170
      %v8295 = vunpack.c.l.b16 %v8174
      %v8296 = vunpack.c.l.b16 %v8177
      %v8297 = vunpack.c.l.b16 %v8181
      %v8298 = vunpack.c.l.b16 %v8184
      %v8299 = vunpack.c.l.b16 %v8188
      %v8300 = vunpack.c.l.b16 %v8191
      %v8301 = vunpack.c.l.b16 %v8195
      %v8302 = vunpack.c.l.b16 %v8198
      %v8303 = vunpack.c.l.b16 %v8202
      %v8304 = vunpack.c.l.b16 %v8205
      %v8305 = vunpack.c.l.b16 %v8209
      %v8306 = vunpack.c.l.b16 %v8212
      %v8307 = vunpack.c.l.b16 %v8216
      %v8308 = vunpack.c.l.b16 %v8219
      %v8309 = vunpack.c.l.b16 %v8223
      %v8310 = vunpack.c.l.b16 %v8226
      %v8311 = vunpack.c.l.b16 %v8230
      %v8312 = vunpack.c.l.b16 %v8233
      %v8313 = vunpack.c.l.b16 %v8237
      %v8314 = vunpack.c.l.b16 %v8240
      %v8315 = vunpack.c.l.b16 %v8244
      %v8316 = vunpack.c.l.b16 %v8247
      %v8317 = vunpack.c.l.b16 %v8251
      %v8318 = vunpack.c.l.b16 %v8254
      %v8319 = vunpack.c.l.b16 %v8258
      %v8320 = vunpack.c.l.b16 %v8261
      %v8321 = vunpack.c.l.b16 %v8265
      %v8322 = vunpack.c.l.b16 %v8268
      %v8323 = vunpack.c.l.b16 %v8272
      %v8324 = vunpack.c.l.b16 %v8275
      %v8325 = vpack.c.b16 %v8294, %v8293
      %v8326 = vpack.c.b16 %v8296, %v8295
      %v8327 = vpack.c.b16 %v8298, %v8297
      %v8328 = vpack.c.b16 %v8300, %v8299
      %v8329 = vpack.c.b16 %v8302, %v8301
      %v8330 = vpack.c.b16 %v8304, %v8303
      %v8331 = vpack.c.b16 %v8306, %v8305
      %v8332 = vpack.c.b16 %v8308, %v8307
      %v8333 = vpack.c.b16 %v8310, %v8309
      %v8334 = vpack.c.b16 %v8312, %v8311
      %v8335 = vpack.c.b16 %v8314, %v8313
      %v8336 = vpack.c.b16 %v8316, %v8315
      %v8337 = vpack.c.b16 %v8318, %v8317
      %v8338 = vpack.c.b16 %v8320, %v8319
      %v8339 = vpack.c.b16 %v8322, %v8321
      %v8340 = vpack.c.b16 %v8324, %v8323
      %v8373 = vunpack.c.l.b16 %v8277
      %v8374 = vunpack.c.l.b16 %v8278
      %v8375 = vunpack.c.l.b16 %v8279
      %v8376 = vunpack.c.l.b16 %v8280
      %v8377 = vunpack.c.l.b16 %v8281
      %v8378 = vunpack.c.l.b16 %v8282
      %v8379 = vunpack.c.l.b16 %v8283
      %v8380 = vunpack.c.l.b16 %v8284
      %v8381 = vunpack.c.l.b16 %v8285
      %v8382 = vunpack.c.l.b16 %v8286
      %v8383 = vunpack.c.l.b16 %v8287
      %v8384 = vunpack.c.l.b16 %v8288
      %v8385 = vunpack.c.l.b16 %v8289
      %v8386 = vunpack.c.l.b16 %v8290
      %v8387 = vunpack.c.l.b16 %v8291
      %v8388 = vunpack.c.l.b16 %v8292
      %v8389 = vpack.c.b16 %v8374, %v8373
      %v8390 = vpack.c.b16 %v8376, %v8375
      %v8391 = vpack.c.b16 %v8378, %v8377
      %v8392 = vpack.c.b16 %v8380, %v8379
      %v8393 = vpack.c.b16 %v8382, %v8381
      %v8394 = vpack.c.b16 %v8384, %v8383
      %v8395 = vpack.c.b16 %v8386, %v8385
      %v8396 = vpack.c.b16 %v8388, %v8387
      %8405 = vmatprep.subr.bf16.mxu0 0
      %8406 = vmatpush1.bf16.msra.mxu0 %v8389
      %8407 = vmatprep.subr.bf16.mxu0 0
      %8408 = vmatpush1.bf16.msra.mxu0 %v8390
      %8409 = vmatprep.subr.bf16.mxu0 0
      %8410 = vmatpush1.bf16.msra.mxu0 %v8391
      %8411 = vmatprep.subr.bf16.mxu0 0
      %8412 = vmatpush1.bf16.msra.mxu0 %v8392
      %8413 = vmatprep.subr.bf16.mxu0 0
      %8414 = vmatpush1.bf16.msra.mxu0 %v8393
      %8415 = vmatprep.subr.bf16.mxu0 0
      %8416 = vmatpush1.bf16.msra.mxu0 %v8394
      %8417 = vmatprep.subr.bf16.mxu0 0
      %8418 = vmatpush1.bf16.msra.mxu0 %v8395
      %8419 = vmatprep.subr.bf16.mxu0 0
      %8420 = vmatpush1.bf16.msra.mxu0 %v8396
      %8421 = vmatprep.subr.bf16.mxu0 0
      %8422 = vmatpush1.bf16.msra.mxu0 0
      %8423 = vmatprep.subr.bf16.mxu0 0
      %8424 = vmatpush1.bf16.msra.mxu0 0
      %8425 = vmatprep.subr.bf16.mxu0 0
      %8426 = vmatpush1.bf16.msra.mxu0 0
      %8427 = vmatprep.subr.bf16.mxu0 0
      %8428 = vmatpush1.bf16.msra.mxu0 0
      %8429 = vmatprep.subr.bf16.mxu0 0
      %8430 = vmatpush1.bf16.msra.mxu0 0
      %8431 = vmatprep.subr.bf16.mxu0 0
      %8432 = vmatpush1.bf16.msra.mxu0 0
      %8433 = vmatprep.subr.bf16.mxu0 0
      %8434 = vmatpush1.bf16.msra.mxu0 0
      %8435 = vmatprep.subr.bf16.mxu0 0
      %8436 = vmatpush1.bf16.msra.mxu0 0
      %8437 = vmatprep.mubr.bf16.mxu0 0
      %8438 = vmatmul.mubr.bf16.gmra.mrb[0].mxu0 %v8325
      %v8439 = vpop.f32.mrb[0].mxu0
      %v8440 = vadd.f32 0.0, %v8439
      %v8441 = vpop.f32.mrb[0].mxu0
      %v8442 = vpop.f32.mrb[0].mxu0
      %v8443 = vadd.f32 0.0, %v8442
      %v8444 = vpop.f32.mrb[0].mxu0
      %8445 = vmatprep.mubr.bf16.mxu0 0
      %8446 = vmatmul.mubr.bf16.gmra.mrb[0].mxu0 %v8326
      %v8447 = vpop.f32.mrb[0].mxu0
      %v8448 = vadd.f32 0.0, %v8447
      %v8449 = vpop.f32.mrb[0].mxu0
      %v8450 = vpop.f32.mrb[0].mxu0
      %v8451 = vadd.f32 0.0, %v8450
      %v8452 = vpop.f32.mrb[0].mxu0
      %8453 = vmatprep.mubr.bf16.mxu0 0
      %8454 = vmatmul.mubr.bf16.gmra.mrb[0].mxu0 %v8327
      %v8455 = vpop.f32.mrb[0].mxu0
      %v8456 = vadd.f32 0.0, %v8455
      %v8457 = vpop.f32.mrb[0].mxu0
      %v8458 = vpop.f32.mrb[0].mxu0
      %v8459 = vadd.f32 0.0, %v8458
      %v8460 = vpop.f32.mrb[0].mxu0
      %8461 = vmatprep.mubr.bf16.mxu0 0
      %8462 = vmatmul.mubr.bf16.gmra.mrb[0].mxu0 %v8328
      %v8463 = vpop.f32.mrb[0].mxu0
      %v8464 = vadd.f32 0.0, %v8463
      %v8465 = vpop.f32.mrb[0].mxu0
      %v8466 = vpop.f32.mrb[0].mxu0
      %v8467 = vadd.f32 0.0, %v8466
      %v8468 = vpop.f32.mrb[0].mxu0
      %8469 = vmatprep.mubr.bf16.mxu0 0
      %8470 = vmatmul.mubr.bf16.gmra.mrb[0].mxu0 %v8329
      %v8471 = vpop.f32.mrb[0].mxu0
      %v8472 = vadd.f32 0.0, %v8471
      %v8473 = vpop.f32.mrb[0].mxu0
      %v8474 = vpop.f32.mrb[0].mxu0
      %v8475 = vadd.f32 0.0, %v8474
      %v8476 = vpop.f32.mrb[0].mxu0
      %8477 = vmatprep.mubr.bf16.mxu0 0
      %8478 = vmatmul.mubr.bf16.gmra.mrb[0].mxu0 %v8330
      %v8479 = vpop.f32.mrb[0].mxu0
      %v8480 = vadd.f32 0.0, %v8479
      %v8481 = vpop.f32.mrb[0].mxu0
      %v8482 = vpop.f32.mrb[0].mxu0
      %v8483 = vadd.f32 0.0, %v8482
      %v8484 = vpop.f32.mrb[0].mxu0
      %8485 = vmatprep.mubr.bf16.mxu0 0
      %8486 = vmatmul.mubr.bf16.gmra.mrb[0].mxu0 %v8331
      %v8487 = vpop.f32.mrb[0].mxu0
      %v8488 = vadd.f32 0.0, %v8487
      %v8489 = vpop.f32.mrb[0].mxu0
      %v8490 = vpop.f32.mrb[0].mxu0
      %v8491 = vadd.f32 0.0, %v8490
      %v8492 = vpop.f32.mrb[0].mxu0
      %8493 = vmatprep.mubr.bf16.mxu0 0
      %8494 = vmatmul.mubr.bf16.gmra.mrb[0].mxu0 %v8332
      %v8495 = vpop.f32.mrb[0].mxu0
      %v8496 = vadd.f32 0.0, %v8495
      %v8497 = vpop.f32.mrb[0].mxu0
      %v8498 = vpop.f32.mrb[0].mxu0
      %v8499 = vadd.f32 0.0, %v8498
      %v8500 = vpop.f32.mrb[0].mxu0
      %8501 = vmatprep.mubr.bf16.mxu0 0
      %8502 = vmatmul.mubr.bf16.gmra.mrb[0].mxu0 %v8333
      %v8503 = vpop.f32.mrb[0].mxu0
      %v8504 = vadd.f32 0.0, %v8503
      %v8505 = vpop.f32.mrb[0].mxu0
      %v8506 = vpop.f32.mrb[0].mxu0
      %v8507 = vadd.f32 0.0, %v8506
      %v8508 = vpop.f32.mrb[0].mxu0
      %8509 = vmatprep.mubr.bf16.mxu0 0
      %8510 = vmatmul.mubr.bf16.gmra.mrb[0].mxu0 %v8334
      %v8511 = vpop.f32.mrb[0].mxu0
      %v8512 = vadd.f32 0.0, %v8511
      %v8513 = vpop.f32.mrb[0].mxu0
      %v8514 = vpop.f32.mrb[0].mxu0
      %v8515 = vadd.f32 0.0, %v8514
      %v8516 = vpop.f32.mrb[0].mxu0
      %8517 = vmatprep.mubr.bf16.mxu0 0
      %8518 = vmatmul.mubr.bf16.gmra.mrb[0].mxu0 %v8335
      %v8519 = vpop.f32.mrb[0].mxu0
      %v8520 = vadd.f32 0.0, %v8519
      %v8521 = vpop.f32.mrb[0].mxu0
      %v8522 = vpop.f32.mrb[0].mxu0
      %v8523 = vadd.f32 0.0, %v8522
      %v8524 = vpop.f32.mrb[0].mxu0
      %8525 = vmatprep.mubr.bf16.mxu0 0
      %8526 = vmatmul.mubr.bf16.gmra.mrb[0].mxu0 %v8336
      %v8527 = vpop.f32.mrb[0].mxu0
      %v8528 = vadd.f32 0.0, %v8527
      %v8529 = vpop.f32.mrb[0].mxu0
      %v8530 = vpop.f32.mrb[0].mxu0
      %v8531 = vadd.f32 0.0, %v8530
      %v8532 = vpop.f32.mrb[0].mxu0
      %8533 = vmatprep.mubr.bf16.mxu0 0
      %8534 = vmatmul.mubr.bf16.gmra.mrb[0].mxu0 %v8337
      %v8535 = vpop.f32.mrb[0].mxu0
      %v8536 = vadd.f32 0.0, %v8535
      %v8537 = vpop.f32.mrb[0].mxu0
      %v8538 = vpop.f32.mrb[0].mxu0
      %v8539 = vadd.f32 0.0, %v8538
      %v8540 = vpop.f32.mrb[0].mxu0
      %8541 = vmatprep.mubr.bf16.mxu0 0
      %8542 = vmatmul.mubr.bf16.gmra.mrb[0].mxu0 %v8338
      %v8543 = vpop.f32.mrb[0].mxu0
      %v8544 = vadd.f32 0.0, %v8543
      %v8545 = vpop.f32.mrb[0].mxu0
      %v8546 = vpop.f32.mrb[0].mxu0
      %v8547 = vadd.f32 0.0, %v8546
      %v8548 = vpop.f32.mrb[0].mxu0
      %8549 = vmatprep.mubr.bf16.mxu0 0
      %8550 = vmatmul.mubr.bf16.gmra.mrb[0].mxu0 %v8339
      %v8551 = vpop.f32.mrb[0].mxu0
      %v8552 = vadd.f32 0.0, %v8551
      %v8553 = vpop.f32.mrb[0].mxu0
      %v8554 = vpop.f32.mrb[0].mxu0
      %v8555 = vadd.f32 0.0, %v8554
      %v8556 = vpop.f32.mrb[0].mxu0
      %8557 = vmatprep.mubr.bf16.mxu0 0
      %8558 = vmatmul.mubr.bf16.gmra.mrb[0].mxu0 %v8340
      %v8559 = vpop.f32.mrb[0].mxu0
      %v8560 = vadd.f32 0.0, %v8559
      %v8561 = vpop.f32.mrb[0].mxu0
      %v8562 = vpop.f32.mrb[0].mxu0
      %v8563 = vadd.f32 0.0, %v8562
      %v8564 = vpop.f32.mrb[0].mxu0
      %8565 = vdwg.mxu0
      %v8566 = vadd.f32 %v8084, %v8440
      %v8567 = vadd.f32 %v8085, %v8443
      %v8568 = vadd.f32 %v8086, %v8448
      %v8569 = vadd.f32 %v8087, %v8451
      %v8570 = vadd.f32 %v8088, %v8456
      %v8571 = vadd.f32 %v8089, %v8459
      %v8572 = vadd.f32 %v8090, %v8464
      %v8573 = vadd.f32 %v8091, %v8467
      %v8574 = vadd.f32 %v8092, %v8472
      %v8575 = vadd.f32 %v8093, %v8475
      %v8576 = vadd.f32 %v8094, %v8480
      %v8577 = vadd.f32 %v8095, %v8483
      %v8578 = vadd.f32 %v8096, %v8488
      %v8579 = vadd.f32 %v8097, %v8491
      %v8580 = vadd.f32 %v8098, %v8496
      %v8581 = vadd.f32 %v8099, %v8499
      %v8582 = vadd.f32 %v8100, %v8504
      %v8583 = vadd.f32 %v8101, %v8507
      %v8584 = vadd.f32 %v8102, %v8512
      %v8585 = vadd.f32 %v8103, %v8515
      %v8586 = vadd.f32 %v8104, %v8520
      %v8587 = vadd.f32 %v8105, %v8523
      %v8588 = vadd.f32 %v8106, %v8528
      %v8589 = vadd.f32 %v8107, %v8531
      %v8590 = vadd.f32 %v8108, %v8536
      %v8591 = vadd.f32 %v8109, %v8539
      %v8592 = vadd.f32 %v8110, %v8544
      %v8593 = vadd.f32 %v8111, %v8547
      %v8594 = vadd.f32 %v8112, %v8552
      %v8595 = vadd.f32 %v8113, %v8555
      %v8596 = vadd.f32 %v8114, %v8560
      %v8597 = vadd.f32 %v8115, %v8563
      %8598 = vst [vmem:[#allocation3] sm:$0xff] %v8566
      %8599 = vst [vmem:[#allocation3 + $0x8] sm:$0xff] %v8567
      %8600 = vst [vmem:[#allocation3 + $0x10] sm:$0xff] %v8568
      %8601 = vst [vmem:[#allocation3 + $0x18] sm:$0xff] %v8569
      %8602 = vst [vmem:[#allocation3 + $0x20] sm:$0xff] %v8570
      %8603 = vst [vmem:[#allocation3 + $0x28] sm:$0xff] %v8571
      %8604 = vst [vmem:[#allocation3 + $0x30] sm:$0xff] %v8572
      %8605 = vst [vmem:[#allocation3 + $0x38] sm:$0xff] %v8573
      %8606 = vst [vmem:[#allocation3 + $0x40] sm:$0xff] %v8574
      %8607 = vst [vmem:[#allocation3 + $0x48] sm:$0xff] %v8575
      %8608 = vst [vmem:[#allocation3 + $0x50] sm:$0xff] %v8576
      %8609 = vst [vmem:[#allocation3 + $0x58] sm:$0xff] %v8577
      %8610 = vst [vmem:[#allocation3 + $0x60] sm:$0xff] %v8578
      %8611 = vst [vmem:[#allocation3 + $0x68] sm:$0xff] %v8579
      %8612 = vst [vmem:[#allocation3 + $0x70] sm:$0xff] %v8580
      %8613 = vst [vmem:[#allocation3 + $0x78] sm:$0xff] %v8581
      %8614 = vst [vmem:[#allocation3 + $0x80] sm:$0xff] %v8582
      %8615 = vst [vmem:[#allocation3 + $0x88] sm:$0xff] %v8583
      %8616 = vst [vmem:[#allocation3 + $0x90] sm:$0xff] %v8584
      %8617 = vst [vmem:[#allocation3 + $0x98] sm:$0xff] %v8585
      %8618 = vst [vmem:[#allocation3 + $0xa0] sm:$0xff] %v8586
      %8619 = vst [vmem:[#allocation3 + $0xa8] sm:$0xff] %v8587
      %8620 = vst [vmem:[#allocation3 + $0xb0] sm:$0xff] %v8588
      %8621 = vst [vmem:[#allocation3 + $0xb8] sm:$0xff] %v8589
      %8622 = vst [vmem:[#allocation3 + $0xc0] sm:$0xff] %v8590
      %8623 = vst [vmem:[#allocation3 + $0xc8] sm:$0xff] %v8591
      %8624 = vst [vmem:[#allocation3 + $0xd0] sm:$0xff] %v8592
      %8625 = vst [vmem:[#allocation3 + $0xd8] sm:$0xff] %v8593
      %8626 = vst [vmem:[#allocation3 + $0xe0] sm:$0xff] %v8594
      %8627 = vst [vmem:[#allocation3 + $0xe8] sm:$0xff] %v8595
      %8628 = vst [vmem:[#allocation3 + $0xf0] sm:$0xff] %v8596
      %8629 = vst [vmem:[#allocation3 + $0xf8] sm:$0xff] %v8597
      %v8630 = vld [vmem:[#allocation3] sm:$0xff]
      %v8631 = vld [vmem:[#allocation3 + $0x8] sm:$0xff]
      %v8632 = vld [vmem:[#allocation3 + $0x10] sm:$0xff]
      %v8633 = vld [vmem:[#allocation3 + $0x18] sm:$0xff]
      %v8634 = vld [vmem:[#allocation3 + $0x20] sm:$0xff]
      %v8635 = vld [vmem:[#allocation3 + $0x28] sm:$0xff]
      %v8636 = vld [vmem:[#allocation3 + $0x30] sm:$0xff]
      %v8637 = vld [vmem:[#allocation3 + $0x38] sm:$0xff]
      %v8638 = vld [vmem:[#allocation3 + $0x40] sm:$0xff]
      %v8639 = vld [vmem:[#allocation3 + $0x48] sm:$0xff]
      %v8640 = vld [vmem:[#allocation3 + $0x50] sm:$0xff]
      %v8641 = vld [vmem:[#allocation3 + $0x58] sm:$0xff]
      %v8642 = vld [vmem:[#allocation3 + $0x60] sm:$0xff]
      %v8643 = vld [vmem:[#allocation3 + $0x68] sm:$0xff]
      %v8644 = vld [vmem:[#allocation3 + $0x70] sm:$0xff]
      %v8645 = vld [vmem:[#allocation3 + $0x78] sm:$0xff]
      %v8646 = vld [vmem:[#allocation3 + $0x80] sm:$0xff]
      %v8647 = vld [vmem:[#allocation3 + $0x88] sm:$0xff]
      %v8648 = vld [vmem:[#allocation3 + $0x90] sm:$0xff]
      %v8649 = vld [vmem:[#allocation3 + $0x98] sm:$0xff]
      %v8650 = vld [vmem:[#allocation3 + $0xa0] sm:$0xff]
      %v8651 = vld [vmem:[#allocation3 + $0xa8] sm:$0xff]
      %v8652 = vld [vmem:[#allocation3 + $0xb0] sm:$0xff]
      %v8653 = vld [vmem:[#allocation3 + $0xb8] sm:$0xff]
      %v8654 = vld [vmem:[#allocation3 + $0xc0] sm:$0xff]
      %v8655 = vld [vmem:[#allocation3 + $0xc8] sm:$0xff]
      %v8656 = vld [vmem:[#allocation3 + $0xd0] sm:$0xff]
      %v8657 = vld [vmem:[#allocation3 + $0xd8] sm:$0xff]
      %v8658 = vld [vmem:[#allocation3 + $0xe0] sm:$0xff]
      %v8659 = vld [vmem:[#allocation3 + $0xe8] sm:$0xff]
      %v8660 = vld [vmem:[#allocation3 + $0xf0] sm:$0xff]
      %v8661 = vld [vmem:[#allocation3 + $0xf8] sm:$0xff]
      %v8662 = vld [vmem:[%s5] sm:$0x1]
      %v8664 = vlaneseq
      %v8665 = vshrl.u32 %v8664, 7
      %v8666 = vsub.s32 0, %v8665
      %v8667 = vrot.slane %v8662, %v8666
      %v8669 = vmul.f32 %v8630, %v8667
      %v8670 = vmul.f32 %v8631, %v8667
      %v8671 = vmul.f32 %v8632, %v8667
      %v8672 = vmul.f32 %v8633, %v8667
      %v8673 = vmul.f32 %v8634, %v8667
      %v8674 = vmul.f32 %v8635, %v8667
      %v8675 = vmul.f32 %v8636, %v8667
      %v8676 = vmul.f32 %v8637, %v8667
      %v8677 = vmul.f32 %v8638, %v8667
      %v8678 = vmul.f32 %v8639, %v8667
      %v8679 = vmul.f32 %v8640, %v8667
      %v8680 = vmul.f32 %v8641, %v8667
      %v8681 = vmul.f32 %v8642, %v8667
      %v8682 = vmul.f32 %v8643, %v8667
      %v8683 = vmul.f32 %v8644, %v8667
      %v8684 = vmul.f32 %v8645, %v8667
      %v8685 = vmul.f32 %v8646, %v8667
      %v8686 = vmul.f32 %v8647, %v8667
      %v8687 = vmul.f32 %v8648, %v8667
      %v8688 = vmul.f32 %v8649, %v8667
      %v8689 = vmul.f32 %v8650, %v8667
      %v8690 = vmul.f32 %v8651, %v8667
      %v8691 = vmul.f32 %v8652, %v8667
      %v8692 = vmul.f32 %v8653, %v8667
      %v8693 = vmul.f32 %v8654, %v8667
      %v8694 = vmul.f32 %v8655, %v8667
      %v8695 = vmul.f32 %v8656, %v8667
      %v8696 = vmul.f32 %v8657, %v8667
      %v8697 = vmul.f32 %v8658, %v8667
      %v8698 = vmul.f32 %v8659, %v8667
      %v8699 = vmul.f32 %v8660, %v8667
      %v8700 = vmul.f32 %v8661, %v8667
      %v8701 = vld [vmem:[%s6] sm:$0x1]
      %v8703 = vlaneseq
      %v8704 = vshrl.u32 %v8703, 7
      %v8705 = vsub.s32 0, %v8704
      %v8706 = vrot.slane %v8701, %v8705
      %v8708 = vadd.f32 %v8669, %v8706
      %v8709 = vadd.f32 %v8670, %v8706
      %v8710 = vadd.f32 %v8671, %v8706
      %v8711 = vadd.f32 %v8672, %v8706
      %v8712 = vadd.f32 %v8673, %v8706
      %v8713 = vadd.f32 %v8674, %v8706
      %v8714 = vadd.f32 %v8675, %v8706
      %v8715 = vadd.f32 %v8676, %v8706
      %v8716 = vadd.f32 %v8677, %v8706
      %v8717 = vadd.f32 %v8678, %v8706
      %v8718 = vadd.f32 %v8679, %v8706
      %v8719 = vadd.f32 %v8680, %v8706
      %v8720 = vadd.f32 %v8681, %v8706
      %v8721 = vadd.f32 %v8682, %v8706
      %v8722 = vadd.f32 %v8683, %v8706
      %v8723 = vadd.f32 %v8684, %v8706
      %v8724 = vadd.f32 %v8685, %v8706
      %v8725 = vadd.f32 %v8686, %v8706
      %v8726 = vadd.f32 %v8687, %v8706
      %v8727 = vadd.f32 %v8688, %v8706
      %v8728 = vadd.f32 %v8689, %v8706
      %v8729 = vadd.f32 %v8690, %v8706
      %v8730 = vadd.f32 %v8691, %v8706
      %v8731 = vadd.f32 %v8692, %v8706
      %v8732 = vadd.f32 %v8693, %v8706
      %v8733 = vadd.f32 %v8694, %v8706
      %v8734 = vadd.f32 %v8695, %v8706
      %v8735 = vadd.f32 %v8696, %v8706
      %v8736 = vadd.f32 %v8697, %v8706
      %v8737 = vadd.f32 %v8698, %v8706
      %v8738 = vadd.f32 %v8699, %v8706
      %v8739 = vadd.f32 %v8700, %v8706
      %v8740 = vsub.f32 0.0, %v8708
      %v8741 = vsub.f32 0.0, %v8709
      %v8742 = vsub.f32 0.0, %v8710
      %v8743 = vsub.f32 0.0, %v8711
      %v8744 = vsub.f32 0.0, %v8712
      %v8745 = vsub.f32 0.0, %v8713
      %v8746 = vsub.f32 0.0, %v8714
      %v8747 = vsub.f32 0.0, %v8715
      %v8748 = vsub.f32 0.0, %v8716
      %v8749 = vsub.f32 0.0, %v8717
      %v8750 = vsub.f32 0.0, %v8718
      %v8751 = vsub.f32 0.0, %v8719
      %v8752 = vsub.f32 0.0, %v8720
      %v8753 = vsub.f32 0.0, %v8721
      %v8754 = vsub.f32 0.0, %v8722
      %v8755 = vsub.f32 0.0, %v8723
      %v8756 = vsub.f32 0.0, %v8724
      %v8757 = vsub.f32 0.0, %v8725
      %v8758 = vsub.f32 0.0, %v8726
      %v8759 = vsub.f32 0.0, %v8727
      %v8760 = vsub.f32 0.0, %v8728
      %v8761 = vsub.f32 0.0, %v8729
      %v8762 = vsub.f32 0.0, %v8730
      %v8763 = vsub.f32 0.0, %v8731
      %v8764 = vsub.f32 0.0, %v8732
      %v8765 = vsub.f32 0.0, %v8733
      %v8766 = vsub.f32 0.0, %v8734
      %v8767 = vsub.f32 0.0, %v8735
      %v8768 = vsub.f32 0.0, %v8736
      %v8769 = vsub.f32 0.0, %v8737
      %v8770 = vsub.f32 0.0, %v8738
      %v8771 = vsub.f32 0.0, %v8739
      %v8772 = vmul.f32 %v8740, 1.442695
      %v8773 = vpow.pop %v8772
      %v8774 = vmul.f32 %v8741, 1.442695
      %v8775 = vpow.pop %v8774
      %v8776 = vmul.f32 %v8742, 1.442695
      %v8777 = vpow.pop %v8776
      %v8778 = vmul.f32 %v8743, 1.442695
      %v8779 = vpow.pop %v8778
      %v8780 = vmul.f32 %v8744, 1.442695
      %v8781 = vpow.pop %v8780
      %v8782 = vmul.f32 %v8745, 1.442695
      %v8783 = vpow.pop %v8782
      %v8784 = vmul.f32 %v8746, 1.442695
      %v8785 = vpow.pop %v8784
      %v8786 = vmul.f32 %v8747, 1.442695
      %v8787 = vpow.pop %v8786
      %v8788 = vmul.f32 %v8748, 1.442695
      %v8789 = vpow.pop %v8788
      %v8790 = vmul.f32 %v8749, 1.442695
      %v8791 = vpow.pop %v8790
      %v8792 = vmul.f32 %v8750, 1.442695
      %v8793 = vpow.pop %v8792
      %v8794 = vmul.f32 %v8751, 1.442695
      %v8795 = vpow.pop %v8794
      %v8796 = vmul.f32 %v8752, 1.442695
      %v8797 = vpow.pop %v8796
      %v8798 = vmul.f32 %v8753, 1.442695
      %v8799 = vpow.pop %v8798
      %v8800 = vmul.f32 %v8754, 1.442695
      %v8801 = vpow.pop %v8800
      %v8802 = vmul.f32 %v8755, 1.442695
      %v8803 = vpow.pop %v8802
      %v8804 = vmul.f32 %v8756, 1.442695
      %v8805 = vpow.pop %v8804
      %v8806 = vmul.f32 %v8757, 1.442695
      %v8807 = vpow.pop %v8806
      %v8808 = vmul.f32 %v8758, 1.442695
      %v8809 = vpow.pop %v8808
      %v8810 = vmul.f32 %v8759, 1.442695
      %v8811 = vpow.pop %v8810
      %v8812 = vmul.f32 %v8760, 1.442695
      %v8813 = vpow.pop %v8812
      %v8814 = vmul.f32 %v8761, 1.442695
      %v8815 = vpow.pop %v8814
      %v8816 = vmul.f32 %v8762, 1.442695
      %v8817 = vpow.pop %v8816
      %v8818 = vmul.f32 %v8763, 1.442695
      %v8819 = vpow.pop %v8818
      %v8820 = vmul.f32 %v8764, 1.442695
      %v8821 = vpow.pop %v8820
      %v8822 = vmul.f32 %v8765, 1.442695
      %v8823 = vpow.pop %v8822
      %v8824 = vmul.f32 %v8766, 1.442695
      %v8825 = vpow.pop %v8824
      %v8826 = vmul.f32 %v8767, 1.442695
      %v8827 = vpow.pop %v8826
      %v8828 = vmul.f32 %v8768, 1.442695
      %v8829 = vpow.pop %v8828
      %v8830 = vmul.f32 %v8769, 1.442695
      %v8831 = vpow.pop %v8830
      %v8832 = vmul.f32 %v8770, 1.442695
      %v8833 = vpow.pop %v8832
      %v8834 = vmul.f32 %v8771, 1.442695
      %v8835 = vpow.pop %v8834
      %v8836 = vadd.f32 %v8773, 1.0
      %v8837 = vadd.f32 %v8775, 1.0
      %v8838 = vadd.f32 %v8777, 1.0
      %v8839 = vadd.f32 %v8779, 1.0
      %v8840 = vadd.f32 %v8781, 1.0
      %v8841 = vadd.f32 %v8783, 1.0
      %v8842 = vadd.f32 %v8785, 1.0
      %v8843 = vadd.f32 %v8787, 1.0
      %v8844 = vadd.f32 %v8789, 1.0
      %v8845 = vadd.f32 %v8791, 1.0
      %v8846 = vadd.f32 %v8793, 1.0
      %v8847 = vadd.f32 %v8795, 1.0
      %v8848 = vadd.f32 %v8797, 1.0
      %v8849 = vadd.f32 %v8799, 1.0
      %v8850 = vadd.f32 %v8801, 1.0
      %v8851 = vadd.f32 %v8803, 1.0
      %v8852 = vadd.f32 %v8805, 1.0
      %v8853 = vadd.f32 %v8807, 1.0
      %v8854 = vadd.f32 %v8809, 1.0
      %v8855 = vadd.f32 %v8811, 1.0
      %v8856 = vadd.f32 %v8813, 1.0
      %v8857 = vadd.f32 %v8815, 1.0
      %v8858 = vadd.f32 %v8817, 1.0
      %v8859 = vadd.f32 %v8819, 1.0
      %v8860 = vadd.f32 %v8821, 1.0
      %v8861 = vadd.f32 %v8823, 1.0
      %v8862 = vadd.f32 %v8825, 1.0
      %v8863 = vadd.f32 %v8827, 1.0
      %v8864 = vadd.f32 %v8829, 1.0
      %v8865 = vadd.f32 %v8831, 1.0
      %v8866 = vadd.f32 %v8833, 1.0
      %v8867 = vadd.f32 %v8835, 1.0
      %v8868 = vrcp.pop %v8836
      %v8869 = vrcp.pop %v8837
      %v8870 = vrcp.pop %v8838
      %v8871 = vrcp.pop %v8839
      %v8872 = vrcp.pop %v8840
      %v8873 = vrcp.pop %v8841
      %v8874 = vrcp.pop %v8842
      %v8875 = vrcp.pop %v8843
      %v8876 = vrcp.pop %v8844
      %v8877 = vrcp.pop %v8845
      %v8878 = vrcp.pop %v8846
      %v8879 = vrcp.pop %v8847
      %v8880 = vrcp.pop %v8848
      %v8881 = vrcp.pop %v8849
      %v8882 = vrcp.pop %v8850
      %v8883 = vrcp.pop %v8851
      %v8884 = vrcp.pop %v8852
      %v8885 = vrcp.pop %v8853
      %v8886 = vrcp.pop %v8854
      %v8887 = vrcp.pop %v8855
      %v8888 = vrcp.pop %v8856
      %v8889 = vrcp.pop %v8857
      %v8890 = vrcp.pop %v8858
      %v8891 = vrcp.pop %v8859
      %v8892 = vrcp.pop %v8860
      %v8893 = vrcp.pop %v8861
      %v8894 = vrcp.pop %v8862
      %v8895 = vrcp.pop %v8863
      %v8896 = vrcp.pop %v8864
      %v8897 = vrcp.pop %v8865
      %v8898 = vrcp.pop %v8866
      %v8899 = vrcp.pop %v8867
      %v8900 = vmul.f32 %v8708, %v8868
      %v8901 = vmul.f32 %v8709, %v8869
      %v8902 = vmul.f32 %v8710, %v8870
      %v8903 = vmul.f32 %v8711, %v8871
      %v8904 = vmul.f32 %v8712, %v8872
      %v8905 = vmul.f32 %v8713, %v8873
      %v8906 = vmul.f32 %v8714, %v8874
      %v8907 = vmul.f32 %v8715, %v8875
      %v8908 = vmul.f32 %v8716, %v8876
      %v8909 = vmul.f32 %v8717, %v8877
      %v8910 = vmul.f32 %v8718, %v8878
      %v8911 = vmul.f32 %v8719, %v8879
      %v8912 = vmul.f32 %v8720, %v8880
      %v8913 = vmul.f32 %v8721, %v8881
      %v8914 = vmul.f32 %v8722, %v8882
      %v8915 = vmul.f32 %v8723, %v8883
      %v8916 = vmul.f32 %v8724, %v8884
      %v8917 = vmul.f32 %v8725, %v8885
      %v8918 = vmul.f32 %v8726, %v8886
      %v8919 = vmul.f32 %v8727, %v8887
      %v8920 = vmul.f32 %v8728, %v8888
      %v8921 = vmul.f32 %v8729, %v8889
      %v8922 = vmul.f32 %v8730, %v8890
      %v8923 = vmul.f32 %v8731, %v8891
      %v8924 = vmul.f32 %v8732, %v8892
      %v8925 = vmul.f32 %v8733, %v8893
      %v8926 = vmul.f32 %v8734, %v8894
      %v8927 = vmul.f32 %v8735, %v8895
      %v8928 = vmul.f32 %v8736, %v8896
      %v8929 = vmul.f32 %v8737, %v8897
      %v8930 = vmul.f32 %v8738, %v8898
      %v8931 = vmul.f32 %v8739, %v8899
      %v8932 = vpack.c.bf16 %v8901, %v8900
      %v8933 = vpack.c.bf16 %v8903, %v8902
      %v8934 = vpack.c.bf16 %v8905, %v8904
      %v8935 = vpack.c.bf16 %v8907, %v8906
      %v8936 = vpack.c.bf16 %v8909, %v8908
      %v8937 = vpack.c.bf16 %v8911, %v8910
      %v8938 = vpack.c.bf16 %v8913, %v8912
      %v8939 = vpack.c.bf16 %v8915, %v8914
      %v8940 = vpack.c.bf16 %v8917, %v8916
      %v8941 = vpack.c.bf16 %v8919, %v8918
      %v8942 = vpack.c.bf16 %v8921, %v8920
      %v8943 = vpack.c.bf16 %v8923, %v8922
      %v8944 = vpack.c.bf16 %v8925, %v8924
      %v8945 = vpack.c.bf16 %v8927, %v8926
      %v8946 = vpack.c.bf16 %v8929, %v8928
      %v8947 = vpack.c.bf16 %v8931, %v8930
      %v8964 = vunpack.c.l.b16 %v8932
      %v8965 = vunpack.c.h.b16 %v8932
      %v8966 = vunpack.c.l.b16 %v8933
      %v8967 = vunpack.c.h.b16 %v8933
      %v8968 = vunpack.c.l.b16 %v8934
      %v8969 = vunpack.c.h.b16 %v8934
      %v8970 = vunpack.c.l.b16 %v8935
      %v8971 = vunpack.c.h.b16 %v8935
      %v8972 = vunpack.c.l.b16 %v8936
      %v8973 = vunpack.c.h.b16 %v8936
      %v8974 = vunpack.c.l.b16 %v8937
      %v8975 = vunpack.c.h.b16 %v8937
      %v8976 = vunpack.c.l.b16 %v8938
      %v8977 = vunpack.c.h.b16 %v8938
      %v8978 = vunpack.c.l.b16 %v8939
      %v8979 = vunpack.c.h.b16 %v8939
      %v8980 = vunpack.c.l.b16 %v8940
      %v8981 = vunpack.c.h.b16 %v8940
      %v8982 = vunpack.c.l.b16 %v8941
      %v8983 = vunpack.c.h.b16 %v8941
      %v8984 = vunpack.c.l.b16 %v8942
      %v8985 = vunpack.c.h.b16 %v8942
      %v8986 = vunpack.c.l.b16 %v8943
      %v8987 = vunpack.c.h.b16 %v8943
      %v8988 = vunpack.c.l.b16 %v8944
      %v8989 = vunpack.c.h.b16 %v8944
      %v8990 = vunpack.c.l.b16 %v8945
      %v8991 = vunpack.c.h.b16 %v8945
      %v8992 = vunpack.c.l.b16 %v8946
      %v8993 = vunpack.c.h.b16 %v8946
      %v8994 = vunpack.c.l.b16 %v8947
      %v8995 = vunpack.c.h.b16 %v8947
      %v8996 = vpack.c.b16 %v8964, %v8964
      %v8997 = vpack.c.b16 %v8965, %v8965
      %v8998 = vpack.c.b16 %v8966, %v8966
      %v8999 = vpack.c.b16 %v8967, %v8967
      %v9000 = vpack.c.b16 %v8968, %v8968
      %v9001 = vpack.c.b16 %v8969, %v8969
      %v9002 = vpack.c.b16 %v8970, %v8970
      %v9003 = vpack.c.b16 %v8971, %v8971
      %v9004 = vpack.c.b16 %v8972, %v8972
      %v9005 = vpack.c.b16 %v8973, %v8973
      %v9006 = vpack.c.b16 %v8974, %v8974
      %v9007 = vpack.c.b16 %v8975, %v8975
      %v9008 = vpack.c.b16 %v8976, %v8976
      %v9009 = vpack.c.b16 %v8977, %v8977
      %v9010 = vpack.c.b16 %v8978, %v8978
      %v9011 = vpack.c.b16 %v8979, %v8979
      %v9012 = vpack.c.b16 %v8980, %v8980
      %v9013 = vpack.c.b16 %v8981, %v8981
      %v9014 = vpack.c.b16 %v8982, %v8982
      %v9015 = vpack.c.b16 %v8983, %v8983
      %v9016 = vpack.c.b16 %v8984, %v8984
      %v9017 = vpack.c.b16 %v8985, %v8985
      %v9018 = vpack.c.b16 %v8986, %v8986
      %v9019 = vpack.c.b16 %v8987, %v8987
      %v9020 = vpack.c.b16 %v8988, %v8988
      %v9021 = vpack.c.b16 %v8989, %v8989
      %v9022 = vpack.c.b16 %v8990, %v8990
      %v9023 = vpack.c.b16 %v8991, %v8991
      %v9024 = vpack.c.b16 %v8992, %v8992
      %v9025 = vpack.c.b16 %v8993, %v8993
      %v9026 = vpack.c.b16 %v8994, %v8994
      %v9027 = vpack.c.b16 %v8995, %v8995
      %9060 = vst [vmem:[%s278] sm:$0xf] %v8996
      %9061 = vst [vmem:[%s278 + $0x4] sm:$0xf] %v8997
      %9062 = vst [vmem:[%s278 + $0x8] sm:$0xf] %v8998
      %9063 = vst [vmem:[%s278 + $0xc] sm:$0xf] %v8999
      %9064 = vst [vmem:[%s278 + $0x10] sm:$0xf] %v9000
      %9065 = vst [vmem:[%s278 + $0x14] sm:$0xf] %v9001
      %9066 = vst [vmem:[%s278 + $0x18] sm:$0xf] %v9002
      %9067 = vst [vmem:[%s278 + $0x1c] sm:$0xf] %v9003
      %9068 = vst [vmem:[%s278 + $0x20] sm:$0xf] %v9004
      %9069 = vst [vmem:[%s278 + $0x24] sm:$0xf] %v9005
      %9070 = vst [vmem:[%s278 + $0x28] sm:$0xf] %v9006
      %9071 = vst [vmem:[%s278 + $0x2c] sm:$0xf] %v9007
      %9072 = vst [vmem:[%s278 + $0x30] sm:$0xf] %v9008
      %9073 = vst [vmem:[%s278 + $0x34] sm:$0xf] %v9009
      %9074 = vst [vmem:[%s278 + $0x38] sm:$0xf] %v9010
      %9075 = vst [vmem:[%s278 + $0x3c] sm:$0xf] %v9011
      %9076 = vst [vmem:[%s278 + $0x40] sm:$0xf] %v9012
      %9077 = vst [vmem:[%s278 + $0x44] sm:$0xf] %v9013
      %9078 = vst [vmem:[%s278 + $0x48] sm:$0xf] %v9014
      %9079 = vst [vmem:[%s278 + $0x4c] sm:$0xf] %v9015
      %9080 = vst [vmem:[%s278 + $0x50] sm:$0xf] %v9016
      %9081 = vst [vmem:[%s278 + $0x54] sm:$0xf] %v9017
      %9082 = vst [vmem:[%s278 + $0x58] sm:$0xf] %v9018
      %9083 = vst [vmem:[%s278 + $0x5c] sm:$0xf] %v9019
      %9084 = vst [vmem:[%s278 + $0x60] sm:$0xf] %v9020
      %9085 = vst [vmem:[%s278 + $0x64] sm:$0xf] %v9021
      %9086 = vst [vmem:[%s278 + $0x68] sm:$0xf] %v9022
      %9087 = vst [vmem:[%s278 + $0x6c] sm:$0xf] %v9023
      %9088 = vst [vmem:[%s278 + $0x70] sm:$0xf] %v9024
      %9089 = vst [vmem:[%s278 + $0x74] sm:$0xf] %v9025
      %9090 = vst [vmem:[%s278 + $0x78] sm:$0xf] %v9026
      %9091 = vst [vmem:[%s278 + $0x7c] sm:$0xf] %v9027
      %p9092 = scmp.lt.s32.totalorder %s18, 1
      %s9093 = scalar_select %p9092, %s18, 1
      %s9094 = smul.addr %s9093, 32
      %s9095 = smul.addr %s9094, 4
      %s9096 = scalar_lea.vmem %s7, %s9095
      // Predicated region
      $region49: #{sppf_forward_nhwc.1} parent=47 // pred_check
        %p9097 = pneg %p188
      $region50: #{sppf_forward_nhwc.1} parent=47 // pred_check_branch
        %9099 = sbr.rel (%p9097) target = $region52
      $region51: #{sppf_forward_nhwc.1} parent=47 // pred_region
        _
      $region52: #{sppf_forward_nhwc.1} parent=47 // pred_fallthru
        _
    $region48: #{sppf_forward_nhwc.1} parent=5 // pred_fallthru
      _
    %p9100 = scmp.le.s32.totalorder 2, %s13
    // Predicated region
    $region53: #{sppf_forward_nhwc.1} parent=5 // pred_check
      %p9101 = pneg %p9100
    $region54: #{sppf_forward_nhwc.1} parent=5 // pred_check_branch
      %9103 = sbr.rel (%p9101) target = $region56
    $region55: #{sppf_forward_nhwc.1} parent=5 // pred_region
      %s9104 = ssub.s32 %s13, 2
      // Predicated region
      $region57: #{sppf_forward_nhwc.1} parent=55 // pred_check
        %p9105 = pneg %p194
      $region58: #{sppf_forward_nhwc.1} parent=55 // pred_check_branch
        %9107 = sbr.rel (%p9105) target = $region60
      $region59: #{sppf_forward_nhwc.1} parent=55 // pred_region
        %p9108 = scmp.lt.s32.totalorder %s19, 1
        %s9109 = scalar_select %p9108, %s19, 1
        %s9110 = smul.addr %s9109, 32
        %s9111 = smul.addr %s9110, 4
        %s9112 = scalar_lea.vmem %s7, %s9111
      $region60: #{sppf_forward_nhwc.1} parent=55 // pred_fallthru
        _
    $region56: #{sppf_forward_nhwc.1} parent=5 // pred_fallthru
      _
  $region6: #{sppf_forward_nhwc.1} parent=0 // loop_footer
    %s17 = sadd.s32 1, %s13
  $region7: #{sppf_forward_nhwc.1} parent=0 // loop_footer_branch
    %12 = sbr.rel target = $region3
  $region8: #{sppf_forward_nhwc.1} parent=0 // loop_exit
    _

</llo_original>
